<compile_context>
chip_gen: v6e
topology: v6e:2x2x1
jax: 0.10.0
libtpu: 0.0.40
codegen_flags: <defaults>
</compile_context>

<pallas_src>
import functools

import jax
import jax.numpy as jnp
from jax.experimental import pallas as pl
from jax.experimental.pallas import tpu as pltpu

VMEM = pltpu.MemorySpace.VMEM

GATE_PAD = 128    # per-gate lane width inside the LSTM (one full vreg tile)
CONV1_PAD = 256   # conv layer-1 out channels, 210 -> 256
CONV2_PAD = 128   # conv layer-2 out channels, 100 -> 128 (also LSTM input dim)
VOCAB_PAD = 128   # embedding table rows padded to a lane tile


# ---------------------------------------------------------------------------
# The fused kernel
# ---------------------------------------------------------------------------
def _fused_forward_kernel(B, S, H,
                          ids_ref, emb_ref,
                          ctw1_ref, ctb1_ref, ctw2_ref, ctb2_ref,
                          cbw1_ref, cbb1_ref, cbw2_ref, cbb2_ref,
                          ltwih_ref, ltwhhf_ref, ltwhhb_ref, ltb_ref,
                          lbwih_ref, lbwhhf_ref, lbwhhb_ref, lbb_ref,
                          mw1_ref, mb1_ref, mw2_ref, mb2_ref,
                          o_ref):
    GP = GATE_PAD
    V, E = emb_ref.shape
    SB = S * B

    def sigmoid(x):
        return 1.0 / (1.0 + jnp.exp(-x))

    # ---- embedding: gather-free one-hot matmul (ids are time-major rows) ----
    ids = ids_ref[...]                                        # (S*B, 1) int32
    lane = jax.lax.broadcasted_iota(jnp.int32, (SB, V), 1)
    onehot = jnp.where(lane == ids, 1.0, 0.0).astype(jnp.bfloat16)
    emb = jnp.dot(onehot, emb_ref[...],
                  preferred_element_type=jnp.float32)         # (S*B, E) f32
    emb = emb.reshape(S, B, E)                                # time-major (T, B, E)

    def pad_time(x):   # zero-pad one step on both ends of the time axis
        z = jnp.zeros((1,) + x.shape[1:], x.dtype)
        return jnp.concatenate([z, x, z], axis=0)

    def conv_relu(x, w_ref, b_ref, K):
        # x: (Lp, B, Cin) f32, already padded along time; im2col -> one matmul.
        Lp, Bx, C = x.shape
        Lout = Lp - K + 1
        patches = jnp.concatenate([x[k:k + Lout] for k in range(K)], axis=-1)
        p2 = patches.reshape(Lout * Bx, K * C).astype(jnp.bfloat16)
        y = jnp.dot(p2, w_ref[...], preferred_element_type=jnp.float32)
        y = jnp.maximum(y + b_ref[...], 0.0)
        return y.reshape(Lout, Bx, -1)

    emb_p = pad_time(emb)                                     # (S+2, B, E)
    # trigram CNN: two K=3, pad=1 convs (length preserved)
    xt = conv_relu(emb_p, ctw1_ref, ctb1_ref, 3)              # (S,   B, 256)
    xt = conv_relu(pad_time(xt), ctw2_ref, ctb2_ref, 3)       # (S,   B, 128)
    # bigram CNN: two K=2, pad=1 convs (length grows by 1 each)
    xg = conv_relu(emb_p, cbw1_ref, cbb1_ref, 2)              # (S+1, B, 256)
    xg = conv_relu(pad_time(xg), cbw2_ref, cbb2_ref, 2)       # (S+2, B, 128)
    # TODO(synk): nn.Dropout is inference-time identity here (no train RNG mask).

    def bilstm_last_h(x, wih_ref, whhf_ref, whhb_ref, b_ref):
        # x: (T, B, D) time-major.  Returns final fwd / bwd hidden, (B, GP) each.
        T, Bx, D = x.shape
        G4 = 4 * GP
        xb = x.reshape(T * Bx, D).astype(jnp.bfloat16)
        # Hoisted input projection for BOTH directions in one matmul.
        xproj = jnp.dot(xb, wih_ref[...],
                        preferred_element_type=jnp.float32) + b_ref[...]   # (T*B, 2*G4)
        whh_f = whhf_ref[...]                                              # (GP, 4*GP) bf16
        whh_b = whhb_ref[...]

        def cell(gin, h, c, whh):
            g = gin + jnp.dot(h.astype(jnp.bfloat16), whh,
                              preferred_element_type=jnp.float32)          # (B, 4*GP)
            # PyTorch gate order i, f, g, o; each gate owns one 128-lane tile.
            i = sigmoid(g[:, 0 * GP:1 * GP])
            f = sigmoid(g[:, 1 * GP:2 * GP])
            gc = jnp.tanh(g[:, 2 * GP:3 * GP])
            o = sigmoid(g[:, 3 * GP:4 * GP])
            c_new = f * c + i * gc
            return o * jnp.tanh(c_new), c_new

        h_f = jnp.zeros((Bx, GP), jnp.float32)
        c_f = jnp.zeros((Bx, GP), jnp.float32)
        h_b = jnp.zeros((Bx, GP), jnp.float32)
        c_b = jnp.zeros((Bx, GP), jnp.float32)
        for ts in range(T):                      # static trip count: fully unrolled
            rows_f = xproj[ts * Bx:(ts + 1) * Bx, 0:G4]
            tb = T - 1 - ts
            rows_b = xproj[tb * Bx:(tb + 1) * Bx, G4:2 * G4]
            h_f, c_f = cell(rows_f, h_f, c_f, whh_f)
            h_b, c_b = cell(rows_b, h_b, c_b, whh_b)
        return h_f, h_b

    ht_f, ht_b = bilstm_last_h(xt, ltwih_ref, ltwhhf_ref, ltwhhb_ref, ltb_ref)
    hg_f, hg_b = bilstm_last_h(xg, lbwih_ref, lbwhhf_ref, lbwhhb_ref, lbb_ref)

    def path_feats(h_fwd, h_bwd):
        hf = h_fwd[:, :H]                                     # real hidden lanes
        hb = h_bwd[:, :H]
        flat = jnp.concatenate([hf, hb], axis=1)              # (B, 2H) == torch reshape
        avg = jnp.concatenate([jnp.sum(hf, axis=1, keepdims=True),
                               jnp.sum(hb, axis=1, keepdims=True)],
                              axis=1) * (1.0 / H)             # (B, 2)  mean over H
        mx = jnp.concatenate([jnp.max(hf, axis=1, keepdims=True),
                              jnp.max(hb, axis=1, keepdims=True)],
                             axis=1)                          # (B, 2)  max over H
        return flat, avg, mx

    t_flat, t_avg, t_max = path_feats(ht_f, ht_b)
    g_flat, g_avg, g_max = path_feats(hg_f, hg_b)
    feat = jnp.concatenate([t_flat, t_avg, t_max, g_flat, g_avg, g_max],
                           axis=1)                            # (B, 4H + 8)

    h1 = jnp.dot(feat.astype(jnp.bfloat16), mw1_ref[...],
                 preferred_element_type=jnp.float32) + mb1_ref[...]
    h1 = jnp.maximum(h1, 0.0)
    y = jnp.dot(h1.astype(jnp.bfloat16), mw2_ref[...],
                preferred_element_type=jnp.float32) + mb2_ref[...]
    o_ref[...] = y.astype(o_ref.dtype)


# ---------------------------------------------------------------------------
# Forward wrapper (one pallas_call for the whole net)
# ---------------------------------------------------------------------------
@functools.partial(jax.jit, static_argnames=("phase",))
def attractive_net_forward(packed, x_ids, category=None, phase="eval"):
    """Mirrors AttractiveNet.forward; `category` / `phase` are unused there."""
    del category, phase                               # unused, as in the torch forward
    B, S = x_ids.shape
    H = (packed["mw1"].shape[0] - 8) // 4             # linear in-features = 4H + 8
    ids_tm = jnp.transpose(x_ids).reshape(S * B, 1).astype(jnp.int32)  # time-major rows
    kernel = functools.partial(_fused_forward_kernel, B, S, H)
    return pl.pallas_call(
        kernel,
        out_shape=jax.ShapeDtypeStruct((B, 1), jnp.float32),
        in_specs=[pl.BlockSpec(memory_space=VMEM)] * 22,
        out_specs=pl.BlockSpec(memory_space=VMEM),
    )(ids_tm, packed["emb"],
      packed["ctw1"], packed["ctb1"], packed["ctw2"], packed["ctb2"],
      packed["cbw1"], packed["cbb1"], packed["cbw2"], packed["cbb2"],
      packed["lt_wih"], packed["lt_whh_f"], packed["lt_whh_b"], packed["lt_b"],
      packed["lb_wih"], packed["lb_whh_f"], packed["lb_whh_b"], packed["lb_b"],
      packed["mw1"], packed["mb1"], packed["mw2"], packed["mb2"])


# ---------------------------------------------------------------------------
# Synthetic parameter init (PyTorch layouts), then pack to kernel layouts
# ---------------------------------------------------------------------------
def init_params(key, vocab, emb, hidden, ksize):
    # TODO(synk): orthogonal init is approximated with scaled normal (synthetic
    # demo weights); LSTM biases are zero exactly as in init_weights().
    keys = list(jax.random.split(key, 20))
    it = iter(keys)

    def nrm(shape, fan_in):
        return jax.random.normal(next(it), shape, jnp.float32) * (float(fan_in) ** -0.5)

    H4 = 4 * hidden
    p = {}
    p["embedding"] = nrm((vocab, emb), 1.0)
    # PyTorch Conv1d weight layout (Cout, Cin, K); bias (Cout,)
    p["tri_w1"] = nrm((210, emb, ksize), emb * ksize)
    p["tri_b1"] = jnp.zeros((210,), jnp.float32)
    p["tri_w2"] = nrm((100, 210, ksize), 210 * ksize)
    p["tri_b2"] = jnp.zeros((100,), jnp.float32)
    p["bi_w1"] = nrm((210, emb, ksize - 1), emb * (ksize - 1))
    p["bi_b1"] = jnp.zeros((210,), jnp.float32)
    p["bi_w2"] = nrm((100, 210, ksize - 1), 210 * (ksize - 1))
    p["bi_b2"] = jnp.zeros((100,), jnp.float32)

    # PyTorch LSTM layout: weight_ih (4H, D), weight_hh (4H, H), gates i,f,g,o
    def lstm():
        return {"wih_f": nrm((H4, 100), 100), "whh_f": nrm((H4, hidden), hidden),
                "b_f": jnp.zeros((H4,), jnp.float32),
                "wih_b": nrm((H4, 100), 100), "whh_b": nrm((H4, hidden), hidden),
                "b_b": jnp.zeros((H4,), jnp.float32)}

    p["lstm_tri"] = lstm()
    p["lstm_bi"] = lstm()

    fin = 4 * hidden + 2 * 4
    p["w1"] = nrm((hidden, fin), fin)      # PyTorch Linear layout (out, in)
    p["b1"] = jnp.zeros((hidden,), jnp.float32)
    p["w2"] = nrm((1, hidden), hidden)
    p["b2"] = jnp.zeros((1,), jnp.float32)
    return p


def pack_params(p, hidden):
    """Pad / transpose / cast the PyTorch-layout params into kernel layouts."""
    GP = GATE_PAD
    bf = jnp.bfloat16

    def conv_w(w_ock, cin_pad, cout_pad):
        Cout, Cin, K = w_ock.shape
        w = jnp.transpose(w_ock, (2, 1, 0))                       # (K, Cin, Cout)
        w = jnp.pad(w, ((0, 0), (0, cin_pad - Cin), (0, cout_pad - Cout)))
        return w.reshape(K * cin_pad, cout_pad).astype(bf)        # im2col layout

    def conv_b(b, cout_pad):
        return jnp.pad(b, (0, cout_pad - b.shape[0])).reshape(1, cout_pad).astype(jnp.float32)

    def lstm_dir(wih, whh, bias, d_pad):
        # wih (4H, D), whh (4H, H) -> per-gate 128-lane padded (D_pad, 4*GP) / (GP, 4*GP)
        Hh = whh.shape[1]
        D = wih.shape[1]
        wih_p = jnp.zeros((d_pad, 4 * GP), jnp.float32)
        whh_p = jnp.zeros((GP, 4 * GP), jnp.float32)
        b_p = jnp.zeros((4 * GP,), jnp.float32)
        for q in range(4):                       # gate order i, f, g, o
            wih_p = wih_p.at[:D, q * GP:q * GP + Hh].set(wih[q * Hh:(q + 1) * Hh, :].T)
            whh_p = whh_p.at[:Hh, q * GP:q * GP + Hh].set(whh[q * Hh:(q + 1) * Hh, :].T)
            b_p = b_p.at[q * GP:q * GP + Hh].set(bias[q * Hh:(q + 1) * Hh])
        return wih_p.astype(bf), whh_p.astype(bf), b_p

    V, E = p["embedding"].shape
    packed = {}
    packed["emb"] = jnp.pad(p["embedding"], ((0, VOCAB_PAD - V), (0, 0))).astype(bf)

    packed["ctw1"] = conv_w(p["tri_w1"], E, CONV1_PAD)
    packed["ctb1"] = conv_b(p["tri_b1"], CONV1_PAD)
    packed["ctw2"] = conv_w(p["tri_w2"], CONV1_PAD, CONV2_PAD)
    packed["ctb2"] = conv_b(p["tri_b2"], CONV2_PAD)
    packed["cbw1"] = conv_w(p["bi_w1"], E, CONV1_PAD)
    packed["cbb1"] = conv_b(p["bi_b1"], CONV1_PAD)
    packed["cbw2"] = conv_w(p["bi_w2"], CONV1_PAD, CONV2_PAD)
    packed["cbb2"] = conv_b(p["bi_b2"], CONV2_PAD)

    def pack_lstm(lp, prefix):
        wf, uf, bf_ = lstm_dir(lp["wih_f"], lp["whh_f"], lp["b_f"], GP)
        wb, ub, bb_ = lstm_dir(lp["wih_b"], lp["whh_b"], lp["b_b"], GP)
        packed[prefix + "_wih"] = jnp.concatenate([wf, wb], axis=1)       # (128, 1024) bf16
        packed[prefix + "_whh_f"] = uf                                    # (128, 512) bf16
        packed[prefix + "_whh_b"] = ub
        packed[prefix + "_b"] = jnp.concatenate([bf_, bb_]).reshape(1, 8 * GP)

    pack_lstm(p["lstm_tri"], "lt")
    pack_lstm(p["lstm_bi"], "lb")

    packed["mw1"] = jnp.pad(p["w1"].T, ((0, 0), (0, 128 - hidden))).astype(bf)  # (4H+8, 128)
    packed["mb1"] = jnp.pad(p["b1"], (0, 128 - hidden)).reshape(1, 128).astype(jnp.float32)
    packed["mw2"] = jnp.pad(p["w2"].T, ((0, 128 - hidden), (0, 0))).astype(bf)  # (128, 1)
    packed["mb2"] = p["b2"].reshape(1, 1).astype(jnp.float32)
    return packed


# ---------------------------------------------------------------------------
if __name__ == "__main__":
    # num_layers must be 1 for the torch linear dims (4H + 8) to be consistent.
    config = dict(input_dim=50, embedding_dim=32, kernel_size=3,
                  hidden_dim=32, num_layers=1, dropout=0.1)

    key = jax.random.PRNGKey(0)
    pkey, xkey, ckey = jax.random.split(key, 3)

    params = init_params(pkey, config["input_dim"], config["embedding_dim"],
                         config["hidden_dim"], config["kernel_size"])
    packed = pack_params(params, config["hidden_dim"])        # done once, off the hot path

    B, S = 2, 8
    x_ids = jax.random.randint(xkey, (B, S), 0, config["input_dim"], dtype=jnp.int32)
    category = jax.random.randint(ckey, (B,), 0, 4, dtype=jnp.int32)   # unused, as in torch

    pred = attractive_net_forward(packed, x_ids, category, phase="eval")
    pred = jax.block_until_ready(pred)

    assert pred.shape == (B, 1) and pred.dtype == jnp.float32
    assert bool(jnp.all(jnp.isfinite(pred)))
    print("KERNEL_OK")
</pallas_src>

<mosaic_0001>
module attributes {stable_mosaic.version = 11 : i64} {
  func.func @_fused_forward_kernel(%arg0: memref<16x1xi32, #tpu.memory_space<vmem>>, %arg1: memref<128x32xbf16, #tpu.memory_space<vmem>>, %arg2: memref<96x256xbf16, #tpu.memory_space<vmem>>, %arg3: memref<1x256xf32, #tpu.memory_space<vmem>>, %arg4: memref<768x128xbf16, #tpu.memory_space<vmem>>, %arg5: memref<1x128xf32, #tpu.memory_space<vmem>>, %arg6: memref<64x256xbf16, #tpu.memory_space<vmem>>, %arg7: memref<1x256xf32, #tpu.memory_space<vmem>>, %arg8: memref<512x128xbf16, #tpu.memory_space<vmem>>, %arg9: memref<1x128xf32, #tpu.memory_space<vmem>>, %arg10: memref<128x1024xbf16, #tpu.memory_space<vmem>>, %arg11: memref<128x512xbf16, #tpu.memory_space<vmem>>, %arg12: memref<128x512xbf16, #tpu.memory_space<vmem>>, %arg13: memref<1x1024xf32, #tpu.memory_space<vmem>>, %arg14: memref<128x1024xbf16, #tpu.memory_space<vmem>>, %arg15: memref<128x512xbf16, #tpu.memory_space<vmem>>, %arg16: memref<128x512xbf16, #tpu.memory_space<vmem>>, %arg17: memref<1x1024xf32, #tpu.memory_space<vmem>>, %arg18: memref<136x128xbf16, #tpu.memory_space<vmem>>, %arg19: memref<1x128xf32, #tpu.memory_space<vmem>>, %arg20: memref<128x1xbf16, #tpu.memory_space<vmem>>, %arg21: memref<1x1xf32, #tpu.memory_space<vmem>>, %arg22: memref<2x1xf32, #tpu.memory_space<vmem>>) attributes {dimension_semantics = [], scalar_prefetch = 0 : i64, scratch_operands = 0 : i64, tpu.core_type = #tpu.core_type<tc>} {
    %c0 = arith.constant 0 : index
    %c0_0 = arith.constant 0 : index
    %0 = vector.load %arg0[%c0, %c0_0] : memref<16x1xi32, #tpu.memory_space<vmem>>, vector<16x1xi32>
    %1 = tpu.iota {dimensions = array<i32: 1>} : vector<16x128xi32>
    %2 = vector.broadcast %0 : vector<16x1xi32> to vector<16x128xi32>
    %3 = arith.cmpi eq, %1, %2 : vector<16x128xi32>
    %cst = arith.constant 1.000000e+00 : f32
    %cst_1 = arith.constant 0.000000e+00 : f32
    %4 = vector.broadcast %cst : f32 to vector<16x128xf32>
    %5 = vector.broadcast %cst_1 : f32 to vector<16x128xf32>
    %6 = arith.select %3, %4, %5 : vector<16x128xi1>, vector<16x128xf32>
    %7 = arith.truncf %6 : vector<16x128xf32> to vector<16x128xbf16>
    %c0_2 = arith.constant 0 : index
    %c0_3 = arith.constant 0 : index
    %8 = vector.load %arg1[%c0_2, %c0_3] : memref<128x32xbf16, #tpu.memory_space<vmem>>, vector<128x32xbf16>
    %cst_4 = arith.constant dense<0.000000e+00> : vector<16x32xf32>
    %9 = tpu.matmul %7, %8, %cst_4 {dimension_numbers = #tpu.dot_dimension_numbers<[1], [0], [0], [1], [0, 0, 1, 1], [], []>} : vector<16x128xbf16>, vector<128x32xbf16>, vector<16x32xf32> -> vector<16x32xf32>
    %10 = vector.shape_cast %9 : vector<16x32xf32> to vector<8x2x32xf32>
    %cst_5 = arith.constant 0.000000e+00 : f32
    %11 = vector.broadcast %cst_5 : f32 to vector<1x2x32xf32>
    %12 = tpu.concatenate %11, %10, %11 in 0 : vector<1x2x32xf32>, vector<8x2x32xf32>, vector<1x2x32xf32> -> vector<10x2x32xf32>
    %13 = vector.extract_strided_slice %12 {offsets = [0, 0, 0], sizes = [8, 2, 32], strides = [1, 1, 1]} : vector<10x2x32xf32> to vector<8x2x32xf32>
    %14 = vector.extract_strided_slice %12 {offsets = [1, 0, 0], sizes = [8, 2, 32], strides = [1, 1, 1]} : vector<10x2x32xf32> to vector<8x2x32xf32>
    %15 = vector.extract_strided_slice %12 {offsets = [2, 0, 0], sizes = [8, 2, 32], strides = [1, 1, 1]} : vector<10x2x32xf32> to vector<8x2x32xf32>
    %16 = tpu.concatenate %13, %14, %15 in 2 : vector<8x2x32xf32>, vector<8x2x32xf32>, vector<8x2x32xf32> -> vector<8x2x96xf32>
    %17 = vector.shape_cast %16 : vector<8x2x96xf32> to vector<16x96xf32>
    %18 = arith.truncf %17 : vector<16x96xf32> to vector<16x96xbf16>
    %c0_6 = arith.constant 0 : index
    %c0_7 = arith.constant 0 : index
    %19 = vector.load %arg2[%c0_6, %c0_7] : memref<96x256xbf16, #tpu.memory_space<vmem>>, vector<96x256xbf16>
    %cst_8 = arith.constant dense<0.000000e+00> : vector<16x256xf32>
    %20 = tpu.matmul %18, %19, %cst_8 {dimension_numbers = #tpu.dot_dimension_numbers<[1], [0], [0], [1], [0, 0, 1, 1], [], []>} : vector<16x96xbf16>, vector<96x256xbf16>, vector<16x256xf32> -> vector<16x256xf32>
    %c0_9 = arith.constant 0 : index
    %c0_10 = arith.constant 0 : index
    %21 = vector.load %arg3[%c0_9, %c0_10] : memref<1x256xf32, #tpu.memory_space<vmem>>, vector<1x256xf32>
    %22 = vector.broadcast %21 : vector<1x256xf32> to vector<16x256xf32>
    %23 = arith.addf %20, %22 : vector<16x256xf32>
    %cst_11 = arith.constant 0.000000e+00 : f32
    %24 = vector.broadcast %cst_11 : f32 to vector<16x256xf32>
    %25 = arith.maximumf %23, %24 : vector<16x256xf32>
    %26 = vector.shape_cast %25 : vector<16x256xf32> to vector<8x2x256xf32>
    %cst_12 = arith.constant 0.000000e+00 : f32
    %27 = vector.broadcast %cst_12 : f32 to vector<1x2x256xf32>
    %28 = tpu.concatenate %27, %26, %27 in 0 : vector<1x2x256xf32>, vector<8x2x256xf32>, vector<1x2x256xf32> -> vector<10x2x256xf32>
    %29 = vector.extract_strided_slice %28 {offsets = [0, 0, 0], sizes = [8, 2, 256], strides = [1, 1, 1]} : vector<10x2x256xf32> to vector<8x2x256xf32>
    %30 = vector.extract_strided_slice %28 {offsets = [1, 0, 0], sizes = [8, 2, 256], strides = [1, 1, 1]} : vector<10x2x256xf32> to vector<8x2x256xf32>
    %31 = vector.extract_strided_slice %28 {offsets = [2, 0, 0], sizes = [8, 2, 256], strides = [1, 1, 1]} : vector<10x2x256xf32> to vector<8x2x256xf32>
    %32 = tpu.concatenate %29, %30, %31 in 2 : vector<8x2x256xf32>, vector<8x2x256xf32>, vector<8x2x256xf32> -> vector<8x2x768xf32>
    %33 = vector.shape_cast %32 : vector<8x2x768xf32> to vector<16x768xf32>
    %34 = arith.truncf %33 : vector<16x768xf32> to vector<16x768xbf16>
    %c0_13 = arith.constant 0 : index
    %c0_14 = arith.constant 0 : index
    %35 = vector.load %arg4[%c0_13, %c0_14] : memref<768x128xbf16, #tpu.memory_space<vmem>>, vector<768x128xbf16>
    %cst_15 = arith.constant dense<0.000000e+00> : vector<16x128xf32>
    %36 = tpu.matmul %34, %35, %cst_15 {dimension_numbers = #tpu.dot_dimension_numbers<[1], [0], [0], [1], [0, 0, 1, 1], [], []>} : vector<16x768xbf16>, vector<768x128xbf16>, vector<16x128xf32> -> vector<16x128xf32>
    %c0_16 = arith.constant 0 : index
    %c0_17 = arith.constant 0 : index
    %37 = vector.load %arg5[%c0_16, %c0_17] : memref<1x128xf32, #tpu.memory_space<vmem>>, vector<1x128xf32>
    %38 = vector.broadcast %37 : vector<1x128xf32> to vector<16x128xf32>
    %39 = arith.addf %36, %38 : vector<16x128xf32>
    %cst_18 = arith.constant 0.000000e+00 : f32
    %40 = vector.broadcast %cst_18 : f32 to vector<16x128xf32>
    %41 = arith.maximumf %39, %40 : vector<16x128xf32>
    %42 = vector.shape_cast %41 : vector<16x128xf32> to vector<8x2x128xf32>
    %43 = vector.extract_strided_slice %12 {offsets = [0, 0, 0], sizes = [9, 2, 32], strides = [1, 1, 1]} : vector<10x2x32xf32> to vector<9x2x32xf32>
    %44 = vector.extract_strided_slice %12 {offsets = [1, 0, 0], sizes = [9, 2, 32], strides = [1, 1, 1]} : vector<10x2x32xf32> to vector<9x2x32xf32>
    %45 = tpu.concatenate %43, %44 in 2 : vector<9x2x32xf32>, vector<9x2x32xf32> -> vector<9x2x64xf32>
    %46 = vector.shape_cast %45 : vector<9x2x64xf32> to vector<18x64xf32>
    %47 = arith.truncf %46 : vector<18x64xf32> to vector<18x64xbf16>
    %c0_19 = arith.constant 0 : index
    %c0_20 = arith.constant 0 : index
    %48 = vector.load %arg6[%c0_19, %c0_20] : memref<64x256xbf16, #tpu.memory_space<vmem>>, vector<64x256xbf16>
    %cst_21 = arith.constant dense<0.000000e+00> : vector<18x256xf32>
    %49 = tpu.matmul %47, %48, %cst_21 {dimension_numbers = #tpu.dot_dimension_numbers<[1], [0], [0], [1], [0, 0, 1, 1], [], []>} : vector<18x64xbf16>, vector<64x256xbf16>, vector<18x256xf32> -> vector<18x256xf32>
    %c0_22 = arith.constant 0 : index
    %c0_23 = arith.constant 0 : index
    %50 = vector.load %arg7[%c0_22, %c0_23] : memref<1x256xf32, #tpu.memory_space<vmem>>, vector<1x256xf32>
    %51 = vector.broadcast %50 : vector<1x256xf32> to vector<18x256xf32>
    %52 = arith.addf %49, %51 : vector<18x256xf32>
    %cst_24 = arith.constant 0.000000e+00 : f32
    %53 = vector.broadcast %cst_24 : f32 to vector<18x256xf32>
    %54 = arith.maximumf %52, %53 : vector<18x256xf32>
    %55 = vector.shape_cast %54 : vector<18x256xf32> to vector<9x2x256xf32>
    %cst_25 = arith.constant 0.000000e+00 : f32
    %56 = vector.broadcast %cst_25 : f32 to vector<1x2x256xf32>
    %57 = tpu.concatenate %56, %55, %56 in 0 : vector<1x2x256xf32>, vector<9x2x256xf32>, vector<1x2x256xf32> -> vector<11x2x256xf32>
    %58 = vector.extract_strided_slice %57 {offsets = [0, 0, 0], sizes = [10, 2, 256], strides = [1, 1, 1]} : vector<11x2x256xf32> to vector<10x2x256xf32>
    %59 = vector.extract_strided_slice %57 {offsets = [1, 0, 0], sizes = [10, 2, 256], strides = [1, 1, 1]} : vector<11x2x256xf32> to vector<10x2x256xf32>
    %60 = tpu.concatenate %58, %59 in 2 : vector<10x2x256xf32>, vector<10x2x256xf32> -> vector<10x2x512xf32>
    %61 = vector.shape_cast %60 : vector<10x2x512xf32> to vector<20x512xf32>
    %62 = arith.truncf %61 : vector<20x512xf32> to vector<20x512xbf16>
    %c0_26 = arith.constant 0 : index
    %c0_27 = arith.constant 0 : index
    %63 = vector.load %arg8[%c0_26, %c0_27] : memref<512x128xbf16, #tpu.memory_space<vmem>>, vector<512x128xbf16>
    %cst_28 = arith.constant dense<0.000000e+00> : vector<20x128xf32>
    %64 = tpu.matmul %62, %63, %cst_28 {dimension_numbers = #tpu.dot_dimension_numbers<[1], [0], [0], [1], [0, 0, 1, 1], [], []>} : vector<20x512xbf16>, vector<512x128xbf16>, vector<20x128xf32> -> vector<20x128xf32>
    %c0_29 = arith.constant 0 : index
    %c0_30 = arith.constant 0 : index
    %65 = vector.load %arg9[%c0_29, %c0_30] : memref<1x128xf32, #tpu.memory_space<vmem>>, vector<1x128xf32>
    %66 = vector.broadcast %65 : vector<1x128xf32> to vector<20x128xf32>
    %67 = arith.addf %64, %66 : vector<20x128xf32>
    %cst_31 = arith.constant 0.000000e+00 : f32
    %68 = vector.broadcast %cst_31 : f32 to vector<20x128xf32>
    %69 = arith.maximumf %67, %68 : vector<20x128xf32>
    %70 = vector.shape_cast %69 : vector<20x128xf32> to vector<10x2x128xf32>
    %71 = vector.shape_cast %42 : vector<8x2x128xf32> to vector<16x128xf32>
    %72 = arith.truncf %71 : vector<16x128xf32> to vector<16x128xbf16>
    %c0_32 = arith.constant 0 : index
    %c0_33 = arith.constant 0 : index
    %73 = vector.load %arg10[%c0_32, %c0_33] : memref<128x1024xbf16, #tpu.memory_space<vmem>>, vector<128x1024xbf16>
    %cst_34 = arith.constant dense<0.000000e+00> : vector<16x1024xf32>
    %74 = tpu.matmul %72, %73, %cst_34 {dimension_numbers = #tpu.dot_dimension_numbers<[1], [0], [0], [1], [0, 0, 1, 1], [], []>} : vector<16x128xbf16>, vector<128x1024xbf16>, vector<16x1024xf32> -> vector<16x1024xf32>
    %c0_35 = arith.constant 0 : index
    %c0_36 = arith.constant 0 : index
    %75 = vector.load %arg13[%c0_35, %c0_36] : memref<1x1024xf32, #tpu.memory_space<vmem>>, vector<1x1024xf32>
    %76 = vector.broadcast %75 : vector<1x1024xf32> to vector<16x1024xf32>
    %77 = arith.addf %74, %76 : vector<16x1024xf32>
    %c0_37 = arith.constant 0 : index
    %c0_38 = arith.constant 0 : index
    %78 = vector.load %arg11[%c0_37, %c0_38] : memref<128x512xbf16, #tpu.memory_space<vmem>>, vector<128x512xbf16>
    %c0_39 = arith.constant 0 : index
    %c0_40 = arith.constant 0 : index
    %79 = vector.load %arg12[%c0_39, %c0_40] : memref<128x512xbf16, #tpu.memory_space<vmem>>, vector<128x512xbf16>
    %cst_41 = arith.constant 0.000000e+00 : f32
    %80 = vector.broadcast %cst_41 : f32 to vector<2x128xf32>
    %cst_42 = arith.constant 0.000000e+00 : f32
    %81 = vector.broadcast %cst_42 : f32 to vector<2x128xf32>
    %cst_43 = arith.constant 0.000000e+00 : f32
    %82 = vector.broadcast %cst_43 : f32 to vector<2x128xf32>
    %cst_44 = arith.constant 0.000000e+00 : f32
    %83 = vector.broadcast %cst_44 : f32 to vector<2x128xf32>
    %84 = vector.extract_strided_slice %77 {offsets = [0, 0], sizes = [2, 512], strides = [1, 1]} : vector<16x1024xf32> to vector<2x512xf32>
    %85 = vector.extract_strided_slice %77 {offsets = [14, 512], sizes = [2, 512], strides = [1, 1]} : vector<16x1024xf32> to vector<2x512xf32>
    %86 = arith.truncf %80 : vector<2x128xf32> to vector<2x128xbf16>
    %cst_45 = arith.constant dense<0.000000e+00> : vector<2x512xf32>
    %87 = tpu.matmul %86, %78, %cst_45 {dimension_numbers = #tpu.dot_dimension_numbers<[1], [0], [0], [1], [0, 0, 1, 1], [], []>} : vector<2x128xbf16>, vector<128x512xbf16>, vector<2x512xf32> -> vector<2x512xf32>
    %88 = arith.addf %84, %87 : vector<2x512xf32>
    %89 = vector.extract_strided_slice %88 {offsets = [0, 0], sizes = [2, 128], strides = [1, 1]} : vector<2x512xf32> to vector<2x128xf32>
    %cst_46 = arith.constant 0.000000e+00 : f32
    %90 = vector.broadcast %cst_46 : f32 to vector<2x128xf32>
    %91 = arith.subf %90, %89 : vector<2x128xf32>
    %92 = math.exp %91 : vector<2x128xf32>
    %cst_47 = arith.constant 1.000000e+00 : f32
    %93 = vector.broadcast %cst_47 : f32 to vector<2x128xf32>
    %94 = arith.addf %93, %92 : vector<2x128xf32>
    %cst_48 = arith.constant 1.000000e+00 : f32
    %95 = vector.broadcast %cst_48 : f32 to vector<2x128xf32>
    %96 = arith.divf %95, %94 : vector<2x128xf32>
    %97 = vector.extract_strided_slice %88 {offsets = [0, 128], sizes = [2, 128], strides = [1, 1]} : vector<2x512xf32> to vector<2x128xf32>
    %cst_49 = arith.constant 0.000000e+00 : f32
    %98 = vector.broadcast %cst_49 : f32 to vector<2x128xf32>
    %99 = arith.subf %98, %97 : vector<2x128xf32>
    %100 = math.exp %99 : vector<2x128xf32>
    %cst_50 = arith.constant 1.000000e+00 : f32
    %101 = vector.broadcast %cst_50 : f32 to vector<2x128xf32>
    %102 = arith.addf %101, %100 : vector<2x128xf32>
    %cst_51 = arith.constant 1.000000e+00 : f32
    %103 = vector.broadcast %cst_51 : f32 to vector<2x128xf32>
    %104 = arith.divf %103, %102 : vector<2x128xf32>
    %105 = vector.extract_strided_slice %88 {offsets = [0, 256], sizes = [2, 128], strides = [1, 1]} : vector<2x512xf32> to vector<2x128xf32>
    %106 = math.tanh %105 : vector<2x128xf32>
    %107 = vector.extract_strided_slice %88 {offsets = [0, 384], sizes = [2, 128], strides = [1, 1]} : vector<2x512xf32> to vector<2x128xf32>
    %cst_52 = arith.constant 0.000000e+00 : f32
    %108 = vector.broadcast %cst_52 : f32 to vector<2x128xf32>
    %109 = arith.subf %108, %107 : vector<2x128xf32>
    %110 = math.exp %109 : vector<2x128xf32>
    %cst_53 = arith.constant 1.000000e+00 : f32
    %111 = vector.broadcast %cst_53 : f32 to vector<2x128xf32>
    %112 = arith.addf %111, %110 : vector<2x128xf32>
    %cst_54 = arith.constant 1.000000e+00 : f32
    %113 = vector.broadcast %cst_54 : f32 to vector<2x128xf32>
    %114 = arith.divf %113, %112 : vector<2x128xf32>
    %115 = arith.mulf %104, %81 : vector<2x128xf32>
    %116 = arith.mulf %96, %106 : vector<2x128xf32>
    %117 = arith.addf %115, %116 : vector<2x128xf32>
    %118 = math.tanh %117 : vector<2x128xf32>
    %119 = arith.mulf %114, %118 : vector<2x128xf32>
    %120 = arith.truncf %82 : vector<2x128xf32> to vector<2x128xbf16>
    %cst_55 = arith.constant dense<0.000000e+00> : vector<2x512xf32>
    %121 = tpu.matmul %120, %79, %cst_55 {dimension_numbers = #tpu.dot_dimension_numbers<[1], [0], [0], [1], [0, 0, 1, 1], [], []>} : vector<2x128xbf16>, vector<128x512xbf16>, vector<2x512xf32> -> vector<2x512xf32>
    %122 = arith.addf %85, %121 : vector<2x512xf32>
    %123 = vector.extract_strided_slice %122 {offsets = [0, 0], sizes = [2, 128], strides = [1, 1]} : vector<2x512xf32> to vector<2x128xf32>
    %cst_56 = arith.constant 0.000000e+00 : f32
    %124 = vector.broadcast %cst_56 : f32 to vector<2x128xf32>
    %125 = arith.subf %124, %123 : vector<2x128xf32>
    %126 = math.exp %125 : vector<2x128xf32>
    %cst_57 = arith.constant 1.000000e+00 : f32
    %127 = vector.broadcast %cst_57 : f32 to vector<2x128xf32>
    %128 = arith.addf %127, %126 : vector<2x128xf32>
    %cst_58 = arith.constant 1.000000e+00 : f32
    %129 = vector.broadcast %cst_58 : f32 to vector<2x128xf32>
    %130 = arith.divf %129, %128 : vector<2x128xf32>
    %131 = vector.extract_strided_slice %122 {offsets = [0, 128], sizes = [2, 128], strides = [1, 1]} : vector<2x512xf32> to vector<2x128xf32>
    %cst_59 = arith.constant 0.000000e+00 : f32
    %132 = vector.broadcast %cst_59 : f32 to vector<2x128xf32>
    %133 = arith.subf %132, %131 : vector<2x128xf32>
    %134 = math.exp %133 : vector<2x128xf32>
    %cst_60 = arith.constant 1.000000e+00 : f32
    %135 = vector.broadcast %cst_60 : f32 to vector<2x128xf32>
    %136 = arith.addf %135, %134 : vector<2x128xf32>
    %cst_61 = arith.constant 1.000000e+00 : f32
    %137 = vector.broadcast %cst_61 : f32 to vector<2x128xf32>
    %138 = arith.divf %137, %136 : vector<2x128xf32>
    %139 = vector.extract_strided_slice %122 {offsets = [0, 256], sizes = [2, 128], strides = [1, 1]} : vector<2x512xf32> to vector<2x128xf32>
    %140 = math.tanh %139 : vector<2x128xf32>
    %141 = vector.extract_strided_slice %122 {offsets = [0, 384], sizes = [2, 128], strides = [1, 1]} : vector<2x512xf32> to vector<2x128xf32>
    %cst_62 = arith.constant 0.000000e+00 : f32
    %142 = vector.broadcast %cst_62 : f32 to vector<2x128xf32>
    %143 = arith.subf %142, %141 : vector<2x128xf32>
    %144 = math.exp %143 : vector<2x128xf32>
    %cst_63 = arith.constant 1.000000e+00 : f32
    %145 = vector.broadcast %cst_63 : f32 to vector<2x128xf32>
    %146 = arith.addf %145, %144 : vector<2x128xf32>
    %cst_64 = arith.constant 1.000000e+00 : f32
    %147 = vector.broadcast %cst_64 : f32 to vector<2x128xf32>
    %148 = arith.divf %147, %146 : vector<2x128xf32>
    %149 = arith.mulf %138, %83 : vector<2x128xf32>
    %150 = arith.mulf %130, %140 : vector<2x128xf32>
    %151 = arith.addf %149, %150 : vector<2x128xf32>
    %152 = math.tanh %151 : vector<2x128xf32>
    %153 = arith.mulf %148, %152 : vector<2x128xf32>
    %154 = vector.extract_strided_slice %77 {offsets = [2, 0], sizes = [2, 512], strides = [1, 1]} : vector<16x1024xf32> to vector<2x512xf32>
    %155 = vector.extract_strided_slice %77 {offsets = [12, 512], sizes = [2, 512], strides = [1, 1]} : vector<16x1024xf32> to vector<2x512xf32>
    %156 = arith.truncf %119 : vector<2x128xf32> to vector<2x128xbf16>
    %cst_65 = arith.constant dense<0.000000e+00> : vector<2x512xf32>
    %157 = tpu.matmul %156, %78, %cst_65 {dimension_numbers = #tpu.dot_dimension_numbers<[1], [0], [0], [1], [0, 0, 1, 1], [], []>} : vector<2x128xbf16>, vector<128x512xbf16>, vector<2x512xf32> -> vector<2x512xf32>
    %158 = arith.addf %154, %157 : vector<2x512xf32>
    %159 = vector.extract_strided_slice %158 {offsets = [0, 0], sizes = [2, 128], strides = [1, 1]} : vector<2x512xf32> to vector<2x128xf32>
    %cst_66 = arith.constant 0.000000e+00 : f32
    %160 = vector.broadcast %cst_66 : f32 to vector<2x128xf32>
    %161 = arith.subf %160, %159 : vector<2x128xf32>
    %162 = math.exp %161 : vector<2x128xf32>
    %cst_67 = arith.constant 1.000000e+00 : f32
    %163 = vector.broadcast %cst_67 : f32 to vector<2x128xf32>
    %164 = arith.addf %163, %162 : vector<2x128xf32>
    %cst_68 = arith.constant 1.000000e+00 : f32
    %165 = vector.broadcast %cst_68 : f32 to vector<2x128xf32>
    %166 = arith.divf %165, %164 : vector<2x128xf32>
    %167 = vector.extract_strided_slice %158 {offsets = [0, 128], sizes = [2, 128], strides = [1, 1]} : vector<2x512xf32> to vector<2x128xf32>
    %cst_69 = arith.constant 0.000000e+00 : f32
    %168 = vector.broadcast %cst_69 : f32 to vector<2x128xf32>
    %169 = arith.subf %168, %167 : vector<2x128xf32>
    %170 = math.exp %169 : vector<2x128xf32>
    %cst_70 = arith.constant 1.000000e+00 : f32
    %171 = vector.broadcast %cst_70 : f32 to vector<2x128xf32>
    %172 = arith.addf %171, %170 : vector<2x128xf32>
    %cst_71 = arith.constant 1.000000e+00 : f32
    %173 = vector.broadcast %cst_71 : f32 to vector<2x128xf32>
    %174 = arith.divf %173, %172 : vector<2x128xf32>
    %175 = vector.extract_strided_slice %158 {offsets = [0, 256], sizes = [2, 128], strides = [1, 1]} : vector<2x512xf32> to vector<2x128xf32>
    %176 = math.tanh %175 : vector<2x128xf32>
    %177 = vector.extract_strided_slice %158 {offsets = [0, 384], sizes = [2, 128], strides = [1, 1]} : vector<2x512xf32> to vector<2x128xf32>
    %cst_72 = arith.constant 0.000000e+00 : f32
    %178 = vector.broadcast %cst_72 : f32 to vector<2x128xf32>
    %179 = arith.subf %178, %177 : vector<2x128xf32>
    %180 = math.exp %179 : vector<2x128xf32>
    %cst_73 = arith.constant 1.000000e+00 : f32
    %181 = vector.broadcast %cst_73 : f32 to vector<2x128xf32>
    %182 = arith.addf %181, %180 : vector<2x128xf32>
    %cst_74 = arith.constant 1.000000e+00 : f32
    %183 = vector.broadcast %cst_74 : f32 to vector<2x128xf32>
    %184 = arith.divf %183, %182 : vector<2x128xf32>
    %185 = arith.mulf %174, %117 : vector<2x128xf32>
    %186 = arith.mulf %166, %176 : vector<2x128xf32>
    %187 = arith.addf %185, %186 : vector<2x128xf32>
    %188 = math.tanh %187 : vector<2x128xf32>
    %189 = arith.mulf %184, %188 : vector<2x128xf32>
    %190 = arith.truncf %153 : vector<2x128xf32> to vector<2x128xbf16>
    %cst_75 = arith.constant dense<0.000000e+00> : vector<2x512xf32>
    %191 = tpu.matmul %190, %79, %cst_75 {dimension_numbers = #tpu.dot_dimension_numbers<[1], [0], [0], [1], [0, 0, 1, 1], [], []>} : vector<2x128xbf16>, vector<128x512xbf16>, vector<2x512xf32> -> vector<2x512xf32>
    %192 = arith.addf %155, %191 : vector<2x512xf32>
    %193 = vector.extract_strided_slice %192 {offsets = [0, 0], sizes = [2, 128], strides = [1, 1]} : vector<2x512xf32> to vector<2x128xf32>
    %cst_76 = arith.constant 0.000000e+00 : f32
    %194 = vector.broadcast %cst_76 : f32 to vector<2x128xf32>
    %195 = arith.subf %194, %193 : vector<2x128xf32>
    %196 = math.exp %195 : vector<2x128xf32>
    %cst_77 = arith.constant 1.000000e+00 : f32
    %197 = vector.broadcast %cst_77 : f32 to vector<2x128xf32>
    %198 = arith.addf %197, %196 : vector<2x128xf32>
    %cst_78 = arith.constant 1.000000e+00 : f32
    %199 = vector.broadcast %cst_78 : f32 to vector<2x128xf32>
    %200 = arith.divf %199, %198 : vector<2x128xf32>
    %201 = vector.extract_strided_slice %192 {offsets = [0, 128], sizes = [2, 128], strides = [1, 1]} : vector<2x512xf32> to vector<2x128xf32>
    %cst_79 = arith.constant 0.000000e+00 : f32
    %202 = vector.broadcast %cst_79 : f32 to vector<2x128xf32>
    %203 = arith.subf %202, %201 : vector<2x128xf32>
    %204 = math.exp %203 : vector<2x128xf32>
    %cst_80 = arith.constant 1.000000e+00 : f32
    %205 = vector.broadcast %cst_80 : f32 to vector<2x128xf32>
    %206 = arith.addf %205, %204 : vector<2x128xf32>
    %cst_81 = arith.constant 1.000000e+00 : f32
    %207 = vector.broadcast %cst_81 : f32 to vector<2x128xf32>
    %208 = arith.divf %207, %206 : vector<2x128xf32>
    %209 = vector.extract_strided_slice %192 {offsets = [0, 256], sizes = [2, 128], strides = [1, 1]} : vector<2x512xf32> to vector<2x128xf32>
    %210 = math.tanh %209 : vector<2x128xf32>
    %211 = vector.extract_strided_slice %192 {offsets = [0, 384], sizes = [2, 128], strides = [1, 1]} : vector<2x512xf32> to vector<2x128xf32>
    %cst_82 = arith.constant 0.000000e+00 : f32
    %212 = vector.broadcast %cst_82 : f32 to vector<2x128xf32>
    %213 = arith.subf %212, %211 : vector<2x128xf32>
    %214 = math.exp %213 : vector<2x128xf32>
    %cst_83 = arith.constant 1.000000e+00 : f32
    %215 = vector.broadcast %cst_83 : f32 to vector<2x128xf32>
    %216 = arith.addf %215, %214 : vector<2x128xf32>
    %cst_84 = arith.constant 1.000000e+00 : f32
    %217 = vector.broadcast %cst_84 : f32 to vector<2x128xf32>
    %218 = arith.divf %217, %216 : vector<2x128xf32>
    %219 = arith.mulf %208, %151 : vector<2x128xf32>
    %220 = arith.mulf %200, %210 : vector<2x128xf32>
    %221 = arith.addf %219, %220 : vector<2x128xf32>
    %222 = math.tanh %221 : vector<2x128xf32>
    %223 = arith.mulf %218, %222 : vector<2x128xf32>
    %224 = vector.extract_strided_slice %77 {offsets = [4, 0], sizes = [2, 512], strides = [1, 1]} : vector<16x1024xf32> to vector<2x512xf32>
    %225 = vector.extract_strided_slice %77 {offsets = [10, 512], sizes = [2, 512], strides = [1, 1]} : vector<16x1024xf32> to vector<2x512xf32>
    %226 = arith.truncf %189 : vector<2x128xf32> to vector<2x128xbf16>
    %cst_85 = arith.constant dense<0.000000e+00> : vector<2x512xf32>
    %227 = tpu.matmul %226, %78, %cst_85 {dimension_numbers = #tpu.dot_dimension_numbers<[1], [0], [0], [1], [0, 0, 1, 1], [], []>} : vector<2x128xbf16>, vector<128x512xbf16>, vector<2x512xf32> -> vector<2x512xf32>
    %228 = arith.addf %224, %227 : vector<2x512xf32>
    %229 = vector.extract_strided_slice %228 {offsets = [0, 0], sizes = [2, 128], strides = [1, 1]} : vector<2x512xf32> to vector<2x128xf32>
    %cst_86 = arith.constant 0.000000e+00 : f32
    %230 = vector.broadcast %cst_86 : f32 to vector<2x128xf32>
    %231 = arith.subf %230, %229 : vector<2x128xf32>
    %232 = math.exp %231 : vector<2x128xf32>
    %cst_87 = arith.constant 1.000000e+00 : f32
    %233 = vector.broadcast %cst_87 : f32 to vector<2x128xf32>
    %234 = arith.addf %233, %232 : vector<2x128xf32>
    %cst_88 = arith.constant 1.000000e+00 : f32
    %235 = vector.broadcast %cst_88 : f32 to vector<2x128xf32>
    %236 = arith.divf %235, %234 : vector<2x128xf32>
    %237 = vector.extract_strided_slice %228 {offsets = [0, 128], sizes = [2, 128], strides = [1, 1]} : vector<2x512xf32> to vector<2x128xf32>
    %cst_89 = arith.constant 0.000000e+00 : f32
    %238 = vector.broadcast %cst_89 : f32 to vector<2x128xf32>
    %239 = arith.subf %238, %237 : vector<2x128xf32>
    %240 = math.exp %239 : vector<2x128xf32>
    %cst_90 = arith.constant 1.000000e+00 : f32
    %241 = vector.broadcast %cst_90 : f32 to vector<2x128xf32>
    %242 = arith.addf %241, %240 : vector<2x128xf32>
    %cst_91 = arith.constant 1.000000e+00 : f32
    %243 = vector.broadcast %cst_91 : f32 to vector<2x128xf32>
    %244 = arith.divf %243, %242 : vector<2x128xf32>
    %245 = vector.extract_strided_slice %228 {offsets = [0, 256], sizes = [2, 128], strides = [1, 1]} : vector<2x512xf32> to vector<2x128xf32>
    %246 = math.tanh %245 : vector<2x128xf32>
    %247 = vector.extract_strided_slice %228 {offsets = [0, 384], sizes = [2, 128], strides = [1, 1]} : vector<2x512xf32> to vector<2x128xf32>
    %cst_92 = arith.constant 0.000000e+00 : f32
    %248 = vector.broadcast %cst_92 : f32 to vector<2x128xf32>
    %249 = arith.subf %248, %247 : vector<2x128xf32>
    %250 = math.exp %249 : vector<2x128xf32>
    %cst_93 = arith.constant 1.000000e+00 : f32
    %251 = vector.broadcast %cst_93 : f32 to vector<2x128xf32>
    %252 = arith.addf %251, %250 : vector<2x128xf32>
    %cst_94 = arith.constant 1.000000e+00 : f32
    %253 = vector.broadcast %cst_94 : f32 to vector<2x128xf32>
    %254 = arith.divf %253, %252 : vector<2x128xf32>
    %255 = arith.mulf %244, %187 : vector<2x128xf32>
    %256 = arith.mulf %236, %246 : vector<2x128xf32>
    %257 = arith.addf %255, %256 : vector<2x128xf32>
    %258 = math.tanh %257 : vector<2x128xf32>
    %259 = arith.mulf %254, %258 : vector<2x128xf32>
    %260 = arith.truncf %223 : vector<2x128xf32> to vector<2x128xbf16>
    %cst_95 = arith.constant dense<0.000000e+00> : vector<2x512xf32>
    %261 = tpu.matmul %260, %79, %cst_95 {dimension_numbers = #tpu.dot_dimension_numbers<[1], [0], [0], [1], [0, 0, 1, 1], [], []>} : vector<2x128xbf16>, vector<128x512xbf16>, vector<2x512xf32> -> vector<2x512xf32>
    %262 = arith.addf %225, %261 : vector<2x512xf32>
    %263 = vector.extract_strided_slice %262 {offsets = [0, 0], sizes = [2, 128], strides = [1, 1]} : vector<2x512xf32> to vector<2x128xf32>
    %cst_96 = arith.constant 0.000000e+00 : f32
    %264 = vector.broadcast %cst_96 : f32 to vector<2x128xf32>
    %265 = arith.subf %264, %263 : vector<2x128xf32>
    %266 = math.exp %265 : vector<2x128xf32>
    %cst_97 = arith.constant 1.000000e+00 : f32
    %267 = vector.broadcast %cst_97 : f32 to vector<2x128xf32>
    %268 = arith.addf %267, %266 : vector<2x128xf32>
    %cst_98 = arith.constant 1.000000e+00 : f32
    %269 = vector.broadcast %cst_98 : f32 to vector<2x128xf32>
    %270 = arith.divf %269, %268 : vector<2x128xf32>
    %271 = vector.extract_strided_slice %262 {offsets = [0, 128], sizes = [2, 128], strides = [1, 1]} : vector<2x512xf32> to vector<2x128xf32>
    %cst_99 = arith.constant 0.000000e+00 : f32
    %272 = vector.broadcast %cst_99 : f32 to vector<2x128xf32>
    %273 = arith.subf %272, %271 : vector<2x128xf32>
    %274 = math.exp %273 : vector<2x128xf32>
    %cst_100 = arith.constant 1.000000e+00 : f32
    %275 = vector.broadcast %cst_100 : f32 to vector<2x128xf32>
    %276 = arith.addf %275, %274 : vector<2x128xf32>
    %cst_101 = arith.constant 1.000000e+00 : f32
    %277 = vector.broadcast %cst_101 : f32 to vector<2x128xf32>
    %278 = arith.divf %277, %276 : vector<2x128xf32>
    %279 = vector.extract_strided_slice %262 {offsets = [0, 256], sizes = [2, 128], strides = [1, 1]} : vector<2x512xf32> to vector<2x128xf32>
    %280 = math.tanh %279 : vector<2x128xf32>
    %281 = vector.extract_strided_slice %262 {offsets = [0, 384], sizes = [2, 128], strides = [1, 1]} : vector<2x512xf32> to vector<2x128xf32>
    %cst_102 = arith.constant 0.000000e+00 : f32
    %282 = vector.broadcast %cst_102 : f32 to vector<2x128xf32>
    %283 = arith.subf %282, %281 : vector<2x128xf32>
    %284 = math.exp %283 : vector<2x128xf32>
    %cst_103 = arith.constant 1.000000e+00 : f32
    %285 = vector.broadcast %cst_103 : f32 to vector<2x128xf32>
    %286 = arith.addf %285, %284 : vector<2x128xf32>
    %cst_104 = arith.constant 1.000000e+00 : f32
    %287 = vector.broadcast %cst_104 : f32 to vector<2x128xf32>
    %288 = arith.divf %287, %286 : vector<2x128xf32>
    %289 = arith.mulf %278, %221 : vector<2x128xf32>
    %290 = arith.mulf %270, %280 : vector<2x128xf32>
    %291 = arith.addf %289, %290 : vector<2x128xf32>
    %292 = math.tanh %291 : vector<2x128xf32>
    %293 = arith.mulf %288, %292 : vector<2x128xf32>
    %294 = vector.extract_strided_slice %77 {offsets = [6, 0], sizes = [2, 512], strides = [1, 1]} : vector<16x1024xf32> to vector<2x512xf32>
    %295 = vector.extract_strided_slice %77 {offsets = [8, 512], sizes = [2, 512], strides = [1, 1]} : vector<16x1024xf32> to vector<2x512xf32>
    %296 = arith.truncf %259 : vector<2x128xf32> to vector<2x128xbf16>
    %cst_105 = arith.constant dense<0.000000e+00> : vector<2x512xf32>
    %297 = tpu.matmul %296, %78, %cst_105 {dimension_numbers = #tpu.dot_dimension_numbers<[1], [0], [0], [1], [0, 0, 1, 1], [], []>} : vector<2x128xbf16>, vector<128x512xbf16>, vector<2x512xf32> -> vector<2x512xf32>
    %298 = arith.addf %294, %297 : vector<2x512xf32>
    %299 = vector.extract_strided_slice %298 {offsets = [0, 0], sizes = [2, 128], strides = [1, 1]} : vector<2x512xf32> to vector<2x128xf32>
    %cst_106 = arith.constant 0.000000e+00 : f32
    %300 = vector.broadcast %cst_106 : f32 to vector<2x128xf32>
    %301 = arith.subf %300, %299 : vector<2x128xf32>
    %302 = math.exp %301 : vector<2x128xf32>
    %cst_107 = arith.constant 1.000000e+00 : f32
    %303 = vector.broadcast %cst_107 : f32 to vector<2x128xf32>
    %304 = arith.addf %303, %302 : vector<2x128xf32>
    %cst_108 = arith.constant 1.000000e+00 : f32
    %305 = vector.broadcast %cst_108 : f32 to vector<2x128xf32>
    %306 = arith.divf %305, %304 : vector<2x128xf32>
    %307 = vector.extract_strided_slice %298 {offsets = [0, 128], sizes = [2, 128], strides = [1, 1]} : vector<2x512xf32> to vector<2x128xf32>
    %cst_109 = arith.constant 0.000000e+00 : f32
    %308 = vector.broadcast %cst_109 : f32 to vector<2x128xf32>
    %309 = arith.subf %308, %307 : vector<2x128xf32>
    %310 = math.exp %309 : vector<2x128xf32>
    %cst_110 = arith.constant 1.000000e+00 : f32
    %311 = vector.broadcast %cst_110 : f32 to vector<2x128xf32>
    %312 = arith.addf %311, %310 : vector<2x128xf32>
    %cst_111 = arith.constant 1.000000e+00 : f32
    %313 = vector.broadcast %cst_111 : f32 to vector<2x128xf32>
    %314 = arith.divf %313, %312 : vector<2x128xf32>
    %315 = vector.extract_strided_slice %298 {offsets = [0, 256], sizes = [2, 128], strides = [1, 1]} : vector<2x512xf32> to vector<2x128xf32>
    %316 = math.tanh %315 : vector<2x128xf32>
    %317 = vector.extract_strided_slice %298 {offsets = [0, 384], sizes = [2, 128], strides = [1, 1]} : vector<2x512xf32> to vector<2x128xf32>
    %cst_112 = arith.constant 0.000000e+00 : f32
    %318 = vector.broadcast %cst_112 : f32 to vector<2x128xf32>
    %319 = arith.subf %318, %317 : vector<2x128xf32>
    %320 = math.exp %319 : vector<2x128xf32>
    %cst_113 = arith.constant 1.000000e+00 : f32
    %321 = vector.broadcast %cst_113 : f32 to vector<2x128xf32>
    %322 = arith.addf %321, %320 : vector<2x128xf32>
    %cst_114 = arith.constant 1.000000e+00 : f32
    %323 = vector.broadcast %cst_114 : f32 to vector<2x128xf32>
    %324 = arith.divf %323, %322 : vector<2x128xf32>
    %325 = arith.mulf %314, %257 : vector<2x128xf32>
    %326 = arith.mulf %306, %316 : vector<2x128xf32>
    %327 = arith.addf %325, %326 : vector<2x128xf32>
    %328 = math.tanh %327 : vector<2x128xf32>
    %329 = arith.mulf %324, %328 : vector<2x128xf32>
    %330 = arith.truncf %293 : vector<2x128xf32> to vector<2x128xbf16>
    %cst_115 = arith.constant dense<0.000000e+00> : vector<2x512xf32>
    %331 = tpu.matmul %330, %79, %cst_115 {dimension_numbers = #tpu.dot_dimension_numbers<[1], [0], [0], [1], [0, 0, 1, 1], [], []>} : vector<2x128xbf16>, vector<128x512xbf16>, vector<2x512xf32> -> vector<2x512xf32>
    %332 = arith.addf %295, %331 : vector<2x512xf32>
    %333 = vector.extract_strided_slice %332 {offsets = [0, 0], sizes = [2, 128], strides = [1, 1]} : vector<2x512xf32> to vector<2x128xf32>
    %cst_116 = arith.constant 0.000000e+00 : f32
    %334 = vector.broadcast %cst_116 : f32 to vector<2x128xf32>
    %335 = arith.subf %334, %333 : vector<2x128xf32>
    %336 = math.exp %335 : vector<2x128xf32>
    %cst_117 = arith.constant 1.000000e+00 : f32
    %337 = vector.broadcast %cst_117 : f32 to vector<2x128xf32>
    %338 = arith.addf %337, %336 : vector<2x128xf32>
    %cst_118 = arith.constant 1.000000e+00 : f32
    %339 = vector.broadcast %cst_118 : f32 to vector<2x128xf32>
    %340 = arith.divf %339, %338 : vector<2x128xf32>
    %341 = vector.extract_strided_slice %332 {offsets = [0, 128], sizes = [2, 128], strides = [1, 1]} : vector<2x512xf32> to vector<2x128xf32>
    %cst_119 = arith.constant 0.000000e+00 : f32
    %342 = vector.broadcast %cst_119 : f32 to vector<2x128xf32>
    %343 = arith.subf %342, %341 : vector<2x128xf32>
    %344 = math.exp %343 : vector<2x128xf32>
    %cst_120 = arith.constant 1.000000e+00 : f32
    %345 = vector.broadcast %cst_120 : f32 to vector<2x128xf32>
    %346 = arith.addf %345, %344 : vector<2x128xf32>
    %cst_121 = arith.constant 1.000000e+00 : f32
    %347 = vector.broadcast %cst_121 : f32 to vector<2x128xf32>
    %348 = arith.divf %347, %346 : vector<2x128xf32>
    %349 = vector.extract_strided_slice %332 {offsets = [0, 256], sizes = [2, 128], strides = [1, 1]} : vector<2x512xf32> to vector<2x128xf32>
    %350 = math.tanh %349 : vector<2x128xf32>
    %351 = vector.extract_strided_slice %332 {offsets = [0, 384], sizes = [2, 128], strides = [1, 1]} : vector<2x512xf32> to vector<2x128xf32>
    %cst_122 = arith.constant 0.000000e+00 : f32
    %352 = vector.broadcast %cst_122 : f32 to vector<2x128xf32>
    %353 = arith.subf %352, %351 : vector<2x128xf32>
    %354 = math.exp %353 : vector<2x128xf32>
    %cst_123 = arith.constant 1.000000e+00 : f32
    %355 = vector.broadcast %cst_123 : f32 to vector<2x128xf32>
    %356 = arith.addf %355, %354 : vector<2x128xf32>
    %cst_124 = arith.constant 1.000000e+00 : f32
    %357 = vector.broadcast %cst_124 : f32 to vector<2x128xf32>
    %358 = arith.divf %357, %356 : vector<2x128xf32>
    %359 = arith.mulf %348, %291 : vector<2x128xf32>
    %360 = arith.mulf %340, %350 : vector<2x128xf32>
    %361 = arith.addf %359, %360 : vector<2x128xf32>
    %362 = math.tanh %361 : vector<2x128xf32>
    %363 = arith.mulf %358, %362 : vector<2x128xf32>
    %364 = vector.extract_strided_slice %77 {offsets = [8, 0], sizes = [2, 512], strides = [1, 1]} : vector<16x1024xf32> to vector<2x512xf32>
    %365 = vector.extract_strided_slice %77 {offsets = [6, 512], sizes = [2, 512], strides = [1, 1]} : vector<16x1024xf32> to vector<2x512xf32>
    %366 = arith.truncf %329 : vector<2x128xf32> to vector<2x128xbf16>
    %cst_125 = arith.constant dense<0.000000e+00> : vector<2x512xf32>
    %367 = tpu.matmul %366, %78, %cst_125 {dimension_numbers = #tpu.dot_dimension_numbers<[1], [0], [0], [1], [0, 0, 1, 1], [], []>} : vector<2x128xbf16>, vector<128x512xbf16>, vector<2x512xf32> -> vector<2x512xf32>
    %368 = arith.addf %364, %367 : vector<2x512xf32>
    %369 = vector.extract_strided_slice %368 {offsets = [0, 0], sizes = [2, 128], strides = [1, 1]} : vector<2x512xf32> to vector<2x128xf32>
    %cst_126 = arith.constant 0.000000e+00 : f32
    %370 = vector.broadcast %cst_126 : f32 to vector<2x128xf32>
    %371 = arith.subf %370, %369 : vector<2x128xf32>
    %372 = math.exp %371 : vector<2x128xf32>
    %cst_127 = arith.constant 1.000000e+00 : f32
    %373 = vector.broadcast %cst_127 : f32 to vector<2x128xf32>
    %374 = arith.addf %373, %372 : vector<2x128xf32>
    %cst_128 = arith.constant 1.000000e+00 : f32
    %375 = vector.broadcast %cst_128 : f32 to vector<2x128xf32>
    %376 = arith.divf %375, %374 : vector<2x128xf32>
    %377 = vector.extract_strided_slice %368 {offsets = [0, 128], sizes = [2, 128], strides = [1, 1]} : vector<2x512xf32> to vector<2x128xf32>
    %cst_129 = arith.constant 0.000000e+00 : f32
    %378 = vector.broadcast %cst_129 : f32 to vector<2x128xf32>
    %379 = arith.subf %378, %377 : vector<2x128xf32>
    %380 = math.exp %379 : vector<2x128xf32>
    %cst_130 = arith.constant 1.000000e+00 : f32
    %381 = vector.broadcast %cst_130 : f32 to vector<2x128xf32>
    %382 = arith.addf %381, %380 : vector<2x128xf32>
    %cst_131 = arith.constant 1.000000e+00 : f32
    %383 = vector.broadcast %cst_131 : f32 to vector<2x128xf32>
    %384 = arith.divf %383, %382 : vector<2x128xf32>
    %385 = vector.extract_strided_slice %368 {offsets = [0, 256], sizes = [2, 128], strides = [1, 1]} : vector<2x512xf32> to vector<2x128xf32>
    %386 = math.tanh %385 : vector<2x128xf32>
    %387 = vector.extract_strided_slice %368 {offsets = [0, 384], sizes = [2, 128], strides = [1, 1]} : vector<2x512xf32> to vector<2x128xf32>
    %cst_132 = arith.constant 0.000000e+00 : f32
    %388 = vector.broadcast %cst_132 : f32 to vector<2x128xf32>
    %389 = arith.subf %388, %387 : vector<2x128xf32>
    %390 = math.exp %389 : vector<2x128xf32>
    %cst_133 = arith.constant 1.000000e+00 : f32
    %391 = vector.broadcast %cst_133 : f32 to vector<2x128xf32>
    %392 = arith.addf %391, %390 : vector<2x128xf32>
    %cst_134 = arith.constant 1.000000e+00 : f32
    %393 = vector.broadcast %cst_134 : f32 to vector<2x128xf32>
    %394 = arith.divf %393, %392 : vector<2x128xf32>
    %395 = arith.mulf %384, %327 : vector<2x128xf32>
    %396 = arith.mulf %376, %386 : vector<2x128xf32>
    %397 = arith.addf %395, %396 : vector<2x128xf32>
    %398 = math.tanh %397 : vector<2x128xf32>
    %399 = arith.mulf %394, %398 : vector<2x128xf32>
    %400 = arith.truncf %363 : vector<2x128xf32> to vector<2x128xbf16>
    %cst_135 = arith.constant dense<0.000000e+00> : vector<2x512xf32>
    %401 = tpu.matmul %400, %79, %cst_135 {dimension_numbers = #tpu.dot_dimension_numbers<[1], [0], [0], [1], [0, 0, 1, 1], [], []>} : vector<2x128xbf16>, vector<128x512xbf16>, vector<2x512xf32> -> vector<2x512xf32>
    %402 = arith.addf %365, %401 : vector<2x512xf32>
    %403 = vector.extract_strided_slice %402 {offsets = [0, 0], sizes = [2, 128], strides = [1, 1]} : vector<2x512xf32> to vector<2x128xf32>
    %cst_136 = arith.constant 0.000000e+00 : f32
    %404 = vector.broadcast %cst_136 : f32 to vector<2x128xf32>
    %405 = arith.subf %404, %403 : vector<2x128xf32>
    %406 = math.exp %405 : vector<2x128xf32>
    %cst_137 = arith.constant 1.000000e+00 : f32
    %407 = vector.broadcast %cst_137 : f32 to vector<2x128xf32>
    %408 = arith.addf %407, %406 : vector<2x128xf32>
    %cst_138 = arith.constant 1.000000e+00 : f32
    %409 = vector.broadcast %cst_138 : f32 to vector<2x128xf32>
    %410 = arith.divf %409, %408 : vector<2x128xf32>
    %411 = vector.extract_strided_slice %402 {offsets = [0, 128], sizes = [2, 128], strides = [1, 1]} : vector<2x512xf32> to vector<2x128xf32>
    %cst_139 = arith.constant 0.000000e+00 : f32
    %412 = vector.broadcast %cst_139 : f32 to vector<2x128xf32>
    %413 = arith.subf %412, %411 : vector<2x128xf32>
    %414 = math.exp %413 : vector<2x128xf32>
    %cst_140 = arith.constant 1.000000e+00 : f32
    %415 = vector.broadcast %cst_140 : f32 to vector<2x128xf32>
    %416 = arith.addf %415, %414 : vector<2x128xf32>
    %cst_141 = arith.constant 1.000000e+00 : f32
    %417 = vector.broadcast %cst_141 : f32 to vector<2x128xf32>
    %418 = arith.divf %417, %416 : vector<2x128xf32>
    %419 = vector.extract_strided_slice %402 {offsets = [0, 256], sizes = [2, 128], strides = [1, 1]} : vector<2x512xf32> to vector<2x128xf32>
    %420 = math.tanh %419 : vector<2x128xf32>
    %421 = vector.extract_strided_slice %402 {offsets = [0, 384], sizes = [2, 128], strides = [1, 1]} : vector<2x512xf32> to vector<2x128xf32>
    %cst_142 = arith.constant 0.000000e+00 : f32
    %422 = vector.broadcast %cst_142 : f32 to vector<2x128xf32>
    %423 = arith.subf %422, %421 : vector<2x128xf32>
    %424 = math.exp %423 : vector<2x128xf32>
    %cst_143 = arith.constant 1.000000e+00 : f32
    %425 = vector.broadcast %cst_143 : f32 to vector<2x128xf32>
    %426 = arith.addf %425, %424 : vector<2x128xf32>
    %cst_144 = arith.constant 1.000000e+00 : f32
    %427 = vector.broadcast %cst_144 : f32 to vector<2x128xf32>
    %428 = arith.divf %427, %426 : vector<2x128xf32>
    %429 = arith.mulf %418, %361 : vector<2x128xf32>
    %430 = arith.mulf %410, %420 : vector<2x128xf32>
    %431 = arith.addf %429, %430 : vector<2x128xf32>
    %432 = math.tanh %431 : vector<2x128xf32>
    %433 = arith.mulf %428, %432 : vector<2x128xf32>
    %434 = vector.extract_strided_slice %77 {offsets = [10, 0], sizes = [2, 512], strides = [1, 1]} : vector<16x1024xf32> to vector<2x512xf32>
    %435 = vector.extract_strided_slice %77 {offsets = [4, 512], sizes = [2, 512], strides = [1, 1]} : vector<16x1024xf32> to vector<2x512xf32>
    %436 = arith.truncf %399 : vector<2x128xf32> to vector<2x128xbf16>
    %cst_145 = arith.constant dense<0.000000e+00> : vector<2x512xf32>
    %437 = tpu.matmul %436, %78, %cst_145 {dimension_numbers = #tpu.dot_dimension_numbers<[1], [0], [0], [1], [0, 0, 1, 1], [], []>} : vector<2x128xbf16>, vector<128x512xbf16>, vector<2x512xf32> -> vector<2x512xf32>
    %438 = arith.addf %434, %437 : vector<2x512xf32>
    %439 = vector.extract_strided_slice %438 {offsets = [0, 0], sizes = [2, 128], strides = [1, 1]} : vector<2x512xf32> to vector<2x128xf32>
    %cst_146 = arith.constant 0.000000e+00 : f32
    %440 = vector.broadcast %cst_146 : f32 to vector<2x128xf32>
    %441 = arith.subf %440, %439 : vector<2x128xf32>
    %442 = math.exp %441 : vector<2x128xf32>
    %cst_147 = arith.constant 1.000000e+00 : f32
    %443 = vector.broadcast %cst_147 : f32 to vector<2x128xf32>
    %444 = arith.addf %443, %442 : vector<2x128xf32>
    %cst_148 = arith.constant 1.000000e+00 : f32
    %445 = vector.broadcast %cst_148 : f32 to vector<2x128xf32>
    %446 = arith.divf %445, %444 : vector<2x128xf32>
    %447 = vector.extract_strided_slice %438 {offsets = [0, 128], sizes = [2, 128], strides = [1, 1]} : vector<2x512xf32> to vector<2x128xf32>
    %cst_149 = arith.constant 0.000000e+00 : f32
    %448 = vector.broadcast %cst_149 : f32 to vector<2x128xf32>
    %449 = arith.subf %448, %447 : vector<2x128xf32>
    %450 = math.exp %449 : vector<2x128xf32>
    %cst_150 = arith.constant 1.000000e+00 : f32
    %451 = vector.broadcast %cst_150 : f32 to vector<2x128xf32>
    %452 = arith.addf %451, %450 : vector<2x128xf32>
    %cst_151 = arith.constant 1.000000e+00 : f32
    %453 = vector.broadcast %cst_151 : f32 to vector<2x128xf32>
    %454 = arith.divf %453, %452 : vector<2x128xf32>
    %455 = vector.extract_strided_slice %438 {offsets = [0, 256], sizes = [2, 128], strides = [1, 1]} : vector<2x512xf32> to vector<2x128xf32>
    %456 = math.tanh %455 : vector<2x128xf32>
    %457 = vector.extract_strided_slice %438 {offsets = [0, 384], sizes = [2, 128], strides = [1, 1]} : vector<2x512xf32> to vector<2x128xf32>
    %cst_152 = arith.constant 0.000000e+00 : f32
    %458 = vector.broadcast %cst_152 : f32 to vector<2x128xf32>
    %459 = arith.subf %458, %457 : vector<2x128xf32>
    %460 = math.exp %459 : vector<2x128xf32>
    %cst_153 = arith.constant 1.000000e+00 : f32
    %461 = vector.broadcast %cst_153 : f32 to vector<2x128xf32>
    %462 = arith.addf %461, %460 : vector<2x128xf32>
    %cst_154 = arith.constant 1.000000e+00 : f32
    %463 = vector.broadcast %cst_154 : f32 to vector<2x128xf32>
    %464 = arith.divf %463, %462 : vector<2x128xf32>
    %465 = arith.mulf %454, %397 : vector<2x128xf32>
    %466 = arith.mulf %446, %456 : vector<2x128xf32>
    %467 = arith.addf %465, %466 : vector<2x128xf32>
    %468 = math.tanh %467 : vector<2x128xf32>
    %469 = arith.mulf %464, %468 : vector<2x128xf32>
    %470 = arith.truncf %433 : vector<2x128xf32> to vector<2x128xbf16>
    %cst_155 = arith.constant dense<0.000000e+00> : vector<2x512xf32>
    %471 = tpu.matmul %470, %79, %cst_155 {dimension_numbers = #tpu.dot_dimension_numbers<[1], [0], [0], [1], [0, 0, 1, 1], [], []>} : vector<2x128xbf16>, vector<128x512xbf16>, vector<2x512xf32> -> vector<2x512xf32>
    %472 = arith.addf %435, %471 : vector<2x512xf32>
    %473 = vector.extract_strided_slice %472 {offsets = [0, 0], sizes = [2, 128], strides = [1, 1]} : vector<2x512xf32> to vector<2x128xf32>
    %cst_156 = arith.constant 0.000000e+00 : f32
    %474 = vector.broadcast %cst_156 : f32 to vector<2x128xf32>
    %475 = arith.subf %474, %473 : vector<2x128xf32>
    %476 = math.exp %475 : vector<2x128xf32>
    %cst_157 = arith.constant 1.000000e+00 : f32
    %477 = vector.broadcast %cst_157 : f32 to vector<2x128xf32>
    %478 = arith.addf %477, %476 : vector<2x128xf32>
    %cst_158 = arith.constant 1.000000e+00 : f32
    %479 = vector.broadcast %cst_158 : f32 to vector<2x128xf32>
    %480 = arith.divf %479, %478 : vector<2x128xf32>
    %481 = vector.extract_strided_slice %472 {offsets = [0, 128], sizes = [2, 128], strides = [1, 1]} : vector<2x512xf32> to vector<2x128xf32>
    %cst_159 = arith.constant 0.000000e+00 : f32
    %482 = vector.broadcast %cst_159 : f32 to vector<2x128xf32>
    %483 = arith.subf %482, %481 : vector<2x128xf32>
    %484 = math.exp %483 : vector<2x128xf32>
    %cst_160 = arith.constant 1.000000e+00 : f32
    %485 = vector.broadcast %cst_160 : f32 to vector<2x128xf32>
    %486 = arith.addf %485, %484 : vector<2x128xf32>
    %cst_161 = arith.constant 1.000000e+00 : f32
    %487 = vector.broadcast %cst_161 : f32 to vector<2x128xf32>
    %488 = arith.divf %487, %486 : vector<2x128xf32>
    %489 = vector.extract_strided_slice %472 {offsets = [0, 256], sizes = [2, 128], strides = [1, 1]} : vector<2x512xf32> to vector<2x128xf32>
    %490 = math.tanh %489 : vector<2x128xf32>
    %491 = vector.extract_strided_slice %472 {offsets = [0, 384], sizes = [2, 128], strides = [1, 1]} : vector<2x512xf32> to vector<2x128xf32>
    %cst_162 = arith.constant 0.000000e+00 : f32
    %492 = vector.broadcast %cst_162 : f32 to vector<2x128xf32>
    %493 = arith.subf %492, %491 : vector<2x128xf32>
    %494 = math.exp %493 : vector<2x128xf32>
    %cst_163 = arith.constant 1.000000e+00 : f32
    %495 = vector.broadcast %cst_163 : f32 to vector<2x128xf32>
    %496 = arith.addf %495, %494 : vector<2x128xf32>
    %cst_164 = arith.constant 1.000000e+00 : f32
    %497 = vector.broadcast %cst_164 : f32 to vector<2x128xf32>
    %498 = arith.divf %497, %496 : vector<2x128xf32>
    %499 = arith.mulf %488, %431 : vector<2x128xf32>
    %500 = arith.mulf %480, %490 : vector<2x128xf32>
    %501 = arith.addf %499, %500 : vector<2x128xf32>
    %502 = math.tanh %501 : vector<2x128xf32>
    %503 = arith.mulf %498, %502 : vector<2x128xf32>
    %504 = vector.extract_strided_slice %77 {offsets = [12, 0], sizes = [2, 512], strides = [1, 1]} : vector<16x1024xf32> to vector<2x512xf32>
    %505 = vector.extract_strided_slice %77 {offsets = [2, 512], sizes = [2, 512], strides = [1, 1]} : vector<16x1024xf32> to vector<2x512xf32>
    %506 = arith.truncf %469 : vector<2x128xf32> to vector<2x128xbf16>
    %cst_165 = arith.constant dense<0.000000e+00> : vector<2x512xf32>
    %507 = tpu.matmul %506, %78, %cst_165 {dimension_numbers = #tpu.dot_dimension_numbers<[1], [0], [0], [1], [0, 0, 1, 1], [], []>} : vector<2x128xbf16>, vector<128x512xbf16>, vector<2x512xf32> -> vector<2x512xf32>
    %508 = arith.addf %504, %507 : vector<2x512xf32>
    %509 = vector.extract_strided_slice %508 {offsets = [0, 0], sizes = [2, 128], strides = [1, 1]} : vector<2x512xf32> to vector<2x128xf32>
    %cst_166 = arith.constant 0.000000e+00 : f32
    %510 = vector.broadcast %cst_166 : f32 to vector<2x128xf32>
    %511 = arith.subf %510, %509 : vector<2x128xf32>
    %512 = math.exp %511 : vector<2x128xf32>
    %cst_167 = arith.constant 1.000000e+00 : f32
    %513 = vector.broadcast %cst_167 : f32 to vector<2x128xf32>
    %514 = arith.addf %513, %512 : vector<2x128xf32>
    %cst_168 = arith.constant 1.000000e+00 : f32
    %515 = vector.broadcast %cst_168 : f32 to vector<2x128xf32>
    %516 = arith.divf %515, %514 : vector<2x128xf32>
    %517 = vector.extract_strided_slice %508 {offsets = [0, 128], sizes = [2, 128], strides = [1, 1]} : vector<2x512xf32> to vector<2x128xf32>
    %cst_169 = arith.constant 0.000000e+00 : f32
    %518 = vector.broadcast %cst_169 : f32 to vector<2x128xf32>
    %519 = arith.subf %518, %517 : vector<2x128xf32>
    %520 = math.exp %519 : vector<2x128xf32>
    %cst_170 = arith.constant 1.000000e+00 : f32
    %521 = vector.broadcast %cst_170 : f32 to vector<2x128xf32>
    %522 = arith.addf %521, %520 : vector<2x128xf32>
    %cst_171 = arith.constant 1.000000e+00 : f32
    %523 = vector.broadcast %cst_171 : f32 to vector<2x128xf32>
    %524 = arith.divf %523, %522 : vector<2x128xf32>
    %525 = vector.extract_strided_slice %508 {offsets = [0, 256], sizes = [2, 128], strides = [1, 1]} : vector<2x512xf32> to vector<2x128xf32>
    %526 = math.tanh %525 : vector<2x128xf32>
    %527 = vector.extract_strided_slice %508 {offsets = [0, 384], sizes = [2, 128], strides = [1, 1]} : vector<2x512xf32> to vector<2x128xf32>
    %cst_172 = arith.constant 0.000000e+00 : f32
    %528 = vector.broadcast %cst_172 : f32 to vector<2x128xf32>
    %529 = arith.subf %528, %527 : vector<2x128xf32>
    %530 = math.exp %529 : vector<2x128xf32>
    %cst_173 = arith.constant 1.000000e+00 : f32
    %531 = vector.broadcast %cst_173 : f32 to vector<2x128xf32>
    %532 = arith.addf %531, %530 : vector<2x128xf32>
    %cst_174 = arith.constant 1.000000e+00 : f32
    %533 = vector.broadcast %cst_174 : f32 to vector<2x128xf32>
    %534 = arith.divf %533, %532 : vector<2x128xf32>
    %535 = arith.mulf %524, %467 : vector<2x128xf32>
    %536 = arith.mulf %516, %526 : vector<2x128xf32>
    %537 = arith.addf %535, %536 : vector<2x128xf32>
    %538 = math.tanh %537 : vector<2x128xf32>
    %539 = arith.mulf %534, %538 : vector<2x128xf32>
    %540 = arith.truncf %503 : vector<2x128xf32> to vector<2x128xbf16>
    %cst_175 = arith.constant dense<0.000000e+00> : vector<2x512xf32>
    %541 = tpu.matmul %540, %79, %cst_175 {dimension_numbers = #tpu.dot_dimension_numbers<[1], [0], [0], [1], [0, 0, 1, 1], [], []>} : vector<2x128xbf16>, vector<128x512xbf16>, vector<2x512xf32> -> vector<2x512xf32>
    %542 = arith.addf %505, %541 : vector<2x512xf32>
    %543 = vector.extract_strided_slice %542 {offsets = [0, 0], sizes = [2, 128], strides = [1, 1]} : vector<2x512xf32> to vector<2x128xf32>
    %cst_176 = arith.constant 0.000000e+00 : f32
    %544 = vector.broadcast %cst_176 : f32 to vector<2x128xf32>
    %545 = arith.subf %544, %543 : vector<2x128xf32>
    %546 = math.exp %545 : vector<2x128xf32>
    %cst_177 = arith.constant 1.000000e+00 : f32
    %547 = vector.broadcast %cst_177 : f32 to vector<2x128xf32>
    %548 = arith.addf %547, %546 : vector<2x128xf32>
    %cst_178 = arith.constant 1.000000e+00 : f32
    %549 = vector.broadcast %cst_178 : f32 to vector<2x128xf32>
    %550 = arith.divf %549, %548 : vector<2x128xf32>
    %551 = vector.extract_strided_slice %542 {offsets = [0, 128], sizes = [2, 128], strides = [1, 1]} : vector<2x512xf32> to vector<2x128xf32>
    %cst_179 = arith.constant 0.000000e+00 : f32
    %552 = vector.broadcast %cst_179 : f32 to vector<2x128xf32>
    %553 = arith.subf %552, %551 : vector<2x128xf32>
    %554 = math.exp %553 : vector<2x128xf32>
    %cst_180 = arith.constant 1.000000e+00 : f32
    %555 = vector.broadcast %cst_180 : f32 to vector<2x128xf32>
    %556 = arith.addf %555, %554 : vector<2x128xf32>
    %cst_181 = arith.constant 1.000000e+00 : f32
    %557 = vector.broadcast %cst_181 : f32 to vector<2x128xf32>
    %558 = arith.divf %557, %556 : vector<2x128xf32>
    %559 = vector.extract_strided_slice %542 {offsets = [0, 256], sizes = [2, 128], strides = [1, 1]} : vector<2x512xf32> to vector<2x128xf32>
    %560 = math.tanh %559 : vector<2x128xf32>
    %561 = vector.extract_strided_slice %542 {offsets = [0, 384], sizes = [2, 128], strides = [1, 1]} : vector<2x512xf32> to vector<2x128xf32>
    %cst_182 = arith.constant 0.000000e+00 : f32
    %562 = vector.broadcast %cst_182 : f32 to vector<2x128xf32>
    %563 = arith.subf %562, %561 : vector<2x128xf32>
    %564 = math.exp %563 : vector<2x128xf32>
    %cst_183 = arith.constant 1.000000e+00 : f32
    %565 = vector.broadcast %cst_183 : f32 to vector<2x128xf32>
    %566 = arith.addf %565, %564 : vector<2x128xf32>
    %cst_184 = arith.constant 1.000000e+00 : f32
    %567 = vector.broadcast %cst_184 : f32 to vector<2x128xf32>
    %568 = arith.divf %567, %566 : vector<2x128xf32>
    %569 = arith.mulf %558, %501 : vector<2x128xf32>
    %570 = arith.mulf %550, %560 : vector<2x128xf32>
    %571 = arith.addf %569, %570 : vector<2x128xf32>
    %572 = math.tanh %571 : vector<2x128xf32>
    %573 = arith.mulf %568, %572 : vector<2x128xf32>
    %574 = vector.extract_strided_slice %77 {offsets = [14, 0], sizes = [2, 512], strides = [1, 1]} : vector<16x1024xf32> to vector<2x512xf32>
    %575 = vector.extract_strided_slice %77 {offsets = [0, 512], sizes = [2, 512], strides = [1, 1]} : vector<16x1024xf32> to vector<2x512xf32>
    %576 = arith.truncf %539 : vector<2x128xf32> to vector<2x128xbf16>
    %cst_185 = arith.constant dense<0.000000e+00> : vector<2x512xf32>
    %577 = tpu.matmul %576, %78, %cst_185 {dimension_numbers = #tpu.dot_dimension_numbers<[1], [0], [0], [1], [0, 0, 1, 1], [], []>} : vector<2x128xbf16>, vector<128x512xbf16>, vector<2x512xf32> -> vector<2x512xf32>
    %578 = arith.addf %574, %577 : vector<2x512xf32>
    %579 = vector.extract_strided_slice %578 {offsets = [0, 0], sizes = [2, 128], strides = [1, 1]} : vector<2x512xf32> to vector<2x128xf32>
    %cst_186 = arith.constant 0.000000e+00 : f32
    %580 = vector.broadcast %cst_186 : f32 to vector<2x128xf32>
    %581 = arith.subf %580, %579 : vector<2x128xf32>
    %582 = math.exp %581 : vector<2x128xf32>
    %cst_187 = arith.constant 1.000000e+00 : f32
    %583 = vector.broadcast %cst_187 : f32 to vector<2x128xf32>
    %584 = arith.addf %583, %582 : vector<2x128xf32>
    %cst_188 = arith.constant 1.000000e+00 : f32
    %585 = vector.broadcast %cst_188 : f32 to vector<2x128xf32>
    %586 = arith.divf %585, %584 : vector<2x128xf32>
    %587 = vector.extract_strided_slice %578 {offsets = [0, 128], sizes = [2, 128], strides = [1, 1]} : vector<2x512xf32> to vector<2x128xf32>
    %cst_189 = arith.constant 0.000000e+00 : f32
    %588 = vector.broadcast %cst_189 : f32 to vector<2x128xf32>
    %589 = arith.subf %588, %587 : vector<2x128xf32>
    %590 = math.exp %589 : vector<2x128xf32>
    %cst_190 = arith.constant 1.000000e+00 : f32
    %591 = vector.broadcast %cst_190 : f32 to vector<2x128xf32>
    %592 = arith.addf %591, %590 : vector<2x128xf32>
    %cst_191 = arith.constant 1.000000e+00 : f32
    %593 = vector.broadcast %cst_191 : f32 to vector<2x128xf32>
    %594 = arith.divf %593, %592 : vector<2x128xf32>
    %595 = vector.extract_strided_slice %578 {offsets = [0, 256], sizes = [2, 128], strides = [1, 1]} : vector<2x512xf32> to vector<2x128xf32>
    %596 = math.tanh %595 : vector<2x128xf32>
    %597 = vector.extract_strided_slice %578 {offsets = [0, 384], sizes = [2, 128], strides = [1, 1]} : vector<2x512xf32> to vector<2x128xf32>
    %cst_192 = arith.constant 0.000000e+00 : f32
    %598 = vector.broadcast %cst_192 : f32 to vector<2x128xf32>
    %599 = arith.subf %598, %597 : vector<2x128xf32>
    %600 = math.exp %599 : vector<2x128xf32>
    %cst_193 = arith.constant 1.000000e+00 : f32
    %601 = vector.broadcast %cst_193 : f32 to vector<2x128xf32>
    %602 = arith.addf %601, %600 : vector<2x128xf32>
    %cst_194 = arith.constant 1.000000e+00 : f32
    %603 = vector.broadcast %cst_194 : f32 to vector<2x128xf32>
    %604 = arith.divf %603, %602 : vector<2x128xf32>
    %605 = arith.mulf %594, %537 : vector<2x128xf32>
    %606 = arith.mulf %586, %596 : vector<2x128xf32>
    %607 = arith.addf %605, %606 : vector<2x128xf32>
    %608 = math.tanh %607 : vector<2x128xf32>
    %609 = arith.mulf %604, %608 : vector<2x128xf32>
    %610 = arith.truncf %573 : vector<2x128xf32> to vector<2x128xbf16>
    %cst_195 = arith.constant dense<0.000000e+00> : vector<2x512xf32>
    %611 = tpu.matmul %610, %79, %cst_195 {dimension_numbers = #tpu.dot_dimension_numbers<[1], [0], [0], [1], [0, 0, 1, 1], [], []>} : vector<2x128xbf16>, vector<128x512xbf16>, vector<2x512xf32> -> vector<2x512xf32>
    %612 = arith.addf %575, %611 : vector<2x512xf32>
    %613 = vector.extract_strided_slice %612 {offsets = [0, 0], sizes = [2, 128], strides = [1, 1]} : vector<2x512xf32> to vector<2x128xf32>
    %cst_196 = arith.constant 0.000000e+00 : f32
    %614 = vector.broadcast %cst_196 : f32 to vector<2x128xf32>
    %615 = arith.subf %614, %613 : vector<2x128xf32>
    %616 = math.exp %615 : vector<2x128xf32>
    %cst_197 = arith.constant 1.000000e+00 : f32
    %617 = vector.broadcast %cst_197 : f32 to vector<2x128xf32>
    %618 = arith.addf %617, %616 : vector<2x128xf32>
    %cst_198 = arith.constant 1.000000e+00 : f32
    %619 = vector.broadcast %cst_198 : f32 to vector<2x128xf32>
    %620 = arith.divf %619, %618 : vector<2x128xf32>
    %621 = vector.extract_strided_slice %612 {offsets = [0, 128], sizes = [2, 128], strides = [1, 1]} : vector<2x512xf32> to vector<2x128xf32>
    %cst_199 = arith.constant 0.000000e+00 : f32
    %622 = vector.broadcast %cst_199 : f32 to vector<2x128xf32>
    %623 = arith.subf %622, %621 : vector<2x128xf32>
    %624 = math.exp %623 : vector<2x128xf32>
    %cst_200 = arith.constant 1.000000e+00 : f32
    %625 = vector.broadcast %cst_200 : f32 to vector<2x128xf32>
    %626 = arith.addf %625, %624 : vector<2x128xf32>
    %cst_201 = arith.constant 1.000000e+00 : f32
    %627 = vector.broadcast %cst_201 : f32 to vector<2x128xf32>
    %628 = arith.divf %627, %626 : vector<2x128xf32>
    %629 = vector.extract_strided_slice %612 {offsets = [0, 256], sizes = [2, 128], strides = [1, 1]} : vector<2x512xf32> to vector<2x128xf32>
    %630 = math.tanh %629 : vector<2x128xf32>
    %631 = vector.extract_strided_slice %612 {offsets = [0, 384], sizes = [2, 128], strides = [1, 1]} : vector<2x512xf32> to vector<2x128xf32>
    %cst_202 = arith.constant 0.000000e+00 : f32
    %632 = vector.broadcast %cst_202 : f32 to vector<2x128xf32>
    %633 = arith.subf %632, %631 : vector<2x128xf32>
    %634 = math.exp %633 : vector<2x128xf32>
    %cst_203 = arith.constant 1.000000e+00 : f32
    %635 = vector.broadcast %cst_203 : f32 to vector<2x128xf32>
    %636 = arith.addf %635, %634 : vector<2x128xf32>
    %cst_204 = arith.constant 1.000000e+00 : f32
    %637 = vector.broadcast %cst_204 : f32 to vector<2x128xf32>
    %638 = arith.divf %637, %636 : vector<2x128xf32>
    %639 = arith.mulf %628, %571 : vector<2x128xf32>
    %640 = arith.mulf %620, %630 : vector<2x128xf32>
    %641 = arith.addf %639, %640 : vector<2x128xf32>
    %642 = math.tanh %641 : vector<2x128xf32>
    %643 = arith.mulf %638, %642 : vector<2x128xf32>
    %644 = vector.shape_cast %70 : vector<10x2x128xf32> to vector<20x128xf32>
    %645 = arith.truncf %644 : vector<20x128xf32> to vector<20x128xbf16>
    %c0_205 = arith.constant 0 : index
    %c0_206 = arith.constant 0 : index
    %646 = vector.load %arg14[%c0_205, %c0_206] : memref<128x1024xbf16, #tpu.memory_space<vmem>>, vector<128x1024xbf16>
    %cst_207 = arith.constant dense<0.000000e+00> : vector<20x1024xf32>
    %647 = tpu.matmul %645, %646, %cst_207 {dimension_numbers = #tpu.dot_dimension_numbers<[1], [0], [0], [1], [0, 0, 1, 1], [], []>} : vector<20x128xbf16>, vector<128x1024xbf16>, vector<20x1024xf32> -> vector<20x1024xf32>
    %c0_208 = arith.constant 0 : index
    %c0_209 = arith.constant 0 : index
    %648 = vector.load %arg17[%c0_208, %c0_209] : memref<1x1024xf32, #tpu.memory_space<vmem>>, vector<1x1024xf32>
    %649 = vector.broadcast %648 : vector<1x1024xf32> to vector<20x1024xf32>
    %650 = arith.addf %647, %649 : vector<20x1024xf32>
    %c0_210 = arith.constant 0 : index
    %c0_211 = arith.constant 0 : index
    %651 = vector.load %arg15[%c0_210, %c0_211] : memref<128x512xbf16, #tpu.memory_space<vmem>>, vector<128x512xbf16>
    %c0_212 = arith.constant 0 : index
    %c0_213 = arith.constant 0 : index
    %652 = vector.load %arg16[%c0_212, %c0_213] : memref<128x512xbf16, #tpu.memory_space<vmem>>, vector<128x512xbf16>
    %cst_214 = arith.constant 0.000000e+00 : f32
    %653 = vector.broadcast %cst_214 : f32 to vector<2x128xf32>
    %cst_215 = arith.constant 0.000000e+00 : f32
    %654 = vector.broadcast %cst_215 : f32 to vector<2x128xf32>
    %cst_216 = arith.constant 0.000000e+00 : f32
    %655 = vector.broadcast %cst_216 : f32 to vector<2x128xf32>
    %cst_217 = arith.constant 0.000000e+00 : f32
    %656 = vector.broadcast %cst_217 : f32 to vector<2x128xf32>
    %657 = vector.extract_strided_slice %650 {offsets = [0, 0], sizes = [2, 512], strides = [1, 1]} : vector<20x1024xf32> to vector<2x512xf32>
    %658 = vector.extract_strided_slice %650 {offsets = [18, 512], sizes = [2, 512], strides = [1, 1]} : vector<20x1024xf32> to vector<2x512xf32>
    %659 = arith.truncf %653 : vector<2x128xf32> to vector<2x128xbf16>
    %cst_218 = arith.constant dense<0.000000e+00> : vector<2x512xf32>
    %660 = tpu.matmul %659, %651, %cst_218 {dimension_numbers = #tpu.dot_dimension_numbers<[1], [0], [0], [1], [0, 0, 1, 1], [], []>} : vector<2x128xbf16>, vector<128x512xbf16>, vector<2x512xf32> -> vector<2x512xf32>
    %661 = arith.addf %657, %660 : vector<2x512xf32>
    %662 = vector.extract_strided_slice %661 {offsets = [0, 0], sizes = [2, 128], strides = [1, 1]} : vector<2x512xf32> to vector<2x128xf32>
    %cst_219 = arith.constant 0.000000e+00 : f32
    %663 = vector.broadcast %cst_219 : f32 to vector<2x128xf32>
    %664 = arith.subf %663, %662 : vector<2x128xf32>
    %665 = math.exp %664 : vector<2x128xf32>
    %cst_220 = arith.constant 1.000000e+00 : f32
    %666 = vector.broadcast %cst_220 : f32 to vector<2x128xf32>
    %667 = arith.addf %666, %665 : vector<2x128xf32>
    %cst_221 = arith.constant 1.000000e+00 : f32
    %668 = vector.broadcast %cst_221 : f32 to vector<2x128xf32>
    %669 = arith.divf %668, %667 : vector<2x128xf32>
    %670 = vector.extract_strided_slice %661 {offsets = [0, 128], sizes = [2, 128], strides = [1, 1]} : vector<2x512xf32> to vector<2x128xf32>
    %cst_222 = arith.constant 0.000000e+00 : f32
    %671 = vector.broadcast %cst_222 : f32 to vector<2x128xf32>
    %672 = arith.subf %671, %670 : vector<2x128xf32>
    %673 = math.exp %672 : vector<2x128xf32>
    %cst_223 = arith.constant 1.000000e+00 : f32
    %674 = vector.broadcast %cst_223 : f32 to vector<2x128xf32>
    %675 = arith.addf %674, %673 : vector<2x128xf32>
    %cst_224 = arith.constant 1.000000e+00 : f32
    %676 = vector.broadcast %cst_224 : f32 to vector<2x128xf32>
    %677 = arith.divf %676, %675 : vector<2x128xf32>
    %678 = vector.extract_strided_slice %661 {offsets = [0, 256], sizes = [2, 128], strides = [1, 1]} : vector<2x512xf32> to vector<2x128xf32>
    %679 = math.tanh %678 : vector<2x128xf32>
    %680 = vector.extract_strided_slice %661 {offsets = [0, 384], sizes = [2, 128], strides = [1, 1]} : vector<2x512xf32> to vector<2x128xf32>
    %cst_225 = arith.constant 0.000000e+00 : f32
    %681 = vector.broadcast %cst_225 : f32 to vector<2x128xf32>
    %682 = arith.subf %681, %680 : vector<2x128xf32>
    %683 = math.exp %682 : vector<2x128xf32>
    %cst_226 = arith.constant 1.000000e+00 : f32
    %684 = vector.broadcast %cst_226 : f32 to vector<2x128xf32>
    %685 = arith.addf %684, %683 : vector<2x128xf32>
    %cst_227 = arith.constant 1.000000e+00 : f32
    %686 = vector.broadcast %cst_227 : f32 to vector<2x128xf32>
    %687 = arith.divf %686, %685 : vector<2x128xf32>
    %688 = arith.mulf %677, %654 : vector<2x128xf32>
    %689 = arith.mulf %669, %679 : vector<2x128xf32>
    %690 = arith.addf %688, %689 : vector<2x128xf32>
    %691 = math.tanh %690 : vector<2x128xf32>
    %692 = arith.mulf %687, %691 : vector<2x128xf32>
    %693 = arith.truncf %655 : vector<2x128xf32> to vector<2x128xbf16>
    %cst_228 = arith.constant dense<0.000000e+00> : vector<2x512xf32>
    %694 = tpu.matmul %693, %652, %cst_228 {dimension_numbers = #tpu.dot_dimension_numbers<[1], [0], [0], [1], [0, 0, 1, 1], [], []>} : vector<2x128xbf16>, vector<128x512xbf16>, vector<2x512xf32> -> vector<2x512xf32>
    %695 = arith.addf %658, %694 : vector<2x512xf32>
    %696 = vector.extract_strided_slice %695 {offsets = [0, 0], sizes = [2, 128], strides = [1, 1]} : vector<2x512xf32> to vector<2x128xf32>
    %cst_229 = arith.constant 0.000000e+00 : f32
    %697 = vector.broadcast %cst_229 : f32 to vector<2x128xf32>
    %698 = arith.subf %697, %696 : vector<2x128xf32>
    %699 = math.exp %698 : vector<2x128xf32>
    %cst_230 = arith.constant 1.000000e+00 : f32
    %700 = vector.broadcast %cst_230 : f32 to vector<2x128xf32>
    %701 = arith.addf %700, %699 : vector<2x128xf32>
    %cst_231 = arith.constant 1.000000e+00 : f32
    %702 = vector.broadcast %cst_231 : f32 to vector<2x128xf32>
    %703 = arith.divf %702, %701 : vector<2x128xf32>
    %704 = vector.extract_strided_slice %695 {offsets = [0, 128], sizes = [2, 128], strides = [1, 1]} : vector<2x512xf32> to vector<2x128xf32>
    %cst_232 = arith.constant 0.000000e+00 : f32
    %705 = vector.broadcast %cst_232 : f32 to vector<2x128xf32>
    %706 = arith.subf %705, %704 : vector<2x128xf32>
    %707 = math.exp %706 : vector<2x128xf32>
    %cst_233 = arith.constant 1.000000e+00 : f32
    %708 = vector.broadcast %cst_233 : f32 to vector<2x128xf32>
    %709 = arith.addf %708, %707 : vector<2x128xf32>
    %cst_234 = arith.constant 1.000000e+00 : f32
    %710 = vector.broadcast %cst_234 : f32 to vector<2x128xf32>
    %711 = arith.divf %710, %709 : vector<2x128xf32>
    %712 = vector.extract_strided_slice %695 {offsets = [0, 256], sizes = [2, 128], strides = [1, 1]} : vector<2x512xf32> to vector<2x128xf32>
    %713 = math.tanh %712 : vector<2x128xf32>
    %714 = vector.extract_strided_slice %695 {offsets = [0, 384], sizes = [2, 128], strides = [1, 1]} : vector<2x512xf32> to vector<2x128xf32>
    %cst_235 = arith.constant 0.000000e+00 : f32
    %715 = vector.broadcast %cst_235 : f32 to vector<2x128xf32>
    %716 = arith.subf %715, %714 : vector<2x128xf32>
    %717 = math.exp %716 : vector<2x128xf32>
    %cst_236 = arith.constant 1.000000e+00 : f32
    %718 = vector.broadcast %cst_236 : f32 to vector<2x128xf32>
    %719 = arith.addf %718, %717 : vector<2x128xf32>
    %cst_237 = arith.constant 1.000000e+00 : f32
    %720 = vector.broadcast %cst_237 : f32 to vector<2x128xf32>
    %721 = arith.divf %720, %719 : vector<2x128xf32>
    %722 = arith.mulf %711, %656 : vector<2x128xf32>
    %723 = arith.mulf %703, %713 : vector<2x128xf32>
    %724 = arith.addf %722, %723 : vector<2x128xf32>
    %725 = math.tanh %724 : vector<2x128xf32>
    %726 = arith.mulf %721, %725 : vector<2x128xf32>
    %727 = vector.extract_strided_slice %650 {offsets = [2, 0], sizes = [2, 512], strides = [1, 1]} : vector<20x1024xf32> to vector<2x512xf32>
    %728 = vector.extract_strided_slice %650 {offsets = [16, 512], sizes = [2, 512], strides = [1, 1]} : vector<20x1024xf32> to vector<2x512xf32>
    %729 = arith.truncf %692 : vector<2x128xf32> to vector<2x128xbf16>
    %cst_238 = arith.constant dense<0.000000e+00> : vector<2x512xf32>
    %730 = tpu.matmul %729, %651, %cst_238 {dimension_numbers = #tpu.dot_dimension_numbers<[1], [0], [0], [1], [0, 0, 1, 1], [], []>} : vector<2x128xbf16>, vector<128x512xbf16>, vector<2x512xf32> -> vector<2x512xf32>
    %731 = arith.addf %727, %730 : vector<2x512xf32>
    %732 = vector.extract_strided_slice %731 {offsets = [0, 0], sizes = [2, 128], strides = [1, 1]} : vector<2x512xf32> to vector<2x128xf32>
    %cst_239 = arith.constant 0.000000e+00 : f32
    %733 = vector.broadcast %cst_239 : f32 to vector<2x128xf32>
    %734 = arith.subf %733, %732 : vector<2x128xf32>
    %735 = math.exp %734 : vector<2x128xf32>
    %cst_240 = arith.constant 1.000000e+00 : f32
    %736 = vector.broadcast %cst_240 : f32 to vector<2x128xf32>
    %737 = arith.addf %736, %735 : vector<2x128xf32>
    %cst_241 = arith.constant 1.000000e+00 : f32
    %738 = vector.broadcast %cst_241 : f32 to vector<2x128xf32>
    %739 = arith.divf %738, %737 : vector<2x128xf32>
    %740 = vector.extract_strided_slice %731 {offsets = [0, 128], sizes = [2, 128], strides = [1, 1]} : vector<2x512xf32> to vector<2x128xf32>
    %cst_242 = arith.constant 0.000000e+00 : f32
    %741 = vector.broadcast %cst_242 : f32 to vector<2x128xf32>
    %742 = arith.subf %741, %740 : vector<2x128xf32>
    %743 = math.exp %742 : vector<2x128xf32>
    %cst_243 = arith.constant 1.000000e+00 : f32
    %744 = vector.broadcast %cst_243 : f32 to vector<2x128xf32>
    %745 = arith.addf %744, %743 : vector<2x128xf32>
    %cst_244 = arith.constant 1.000000e+00 : f32
    %746 = vector.broadcast %cst_244 : f32 to vector<2x128xf32>
    %747 = arith.divf %746, %745 : vector<2x128xf32>
    %748 = vector.extract_strided_slice %731 {offsets = [0, 256], sizes = [2, 128], strides = [1, 1]} : vector<2x512xf32> to vector<2x128xf32>
    %749 = math.tanh %748 : vector<2x128xf32>
    %750 = vector.extract_strided_slice %731 {offsets = [0, 384], sizes = [2, 128], strides = [1, 1]} : vector<2x512xf32> to vector<2x128xf32>
    %cst_245 = arith.constant 0.000000e+00 : f32
    %751 = vector.broadcast %cst_245 : f32 to vector<2x128xf32>
    %752 = arith.subf %751, %750 : vector<2x128xf32>
    %753 = math.exp %752 : vector<2x128xf32>
    %cst_246 = arith.constant 1.000000e+00 : f32
    %754 = vector.broadcast %cst_246 : f32 to vector<2x128xf32>
    %755 = arith.addf %754, %753 : vector<2x128xf32>
    %cst_247 = arith.constant 1.000000e+00 : f32
    %756 = vector.broadcast %cst_247 : f32 to vector<2x128xf32>
    %757 = arith.divf %756, %755 : vector<2x128xf32>
    %758 = arith.mulf %747, %690 : vector<2x128xf32>
    %759 = arith.mulf %739, %749 : vector<2x128xf32>
    %760 = arith.addf %758, %759 : vector<2x128xf32>
    %761 = math.tanh %760 : vector<2x128xf32>
    %762 = arith.mulf %757, %761 : vector<2x128xf32>
    %763 = arith.truncf %726 : vector<2x128xf32> to vector<2x128xbf16>
    %cst_248 = arith.constant dense<0.000000e+00> : vector<2x512xf32>
    %764 = tpu.matmul %763, %652, %cst_248 {dimension_numbers = #tpu.dot_dimension_numbers<[1], [0], [0], [1], [0, 0, 1, 1], [], []>} : vector<2x128xbf16>, vector<128x512xbf16>, vector<2x512xf32> -> vector<2x512xf32>
    %765 = arith.addf %728, %764 : vector<2x512xf32>
    %766 = vector.extract_strided_slice %765 {offsets = [0, 0], sizes = [2, 128], strides = [1, 1]} : vector<2x512xf32> to vector<2x128xf32>
    %cst_249 = arith.constant 0.000000e+00 : f32
    %767 = vector.broadcast %cst_249 : f32 to vector<2x128xf32>
    %768 = arith.subf %767, %766 : vector<2x128xf32>
    %769 = math.exp %768 : vector<2x128xf32>
    %cst_250 = arith.constant 1.000000e+00 : f32
    %770 = vector.broadcast %cst_250 : f32 to vector<2x128xf32>
    %771 = arith.addf %770, %769 : vector<2x128xf32>
    %cst_251 = arith.constant 1.000000e+00 : f32
    %772 = vector.broadcast %cst_251 : f32 to vector<2x128xf32>
    %773 = arith.divf %772, %771 : vector<2x128xf32>
    %774 = vector.extract_strided_slice %765 {offsets = [0, 128], sizes = [2, 128], strides = [1, 1]} : vector<2x512xf32> to vector<2x128xf32>
    %cst_252 = arith.constant 0.000000e+00 : f32
    %775 = vector.broadcast %cst_252 : f32 to vector<2x128xf32>
    %776 = arith.subf %775, %774 : vector<2x128xf32>
    %777 = math.exp %776 : vector<2x128xf32>
    %cst_253 = arith.constant 1.000000e+00 : f32
    %778 = vector.broadcast %cst_253 : f32 to vector<2x128xf32>
    %779 = arith.addf %778, %777 : vector<2x128xf32>
    %cst_254 = arith.constant 1.000000e+00 : f32
    %780 = vector.broadcast %cst_254 : f32 to vector<2x128xf32>
    %781 = arith.divf %780, %779 : vector<2x128xf32>
    %782 = vector.extract_strided_slice %765 {offsets = [0, 256], sizes = [2, 128], strides = [1, 1]} : vector<2x512xf32> to vector<2x128xf32>
    %783 = math.tanh %782 : vector<2x128xf32>
    %784 = vector.extract_strided_slice %765 {offsets = [0, 384], sizes = [2, 128], strides = [1, 1]} : vector<2x512xf32> to vector<2x128xf32>
    %cst_255 = arith.constant 0.000000e+00 : f32
    %785 = vector.broadcast %cst_255 : f32 to vector<2x128xf32>
    %786 = arith.subf %785, %784 : vector<2x128xf32>
    %787 = math.exp %786 : vector<2x128xf32>
    %cst_256 = arith.constant 1.000000e+00 : f32
    %788 = vector.broadcast %cst_256 : f32 to vector<2x128xf32>
    %789 = arith.addf %788, %787 : vector<2x128xf32>
    %cst_257 = arith.constant 1.000000e+00 : f32
    %790 = vector.broadcast %cst_257 : f32 to vector<2x128xf32>
    %791 = arith.divf %790, %789 : vector<2x128xf32>
    %792 = arith.mulf %781, %724 : vector<2x128xf32>
    %793 = arith.mulf %773, %783 : vector<2x128xf32>
    %794 = arith.addf %792, %793 : vector<2x128xf32>
    %795 = math.tanh %794 : vector<2x128xf32>
    %796 = arith.mulf %791, %795 : vector<2x128xf32>
    %797 = vector.extract_strided_slice %650 {offsets = [4, 0], sizes = [2, 512], strides = [1, 1]} : vector<20x1024xf32> to vector<2x512xf32>
    %798 = vector.extract_strided_slice %650 {offsets = [14, 512], sizes = [2, 512], strides = [1, 1]} : vector<20x1024xf32> to vector<2x512xf32>
    %799 = arith.truncf %762 : vector<2x128xf32> to vector<2x128xbf16>
    %cst_258 = arith.constant dense<0.000000e+00> : vector<2x512xf32>
    %800 = tpu.matmul %799, %651, %cst_258 {dimension_numbers = #tpu.dot_dimension_numbers<[1], [0], [0], [1], [0, 0, 1, 1], [], []>} : vector<2x128xbf16>, vector<128x512xbf16>, vector<2x512xf32> -> vector<2x512xf32>
    %801 = arith.addf %797, %800 : vector<2x512xf32>
    %802 = vector.extract_strided_slice %801 {offsets = [0, 0], sizes = [2, 128], strides = [1, 1]} : vector<2x512xf32> to vector<2x128xf32>
    %cst_259 = arith.constant 0.000000e+00 : f32
    %803 = vector.broadcast %cst_259 : f32 to vector<2x128xf32>
    %804 = arith.subf %803, %802 : vector<2x128xf32>
    %805 = math.exp %804 : vector<2x128xf32>
    %cst_260 = arith.constant 1.000000e+00 : f32
    %806 = vector.broadcast %cst_260 : f32 to vector<2x128xf32>
    %807 = arith.addf %806, %805 : vector<2x128xf32>
    %cst_261 = arith.constant 1.000000e+00 : f32
    %808 = vector.broadcast %cst_261 : f32 to vector<2x128xf32>
    %809 = arith.divf %808, %807 : vector<2x128xf32>
    %810 = vector.extract_strided_slice %801 {offsets = [0, 128], sizes = [2, 128], strides = [1, 1]} : vector<2x512xf32> to vector<2x128xf32>
    %cst_262 = arith.constant 0.000000e+00 : f32
    %811 = vector.broadcast %cst_262 : f32 to vector<2x128xf32>
    %812 = arith.subf %811, %810 : vector<2x128xf32>
    %813 = math.exp %812 : vector<2x128xf32>
    %cst_263 = arith.constant 1.000000e+00 : f32
    %814 = vector.broadcast %cst_263 : f32 to vector<2x128xf32>
    %815 = arith.addf %814, %813 : vector<2x128xf32>
    %cst_264 = arith.constant 1.000000e+00 : f32
    %816 = vector.broadcast %cst_264 : f32 to vector<2x128xf32>
    %817 = arith.divf %816, %815 : vector<2x128xf32>
    %818 = vector.extract_strided_slice %801 {offsets = [0, 256], sizes = [2, 128], strides = [1, 1]} : vector<2x512xf32> to vector<2x128xf32>
    %819 = math.tanh %818 : vector<2x128xf32>
    %820 = vector.extract_strided_slice %801 {offsets = [0, 384], sizes = [2, 128], strides = [1, 1]} : vector<2x512xf32> to vector<2x128xf32>
    %cst_265 = arith.constant 0.000000e+00 : f32
    %821 = vector.broadcast %cst_265 : f32 to vector<2x128xf32>
    %822 = arith.subf %821, %820 : vector<2x128xf32>
    %823 = math.exp %822 : vector<2x128xf32>
    %cst_266 = arith.constant 1.000000e+00 : f32
    %824 = vector.broadcast %cst_266 : f32 to vector<2x128xf32>
    %825 = arith.addf %824, %823 : vector<2x128xf32>
    %cst_267 = arith.constant 1.000000e+00 : f32
    %826 = vector.broadcast %cst_267 : f32 to vector<2x128xf32>
    %827 = arith.divf %826, %825 : vector<2x128xf32>
    %828 = arith.mulf %817, %760 : vector<2x128xf32>
    %829 = arith.mulf %809, %819 : vector<2x128xf32>
    %830 = arith.addf %828, %829 : vector<2x128xf32>
    %831 = math.tanh %830 : vector<2x128xf32>
    %832 = arith.mulf %827, %831 : vector<2x128xf32>
    %833 = arith.truncf %796 : vector<2x128xf32> to vector<2x128xbf16>
    %cst_268 = arith.constant dense<0.000000e+00> : vector<2x512xf32>
    %834 = tpu.matmul %833, %652, %cst_268 {dimension_numbers = #tpu.dot_dimension_numbers<[1], [0], [0], [1], [0, 0, 1, 1], [], []>} : vector<2x128xbf16>, vector<128x512xbf16>, vector<2x512xf32> -> vector<2x512xf32>
    %835 = arith.addf %798, %834 : vector<2x512xf32>
    %836 = vector.extract_strided_slice %835 {offsets = [0, 0], sizes = [2, 128], strides = [1, 1]} : vector<2x512xf32> to vector<2x128xf32>
    %cst_269 = arith.constant 0.000000e+00 : f32
    %837 = vector.broadcast %cst_269 : f32 to vector<2x128xf32>
    %838 = arith.subf %837, %836 : vector<2x128xf32>
    %839 = math.exp %838 : vector<2x128xf32>
    %cst_270 = arith.constant 1.000000e+00 : f32
    %840 = vector.broadcast %cst_270 : f32 to vector<2x128xf32>
    %841 = arith.addf %840, %839 : vector<2x128xf32>
    %cst_271 = arith.constant 1.000000e+00 : f32
    %842 = vector.broadcast %cst_271 : f32 to vector<2x128xf32>
    %843 = arith.divf %842, %841 : vector<2x128xf32>
    %844 = vector.extract_strided_slice %835 {offsets = [0, 128], sizes = [2, 128], strides = [1, 1]} : vector<2x512xf32> to vector<2x128xf32>
    %cst_272 = arith.constant 0.000000e+00 : f32
    %845 = vector.broadcast %cst_272 : f32 to vector<2x128xf32>
    %846 = arith.subf %845, %844 : vector<2x128xf32>
    %847 = math.exp %846 : vector<2x128xf32>
    %cst_273 = arith.constant 1.000000e+00 : f32
    %848 = vector.broadcast %cst_273 : f32 to vector<2x128xf32>
    %849 = arith.addf %848, %847 : vector<2x128xf32>
    %cst_274 = arith.constant 1.000000e+00 : f32
    %850 = vector.broadcast %cst_274 : f32 to vector<2x128xf32>
    %851 = arith.divf %850, %849 : vector<2x128xf32>
    %852 = vector.extract_strided_slice %835 {offsets = [0, 256], sizes = [2, 128], strides = [1, 1]} : vector<2x512xf32> to vector<2x128xf32>
    %853 = math.tanh %852 : vector<2x128xf32>
    %854 = vector.extract_strided_slice %835 {offsets = [0, 384], sizes = [2, 128], strides = [1, 1]} : vector<2x512xf32> to vector<2x128xf32>
    %cst_275 = arith.constant 0.000000e+00 : f32
    %855 = vector.broadcast %cst_275 : f32 to vector<2x128xf32>
    %856 = arith.subf %855, %854 : vector<2x128xf32>
    %857 = math.exp %856 : vector<2x128xf32>
    %cst_276 = arith.constant 1.000000e+00 : f32
    %858 = vector.broadcast %cst_276 : f32 to vector<2x128xf32>
    %859 = arith.addf %858, %857 : vector<2x128xf32>
    %cst_277 = arith.constant 1.000000e+00 : f32
    %860 = vector.broadcast %cst_277 : f32 to vector<2x128xf32>
    %861 = arith.divf %860, %859 : vector<2x128xf32>
    %862 = arith.mulf %851, %794 : vector<2x128xf32>
    %863 = arith.mulf %843, %853 : vector<2x128xf32>
    %864 = arith.addf %862, %863 : vector<2x128xf32>
    %865 = math.tanh %864 : vector<2x128xf32>
    %866 = arith.mulf %861, %865 : vector<2x128xf32>
    %867 = vector.extract_strided_slice %650 {offsets = [6, 0], sizes = [2, 512], strides = [1, 1]} : vector<20x1024xf32> to vector<2x512xf32>
    %868 = vector.extract_strided_slice %650 {offsets = [12, 512], sizes = [2, 512], strides = [1, 1]} : vector<20x1024xf32> to vector<2x512xf32>
    %869 = arith.truncf %832 : vector<2x128xf32> to vector<2x128xbf16>
    %cst_278 = arith.constant dense<0.000000e+00> : vector<2x512xf32>
    %870 = tpu.matmul %869, %651, %cst_278 {dimension_numbers = #tpu.dot_dimension_numbers<[1], [0], [0], [1], [0, 0, 1, 1], [], []>} : vector<2x128xbf16>, vector<128x512xbf16>, vector<2x512xf32> -> vector<2x512xf32>
    %871 = arith.addf %867, %870 : vector<2x512xf32>
    %872 = vector.extract_strided_slice %871 {offsets = [0, 0], sizes = [2, 128], strides = [1, 1]} : vector<2x512xf32> to vector<2x128xf32>
    %cst_279 = arith.constant 0.000000e+00 : f32
    %873 = vector.broadcast %cst_279 : f32 to vector<2x128xf32>
    %874 = arith.subf %873, %872 : vector<2x128xf32>
    %875 = math.exp %874 : vector<2x128xf32>
    %cst_280 = arith.constant 1.000000e+00 : f32
    %876 = vector.broadcast %cst_280 : f32 to vector<2x128xf32>
    %877 = arith.addf %876, %875 : vector<2x128xf32>
    %cst_281 = arith.constant 1.000000e+00 : f32
    %878 = vector.broadcast %cst_281 : f32 to vector<2x128xf32>
    %879 = arith.divf %878, %877 : vector<2x128xf32>
    %880 = vector.extract_strided_slice %871 {offsets = [0, 128], sizes = [2, 128], strides = [1, 1]} : vector<2x512xf32> to vector<2x128xf32>
    %cst_282 = arith.constant 0.000000e+00 : f32
    %881 = vector.broadcast %cst_282 : f32 to vector<2x128xf32>
    %882 = arith.subf %881, %880 : vector<2x128xf32>
    %883 = math.exp %882 : vector<2x128xf32>
    %cst_283 = arith.constant 1.000000e+00 : f32
    %884 = vector.broadcast %cst_283 : f32 to vector<2x128xf32>
    %885 = arith.addf %884, %883 : vector<2x128xf32>
    %cst_284 = arith.constant 1.000000e+00 : f32
    %886 = vector.broadcast %cst_284 : f32 to vector<2x128xf32>
    %887 = arith.divf %886, %885 : vector<2x128xf32>
    %888 = vector.extract_strided_slice %871 {offsets = [0, 256], sizes = [2, 128], strides = [1, 1]} : vector<2x512xf32> to vector<2x128xf32>
    %889 = math.tanh %888 : vector<2x128xf32>
    %890 = vector.extract_strided_slice %871 {offsets = [0, 384], sizes = [2, 128], strides = [1, 1]} : vector<2x512xf32> to vector<2x128xf32>
    %cst_285 = arith.constant 0.000000e+00 : f32
    %891 = vector.broadcast %cst_285 : f32 to vector<2x128xf32>
    %892 = arith.subf %891, %890 : vector<2x128xf32>
    %893 = math.exp %892 : vector<2x128xf32>
    %cst_286 = arith.constant 1.000000e+00 : f32
    %894 = vector.broadcast %cst_286 : f32 to vector<2x128xf32>
    %895 = arith.addf %894, %893 : vector<2x128xf32>
    %cst_287 = arith.constant 1.000000e+00 : f32
    %896 = vector.broadcast %cst_287 : f32 to vector<2x128xf32>
    %897 = arith.divf %896, %895 : vector<2x128xf32>
    %898 = arith.mulf %887, %830 : vector<2x128xf32>
    %899 = arith.mulf %879, %889 : vector<2x128xf32>
    %900 = arith.addf %898, %899 : vector<2x128xf32>
    %901 = math.tanh %900 : vector<2x128xf32>
    %902 = arith.mulf %897, %901 : vector<2x128xf32>
    %903 = arith.truncf %866 : vector<2x128xf32> to vector<2x128xbf16>
    %cst_288 = arith.constant dense<0.000000e+00> : vector<2x512xf32>
    %904 = tpu.matmul %903, %652, %cst_288 {dimension_numbers = #tpu.dot_dimension_numbers<[1], [0], [0], [1], [0, 0, 1, 1], [], []>} : vector<2x128xbf16>, vector<128x512xbf16>, vector<2x512xf32> -> vector<2x512xf32>
    %905 = arith.addf %868, %904 : vector<2x512xf32>
    %906 = vector.extract_strided_slice %905 {offsets = [0, 0], sizes = [2, 128], strides = [1, 1]} : vector<2x512xf32> to vector<2x128xf32>
    %cst_289 = arith.constant 0.000000e+00 : f32
    %907 = vector.broadcast %cst_289 : f32 to vector<2x128xf32>
    %908 = arith.subf %907, %906 : vector<2x128xf32>
    %909 = math.exp %908 : vector<2x128xf32>
    %cst_290 = arith.constant 1.000000e+00 : f32
    %910 = vector.broadcast %cst_290 : f32 to vector<2x128xf32>
    %911 = arith.addf %910, %909 : vector<2x128xf32>
    %cst_291 = arith.constant 1.000000e+00 : f32
    %912 = vector.broadcast %cst_291 : f32 to vector<2x128xf32>
    %913 = arith.divf %912, %911 : vector<2x128xf32>
    %914 = vector.extract_strided_slice %905 {offsets = [0, 128], sizes = [2, 128], strides = [1, 1]} : vector<2x512xf32> to vector<2x128xf32>
    %cst_292 = arith.constant 0.000000e+00 : f32
    %915 = vector.broadcast %cst_292 : f32 to vector<2x128xf32>
    %916 = arith.subf %915, %914 : vector<2x128xf32>
    %917 = math.exp %916 : vector<2x128xf32>
    %cst_293 = arith.constant 1.000000e+00 : f32
    %918 = vector.broadcast %cst_293 : f32 to vector<2x128xf32>
    %919 = arith.addf %918, %917 : vector<2x128xf32>
    %cst_294 = arith.constant 1.000000e+00 : f32
    %920 = vector.broadcast %cst_294 : f32 to vector<2x128xf32>
    %921 = arith.divf %920, %919 : vector<2x128xf32>
    %922 = vector.extract_strided_slice %905 {offsets = [0, 256], sizes = [2, 128], strides = [1, 1]} : vector<2x512xf32> to vector<2x128xf32>
    %923 = math.tanh %922 : vector<2x128xf32>
    %924 = vector.extract_strided_slice %905 {offsets = [0, 384], sizes = [2, 128], strides = [1, 1]} : vector<2x512xf32> to vector<2x128xf32>
    %cst_295 = arith.constant 0.000000e+00 : f32
    %925 = vector.broadcast %cst_295 : f32 to vector<2x128xf32>
    %926 = arith.subf %925, %924 : vector<2x128xf32>
    %927 = math.exp %926 : vector<2x128xf32>
    %cst_296 = arith.constant 1.000000e+00 : f32
    %928 = vector.broadcast %cst_296 : f32 to vector<2x128xf32>
    %929 = arith.addf %928, %927 : vector<2x128xf32>
    %cst_297 = arith.constant 1.000000e+00 : f32
    %930 = vector.broadcast %cst_297 : f32 to vector<2x128xf32>
    %931 = arith.divf %930, %929 : vector<2x128xf32>
    %932 = arith.mulf %921, %864 : vector<2x128xf32>
    %933 = arith.mulf %913, %923 : vector<2x128xf32>
    %934 = arith.addf %932, %933 : vector<2x128xf32>
    %935 = math.tanh %934 : vector<2x128xf32>
    %936 = arith.mulf %931, %935 : vector<2x128xf32>
    %937 = vector.extract_strided_slice %650 {offsets = [8, 0], sizes = [2, 512], strides = [1, 1]} : vector<20x1024xf32> to vector<2x512xf32>
    %938 = vector.extract_strided_slice %650 {offsets = [10, 512], sizes = [2, 512], strides = [1, 1]} : vector<20x1024xf32> to vector<2x512xf32>
    %939 = arith.truncf %902 : vector<2x128xf32> to vector<2x128xbf16>
    %cst_298 = arith.constant dense<0.000000e+00> : vector<2x512xf32>
    %940 = tpu.matmul %939, %651, %cst_298 {dimension_numbers = #tpu.dot_dimension_numbers<[1], [0], [0], [1], [0, 0, 1, 1], [], []>} : vector<2x128xbf16>, vector<128x512xbf16>, vector<2x512xf32> -> vector<2x512xf32>
    %941 = arith.addf %937, %940 : vector<2x512xf32>
    %942 = vector.extract_strided_slice %941 {offsets = [0, 0], sizes = [2, 128], strides = [1, 1]} : vector<2x512xf32> to vector<2x128xf32>
    %cst_299 = arith.constant 0.000000e+00 : f32
    %943 = vector.broadcast %cst_299 : f32 to vector<2x128xf32>
    %944 = arith.subf %943, %942 : vector<2x128xf32>
    %945 = math.exp %944 : vector<2x128xf32>
    %cst_300 = arith.constant 1.000000e+00 : f32
    %946 = vector.broadcast %cst_300 : f32 to vector<2x128xf32>
    %947 = arith.addf %946, %945 : vector<2x128xf32>
    %cst_301 = arith.constant 1.000000e+00 : f32
    %948 = vector.broadcast %cst_301 : f32 to vector<2x128xf32>
    %949 = arith.divf %948, %947 : vector<2x128xf32>
    %950 = vector.extract_strided_slice %941 {offsets = [0, 128], sizes = [2, 128], strides = [1, 1]} : vector<2x512xf32> to vector<2x128xf32>
    %cst_302 = arith.constant 0.000000e+00 : f32
    %951 = vector.broadcast %cst_302 : f32 to vector<2x128xf32>
    %952 = arith.subf %951, %950 : vector<2x128xf32>
    %953 = math.exp %952 : vector<2x128xf32>
    %cst_303 = arith.constant 1.000000e+00 : f32
    %954 = vector.broadcast %cst_303 : f32 to vector<2x128xf32>
    %955 = arith.addf %954, %953 : vector<2x128xf32>
    %cst_304 = arith.constant 1.000000e+00 : f32
    %956 = vector.broadcast %cst_304 : f32 to vector<2x128xf32>
    %957 = arith.divf %956, %955 : vector<2x128xf32>
    %958 = vector.extract_strided_slice %941 {offsets = [0, 256], sizes = [2, 128], strides = [1, 1]} : vector<2x512xf32> to vector<2x128xf32>
    %959 = math.tanh %958 : vector<2x128xf32>
    %960 = vector.extract_strided_slice %941 {offsets = [0, 384], sizes = [2, 128], strides = [1, 1]} : vector<2x512xf32> to vector<2x128xf32>
    %cst_305 = arith.constant 0.000000e+00 : f32
    %961 = vector.broadcast %cst_305 : f32 to vector<2x128xf32>
    %962 = arith.subf %961, %960 : vector<2x128xf32>
    %963 = math.exp %962 : vector<2x128xf32>
    %cst_306 = arith.constant 1.000000e+00 : f32
    %964 = vector.broadcast %cst_306 : f32 to vector<2x128xf32>
    %965 = arith.addf %964, %963 : vector<2x128xf32>
    %cst_307 = arith.constant 1.000000e+00 : f32
    %966 = vector.broadcast %cst_307 : f32 to vector<2x128xf32>
    %967 = arith.divf %966, %965 : vector<2x128xf32>
    %968 = arith.mulf %957, %900 : vector<2x128xf32>
    %969 = arith.mulf %949, %959 : vector<2x128xf32>
    %970 = arith.addf %968, %969 : vector<2x128xf32>
    %971 = math.tanh %970 : vector<2x128xf32>
    %972 = arith.mulf %967, %971 : vector<2x128xf32>
    %973 = arith.truncf %936 : vector<2x128xf32> to vector<2x128xbf16>
    %cst_308 = arith.constant dense<0.000000e+00> : vector<2x512xf32>
    %974 = tpu.matmul %973, %652, %cst_308 {dimension_numbers = #tpu.dot_dimension_numbers<[1], [0], [0], [1], [0, 0, 1, 1], [], []>} : vector<2x128xbf16>, vector<128x512xbf16>, vector<2x512xf32> -> vector<2x512xf32>
    %975 = arith.addf %938, %974 : vector<2x512xf32>
    %976 = vector.extract_strided_slice %975 {offsets = [0, 0], sizes = [2, 128], strides = [1, 1]} : vector<2x512xf32> to vector<2x128xf32>
    %cst_309 = arith.constant 0.000000e+00 : f32
    %977 = vector.broadcast %cst_309 : f32 to vector<2x128xf32>
    %978 = arith.subf %977, %976 : vector<2x128xf32>
    %979 = math.exp %978 : vector<2x128xf32>
    %cst_310 = arith.constant 1.000000e+00 : f32
    %980 = vector.broadcast %cst_310 : f32 to vector<2x128xf32>
    %981 = arith.addf %980, %979 : vector<2x128xf32>
    %cst_311 = arith.constant 1.000000e+00 : f32
    %982 = vector.broadcast %cst_311 : f32 to vector<2x128xf32>
    %983 = arith.divf %982, %981 : vector<2x128xf32>
    %984 = vector.extract_strided_slice %975 {offsets = [0, 128], sizes = [2, 128], strides = [1, 1]} : vector<2x512xf32> to vector<2x128xf32>
    %cst_312 = arith.constant 0.000000e+00 : f32
    %985 = vector.broadcast %cst_312 : f32 to vector<2x128xf32>
    %986 = arith.subf %985, %984 : vector<2x128xf32>
    %987 = math.exp %986 : vector<2x128xf32>
    %cst_313 = arith.constant 1.000000e+00 : f32
    %988 = vector.broadcast %cst_313 : f32 to vector<2x128xf32>
    %989 = arith.addf %988, %987 : vector<2x128xf32>
    %cst_314 = arith.constant 1.000000e+00 : f32
    %990 = vector.broadcast %cst_314 : f32 to vector<2x128xf32>
    %991 = arith.divf %990, %989 : vector<2x128xf32>
    %992 = vector.extract_strided_slice %975 {offsets = [0, 256], sizes = [2, 128], strides = [1, 1]} : vector<2x512xf32> to vector<2x128xf32>
    %993 = math.tanh %992 : vector<2x128xf32>
    %994 = vector.extract_strided_slice %975 {offsets = [0, 384], sizes = [2, 128], strides = [1, 1]} : vector<2x512xf32> to vector<2x128xf32>
    %cst_315 = arith.constant 0.000000e+00 : f32
    %995 = vector.broadcast %cst_315 : f32 to vector<2x128xf32>
    %996 = arith.subf %995, %994 : vector<2x128xf32>
    %997 = math.exp %996 : vector<2x128xf32>
    %cst_316 = arith.constant 1.000000e+00 : f32
    %998 = vector.broadcast %cst_316 : f32 to vector<2x128xf32>
    %999 = arith.addf %998, %997 : vector<2x128xf32>
    %cst_317 = arith.constant 1.000000e+00 : f32
    %1000 = vector.broadcast %cst_317 : f32 to vector<2x128xf32>
    %1001 = arith.divf %1000, %999 : vector<2x128xf32>
    %1002 = arith.mulf %991, %934 : vector<2x128xf32>
    %1003 = arith.mulf %983, %993 : vector<2x128xf32>
    %1004 = arith.addf %1002, %1003 : vector<2x128xf32>
    %1005 = math.tanh %1004 : vector<2x128xf32>
    %1006 = arith.mulf %1001, %1005 : vector<2x128xf32>
    %1007 = vector.extract_strided_slice %650 {offsets = [10, 0], sizes = [2, 512], strides = [1, 1]} : vector<20x1024xf32> to vector<2x512xf32>
    %1008 = vector.extract_strided_slice %650 {offsets = [8, 512], sizes = [2, 512], strides = [1, 1]} : vector<20x1024xf32> to vector<2x512xf32>
    %1009 = arith.truncf %972 : vector<2x128xf32> to vector<2x128xbf16>
    %cst_318 = arith.constant dense<0.000000e+00> : vector<2x512xf32>
    %1010 = tpu.matmul %1009, %651, %cst_318 {dimension_numbers = #tpu.dot_dimension_numbers<[1], [0], [0], [1], [0, 0, 1, 1], [], []>} : vector<2x128xbf16>, vector<128x512xbf16>, vector<2x512xf32> -> vector<2x512xf32>
    %1011 = arith.addf %1007, %1010 : vector<2x512xf32>
    %1012 = vector.extract_strided_slice %1011 {offsets = [0, 0], sizes = [2, 128], strides = [1, 1]} : vector<2x512xf32> to vector<2x128xf32>
    %cst_319 = arith.constant 0.000000e+00 : f32
    %1013 = vector.broadcast %cst_319 : f32 to vector<2x128xf32>
    %1014 = arith.subf %1013, %1012 : vector<2x128xf32>
    %1015 = math.exp %1014 : vector<2x128xf32>
    %cst_320 = arith.constant 1.000000e+00 : f32
    %1016 = vector.broadcast %cst_320 : f32 to vector<2x128xf32>
    %1017 = arith.addf %1016, %1015 : vector<2x128xf32>
    %cst_321 = arith.constant 1.000000e+00 : f32
    %1018 = vector.broadcast %cst_321 : f32 to vector<2x128xf32>
    %1019 = arith.divf %1018, %1017 : vector<2x128xf32>
    %1020 = vector.extract_strided_slice %1011 {offsets = [0, 128], sizes = [2, 128], strides = [1, 1]} : vector<2x512xf32> to vector<2x128xf32>
    %cst_322 = arith.constant 0.000000e+00 : f32
    %1021 = vector.broadcast %cst_322 : f32 to vector<2x128xf32>
    %1022 = arith.subf %1021, %1020 : vector<2x128xf32>
    %1023 = math.exp %1022 : vector<2x128xf32>
    %cst_323 = arith.constant 1.000000e+00 : f32
    %1024 = vector.broadcast %cst_323 : f32 to vector<2x128xf32>
    %1025 = arith.addf %1024, %1023 : vector<2x128xf32>
    %cst_324 = arith.constant 1.000000e+00 : f32
    %1026 = vector.broadcast %cst_324 : f32 to vector<2x128xf32>
    %1027 = arith.divf %1026, %1025 : vector<2x128xf32>
    %1028 = vector.extract_strided_slice %1011 {offsets = [0, 256], sizes = [2, 128], strides = [1, 1]} : vector<2x512xf32> to vector<2x128xf32>
    %1029 = math.tanh %1028 : vector<2x128xf32>
    %1030 = vector.extract_strided_slice %1011 {offsets = [0, 384], sizes = [2, 128], strides = [1, 1]} : vector<2x512xf32> to vector<2x128xf32>
    %cst_325 = arith.constant 0.000000e+00 : f32
    %1031 = vector.broadcast %cst_325 : f32 to vector<2x128xf32>
    %1032 = arith.subf %1031, %1030 : vector<2x128xf32>
    %1033 = math.exp %1032 : vector<2x128xf32>
    %cst_326 = arith.constant 1.000000e+00 : f32
    %1034 = vector.broadcast %cst_326 : f32 to vector<2x128xf32>
    %1035 = arith.addf %1034, %1033 : vector<2x128xf32>
    %cst_327 = arith.constant 1.000000e+00 : f32
    %1036 = vector.broadcast %cst_327 : f32 to vector<2x128xf32>
    %1037 = arith.divf %1036, %1035 : vector<2x128xf32>
    %1038 = arith.mulf %1027, %970 : vector<2x128xf32>
    %1039 = arith.mulf %1019, %1029 : vector<2x128xf32>
    %1040 = arith.addf %1038, %1039 : vector<2x128xf32>
    %1041 = math.tanh %1040 : vector<2x128xf32>
    %1042 = arith.mulf %1037, %1041 : vector<2x128xf32>
    %1043 = arith.truncf %1006 : vector<2x128xf32> to vector<2x128xbf16>
    %cst_328 = arith.constant dense<0.000000e+00> : vector<2x512xf32>
    %1044 = tpu.matmul %1043, %652, %cst_328 {dimension_numbers = #tpu.dot_dimension_numbers<[1], [0], [0], [1], [0, 0, 1, 1], [], []>} : vector<2x128xbf16>, vector<128x512xbf16>, vector<2x512xf32> -> vector<2x512xf32>
    %1045 = arith.addf %1008, %1044 : vector<2x512xf32>
    %1046 = vector.extract_strided_slice %1045 {offsets = [0, 0], sizes = [2, 128], strides = [1, 1]} : vector<2x512xf32> to vector<2x128xf32>
    %cst_329 = arith.constant 0.000000e+00 : f32
    %1047 = vector.broadcast %cst_329 : f32 to vector<2x128xf32>
    %1048 = arith.subf %1047, %1046 : vector<2x128xf32>
    %1049 = math.exp %1048 : vector<2x128xf32>
    %cst_330 = arith.constant 1.000000e+00 : f32
    %1050 = vector.broadcast %cst_330 : f32 to vector<2x128xf32>
    %1051 = arith.addf %1050, %1049 : vector<2x128xf32>
    %cst_331 = arith.constant 1.000000e+00 : f32
    %1052 = vector.broadcast %cst_331 : f32 to vector<2x128xf32>
    %1053 = arith.divf %1052, %1051 : vector<2x128xf32>
    %1054 = vector.extract_strided_slice %1045 {offsets = [0, 128], sizes = [2, 128], strides = [1, 1]} : vector<2x512xf32> to vector<2x128xf32>
    %cst_332 = arith.constant 0.000000e+00 : f32
    %1055 = vector.broadcast %cst_332 : f32 to vector<2x128xf32>
    %1056 = arith.subf %1055, %1054 : vector<2x128xf32>
    %1057 = math.exp %1056 : vector<2x128xf32>
    %cst_333 = arith.constant 1.000000e+00 : f32
    %1058 = vector.broadcast %cst_333 : f32 to vector<2x128xf32>
    %1059 = arith.addf %1058, %1057 : vector<2x128xf32>
    %cst_334 = arith.constant 1.000000e+00 : f32
    %1060 = vector.broadcast %cst_334 : f32 to vector<2x128xf32>
    %1061 = arith.divf %1060, %1059 : vector<2x128xf32>
    %1062 = vector.extract_strided_slice %1045 {offsets = [0, 256], sizes = [2, 128], strides = [1, 1]} : vector<2x512xf32> to vector<2x128xf32>
    %1063 = math.tanh %1062 : vector<2x128xf32>
    %1064 = vector.extract_strided_slice %1045 {offsets = [0, 384], sizes = [2, 128], strides = [1, 1]} : vector<2x512xf32> to vector<2x128xf32>
    %cst_335 = arith.constant 0.000000e+00 : f32
    %1065 = vector.broadcast %cst_335 : f32 to vector<2x128xf32>
    %1066 = arith.subf %1065, %1064 : vector<2x128xf32>
    %1067 = math.exp %1066 : vector<2x128xf32>
    %cst_336 = arith.constant 1.000000e+00 : f32
    %1068 = vector.broadcast %cst_336 : f32 to vector<2x128xf32>
    %1069 = arith.addf %1068, %1067 : vector<2x128xf32>
    %cst_337 = arith.constant 1.000000e+00 : f32
    %1070 = vector.broadcast %cst_337 : f32 to vector<2x128xf32>
    %1071 = arith.divf %1070, %1069 : vector<2x128xf32>
    %1072 = arith.mulf %1061, %1004 : vector<2x128xf32>
    %1073 = arith.mulf %1053, %1063 : vector<2x128xf32>
    %1074 = arith.addf %1072, %1073 : vector<2x128xf32>
    %1075 = math.tanh %1074 : vector<2x128xf32>
    %1076 = arith.mulf %1071, %1075 : vector<2x128xf32>
    %1077 = vector.extract_strided_slice %650 {offsets = [12, 0], sizes = [2, 512], strides = [1, 1]} : vector<20x1024xf32> to vector<2x512xf32>
    %1078 = vector.extract_strided_slice %650 {offsets = [6, 512], sizes = [2, 512], strides = [1, 1]} : vector<20x1024xf32> to vector<2x512xf32>
    %1079 = arith.truncf %1042 : vector<2x128xf32> to vector<2x128xbf16>
    %cst_338 = arith.constant dense<0.000000e+00> : vector<2x512xf32>
    %1080 = tpu.matmul %1079, %651, %cst_338 {dimension_numbers = #tpu.dot_dimension_numbers<[1], [0], [0], [1], [0, 0, 1, 1], [], []>} : vector<2x128xbf16>, vector<128x512xbf16>, vector<2x512xf32> -> vector<2x512xf32>
    %1081 = arith.addf %1077, %1080 : vector<2x512xf32>
    %1082 = vector.extract_strided_slice %1081 {offsets = [0, 0], sizes = [2, 128], strides = [1, 1]} : vector<2x512xf32> to vector<2x128xf32>
    %cst_339 = arith.constant 0.000000e+00 : f32
    %1083 = vector.broadcast %cst_339 : f32 to vector<2x128xf32>
    %1084 = arith.subf %1083, %1082 : vector<2x128xf32>
    %1085 = math.exp %1084 : vector<2x128xf32>
    %cst_340 = arith.constant 1.000000e+00 : f32
    %1086 = vector.broadcast %cst_340 : f32 to vector<2x128xf32>
    %1087 = arith.addf %1086, %1085 : vector<2x128xf32>
    %cst_341 = arith.constant 1.000000e+00 : f32
    %1088 = vector.broadcast %cst_341 : f32 to vector<2x128xf32>
    %1089 = arith.divf %1088, %1087 : vector<2x128xf32>
    %1090 = vector.extract_strided_slice %1081 {offsets = [0, 128], sizes = [2, 128], strides = [1, 1]} : vector<2x512xf32> to vector<2x128xf32>
    %cst_342 = arith.constant 0.000000e+00 : f32
    %1091 = vector.broadcast %cst_342 : f32 to vector<2x128xf32>
    %1092 = arith.subf %1091, %1090 : vector<2x128xf32>
    %1093 = math.exp %1092 : vector<2x128xf32>
    %cst_343 = arith.constant 1.000000e+00 : f32
    %1094 = vector.broadcast %cst_343 : f32 to vector<2x128xf32>
    %1095 = arith.addf %1094, %1093 : vector<2x128xf32>
    %cst_344 = arith.constant 1.000000e+00 : f32
    %1096 = vector.broadcast %cst_344 : f32 to vector<2x128xf32>
    %1097 = arith.divf %1096, %1095 : vector<2x128xf32>
    %1098 = vector.extract_strided_slice %1081 {offsets = [0, 256], sizes = [2, 128], strides = [1, 1]} : vector<2x512xf32> to vector<2x128xf32>
    %1099 = math.tanh %1098 : vector<2x128xf32>
    %1100 = vector.extract_strided_slice %1081 {offsets = [0, 384], sizes = [2, 128], strides = [1, 1]} : vector<2x512xf32> to vector<2x128xf32>
    %cst_345 = arith.constant 0.000000e+00 : f32
    %1101 = vector.broadcast %cst_345 : f32 to vector<2x128xf32>
    %1102 = arith.subf %1101, %1100 : vector<2x128xf32>
    %1103 = math.exp %1102 : vector<2x128xf32>
    %cst_346 = arith.constant 1.000000e+00 : f32
    %1104 = vector.broadcast %cst_346 : f32 to vector<2x128xf32>
    %1105 = arith.addf %1104, %1103 : vector<2x128xf32>
    %cst_347 = arith.constant 1.000000e+00 : f32
    %1106 = vector.broadcast %cst_347 : f32 to vector<2x128xf32>
    %1107 = arith.divf %1106, %1105 : vector<2x128xf32>
    %1108 = arith.mulf %1097, %1040 : vector<2x128xf32>
    %1109 = arith.mulf %1089, %1099 : vector<2x128xf32>
    %1110 = arith.addf %1108, %1109 : vector<2x128xf32>
    %1111 = math.tanh %1110 : vector<2x128xf32>
    %1112 = arith.mulf %1107, %1111 : vector<2x128xf32>
    %1113 = arith.truncf %1076 : vector<2x128xf32> to vector<2x128xbf16>
    %cst_348 = arith.constant dense<0.000000e+00> : vector<2x512xf32>
    %1114 = tpu.matmul %1113, %652, %cst_348 {dimension_numbers = #tpu.dot_dimension_numbers<[1], [0], [0], [1], [0, 0, 1, 1], [], []>} : vector<2x128xbf16>, vector<128x512xbf16>, vector<2x512xf32> -> vector<2x512xf32>
    %1115 = arith.addf %1078, %1114 : vector<2x512xf32>
    %1116 = vector.extract_strided_slice %1115 {offsets = [0, 0], sizes = [2, 128], strides = [1, 1]} : vector<2x512xf32> to vector<2x128xf32>
    %cst_349 = arith.constant 0.000000e+00 : f32
    %1117 = vector.broadcast %cst_349 : f32 to vector<2x128xf32>
    %1118 = arith.subf %1117, %1116 : vector<2x128xf32>
    %1119 = math.exp %1118 : vector<2x128xf32>
    %cst_350 = arith.constant 1.000000e+00 : f32
    %1120 = vector.broadcast %cst_350 : f32 to vector<2x128xf32>
    %1121 = arith.addf %1120, %1119 : vector<2x128xf32>
    %cst_351 = arith.constant 1.000000e+00 : f32
    %1122 = vector.broadcast %cst_351 : f32 to vector<2x128xf32>
    %1123 = arith.divf %1122, %1121 : vector<2x128xf32>
    %1124 = vector.extract_strided_slice %1115 {offsets = [0, 128], sizes = [2, 128], strides = [1, 1]} : vector<2x512xf32> to vector<2x128xf32>
    %cst_352 = arith.constant 0.000000e+00 : f32
    %1125 = vector.broadcast %cst_352 : f32 to vector<2x128xf32>
    %1126 = arith.subf %1125, %1124 : vector<2x128xf32>
    %1127 = math.exp %1126 : vector<2x128xf32>
    %cst_353 = arith.constant 1.000000e+00 : f32
    %1128 = vector.broadcast %cst_353 : f32 to vector<2x128xf32>
    %1129 = arith.addf %1128, %1127 : vector<2x128xf32>
    %cst_354 = arith.constant 1.000000e+00 : f32
    %1130 = vector.broadcast %cst_354 : f32 to vector<2x128xf32>
    %1131 = arith.divf %1130, %1129 : vector<2x128xf32>
    %1132 = vector.extract_strided_slice %1115 {offsets = [0, 256], sizes = [2, 128], strides = [1, 1]} : vector<2x512xf32> to vector<2x128xf32>
    %1133 = math.tanh %1132 : vector<2x128xf32>
    %1134 = vector.extract_strided_slice %1115 {offsets = [0, 384], sizes = [2, 128], strides = [1, 1]} : vector<2x512xf32> to vector<2x128xf32>
    %cst_355 = arith.constant 0.000000e+00 : f32
    %1135 = vector.broadcast %cst_355 : f32 to vector<2x128xf32>
    %1136 = arith.subf %1135, %1134 : vector<2x128xf32>
    %1137 = math.exp %1136 : vector<2x128xf32>
    %cst_356 = arith.constant 1.000000e+00 : f32
    %1138 = vector.broadcast %cst_356 : f32 to vector<2x128xf32>
    %1139 = arith.addf %1138, %1137 : vector<2x128xf32>
    %cst_357 = arith.constant 1.000000e+00 : f32
    %1140 = vector.broadcast %cst_357 : f32 to vector<2x128xf32>
    %1141 = arith.divf %1140, %1139 : vector<2x128xf32>
    %1142 = arith.mulf %1131, %1074 : vector<2x128xf32>
    %1143 = arith.mulf %1123, %1133 : vector<2x128xf32>
    %1144 = arith.addf %1142, %1143 : vector<2x128xf32>
    %1145 = math.tanh %1144 : vector<2x128xf32>
    %1146 = arith.mulf %1141, %1145 : vector<2x128xf32>
    %1147 = vector.extract_strided_slice %650 {offsets = [14, 0], sizes = [2, 512], strides = [1, 1]} : vector<20x1024xf32> to vector<2x512xf32>
    %1148 = vector.extract_strided_slice %650 {offsets = [4, 512], sizes = [2, 512], strides = [1, 1]} : vector<20x1024xf32> to vector<2x512xf32>
    %1149 = arith.truncf %1112 : vector<2x128xf32> to vector<2x128xbf16>
    %cst_358 = arith.constant dense<0.000000e+00> : vector<2x512xf32>
    %1150 = tpu.matmul %1149, %651, %cst_358 {dimension_numbers = #tpu.dot_dimension_numbers<[1], [0], [0], [1], [0, 0, 1, 1], [], []>} : vector<2x128xbf16>, vector<128x512xbf16>, vector<2x512xf32> -> vector<2x512xf32>
    %1151 = arith.addf %1147, %1150 : vector<2x512xf32>
    %1152 = vector.extract_strided_slice %1151 {offsets = [0, 0], sizes = [2, 128], strides = [1, 1]} : vector<2x512xf32> to vector<2x128xf32>
    %cst_359 = arith.constant 0.000000e+00 : f32
    %1153 = vector.broadcast %cst_359 : f32 to vector<2x128xf32>
    %1154 = arith.subf %1153, %1152 : vector<2x128xf32>
    %1155 = math.exp %1154 : vector<2x128xf32>
    %cst_360 = arith.constant 1.000000e+00 : f32
    %1156 = vector.broadcast %cst_360 : f32 to vector<2x128xf32>
    %1157 = arith.addf %1156, %1155 : vector<2x128xf32>
    %cst_361 = arith.constant 1.000000e+00 : f32
    %1158 = vector.broadcast %cst_361 : f32 to vector<2x128xf32>
    %1159 = arith.divf %1158, %1157 : vector<2x128xf32>
    %1160 = vector.extract_strided_slice %1151 {offsets = [0, 128], sizes = [2, 128], strides = [1, 1]} : vector<2x512xf32> to vector<2x128xf32>
    %cst_362 = arith.constant 0.000000e+00 : f32
    %1161 = vector.broadcast %cst_362 : f32 to vector<2x128xf32>
    %1162 = arith.subf %1161, %1160 : vector<2x128xf32>
    %1163 = math.exp %1162 : vector<2x128xf32>
    %cst_363 = arith.constant 1.000000e+00 : f32
    %1164 = vector.broadcast %cst_363 : f32 to vector<2x128xf32>
    %1165 = arith.addf %1164, %1163 : vector<2x128xf32>
    %cst_364 = arith.constant 1.000000e+00 : f32
    %1166 = vector.broadcast %cst_364 : f32 to vector<2x128xf32>
    %1167 = arith.divf %1166, %1165 : vector<2x128xf32>
    %1168 = vector.extract_strided_slice %1151 {offsets = [0, 256], sizes = [2, 128], strides = [1, 1]} : vector<2x512xf32> to vector<2x128xf32>
    %1169 = math.tanh %1168 : vector<2x128xf32>
    %1170 = vector.extract_strided_slice %1151 {offsets = [0, 384], sizes = [2, 128], strides = [1, 1]} : vector<2x512xf32> to vector<2x128xf32>
    %cst_365 = arith.constant 0.000000e+00 : f32
    %1171 = vector.broadcast %cst_365 : f32 to vector<2x128xf32>
    %1172 = arith.subf %1171, %1170 : vector<2x128xf32>
    %1173 = math.exp %1172 : vector<2x128xf32>
    %cst_366 = arith.constant 1.000000e+00 : f32
    %1174 = vector.broadcast %cst_366 : f32 to vector<2x128xf32>
    %1175 = arith.addf %1174, %1173 : vector<2x128xf32>
    %cst_367 = arith.constant 1.000000e+00 : f32
    %1176 = vector.broadcast %cst_367 : f32 to vector<2x128xf32>
    %1177 = arith.divf %1176, %1175 : vector<2x128xf32>
    %1178 = arith.mulf %1167, %1110 : vector<2x128xf32>
    %1179 = arith.mulf %1159, %1169 : vector<2x128xf32>
    %1180 = arith.addf %1178, %1179 : vector<2x128xf32>
    %1181 = math.tanh %1180 : vector<2x128xf32>
    %1182 = arith.mulf %1177, %1181 : vector<2x128xf32>
    %1183 = arith.truncf %1146 : vector<2x128xf32> to vector<2x128xbf16>
    %cst_368 = arith.constant dense<0.000000e+00> : vector<2x512xf32>
    %1184 = tpu.matmul %1183, %652, %cst_368 {dimension_numbers = #tpu.dot_dimension_numbers<[1], [0], [0], [1], [0, 0, 1, 1], [], []>} : vector<2x128xbf16>, vector<128x512xbf16>, vector<2x512xf32> -> vector<2x512xf32>
    %1185 = arith.addf %1148, %1184 : vector<2x512xf32>
    %1186 = vector.extract_strided_slice %1185 {offsets = [0, 0], sizes = [2, 128], strides = [1, 1]} : vector<2x512xf32> to vector<2x128xf32>
    %cst_369 = arith.constant 0.000000e+00 : f32
    %1187 = vector.broadcast %cst_369 : f32 to vector<2x128xf32>
    %1188 = arith.subf %1187, %1186 : vector<2x128xf32>
    %1189 = math.exp %1188 : vector<2x128xf32>
    %cst_370 = arith.constant 1.000000e+00 : f32
    %1190 = vector.broadcast %cst_370 : f32 to vector<2x128xf32>
    %1191 = arith.addf %1190, %1189 : vector<2x128xf32>
    %cst_371 = arith.constant 1.000000e+00 : f32
    %1192 = vector.broadcast %cst_371 : f32 to vector<2x128xf32>
    %1193 = arith.divf %1192, %1191 : vector<2x128xf32>
    %1194 = vector.extract_strided_slice %1185 {offsets = [0, 128], sizes = [2, 128], strides = [1, 1]} : vector<2x512xf32> to vector<2x128xf32>
    %cst_372 = arith.constant 0.000000e+00 : f32
    %1195 = vector.broadcast %cst_372 : f32 to vector<2x128xf32>
    %1196 = arith.subf %1195, %1194 : vector<2x128xf32>
    %1197 = math.exp %1196 : vector<2x128xf32>
    %cst_373 = arith.constant 1.000000e+00 : f32
    %1198 = vector.broadcast %cst_373 : f32 to vector<2x128xf32>
    %1199 = arith.addf %1198, %1197 : vector<2x128xf32>
    %cst_374 = arith.constant 1.000000e+00 : f32
    %1200 = vector.broadcast %cst_374 : f32 to vector<2x128xf32>
    %1201 = arith.divf %1200, %1199 : vector<2x128xf32>
    %1202 = vector.extract_strided_slice %1185 {offsets = [0, 256], sizes = [2, 128], strides = [1, 1]} : vector<2x512xf32> to vector<2x128xf32>
    %1203 = math.tanh %1202 : vector<2x128xf32>
    %1204 = vector.extract_strided_slice %1185 {offsets = [0, 384], sizes = [2, 128], strides = [1, 1]} : vector<2x512xf32> to vector<2x128xf32>
    %cst_375 = arith.constant 0.000000e+00 : f32
    %1205 = vector.broadcast %cst_375 : f32 to vector<2x128xf32>
    %1206 = arith.subf %1205, %1204 : vector<2x128xf32>
    %1207 = math.exp %1206 : vector<2x128xf32>
    %cst_376 = arith.constant 1.000000e+00 : f32
    %1208 = vector.broadcast %cst_376 : f32 to vector<2x128xf32>
    %1209 = arith.addf %1208, %1207 : vector<2x128xf32>
    %cst_377 = arith.constant 1.000000e+00 : f32
    %1210 = vector.broadcast %cst_377 : f32 to vector<2x128xf32>
    %1211 = arith.divf %1210, %1209 : vector<2x128xf32>
    %1212 = arith.mulf %1201, %1144 : vector<2x128xf32>
    %1213 = arith.mulf %1193, %1203 : vector<2x128xf32>
    %1214 = arith.addf %1212, %1213 : vector<2x128xf32>
    %1215 = math.tanh %1214 : vector<2x128xf32>
    %1216 = arith.mulf %1211, %1215 : vector<2x128xf32>
    %1217 = vector.extract_strided_slice %650 {offsets = [16, 0], sizes = [2, 512], strides = [1, 1]} : vector<20x1024xf32> to vector<2x512xf32>
    %1218 = vector.extract_strided_slice %650 {offsets = [2, 512], sizes = [2, 512], strides = [1, 1]} : vector<20x1024xf32> to vector<2x512xf32>
    %1219 = arith.truncf %1182 : vector<2x128xf32> to vector<2x128xbf16>
    %cst_378 = arith.constant dense<0.000000e+00> : vector<2x512xf32>
    %1220 = tpu.matmul %1219, %651, %cst_378 {dimension_numbers = #tpu.dot_dimension_numbers<[1], [0], [0], [1], [0, 0, 1, 1], [], []>} : vector<2x128xbf16>, vector<128x512xbf16>, vector<2x512xf32> -> vector<2x512xf32>
    %1221 = arith.addf %1217, %1220 : vector<2x512xf32>
    %1222 = vector.extract_strided_slice %1221 {offsets = [0, 0], sizes = [2, 128], strides = [1, 1]} : vector<2x512xf32> to vector<2x128xf32>
    %cst_379 = arith.constant 0.000000e+00 : f32
    %1223 = vector.broadcast %cst_379 : f32 to vector<2x128xf32>
    %1224 = arith.subf %1223, %1222 : vector<2x128xf32>
    %1225 = math.exp %1224 : vector<2x128xf32>
    %cst_380 = arith.constant 1.000000e+00 : f32
    %1226 = vector.broadcast %cst_380 : f32 to vector<2x128xf32>
    %1227 = arith.addf %1226, %1225 : vector<2x128xf32>
    %cst_381 = arith.constant 1.000000e+00 : f32
    %1228 = vector.broadcast %cst_381 : f32 to vector<2x128xf32>
    %1229 = arith.divf %1228, %1227 : vector<2x128xf32>
    %1230 = vector.extract_strided_slice %1221 {offsets = [0, 128], sizes = [2, 128], strides = [1, 1]} : vector<2x512xf32> to vector<2x128xf32>
    %cst_382 = arith.constant 0.000000e+00 : f32
    %1231 = vector.broadcast %cst_382 : f32 to vector<2x128xf32>
    %1232 = arith.subf %1231, %1230 : vector<2x128xf32>
    %1233 = math.exp %1232 : vector<2x128xf32>
    %cst_383 = arith.constant 1.000000e+00 : f32
    %1234 = vector.broadcast %cst_383 : f32 to vector<2x128xf32>
    %1235 = arith.addf %1234, %1233 : vector<2x128xf32>
    %cst_384 = arith.constant 1.000000e+00 : f32
    %1236 = vector.broadcast %cst_384 : f32 to vector<2x128xf32>
    %1237 = arith.divf %1236, %1235 : vector<2x128xf32>
    %1238 = vector.extract_strided_slice %1221 {offsets = [0, 256], sizes = [2, 128], strides = [1, 1]} : vector<2x512xf32> to vector<2x128xf32>
    %1239 = math.tanh %1238 : vector<2x128xf32>
    %1240 = vector.extract_strided_slice %1221 {offsets = [0, 384], sizes = [2, 128], strides = [1, 1]} : vector<2x512xf32> to vector<2x128xf32>
    %cst_385 = arith.constant 0.000000e+00 : f32
    %1241 = vector.broadcast %cst_385 : f32 to vector<2x128xf32>
    %1242 = arith.subf %1241, %1240 : vector<2x128xf32>
    %1243 = math.exp %1242 : vector<2x128xf32>
    %cst_386 = arith.constant 1.000000e+00 : f32
    %1244 = vector.broadcast %cst_386 : f32 to vector<2x128xf32>
    %1245 = arith.addf %1244, %1243 : vector<2x128xf32>
    %cst_387 = arith.constant 1.000000e+00 : f32
    %1246 = vector.broadcast %cst_387 : f32 to vector<2x128xf32>
    %1247 = arith.divf %1246, %1245 : vector<2x128xf32>
    %1248 = arith.mulf %1237, %1180 : vector<2x128xf32>
    %1249 = arith.mulf %1229, %1239 : vector<2x128xf32>
    %1250 = arith.addf %1248, %1249 : vector<2x128xf32>
    %1251 = math.tanh %1250 : vector<2x128xf32>
    %1252 = arith.mulf %1247, %1251 : vector<2x128xf32>
    %1253 = arith.truncf %1216 : vector<2x128xf32> to vector<2x128xbf16>
    %cst_388 = arith.constant dense<0.000000e+00> : vector<2x512xf32>
    %1254 = tpu.matmul %1253, %652, %cst_388 {dimension_numbers = #tpu.dot_dimension_numbers<[1], [0], [0], [1], [0, 0, 1, 1], [], []>} : vector<2x128xbf16>, vector<128x512xbf16>, vector<2x512xf32> -> vector<2x512xf32>
    %1255 = arith.addf %1218, %1254 : vector<2x512xf32>
    %1256 = vector.extract_strided_slice %1255 {offsets = [0, 0], sizes = [2, 128], strides = [1, 1]} : vector<2x512xf32> to vector<2x128xf32>
    %cst_389 = arith.constant 0.000000e+00 : f32
    %1257 = vector.broadcast %cst_389 : f32 to vector<2x128xf32>
    %1258 = arith.subf %1257, %1256 : vector<2x128xf32>
    %1259 = math.exp %1258 : vector<2x128xf32>
    %cst_390 = arith.constant 1.000000e+00 : f32
    %1260 = vector.broadcast %cst_390 : f32 to vector<2x128xf32>
    %1261 = arith.addf %1260, %1259 : vector<2x128xf32>
    %cst_391 = arith.constant 1.000000e+00 : f32
    %1262 = vector.broadcast %cst_391 : f32 to vector<2x128xf32>
    %1263 = arith.divf %1262, %1261 : vector<2x128xf32>
    %1264 = vector.extract_strided_slice %1255 {offsets = [0, 128], sizes = [2, 128], strides = [1, 1]} : vector<2x512xf32> to vector<2x128xf32>
    %cst_392 = arith.constant 0.000000e+00 : f32
    %1265 = vector.broadcast %cst_392 : f32 to vector<2x128xf32>
    %1266 = arith.subf %1265, %1264 : vector<2x128xf32>
    %1267 = math.exp %1266 : vector<2x128xf32>
    %cst_393 = arith.constant 1.000000e+00 : f32
    %1268 = vector.broadcast %cst_393 : f32 to vector<2x128xf32>
    %1269 = arith.addf %1268, %1267 : vector<2x128xf32>
    %cst_394 = arith.constant 1.000000e+00 : f32
    %1270 = vector.broadcast %cst_394 : f32 to vector<2x128xf32>
    %1271 = arith.divf %1270, %1269 : vector<2x128xf32>
    %1272 = vector.extract_strided_slice %1255 {offsets = [0, 256], sizes = [2, 128], strides = [1, 1]} : vector<2x512xf32> to vector<2x128xf32>
    %1273 = math.tanh %1272 : vector<2x128xf32>
    %1274 = vector.extract_strided_slice %1255 {offsets = [0, 384], sizes = [2, 128], strides = [1, 1]} : vector<2x512xf32> to vector<2x128xf32>
    %cst_395 = arith.constant 0.000000e+00 : f32
    %1275 = vector.broadcast %cst_395 : f32 to vector<2x128xf32>
    %1276 = arith.subf %1275, %1274 : vector<2x128xf32>
    %1277 = math.exp %1276 : vector<2x128xf32>
    %cst_396 = arith.constant 1.000000e+00 : f32
    %1278 = vector.broadcast %cst_396 : f32 to vector<2x128xf32>
    %1279 = arith.addf %1278, %1277 : vector<2x128xf32>
    %cst_397 = arith.constant 1.000000e+00 : f32
    %1280 = vector.broadcast %cst_397 : f32 to vector<2x128xf32>
    %1281 = arith.divf %1280, %1279 : vector<2x128xf32>
    %1282 = arith.mulf %1271, %1214 : vector<2x128xf32>
    %1283 = arith.mulf %1263, %1273 : vector<2x128xf32>
    %1284 = arith.addf %1282, %1283 : vector<2x128xf32>
    %1285 = math.tanh %1284 : vector<2x128xf32>
    %1286 = arith.mulf %1281, %1285 : vector<2x128xf32>
    %1287 = vector.extract_strided_slice %650 {offsets = [18, 0], sizes = [2, 512], strides = [1, 1]} : vector<20x1024xf32> to vector<2x512xf32>
    %1288 = vector.extract_strided_slice %650 {offsets = [0, 512], sizes = [2, 512], strides = [1, 1]} : vector<20x1024xf32> to vector<2x512xf32>
    %1289 = arith.truncf %1252 : vector<2x128xf32> to vector<2x128xbf16>
    %cst_398 = arith.constant dense<0.000000e+00> : vector<2x512xf32>
    %1290 = tpu.matmul %1289, %651, %cst_398 {dimension_numbers = #tpu.dot_dimension_numbers<[1], [0], [0], [1], [0, 0, 1, 1], [], []>} : vector<2x128xbf16>, vector<128x512xbf16>, vector<2x512xf32> -> vector<2x512xf32>
    %1291 = arith.addf %1287, %1290 : vector<2x512xf32>
    %1292 = vector.extract_strided_slice %1291 {offsets = [0, 0], sizes = [2, 128], strides = [1, 1]} : vector<2x512xf32> to vector<2x128xf32>
    %cst_399 = arith.constant 0.000000e+00 : f32
    %1293 = vector.broadcast %cst_399 : f32 to vector<2x128xf32>
    %1294 = arith.subf %1293, %1292 : vector<2x128xf32>
    %1295 = math.exp %1294 : vector<2x128xf32>
    %cst_400 = arith.constant 1.000000e+00 : f32
    %1296 = vector.broadcast %cst_400 : f32 to vector<2x128xf32>
    %1297 = arith.addf %1296, %1295 : vector<2x128xf32>
    %cst_401 = arith.constant 1.000000e+00 : f32
    %1298 = vector.broadcast %cst_401 : f32 to vector<2x128xf32>
    %1299 = arith.divf %1298, %1297 : vector<2x128xf32>
    %1300 = vector.extract_strided_slice %1291 {offsets = [0, 128], sizes = [2, 128], strides = [1, 1]} : vector<2x512xf32> to vector<2x128xf32>
    %cst_402 = arith.constant 0.000000e+00 : f32
    %1301 = vector.broadcast %cst_402 : f32 to vector<2x128xf32>
    %1302 = arith.subf %1301, %1300 : vector<2x128xf32>
    %1303 = math.exp %1302 : vector<2x128xf32>
    %cst_403 = arith.constant 1.000000e+00 : f32
    %1304 = vector.broadcast %cst_403 : f32 to vector<2x128xf32>
    %1305 = arith.addf %1304, %1303 : vector<2x128xf32>
    %cst_404 = arith.constant 1.000000e+00 : f32
    %1306 = vector.broadcast %cst_404 : f32 to vector<2x128xf32>
    %1307 = arith.divf %1306, %1305 : vector<2x128xf32>
    %1308 = vector.extract_strided_slice %1291 {offsets = [0, 256], sizes = [2, 128], strides = [1, 1]} : vector<2x512xf32> to vector<2x128xf32>
    %1309 = math.tanh %1308 : vector<2x128xf32>
    %1310 = vector.extract_strided_slice %1291 {offsets = [0, 384], sizes = [2, 128], strides = [1, 1]} : vector<2x512xf32> to vector<2x128xf32>
    %cst_405 = arith.constant 0.000000e+00 : f32
    %1311 = vector.broadcast %cst_405 : f32 to vector<2x128xf32>
    %1312 = arith.subf %1311, %1310 : vector<2x128xf32>
    %1313 = math.exp %1312 : vector<2x128xf32>
    %cst_406 = arith.constant 1.000000e+00 : f32
    %1314 = vector.broadcast %cst_406 : f32 to vector<2x128xf32>
    %1315 = arith.addf %1314, %1313 : vector<2x128xf32>
    %cst_407 = arith.constant 1.000000e+00 : f32
    %1316 = vector.broadcast %cst_407 : f32 to vector<2x128xf32>
    %1317 = arith.divf %1316, %1315 : vector<2x128xf32>
    %1318 = arith.mulf %1307, %1250 : vector<2x128xf32>
    %1319 = arith.mulf %1299, %1309 : vector<2x128xf32>
    %1320 = arith.addf %1318, %1319 : vector<2x128xf32>
    %1321 = math.tanh %1320 : vector<2x128xf32>
    %1322 = arith.mulf %1317, %1321 : vector<2x128xf32>
    %1323 = arith.truncf %1286 : vector<2x128xf32> to vector<2x128xbf16>
    %cst_408 = arith.constant dense<0.000000e+00> : vector<2x512xf32>
    %1324 = tpu.matmul %1323, %652, %cst_408 {dimension_numbers = #tpu.dot_dimension_numbers<[1], [0], [0], [1], [0, 0, 1, 1], [], []>} : vector<2x128xbf16>, vector<128x512xbf16>, vector<2x512xf32> -> vector<2x512xf32>
    %1325 = arith.addf %1288, %1324 : vector<2x512xf32>
    %1326 = vector.extract_strided_slice %1325 {offsets = [0, 0], sizes = [2, 128], strides = [1, 1]} : vector<2x512xf32> to vector<2x128xf32>
    %cst_409 = arith.constant 0.000000e+00 : f32
    %1327 = vector.broadcast %cst_409 : f32 to vector<2x128xf32>
    %1328 = arith.subf %1327, %1326 : vector<2x128xf32>
    %1329 = math.exp %1328 : vector<2x128xf32>
    %cst_410 = arith.constant 1.000000e+00 : f32
    %1330 = vector.broadcast %cst_410 : f32 to vector<2x128xf32>
    %1331 = arith.addf %1330, %1329 : vector<2x128xf32>
    %cst_411 = arith.constant 1.000000e+00 : f32
    %1332 = vector.broadcast %cst_411 : f32 to vector<2x128xf32>
    %1333 = arith.divf %1332, %1331 : vector<2x128xf32>
    %1334 = vector.extract_strided_slice %1325 {offsets = [0, 128], sizes = [2, 128], strides = [1, 1]} : vector<2x512xf32> to vector<2x128xf32>
    %cst_412 = arith.constant 0.000000e+00 : f32
    %1335 = vector.broadcast %cst_412 : f32 to vector<2x128xf32>
    %1336 = arith.subf %1335, %1334 : vector<2x128xf32>
    %1337 = math.exp %1336 : vector<2x128xf32>
    %cst_413 = arith.constant 1.000000e+00 : f32
    %1338 = vector.broadcast %cst_413 : f32 to vector<2x128xf32>
    %1339 = arith.addf %1338, %1337 : vector<2x128xf32>
    %cst_414 = arith.constant 1.000000e+00 : f32
    %1340 = vector.broadcast %cst_414 : f32 to vector<2x128xf32>
    %1341 = arith.divf %1340, %1339 : vector<2x128xf32>
    %1342 = vector.extract_strided_slice %1325 {offsets = [0, 256], sizes = [2, 128], strides = [1, 1]} : vector<2x512xf32> to vector<2x128xf32>
    %1343 = math.tanh %1342 : vector<2x128xf32>
    %1344 = vector.extract_strided_slice %1325 {offsets = [0, 384], sizes = [2, 128], strides = [1, 1]} : vector<2x512xf32> to vector<2x128xf32>
    %cst_415 = arith.constant 0.000000e+00 : f32
    %1345 = vector.broadcast %cst_415 : f32 to vector<2x128xf32>
    %1346 = arith.subf %1345, %1344 : vector<2x128xf32>
    %1347 = math.exp %1346 : vector<2x128xf32>
    %cst_416 = arith.constant 1.000000e+00 : f32
    %1348 = vector.broadcast %cst_416 : f32 to vector<2x128xf32>
    %1349 = arith.addf %1348, %1347 : vector<2x128xf32>
    %cst_417 = arith.constant 1.000000e+00 : f32
    %1350 = vector.broadcast %cst_417 : f32 to vector<2x128xf32>
    %1351 = arith.divf %1350, %1349 : vector<2x128xf32>
    %1352 = arith.mulf %1341, %1284 : vector<2x128xf32>
    %1353 = arith.mulf %1333, %1343 : vector<2x128xf32>
    %1354 = arith.addf %1352, %1353 : vector<2x128xf32>
    %1355 = math.tanh %1354 : vector<2x128xf32>
    %1356 = arith.mulf %1351, %1355 : vector<2x128xf32>
    %1357 = vector.extract_strided_slice %609 {offsets = [0, 0], sizes = [2, 32], strides = [1, 1]} : vector<2x128xf32> to vector<2x32xf32>
    %1358 = vector.extract_strided_slice %643 {offsets = [0, 0], sizes = [2, 32], strides = [1, 1]} : vector<2x128xf32> to vector<2x32xf32>
    %1359 = tpu.concatenate %1357, %1358 in 1 : vector<2x32xf32>, vector<2x32xf32> -> vector<2x64xf32>
    %cst_418 = arith.constant dense<0.000000e+00> : vector<2xf32>
    %1360 = vector.multi_reduction <add>, %1357, %cst_418 [1] : vector<2x32xf32> to vector<2xf32>
    %1361 = vector.shape_cast %1360 : vector<2xf32> to vector<2x1xf32>
    %cst_419 = arith.constant dense<0.000000e+00> : vector<2xf32>
    %1362 = vector.multi_reduction <add>, %1358, %cst_419 [1] : vector<2x32xf32> to vector<2xf32>
    %1363 = vector.shape_cast %1362 : vector<2xf32> to vector<2x1xf32>
    %1364 = tpu.concatenate %1361, %1363 in 1 : vector<2x1xf32>, vector<2x1xf32> -> vector<2x2xf32>
    %cst_420 = arith.constant 3.125000e-02 : f32
    %1365 = vector.broadcast %cst_420 : f32 to vector<2x2xf32>
    %1366 = arith.mulf %1364, %1365 : vector<2x2xf32>
    %cst_421 = arith.constant dense<0xFF800000> : vector<2xf32>
    %1367 = vector.multi_reduction <maximumf>, %1357, %cst_421 [1] : vector<2x32xf32> to vector<2xf32>
    %1368 = vector.shape_cast %1367 : vector<2xf32> to vector<2x1xf32>
    %cst_422 = arith.constant dense<0xFF800000> : vector<2xf32>
    %1369 = vector.multi_reduction <maximumf>, %1358, %cst_422 [1] : vector<2x32xf32> to vector<2xf32>
    %1370 = vector.shape_cast %1369 : vector<2xf32> to vector<2x1xf32>
    %1371 = tpu.concatenate %1368, %1370 in 1 : vector<2x1xf32>, vector<2x1xf32> -> vector<2x2xf32>
    %1372 = vector.extract_strided_slice %1322 {offsets = [0, 0], sizes = [2, 32], strides = [1, 1]} : vector<2x128xf32> to vector<2x32xf32>
    %1373 = vector.extract_strided_slice %1356 {offsets = [0, 0], sizes = [2, 32], strides = [1, 1]} : vector<2x128xf32> to vector<2x32xf32>
    %1374 = tpu.concatenate %1372, %1373 in 1 : vector<2x32xf32>, vector<2x32xf32> -> vector<2x64xf32>
    %cst_423 = arith.constant dense<0.000000e+00> : vector<2xf32>
    %1375 = vector.multi_reduction <add>, %1372, %cst_423 [1] : vector<2x32xf32> to vector<2xf32>
    %1376 = vector.shape_cast %1375 : vector<2xf32> to vector<2x1xf32>
    %cst_424 = arith.constant dense<0.000000e+00> : vector<2xf32>
    %1377 = vector.multi_reduction <add>, %1373, %cst_424 [1] : vector<2x32xf32> to vector<2xf32>
    %1378 = vector.shape_cast %1377 : vector<2xf32> to vector<2x1xf32>
    %1379 = tpu.concatenate %1376, %1378 in 1 : vector<2x1xf32>, vector<2x1xf32> -> vector<2x2xf32>
    %cst_425 = arith.constant 3.125000e-02 : f32
    %1380 = vector.broadcast %cst_425 : f32 to vector<2x2xf32>
    %1381 = arith.mulf %1379, %1380 : vector<2x2xf32>
    %cst_426 = arith.constant dense<0xFF800000> : vector<2xf32>
    %1382 = vector.multi_reduction <maximumf>, %1372, %cst_426 [1] : vector<2x32xf32> to vector<2xf32>
    %1383 = vector.shape_cast %1382 : vector<2xf32> to vector<2x1xf32>
    %cst_427 = arith.constant dense<0xFF800000> : vector<2xf32>
    %1384 = vector.multi_reduction <maximumf>, %1373, %cst_427 [1] : vector<2x32xf32> to vector<2xf32>
    %1385 = vector.shape_cast %1384 : vector<2xf32> to vector<2x1xf32>
    %1386 = tpu.concatenate %1383, %1385 in 1 : vector<2x1xf32>, vector<2x1xf32> -> vector<2x2xf32>
    %1387 = tpu.concatenate %1359, %1366, %1371, %1374, %1381, %1386 in 1 : vector<2x64xf32>, vector<2x2xf32>, vector<2x2xf32>, vector<2x64xf32>, vector<2x2xf32>, vector<2x2xf32> -> vector<2x136xf32>
    %1388 = arith.truncf %1387 : vector<2x136xf32> to vector<2x136xbf16>
    %c0_428 = arith.constant 0 : index
    %c0_429 = arith.constant 0 : index
    %1389 = vector.load %arg18[%c0_428, %c0_429] : memref<136x128xbf16, #tpu.memory_space<vmem>>, vector<136x128xbf16>
    %cst_430 = arith.constant dense<0.000000e+00> : vector<2x128xf32>
    %1390 = tpu.matmul %1388, %1389, %cst_430 {dimension_numbers = #tpu.dot_dimension_numbers<[1], [0], [0], [1], [0, 0, 1, 1], [], []>} : vector<2x136xbf16>, vector<136x128xbf16>, vector<2x128xf32> -> vector<2x128xf32>
    %c0_431 = arith.constant 0 : index
    %c0_432 = arith.constant 0 : index
    %1391 = vector.load %arg19[%c0_431, %c0_432] : memref<1x128xf32, #tpu.memory_space<vmem>>, vector<1x128xf32>
    %1392 = vector.broadcast %1391 : vector<1x128xf32> to vector<2x128xf32>
    %1393 = arith.addf %1390, %1392 : vector<2x128xf32>
    %cst_433 = arith.constant 0.000000e+00 : f32
    %1394 = vector.broadcast %cst_433 : f32 to vector<2x128xf32>
    %1395 = arith.maximumf %1393, %1394 : vector<2x128xf32>
    %1396 = arith.truncf %1395 : vector<2x128xf32> to vector<2x128xbf16>
    %c0_434 = arith.constant 0 : index
    %c0_435 = arith.constant 0 : index
    %1397 = vector.load %arg20[%c0_434, %c0_435] : memref<128x1xbf16, #tpu.memory_space<vmem>>, vector<128x1xbf16>
    %cst_436 = arith.constant dense<0.000000e+00> : vector<2x1xf32>
    %1398 = tpu.matmul %1396, %1397, %cst_436 {dimension_numbers = #tpu.dot_dimension_numbers<[1], [0], [0], [1], [0, 0, 1, 1], [], []>} : vector<2x128xbf16>, vector<128x1xbf16>, vector<2x1xf32> -> vector<2x1xf32>
    %c0_437 = arith.constant 0 : index
    %c0_438 = arith.constant 0 : index
    %1399 = vector.load %arg21[%c0_437, %c0_438] : memref<1x1xf32, #tpu.memory_space<vmem>>, vector<1x1xf32>
    %1400 = vector.broadcast %1399 : vector<1x1xf32> to vector<2x1xf32>
    %1401 = arith.addf %1398, %1400 : vector<2x1xf32>
    %c0_439 = arith.constant 0 : index
    %c0_440 = arith.constant 0 : index
    %1402 = vector.load %arg22[%c0_439, %c0_440] : memref<2x1xf32, #tpu.memory_space<vmem>>, vector<2x1xf32>
    tpu.vector_store %arg22[%c0_439, %c0_440], %1401 {strides = array<i32>} : memref<2x1xf32, #tpu.memory_space<vmem>>, vector<2x1xf32>,
    return
  }
}

</mosaic_0001>

<llo_original>
// kernel: attractive_net_forward.1
$region0: #{attractive_net_forward.1}
  #allocation0 [shape = 'u32[]', space=smem, size = 0x4, offset = 0x4, fixed_abs, tag = 'smem constant byte address 0x4 - core index']
  #allocation1 [shape = 'u32[144,128]{1,0:T(1,128)}', space=vmem, size = 0x12000, scoped, tag = 'internal scratch']
  #allocation2 [shape = 'f32[1,1]{1,0:T(1,128)S(1)}', space=vmem, size = 0x200, scoped, tag = 'scoped memory for attractive_net_forward.1']
  %s0 = inlined_call_operand.vmem [shape: s32[16,1], index: 0, kind: input, shape index: {}]
  %s1 = inlined_call_operand.vmem [shape: bf16[128,32], index: 1, kind: input, shape index: {}]
  %s2 = inlined_call_operand.vmem [shape: bf16[96,256], index: 2, kind: input, shape index: {}]
  %s3 = inlined_call_operand.hbm [shape: f32[1,256], index: 3, kind: input, shape index: {}]
  %s4 = inlined_call_operand.hbm [shape: bf16[768,128], index: 4, kind: input, shape index: {}]
  %s5 = inlined_call_operand.vmem [shape: f32[1,128], index: 5, kind: input, shape index: {}]
  %s6 = inlined_call_operand.hbm [shape: bf16[64,256], index: 6, kind: input, shape index: {}]
  %s7 = inlined_call_operand.hbm [shape: f32[1,256], index: 7, kind: input, shape index: {}]
  %s8 = inlined_call_operand.hbm [shape: bf16[512,128], index: 8, kind: input, shape index: {}]
  %s9 = inlined_call_operand.hbm [shape: f32[1,128], index: 9, kind: input, shape index: {}]
  %s10 = inlined_call_operand.hbm [shape: bf16[128,1024], index: 10, kind: input, shape index: {}]
  %s11 = inlined_call_operand.hbm [shape: bf16[128,512], index: 11, kind: input, shape index: {}]
  %s12 = inlined_call_operand.hbm [shape: bf16[128,512], index: 12, kind: input, shape index: {}]
  %s13 = inlined_call_operand.vmem [shape: f32[1,1024], index: 13, kind: input, shape index: {}]
  %s14 = inlined_call_operand.hbm [shape: bf16[128,1024], index: 14, kind: input, shape index: {}]
  %s15 = inlined_call_operand.hbm [shape: bf16[128,512], index: 15, kind: input, shape index: {}]
  %s16 = inlined_call_operand.hbm [shape: bf16[128,512], index: 16, kind: input, shape index: {}]
  %s17 = inlined_call_operand.vmem [shape: f32[1,1024], index: 17, kind: input, shape index: {}]
  %s18 = inlined_call_operand.vmem [shape: bf16[136,128], index: 18, kind: input, shape index: {}]
  %s19 = inlined_call_operand.vmem [shape: f32[1,128], index: 19, kind: input, shape index: {}]
  %s20 = inlined_call_operand.vmem [shape: bf16[128,1], index: 20, kind: input, shape index: {}]
  %s21 = inlined_call_operand.<no memory space> [shape: f32[1,1], index: 21, kind: input, shape index: {}]
  %s22 = inlined_call_operand.vmem [shape: f32[2,1], index: 22, kind: output, shape index: {}]
  %s23 = sld [smem:[#allocation0]]
  $region146: #{attractive_net_forward.1} parent=0
    _
  %s25 = ssub.s32 1, %s23
  %s26 = scalar_select 0, %s25, %s23
  %v27 = vstv %s21
  %28 = vst [vmem:[#allocation2] sm:$0x1] %v27
  $region1: #{attractive_net_forward.1} parent=0
    #allocation3 [shape = 'u8[1024]{0}', space=vmem, size = 0x400, scoped, tag = 'input window, operand 3, single buffered']
    #allocation4 [shape = 's32[1]{0}', space=sflag, size = 0x4, scoped, tag = 'scoped memory for attractive_net_forward.1']
    #allocation5 [shape = 'u8[196608]{0}', space=vmem, size = 0x30000, scoped, tag = 'input window, operand 4, single buffered']
    #allocation6 [shape = 's32[1]{0}', space=sflag, size = 0x4, scoped, tag = 'scoped memory for attractive_net_forward.1']
    #allocation7 [shape = 'u8[32768]{0}', space=vmem, size = 0x8000, scoped, tag = 'input window, operand 6, single buffered']
    #allocation8 [shape = 'u8[1024]{0}', space=vmem, size = 0x400, scoped, tag = 'input window, operand 7, single buffered']
    #allocation9 [shape = 's32[1]{0}', space=sflag, size = 0x4, scoped, tag = 'scoped memory for attractive_net_forward.1']
    #allocation10 [shape = 'u8[131072]{0}', space=vmem, size = 0x20000, scoped, tag = 'input window, operand 8, single buffered']
    #allocation11 [shape = 'u8[512]{0}', space=vmem, size = 0x400, scoped, tag = 'input window, operand 9, single buffered']
    #allocation12 [shape = 's32[1]{0}', space=sflag, size = 0x4, scoped, tag = 'scoped memory for attractive_net_forward.1']
    #allocation13 [shape = 'u8[262144]{0}', space=vmem, size = 0x40000, scoped, tag = 'input window, operand 10, single buffered']
    #allocation14 [shape = 'u8[131072]{0}', space=vmem, size = 0x20000, scoped, tag = 'input window, operand 11, single buffered']
    #allocation15 [shape = 's32[1]{0}', space=sflag, size = 0x4, scoped, tag = 'scoped memory for attractive_net_forward.1']
    #allocation16 [shape = 'u8[131072]{0}', space=vmem, size = 0x20000, scoped, tag = 'input window, operand 12, single buffered']
    #allocation17 [shape = 'u8[262144]{0}', space=vmem, size = 0x40000, scoped, tag = 'input window, operand 14, single buffered']
    #allocation18 [shape = 's32[1]{0}', space=sflag, size = 0x4, scoped, tag = 'scoped memory for attractive_net_forward.1']
    #allocation19 [shape = 'u8[131072]{0}', space=vmem, size = 0x20000, scoped, tag = 'input window, operand 15, single buffered']
    #allocation20 [shape = 'u8[131072]{0}', space=vmem, size = 0x20000, scoped, tag = 'input window, operand 16, single buffered']
    #allocation21 [shape = 's32[1]{0}', space=sflag, size = 0x4, scoped, tag = 'scoped memory for attractive_net_forward.1']
    %29 = vsyncpa [#allocation4], 0
    %30 = vsyncpa [#allocation6], 0
    %31 = vsyncpa [#allocation9], 0
    %32 = vsyncpa [#allocation12], 0
    %33 = vsyncpa [#allocation15], 0
    %34 = vsyncpa [#allocation18], 0
    %35 = vsyncpa [#allocation21], 0
    // Predicated region
    $region2: #{attractive_net_forward.1} parent=1 // pred_check
      _
    $region3: #{attractive_net_forward.1} parent=1 // pred_check_branch
      %37 = sbr.rel (0) target = $region5
    $region4: #{attractive_net_forward.1} parent=1 // pred_region
      _
    $region5: #{attractive_net_forward.1} parent=1 // pred_fallthru
      _
    // Predicated region
    $region6: #{attractive_net_forward.1} parent=1 // pred_check
      _
    $region7: #{attractive_net_forward.1} parent=1 // pred_check_branch
      %39 = sbr.rel (0) target = $region9
    $region8: #{attractive_net_forward.1} parent=1 // pred_region
      _
    $region9: #{attractive_net_forward.1} parent=1 // pred_fallthru
      _
    // Predicated region
    $region10: #{attractive_net_forward.1} parent=1 // pred_check
      _
    $region11: #{attractive_net_forward.1} parent=1 // pred_check_branch
      %41 = sbr.rel (0) target = $region13
    $region12: #{attractive_net_forward.1} parent=1 // pred_region
      _
    $region13: #{attractive_net_forward.1} parent=1 // pred_fallthru
      _
    // Predicated region
    $region14: #{attractive_net_forward.1} parent=1 // pred_check
      _
    $region15: #{attractive_net_forward.1} parent=1 // pred_check_branch
      %43 = sbr.rel (0) target = $region17
    $region16: #{attractive_net_forward.1} parent=1 // pred_region
      %s45 = ssub.s32 32, 32
      %46 = vsyncadd [#allocation4], %s45
      %s48 = sshll.u32 [#allocation3], 4
      %s49 = int_to_ptr.vmem [resolvable:$true] %s48
      %51 = dma.hbm_to_vmem [thread:$0]  %s3, 32, %s49, [#allocation4]
    $region17: #{attractive_net_forward.1} parent=1 // pred_fallthru
      _
    // Predicated region
    $region18: #{attractive_net_forward.1} parent=1 // pred_check
      _
    $region19: #{attractive_net_forward.1} parent=1 // pred_check_branch
      %53 = sbr.rel (0) target = $region21
    $region20: #{attractive_net_forward.1} parent=1 // pred_region
      %s55 = ssub.s32 6144, 6144
      %56 = vsyncadd [#allocation6], %s55
      %s57 = sshll.u32 [#allocation5], 4
      %s58 = int_to_ptr.vmem [resolvable:$true] %s57
      %63 = dma.hbm_to_vmem [thread:$0]  %s4, 6144, %s58, [#allocation6], 64, 64, 4
    $region21: #{attractive_net_forward.1} parent=1 // pred_fallthru
      _
    // Predicated region
    $region22: #{attractive_net_forward.1} parent=1 // pred_check
      _
    $region23: #{attractive_net_forward.1} parent=1 // pred_check_branch
      %65 = sbr.rel (0) target = $region25
    $region24: #{attractive_net_forward.1} parent=1 // pred_region
      _
    $region25: #{attractive_net_forward.1} parent=1 // pred_fallthru
      _
    // Predicated region
    $region26: #{attractive_net_forward.1} parent=1 // pred_check
      _
    $region27: #{attractive_net_forward.1} parent=1 // pred_check_branch
      %67 = sbr.rel (0) target = $region29
    $region28: #{attractive_net_forward.1} parent=1 // pred_region
      %s69 = ssub.s32 1024, 1024
      %70 = vsyncadd [#allocation6], %s69
      %s71 = sshll.u32 [#allocation7], 4
      %s72 = int_to_ptr.vmem [resolvable:$true] %s71
      %77 = dma.hbm_to_vmem [thread:$0]  %s6, 1024, %s72, [#allocation6], 128, 128, 8
    $region29: #{attractive_net_forward.1} parent=1 // pred_fallthru
      _
    // Predicated region
    $region30: #{attractive_net_forward.1} parent=1 // pred_check
      _
    $region31: #{attractive_net_forward.1} parent=1 // pred_check_branch
      %79 = sbr.rel (0) target = $region33
    $region32: #{attractive_net_forward.1} parent=1 // pred_region
      %s81 = ssub.s32 32, 32
      %82 = vsyncadd [#allocation9], %s81
      %s84 = sshll.u32 [#allocation8], 4
      %s85 = int_to_ptr.vmem [resolvable:$true] %s84
      %87 = dma.hbm_to_vmem [thread:$0]  %s7, 32, %s85, [#allocation9]
    $region33: #{attractive_net_forward.1} parent=1 // pred_fallthru
      _
    // Predicated region
    $region34: #{attractive_net_forward.1} parent=1 // pred_check
      _
    $region35: #{attractive_net_forward.1} parent=1 // pred_check_branch
      %89 = sbr.rel (0) target = $region37
    $region36: #{attractive_net_forward.1} parent=1 // pred_region
      %s91 = ssub.s32 4096, 4096
      %92 = vsyncadd [#allocation9], %s91
      %s93 = sshll.u32 [#allocation10], 4
      %s94 = int_to_ptr.vmem [resolvable:$true] %s93
      %99 = dma.hbm_to_vmem [thread:$0]  %s8, 4096, %s94, [#allocation9], 64, 64, 4
    $region37: #{attractive_net_forward.1} parent=1 // pred_fallthru
      _
    // Predicated region
    $region38: #{attractive_net_forward.1} parent=1 // pred_check
      _
    $region39: #{attractive_net_forward.1} parent=1 // pred_check_branch
      %101 = sbr.rel (0) target = $region41
    $region40: #{attractive_net_forward.1} parent=1 // pred_region
      %s103 = ssub.s32 16, 16
      %104 = vsyncadd [#allocation12], %s103
      %s106 = sshll.u32 [#allocation11], 4
      %s107 = int_to_ptr.vmem [resolvable:$true] %s106
      %109 = dma.hbm_to_vmem [thread:$0]  %s9, 16, %s107, [#allocation12]
    $region41: #{attractive_net_forward.1} parent=1 // pred_fallthru
      _
    // Predicated region
    $region42: #{attractive_net_forward.1} parent=1 // pred_check
      _
    $region43: #{attractive_net_forward.1} parent=1 // pred_check_branch
      %111 = sbr.rel (0) target = $region45
    $region44: #{attractive_net_forward.1} parent=1 // pred_region
      %s113 = ssub.s32 8192, 8192
      %114 = vsyncadd [#allocation12], %s113
      %s115 = sshll.u32 [#allocation13], 4
      %s116 = int_to_ptr.vmem [resolvable:$true] %s115
      %121 = dma.hbm_to_vmem [thread:$0]  %s10, 8192, %s116, [#allocation12], 512, 512, 32
    $region45: #{attractive_net_forward.1} parent=1 // pred_fallthru
      _
    // Predicated region
    $region46: #{attractive_net_forward.1} parent=1 // pred_check
      _
    $region47: #{attractive_net_forward.1} parent=1 // pred_check_branch
      %123 = sbr.rel (0) target = $region49
    $region48: #{attractive_net_forward.1} parent=1 // pred_region
      %s125 = ssub.s32 4096, 4096
      %126 = vsyncadd [#allocation15], %s125
      %s127 = sshll.u32 [#allocation14], 4
      %s128 = int_to_ptr.vmem [resolvable:$true] %s127
      %133 = dma.hbm_to_vmem [thread:$0]  %s11, 4096, %s128, [#allocation15], 256, 256, 16
    $region49: #{attractive_net_forward.1} parent=1 // pred_fallthru
      _
    // Predicated region
    $region50: #{attractive_net_forward.1} parent=1 // pred_check
      _
    $region51: #{attractive_net_forward.1} parent=1 // pred_check_branch
      %135 = sbr.rel (0) target = $region53
    $region52: #{attractive_net_forward.1} parent=1 // pred_region
      %s137 = ssub.s32 4096, 4096
      %138 = vsyncadd [#allocation15], %s137
      %s139 = sshll.u32 [#allocation16], 4
      %s140 = int_to_ptr.vmem [resolvable:$true] %s139
      %145 = dma.hbm_to_vmem [thread:$0]  %s12, 4096, %s140, [#allocation15], 256, 256, 16
    $region53: #{attractive_net_forward.1} parent=1 // pred_fallthru
      _
    // Predicated region
    $region54: #{attractive_net_forward.1} parent=1 // pred_check
      _
    $region55: #{attractive_net_forward.1} parent=1 // pred_check_branch
      %147 = sbr.rel (0) target = $region57
    $region56: #{attractive_net_forward.1} parent=1 // pred_region
      _
    $region57: #{attractive_net_forward.1} parent=1 // pred_fallthru
      _
    // Predicated region
    $region58: #{attractive_net_forward.1} parent=1 // pred_check
      _
    $region59: #{attractive_net_forward.1} parent=1 // pred_check_branch
      %149 = sbr.rel (0) target = $region61
    $region60: #{attractive_net_forward.1} parent=1 // pred_region
      %s151 = ssub.s32 8192, 8192
      %152 = vsyncadd [#allocation18], %s151
      %s153 = sshll.u32 [#allocation17], 4
      %s154 = int_to_ptr.vmem [resolvable:$true] %s153
      %159 = dma.hbm_to_vmem [thread:$0]  %s14, 8192, %s154, [#allocation18], 512, 512, 32
    $region61: #{attractive_net_forward.1} parent=1 // pred_fallthru
      _
    // Predicated region
    $region62: #{attractive_net_forward.1} parent=1 // pred_check
      _
    $region63: #{attractive_net_forward.1} parent=1 // pred_check_branch
      %161 = sbr.rel (0) target = $region65
    $region64: #{attractive_net_forward.1} parent=1 // pred_region
      %s163 = ssub.s32 4096, 4096
      %164 = vsyncadd [#allocation18], %s163
      %s165 = sshll.u32 [#allocation19], 4
      %s166 = int_to_ptr.vmem [resolvable:$true] %s165
      %171 = dma.hbm_to_vmem [thread:$0]  %s15, 4096, %s166, [#allocation18], 256, 256, 16
    $region65: #{attractive_net_forward.1} parent=1 // pred_fallthru
      _
    // Predicated region
    $region66: #{attractive_net_forward.1} parent=1 // pred_check
      _
    $region67: #{attractive_net_forward.1} parent=1 // pred_check_branch
      %173 = sbr.rel (0) target = $region69
    $region68: #{attractive_net_forward.1} parent=1 // pred_region
      %s175 = ssub.s32 4096, 4096
      %176 = vsyncadd [#allocation21], %s175
      %s177 = sshll.u32 [#allocation20], 4
      %s178 = int_to_ptr.vmem [resolvable:$true] %s177
      %183 = dma.hbm_to_vmem [thread:$0]  %s16, 4096, %s178, [#allocation21], 256, 256, 16
    $region69: #{attractive_net_forward.1} parent=1 // pred_fallthru
      _
    // Predicated region
    $region70: #{attractive_net_forward.1} parent=1 // pred_check
      _
    $region71: #{attractive_net_forward.1} parent=1 // pred_check_branch
      %185 = sbr.rel (0) target = $region73
    $region72: #{attractive_net_forward.1} parent=1 // pred_region
      _
    $region73: #{attractive_net_forward.1} parent=1 // pred_fallthru
      _
    // Predicated region
    $region74: #{attractive_net_forward.1} parent=1 // pred_check
      _
    $region75: #{attractive_net_forward.1} parent=1 // pred_check_branch
      %187 = sbr.rel (0) target = $region77
    $region76: #{attractive_net_forward.1} parent=1 // pred_region
      _
    $region77: #{attractive_net_forward.1} parent=1 // pred_fallthru
      _
    // Predicated region
    $region78: #{attractive_net_forward.1} parent=1 // pred_check
      _
    $region79: #{attractive_net_forward.1} parent=1 // pred_check_branch
      %189 = sbr.rel (0) target = $region81
    $region80: #{attractive_net_forward.1} parent=1 // pred_region
      _
    $region81: #{attractive_net_forward.1} parent=1 // pred_fallthru
      _
    // Predicated region
    $region82: #{attractive_net_forward.1} parent=1 // pred_check
      _
    $region83: #{attractive_net_forward.1} parent=1 // pred_check_branch
      %191 = sbr.rel (0) target = $region85
    $region84: #{attractive_net_forward.1} parent=1 // pred_region
      _
    $region85: #{attractive_net_forward.1} parent=1 // pred_fallthru
      _
    // Predicated region
    $region86: #{attractive_net_forward.1} parent=1 // pred_check
      _
    $region87: #{attractive_net_forward.1} parent=1 // pred_check_branch
      %193 = sbr.rel (0) target = $region89
    $region88: #{attractive_net_forward.1} parent=1 // pred_region
      _
    $region89: #{attractive_net_forward.1} parent=1 // pred_fallthru
      _
    // Predicated region
    $region90: #{attractive_net_forward.1} parent=1 // pred_check
      _
    $region91: #{attractive_net_forward.1} parent=1 // pred_check_branch
      %195 = sbr.rel (0) target = $region93
    $region92: #{attractive_net_forward.1} parent=1 // pred_region
      %196 = dma.done [#allocation4], 32
    $region93: #{attractive_net_forward.1} parent=1 // pred_fallthru
      _
    // Predicated region
    $region94: #{attractive_net_forward.1} parent=1 // pred_check
      _
    $region95: #{attractive_net_forward.1} parent=1 // pred_check_branch
      %198 = sbr.rel (0) target = $region97
    $region96: #{attractive_net_forward.1} parent=1 // pred_region
      %199 = dma.done [#allocation6], 6144
    $region97: #{attractive_net_forward.1} parent=1 // pred_fallthru
      _
    // Predicated region
    $region98: #{attractive_net_forward.1} parent=1 // pred_check
      _
    $region99: #{attractive_net_forward.1} parent=1 // pred_check_branch
      %201 = sbr.rel (0) target = $region101
    $region100: #{attractive_net_forward.1} parent=1 // pred_region
      %202 = dma.done [#allocation6], 1024
    $region101: #{attractive_net_forward.1} parent=1 // pred_fallthru
      _
    // Predicated region
    $region102: #{attractive_net_forward.1} parent=1 // pred_check
      _
    $region103: #{attractive_net_forward.1} parent=1 // pred_check_branch
      %204 = sbr.rel (0) target = $region105
    $region104: #{attractive_net_forward.1} parent=1 // pred_region
      %205 = dma.done [#allocation9], 32
    $region105: #{attractive_net_forward.1} parent=1 // pred_fallthru
      _
    // Predicated region
    $region106: #{attractive_net_forward.1} parent=1 // pred_check
      _
    $region107: #{attractive_net_forward.1} parent=1 // pred_check_branch
      %207 = sbr.rel (0) target = $region109
    $region108: #{attractive_net_forward.1} parent=1 // pred_region
      %208 = dma.done [#allocation9], 4096
    $region109: #{attractive_net_forward.1} parent=1 // pred_fallthru
      _
    // Predicated region
    $region110: #{attractive_net_forward.1} parent=1 // pred_check
      _
    $region111: #{attractive_net_forward.1} parent=1 // pred_check_branch
      %210 = sbr.rel (0) target = $region113
    $region112: #{attractive_net_forward.1} parent=1 // pred_region
      %211 = dma.done [#allocation12], 16
    $region113: #{attractive_net_forward.1} parent=1 // pred_fallthru
      _
    // Predicated region
    $region114: #{attractive_net_forward.1} parent=1 // pred_check
      _
    $region115: #{attractive_net_forward.1} parent=1 // pred_check_branch
      %213 = sbr.rel (0) target = $region117
    $region116: #{attractive_net_forward.1} parent=1 // pred_region
      %214 = dma.done [#allocation12], 8192
    $region117: #{attractive_net_forward.1} parent=1 // pred_fallthru
      _
    // Predicated region
    $region118: #{attractive_net_forward.1} parent=1 // pred_check
      _
    $region119: #{attractive_net_forward.1} parent=1 // pred_check_branch
      %216 = sbr.rel (0) target = $region121
    $region120: #{attractive_net_forward.1} parent=1 // pred_region
      %217 = dma.done [#allocation15], 4096
    $region121: #{attractive_net_forward.1} parent=1 // pred_fallthru
      _
    // Predicated region
    $region122: #{attractive_net_forward.1} parent=1 // pred_check
      _
    $region123: #{attractive_net_forward.1} parent=1 // pred_check_branch
      %219 = sbr.rel (0) target = $region125
    $region124: #{attractive_net_forward.1} parent=1 // pred_region
      %220 = dma.done [#allocation15], 4096
    $region125: #{attractive_net_forward.1} parent=1 // pred_fallthru
      _
    // Predicated region
    $region126: #{attractive_net_forward.1} parent=1 // pred_check
      _
    $region127: #{attractive_net_forward.1} parent=1 // pred_check_branch
      %222 = sbr.rel (0) target = $region129
    $region128: #{attractive_net_forward.1} parent=1 // pred_region
      %223 = dma.done [#allocation18], 8192
    $region129: #{attractive_net_forward.1} parent=1 // pred_fallthru
      _
    // Predicated region
    $region130: #{attractive_net_forward.1} parent=1 // pred_check
      _
    $region131: #{attractive_net_forward.1} parent=1 // pred_check_branch
      %225 = sbr.rel (0) target = $region133
    $region132: #{attractive_net_forward.1} parent=1 // pred_region
      %226 = dma.done [#allocation18], 4096
    $region133: #{attractive_net_forward.1} parent=1 // pred_fallthru
      _
    // Predicated region
    $region134: #{attractive_net_forward.1} parent=1 // pred_check
      _
    $region135: #{attractive_net_forward.1} parent=1 // pred_check_branch
      %228 = sbr.rel (0) target = $region137
    $region136: #{attractive_net_forward.1} parent=1 // pred_region
      %229 = dma.done [#allocation21], 4096
    $region137: #{attractive_net_forward.1} parent=1 // pred_fallthru
      _
    %v231 = vld [vmem:[%s0] sm:$0xff]
    %v232 = vld [vmem:[%s0 + $0x8] sm:$0xff]
    %v233 = vlaneseq
    %v234 = vand.u32 %v233, 127
    %235 = vset.pattern.permute.xlu0 0
    %236 = vperm.xlu0 %235, %v231
    %v237 = vpop.permute.xlu0 %236
    %238 = vset.pattern.permute.xlu0 0
    %239 = vperm.xlu0 %238, %v232
    %v240 = vpop.permute.xlu0 %239
    %vm241 = vcmp.eq.s32.totalorder %v234, %v237
    %vm242 = vcmp.eq.s32.totalorder %v234, %v240
    %v243 = vsel %vm241, 1.0, 0.0
    %v244 = vsel %vm242, 1.0, 0.0
    %v245 = vpack.c.bf16 %v244, %v243
    %v246 = vld [vmem:[%s1] sm:$0xf]
    %v247 = vld [vmem:[%s1 + $0x4] sm:$0xf]
    %v248 = vld [vmem:[%s1 + $0x8] sm:$0xf]
    %v249 = vld [vmem:[%s1 + $0xc] sm:$0xf]
    %v250 = vld [vmem:[%s1 + $0x10] sm:$0xf]
    %v251 = vld [vmem:[%s1 + $0x14] sm:$0xf]
    %v252 = vld [vmem:[%s1 + $0x18] sm:$0xf]
    %v253 = vld [vmem:[%s1 + $0x1c] sm:$0xf]
    %v254 = vld [vmem:[%s1 + $0x20] sm:$0xf]
    %v255 = vld [vmem:[%s1 + $0x24] sm:$0xf]
    %v256 = vld [vmem:[%s1 + $0x28] sm:$0xf]
    %v257 = vld [vmem:[%s1 + $0x2c] sm:$0xf]
    %v258 = vld [vmem:[%s1 + $0x30] sm:$0xf]
    %v259 = vld [vmem:[%s1 + $0x34] sm:$0xf]
    %v260 = vld [vmem:[%s1 + $0x38] sm:$0xf]
    %v261 = vld [vmem:[%s1 + $0x3c] sm:$0xf]
    %v278 = vunpack.c.l.b16 %v246
    %v279 = vunpack.c.l.b16 %v247
    %v280 = vunpack.c.l.b16 %v248
    %v281 = vunpack.c.l.b16 %v249
    %v282 = vunpack.c.l.b16 %v250
    %v283 = vunpack.c.l.b16 %v251
    %v284 = vunpack.c.l.b16 %v252
    %v285 = vunpack.c.l.b16 %v253
    %v286 = vunpack.c.l.b16 %v254
    %v287 = vunpack.c.l.b16 %v255
    %v288 = vunpack.c.l.b16 %v256
    %v289 = vunpack.c.l.b16 %v257
    %v290 = vunpack.c.l.b16 %v258
    %v291 = vunpack.c.l.b16 %v259
    %v292 = vunpack.c.l.b16 %v260
    %v293 = vunpack.c.l.b16 %v261
    %v294 = vpack.c.b16 %v279, %v278
    %v295 = vpack.c.b16 %v281, %v280
    %v296 = vpack.c.b16 %v283, %v282
    %v297 = vpack.c.b16 %v285, %v284
    %v298 = vpack.c.b16 %v287, %v286
    %v299 = vpack.c.b16 %v289, %v288
    %v300 = vpack.c.b16 %v291, %v290
    %v301 = vpack.c.b16 %v293, %v292
    %310 = vmatprep.subr.bf16.mxu0 0
    %311 = vmatpush1.bf16.msra.mxu0 %v301
    %312 = vmatprep.subr.bf16.mxu0 0
    %313 = vmatpush1.bf16.msra.mxu0 %v300
    %314 = vmatprep.subr.bf16.mxu0 0
    %315 = vmatpush1.bf16.msra.mxu0 %v299
    %316 = vmatprep.subr.bf16.mxu0 0
    %317 = vmatpush1.bf16.msra.mxu0 %v298
    %318 = vmatprep.subr.bf16.mxu0 0
    %319 = vmatpush1.bf16.msra.mxu0 %v297
    %320 = vmatprep.subr.bf16.mxu0 0
    %321 = vmatpush1.bf16.msra.mxu0 %v296
    %322 = vmatprep.subr.bf16.mxu0 0
    %323 = vmatpush1.bf16.msra.mxu0 %v295
    %324 = vmatprep.subr.bf16.mxu0 0
    %325 = vmatpush1.bf16.msra.mxu0 %v294
    %326 = vmatprep.subr.bf16.mxu0 0
    %327 = vmatpush2.bf16.msra.mxu0 0
    %328 = vmatprep.subr.bf16.mxu0 0
    %329 = vmatpush2.bf16.msra.mxu0 0
    %330 = vmatprep.subr.bf16.mxu0 0
    %331 = vmatpush2.bf16.msra.mxu0 0
    %332 = vmatprep.subr.bf16.mxu0 0
    %333 = vmatpush2.bf16.msra.mxu0 0
    %334 = vmatprep.subr.bf16.mxu0 0
    %335 = vmatpush2.bf16.msra.mxu0 0
    %336 = vmatprep.subr.bf16.mxu0 0
    %337 = vmatpush2.bf16.msra.mxu0 0
    %338 = vmatprep.subr.bf16.mxu0 0
    %339 = vmatpush2.bf16.msra.mxu0 0
    %340 = vmatprep.subr.bf16.mxu0 0
    %341 = vmatpush2.bf16.msra.mxu0 0
    %342 = vmatprep.mubr.bf16.mxu0 0
    %343 = vmatmul.mubr.bf16.gmra.mxu0 %v245
    %v344 = vpop.f32.mrf.mxu0
    %v345 = vadd.f32 0.0, %v344
    %v346 = vpop.f32.mrf.mxu0
    %v347 = vpop.f32.mrf.mxu0
    %v348 = vadd.f32 0.0, %v347
    %v349 = vpop.f32.mrf.mxu0
    %350 = vdwg.mxu0
    %v353 = vcombine.high %v345, %v345
    %v355 = vunpack.c.l.s4 1983009808
    %v356 = vunpack.c.0.s8 %v355
    %v357 = vlaneseq
    %v358 = vshrl.u32 %v357, 7
    %v359 = vsub.s32 %v356, %v358
    %v360 = vrot.slane %v345, %v359
    %v362 = vunpack.c.l.s4 1983009808
    %v363 = vunpack.c.0.s8 %v362
    %v364 = vlaneseq
    %v365 = vshrl.u32 %v364, 7
    %v366 = vsub.s32 %v363, %v365
    %v367 = vrot.slane %v353, %v366
    %v368 = vcombine.high %v360, %v360
    %v369 = vcombine.high %v367, %v367
    %v370 = vcombine.high %v348, %v348
    %v372 = vunpack.c.l.s4 1983009808
    %v373 = vunpack.c.0.s8 %v372
    %v374 = vlaneseq
    %v375 = vshrl.u32 %v374, 7
    %v376 = vsub.s32 %v373, %v375
    %v377 = vrot.slane %v348, %v376
    %v379 = vunpack.c.l.s4 1983009808
    %v380 = vunpack.c.0.s8 %v379
    %v381 = vlaneseq
    %v382 = vshrl.u32 %v381, 7
    %v383 = vsub.s32 %v380, %v382
    %v384 = vrot.slane %v370, %v383
    %v385 = vcombine.high %v377, %v377
    %v386 = vcombine.high %v384, %v384
    %395 = vrot.lane.b32.xlu0 %v360, 32
    %v396 = vpop.permute.xlu0 %395
    %397 = vrot.lane.b32.xlu0 %v368, 32
    %v398 = vpop.permute.xlu0 %397
    %399 = vrot.lane.b32.xlu0 %v367, 32
    %v400 = vpop.permute.xlu0 %399
    %401 = vrot.lane.b32.xlu0 %v369, 32
    %v402 = vpop.permute.xlu0 %401
    %403 = vrot.lane.b32.xlu0 %v377, 32
    %v404 = vpop.permute.xlu0 %403
    %405 = vrot.lane.b32.xlu0 %v385, 32
    %v406 = vpop.permute.xlu0 %405
    %407 = vrot.lane.b32.xlu0 %v384, 32
    %v408 = vpop.permute.xlu0 %407
    %409 = vrot.lane.b32.xlu0 %v386, 32
    %v410 = vpop.permute.xlu0 %409
    %420 = vrot.lane.b32.xlu0 %v368, 64
    %v421 = vpop.permute.xlu0 %420
    %422 = vrot.lane.b32.xlu0 %v367, 64
    %v423 = vpop.permute.xlu0 %422
    %424 = vrot.lane.b32.xlu0 %v369, 64
    %v425 = vpop.permute.xlu0 %424
    %426 = vrot.lane.b32.xlu0 %v377, 64
    %v427 = vpop.permute.xlu0 %426
    %428 = vrot.lane.b32.xlu0 %v385, 64
    %v429 = vpop.permute.xlu0 %428
    %430 = vrot.lane.b32.xlu0 %v384, 64
    %v431 = vpop.permute.xlu0 %430
    %432 = vrot.lane.b32.xlu0 %v386, 64
    %v433 = vpop.permute.xlu0 %432
    %434 = vrot.lane.b32.xlu0 0.0, 64
    %v435 = vpop.permute.xlu0 %434
    %vm444 = vcmask 261120
    %v445 = vsel %vm444, 0.0, %v396
    %v446 = vsel %vm444, %v360, %v398
    %v447 = vsel %vm444, %v368, %v400
    %v448 = vsel %vm444, %v367, %v402
    %v449 = vsel %vm444, %v369, %v404
    %v450 = vsel %vm444, %v377, %v406
    %v451 = vsel %vm444, %v385, %v408
    %v452 = vsel %vm444, %v384, %v410
    %vm453 = vcmask 523264
    %v454 = vsel %vm453, %v445, %v421
    %v455 = vsel %vm453, %v446, %v423
    %v456 = vsel %vm453, %v447, %v425
    %v457 = vsel %vm453, %v448, %v427
    %v458 = vsel %vm453, %v449, %v429
    %v459 = vsel %vm453, %v450, %v431
    %v460 = vsel %vm453, %v451, %v433
    %v461 = vsel %vm453, %v452, %v435
    %v470 = vcombine.low %v454, %v455
    %v471 = vcombine.low %v456, %v457
    %v473 = vunpack.c.l.s4 1983009808
    %v474 = vunpack.c.0.s8 %v473
    %v475 = vlaneseq
    %v476 = vshrl.u32 %v475, 7
    %v477 = vsub.s32 %v474, %v476
    %v478 = vrot.slane %v470, %v477
    %v480 = vunpack.c.l.s4 1983009808
    %v481 = vunpack.c.0.s8 %v480
    %v482 = vlaneseq
    %v483 = vshrl.u32 %v482, 7
    %v484 = vsub.s32 %v481, %v483
    %v485 = vrot.slane %v471, %v484
    %v486 = vcombine.low %v478, %v485
    %v487 = vcombine.low %v458, %v459
    %v488 = vcombine.low %v460, %v461
    %v490 = vunpack.c.l.s4 1983009808
    %v491 = vunpack.c.0.s8 %v490
    %v492 = vlaneseq
    %v493 = vshrl.u32 %v492, 7
    %v494 = vsub.s32 %v491, %v493
    %v495 = vrot.slane %v487, %v494
    %v497 = vunpack.c.l.s4 1983009808
    %v498 = vunpack.c.0.s8 %v497
    %v499 = vlaneseq
    %v500 = vshrl.u32 %v499, 7
    %v501 = vsub.s32 %v498, %v500
    %v502 = vrot.slane %v488, %v501
    %v503 = vcombine.low %v495, %v502
    %v506 = vpack.c.bf16 %v503, %v486
    %v507 = vld [vmem:[%s2] sm:$0xff]
    %v508 = vld [vmem:[%s2 + $0x8] sm:$0xff]
    %v509 = vld [vmem:[%s2 + $0x10] sm:$0xff]
    %v510 = vld [vmem:[%s2 + $0x18] sm:$0xff]
    %v511 = vld [vmem:[%s2 + $0x20] sm:$0xff]
    %v512 = vld [vmem:[%s2 + $0x28] sm:$0xff]
    %v513 = vld [vmem:[%s2 + $0x30] sm:$0xff]
    %v514 = vld [vmem:[%s2 + $0x38] sm:$0xff]
    %v515 = vld [vmem:[%s2 + $0x40] sm:$0xff]
    %v516 = vld [vmem:[%s2 + $0x48] sm:$0xff]
    %v517 = vld [vmem:[%s2 + $0x50] sm:$0xff]
    %v518 = vld [vmem:[%s2 + $0x58] sm:$0xff]
    %v519 = vld [vmem:[#allocation3] sm:$0x3]
    %v521 = vlaneseq
    %v522 = vshrl.u32 %v521, 7
    %v523 = vsub.s32 0, %v522
    %v524 = vrot.slane %v519, %v523
    %v525 = vlaneseq
    %v526 = vshrl.u32 %v525, 7
    %v527 = vsub.s32 1, %v526
    %v528 = vrot.slane %v519, %v527
    %v543 = vunpack.c.l.b16 %v507
    %v544 = vunpack.c.h.b16 %v507
    %v545 = vunpack.c.l.b16 %v508
    %v546 = vunpack.c.h.b16 %v508
    %v547 = vunpack.c.l.b16 %v509
    %v548 = vunpack.c.h.b16 %v509
    %v549 = vunpack.c.l.b16 %v510
    %v550 = vunpack.c.h.b16 %v510
    %v551 = vunpack.c.l.b16 %v511
    %v552 = vunpack.c.h.b16 %v511
    %v553 = vunpack.c.l.b16 %v512
    %v554 = vunpack.c.h.b16 %v512
    %v555 = vunpack.c.l.b16 %v513
    %v556 = vunpack.c.h.b16 %v513
    %v557 = vunpack.c.l.b16 %v514
    %v558 = vunpack.c.h.b16 %v514
    %v559 = vunpack.c.l.b16 %v515
    %v560 = vunpack.c.h.b16 %v515
    %v561 = vunpack.c.l.b16 %v516
    %v562 = vunpack.c.h.b16 %v516
    %v563 = vunpack.c.l.b16 %v517
    %v564 = vunpack.c.h.b16 %v517
    %v565 = vunpack.c.l.b16 %v518
    %v566 = vunpack.c.h.b16 %v518
    %v567 = vpack.c.b16 %v545, %v543
    %v568 = vpack.c.b16 %v546, %v544
    %v569 = vpack.c.b16 %v549, %v547
    %v570 = vpack.c.b16 %v550, %v548
    %v571 = vpack.c.b16 %v553, %v551
    %v572 = vpack.c.b16 %v554, %v552
    %v573 = vpack.c.b16 %v557, %v555
    %v574 = vpack.c.b16 %v558, %v556
    %v575 = vpack.c.b16 %v561, %v559
    %v576 = vpack.c.b16 %v562, %v560
    %v577 = vpack.c.b16 %v565, %v563
    %v578 = vpack.c.b16 %v566, %v564
    %vm591 = vcmask 785408
    %v593 = vsel %vm591, %v506, 0
    %595 = vmatprep.subr.bf16.mxu0 0
    %596 = vmatpush1.bf16.msra.mxu0 0
    %597 = vmatprep.subr.bf16.mxu0 0
    %598 = vmatpush1.bf16.msra.mxu0 0
    %599 = vmatprep.subr.bf16.mxu0 %v578
    %600 = vmatpush1.bf16.msra.mxu0 %v577
    %601 = vmatprep.subr.bf16.mxu0 %v576
    %602 = vmatpush1.bf16.msra.mxu0 %v575
    %603 = vmatprep.subr.bf16.mxu0 %v574
    %604 = vmatpush1.bf16.msra.mxu0 %v573
    %605 = vmatprep.subr.bf16.mxu0 %v572
    %606 = vmatpush1.bf16.msra.mxu0 %v571
    %607 = vmatprep.subr.bf16.mxu0 %v570
    %608 = vmatpush1.bf16.msra.mxu0 %v569
    %609 = vmatprep.subr.bf16.mxu0 %v568
    %610 = vmatpush1.bf16.msra.mxu0 %v567
    %611 = vmatprep.subr.bf16.mxu0 0
    %612 = vmatpush2.bf16.msra.mxu0 0
    %613 = vmatprep.subr.bf16.mxu0 0
    %614 = vmatpush2.bf16.msra.mxu0 0
    %615 = vmatprep.subr.bf16.mxu0 0
    %616 = vmatpush2.bf16.msra.mxu0 0
    %617 = vmatprep.subr.bf16.mxu0 0
    %618 = vmatpush2.bf16.msra.mxu0 0
    %619 = vmatprep.subr.bf16.mxu0 0
    %620 = vmatpush2.bf16.msra.mxu0 0
    %621 = vmatprep.subr.bf16.mxu0 0
    %622 = vmatpush2.bf16.msra.mxu0 0
    %623 = vmatprep.subr.bf16.mxu0 0
    %624 = vmatpush2.bf16.msra.mxu0 0
    %625 = vmatprep.subr.bf16.mxu0 0
    %626 = vmatpush2.bf16.msra.mxu0 0
    %627 = vmatprep.mubr.bf16.mxu0 0
    %628 = vmatmul.mubr.bf16.gmra.mxu0 %v593
    %v629 = vpop.f32.mrf.mxu0
    %v630 = vadd.f32 %v524, %v629
    %v631 = vpop.f32.mrf.mxu0
    %v632 = vadd.f32 %v528, %v631
    %v633 = vpop.f32.mrf.mxu0
    %v634 = vadd.f32 %v524, %v633
    %v635 = vpop.f32.mrf.mxu0
    %v636 = vadd.f32 %v528, %v635
    %637 = vdwg.mxu0
    %v638 = vmax.f32 %v630, 0.0
    %v639 = vmax.f32 %v632, 0.0
    %v640 = vmax.f32 %v634, 0.0
    %v641 = vmax.f32 %v636, 0.0
    %v646 = vcombine.low %v638, %v639
    %v647 = vcombine.high %v638, %v639
    %v649 = vunpack.c.l.s4 1983009808
    %v650 = vunpack.c.0.s8 %v649
    %v651 = vlaneseq
    %v652 = vshrl.u32 %v651, 7
    %v653 = vsub.s32 %v650, %v652
    %v654 = vrot.slane %v646, %v653
    %v656 = vunpack.c.l.s4 1983009808
    %v657 = vunpack.c.0.s8 %v656
    %v658 = vlaneseq
    %v659 = vshrl.u32 %v658, 7
    %v660 = vsub.s32 %v657, %v659
    %v661 = vrot.slane %v647, %v660
    %v662 = vcombine.high %v654, %v654
    %v663 = vcombine.high %v661, %v661
    %v664 = vcombine.low %v640, %v641
    %v665 = vcombine.high %v640, %v641
    %v667 = vunpack.c.l.s4 1983009808
    %v668 = vunpack.c.0.s8 %v667
    %v669 = vlaneseq
    %v670 = vshrl.u32 %v669, 7
    %v671 = vsub.s32 %v668, %v670
    %v672 = vrot.slane %v664, %v671
    %v674 = vunpack.c.l.s4 1983009808
    %v675 = vunpack.c.0.s8 %v674
    %v676 = vlaneseq
    %v677 = vshrl.u32 %v676, 7
    %v678 = vsub.s32 %v675, %v677
    %v679 = vrot.slane %v665, %v678
    %v680 = vcombine.high %v672, %v672
    %v681 = vcombine.high %v679, %v679
    %v683 = vunpack.c.l.s4 1983009808
    %v684 = vunpack.c.0.s8 %v683
    %v685 = vlaneseq
    %v686 = vshrl.u32 %v685, 7
    %v687 = vsub.s32 %v684, %v686
    %v688 = vrot.slane %v654, %v687
    %v689 = vcombine.high %v688, %v688
    %v691 = vunpack.c.l.s4 1983009808
    %v692 = vunpack.c.0.s8 %v691
    %v693 = vlaneseq
    %v694 = vshrl.u32 %v693, 7
    %v695 = vsub.s32 %v692, %v694
    %v696 = vrot.slane %v662, %v695
    %v697 = vcombine.high %v696, %v696
    %v699 = vunpack.c.l.s4 1983009808
    %v700 = vunpack.c.0.s8 %v699
    %v701 = vlaneseq
    %v702 = vshrl.u32 %v701, 7
    %v703 = vsub.s32 %v700, %v702
    %v704 = vrot.slane %v661, %v703
    %v705 = vcombine.high %v704, %v704
    %v707 = vunpack.c.l.s4 1983009808
    %v708 = vunpack.c.0.s8 %v707
    %v709 = vlaneseq
    %v710 = vshrl.u32 %v709, 7
    %v711 = vsub.s32 %v708, %v710
    %v712 = vrot.slane %v663, %v711
    %v713 = vcombine.high %v712, %v712
    %v715 = vunpack.c.l.s4 1983009808
    %v716 = vunpack.c.0.s8 %v715
    %v717 = vlaneseq
    %v718 = vshrl.u32 %v717, 7
    %v719 = vsub.s32 %v716, %v718
    %v720 = vrot.slane %v672, %v719
    %v721 = vcombine.high %v720, %v720
    %v723 = vunpack.c.l.s4 1983009808
    %v724 = vunpack.c.0.s8 %v723
    %v725 = vlaneseq
    %v726 = vshrl.u32 %v725, 7
    %v727 = vsub.s32 %v724, %v726
    %v728 = vrot.slane %v680, %v727
    %v729 = vcombine.high %v728, %v728
    %v731 = vunpack.c.l.s4 1983009808
    %v732 = vunpack.c.0.s8 %v731
    %v733 = vlaneseq
    %v734 = vshrl.u32 %v733, 7
    %v735 = vsub.s32 %v732, %v734
    %v736 = vrot.slane %v679, %v735
    %v737 = vcombine.high %v736, %v736
    %v739 = vunpack.c.l.s4 1983009808
    %v740 = vunpack.c.0.s8 %v739
    %v741 = vlaneseq
    %v742 = vshrl.u32 %v741, 7
    %v743 = vsub.s32 %v740, %v742
    %v744 = vrot.slane %v681, %v743
    %v745 = vcombine.high %v744, %v744
    %v746 = vcombine.low 0.0, 0.0
    %v747 = vcombine.low %v688, %v689
    %v749 = vunpack.c.l.s4 1983009808
    %v750 = vunpack.c.0.s8 %v749
    %v751 = vlaneseq
    %v752 = vshrl.u32 %v751, 7
    %v753 = vsub.s32 %v750, %v752
    %v754 = vrot.slane %v746, %v753
    %v756 = vunpack.c.l.s4 1983009808
    %v757 = vunpack.c.0.s8 %v756
    %v758 = vlaneseq
    %v759 = vshrl.u32 %v758, 7
    %v760 = vsub.s32 %v757, %v759
    %v761 = vrot.slane %v747, %v760
    %v762 = vcombine.low %v754, %v761
    %v763 = vcombine.low %v696, %v697
    %v765 = vunpack.c.l.s4 1983009808
    %v766 = vunpack.c.0.s8 %v765
    %v767 = vlaneseq
    %v768 = vshrl.u32 %v767, 7
    %v769 = vsub.s32 %v766, %v768
    %v770 = vrot.slane %v763, %v769
    %v771 = vcombine.low %v761, %v770
    %v772 = vcombine.low %v704, %v705
    %v774 = vunpack.c.l.s4 1983009808
    %v775 = vunpack.c.0.s8 %v774
    %v776 = vlaneseq
    %v777 = vshrl.u32 %v776, 7
    %v778 = vsub.s32 %v775, %v777
    %v779 = vrot.slane %v772, %v778
    %v780 = vcombine.low %v770, %v779
    %v781 = vcombine.low %v712, %v713
    %v783 = vunpack.c.l.s4 1983009808
    %v784 = vunpack.c.0.s8 %v783
    %v785 = vlaneseq
    %v786 = vshrl.u32 %v785, 7
    %v787 = vsub.s32 %v784, %v786
    %v788 = vrot.slane %v781, %v787
    %v789 = vcombine.low %v779, %v788
    %v790 = vcombine.low %v720, %v721
    %v792 = vunpack.c.l.s4 1983009808
    %v793 = vunpack.c.0.s8 %v792
    %v794 = vlaneseq
    %v795 = vshrl.u32 %v794, 7
    %v796 = vsub.s32 %v793, %v795
    %v797 = vrot.slane %v790, %v796
    %v798 = vcombine.low %v788, %v797
    %v799 = vcombine.low %v728, %v729
    %v801 = vunpack.c.l.s4 1983009808
    %v802 = vunpack.c.0.s8 %v801
    %v803 = vlaneseq
    %v804 = vshrl.u32 %v803, 7
    %v805 = vsub.s32 %v802, %v804
    %v806 = vrot.slane %v799, %v805
    %v807 = vcombine.low %v797, %v806
    %v808 = vcombine.low %v736, %v737
    %v810 = vunpack.c.l.s4 1983009808
    %v811 = vunpack.c.0.s8 %v810
    %v812 = vlaneseq
    %v813 = vshrl.u32 %v812, 7
    %v814 = vsub.s32 %v811, %v813
    %v815 = vrot.slane %v808, %v814
    %v816 = vcombine.low %v806, %v815
    %v817 = vcombine.low %v744, %v745
    %v819 = vunpack.c.l.s4 1983009808
    %v820 = vunpack.c.0.s8 %v819
    %v821 = vlaneseq
    %v822 = vshrl.u32 %v821, 7
    %v823 = vsub.s32 %v820, %v822
    %v824 = vrot.slane %v817, %v823
    %v825 = vcombine.low %v815, %v824
    %v826 = vcombine.low %v762, %v771
    %v827 = vcombine.high %v762, %v771
    %v828 = vcombine.low %v780, %v789
    %v829 = vcombine.high %v780, %v789
    %v831 = vunpack.c.l.s4 1983009808
    %v832 = vunpack.c.0.s8 %v831
    %v833 = vlaneseq
    %v834 = vshrl.u32 %v833, 7
    %v835 = vsub.s32 %v832, %v834
    %v836 = vrot.slane %v826, %v835
    %v838 = vunpack.c.l.s4 1983009808
    %v839 = vunpack.c.0.s8 %v838
    %v840 = vlaneseq
    %v841 = vshrl.u32 %v840, 7
    %v842 = vsub.s32 %v839, %v841
    %v843 = vrot.slane %v827, %v842
    %v845 = vunpack.c.l.s4 1983009808
    %v846 = vunpack.c.0.s8 %v845
    %v847 = vlaneseq
    %v848 = vshrl.u32 %v847, 7
    %v849 = vsub.s32 %v846, %v848
    %v850 = vrot.slane %v828, %v849
    %v852 = vunpack.c.l.s4 1983009808
    %v853 = vunpack.c.0.s8 %v852
    %v854 = vlaneseq
    %v855 = vshrl.u32 %v854, 7
    %v856 = vsub.s32 %v853, %v855
    %v857 = vrot.slane %v829, %v856
    %v858 = vcombine.low %v836, %v850
    %v859 = vcombine.high %v836, %v850
    %v860 = vcombine.low %v843, %v857
    %v861 = vcombine.high %v843, %v857
    %v863 = vunpack.c.l.s4 1983009808
    %v864 = vunpack.c.0.s8 %v863
    %v865 = vlaneseq
    %v866 = vshrl.u32 %v865, 7
    %v867 = vsub.s32 %v864, %v866
    %v868 = vrot.slane %v780, %v867
    %v870 = vunpack.c.l.s4 1983009808
    %v871 = vunpack.c.0.s8 %v870
    %v872 = vlaneseq
    %v873 = vshrl.u32 %v872, 7
    %v874 = vsub.s32 %v871, %v873
    %v875 = vrot.slane %v798, %v874
    %v876 = vcombine.low %v868, %v875
    %v877 = vcombine.high %v868, %v875
    %v878 = vcombine.low %v798, %v807
    %v879 = vcombine.high %v798, %v807
    %v880 = vcombine.low %v816, %v825
    %v881 = vcombine.high %v816, %v825
    %v883 = vunpack.c.l.s4 1983009808
    %v884 = vunpack.c.0.s8 %v883
    %v885 = vlaneseq
    %v886 = vshrl.u32 %v885, 7
    %v887 = vsub.s32 %v884, %v886
    %v888 = vrot.slane %v878, %v887
    %v890 = vunpack.c.l.s4 1983009808
    %v891 = vunpack.c.0.s8 %v890
    %v892 = vlaneseq
    %v893 = vshrl.u32 %v892, 7
    %v894 = vsub.s32 %v891, %v893
    %v895 = vrot.slane %v879, %v894
    %v897 = vunpack.c.l.s4 1983009808
    %v898 = vunpack.c.0.s8 %v897
    %v899 = vlaneseq
    %v900 = vshrl.u32 %v899, 7
    %v901 = vsub.s32 %v898, %v900
    %v902 = vrot.slane %v880, %v901
    %v904 = vunpack.c.l.s4 1983009808
    %v905 = vunpack.c.0.s8 %v904
    %v906 = vlaneseq
    %v907 = vshrl.u32 %v906, 7
    %v908 = vsub.s32 %v905, %v907
    %v909 = vrot.slane %v881, %v908
    %v910 = vcombine.low %v888, %v902
    %v911 = vcombine.high %v888, %v902
    %v912 = vcombine.low %v895, %v909
    %v913 = vcombine.high %v895, %v909
    %v914 = vcombine.low %v824, %v754
    %v916 = vunpack.c.l.s4 1983009808
    %v917 = vunpack.c.0.s8 %v916
    %v918 = vlaneseq
    %v919 = vshrl.u32 %v918, 7
    %v920 = vsub.s32 %v917, %v919
    %v921 = vrot.slane %v816, %v920
    %v923 = vunpack.c.l.s4 1983009808
    %v924 = vunpack.c.0.s8 %v923
    %v925 = vlaneseq
    %v926 = vshrl.u32 %v925, 7
    %v927 = vsub.s32 %v924, %v926
    %v928 = vrot.slane %v914, %v927
    %v929 = vcombine.low %v921, %v928
    %v930 = vcombine.high %v921, %v928
    %v943 = vpack.c.bf16 %v910, %v858
    %v944 = vpack.c.bf16 %v911, %v859
    %v945 = vpack.c.bf16 %v912, %v860
    %v946 = vpack.c.bf16 %v913, %v861
    %v947 = vpack.c.bf16 %v929, %v876
    %v948 = vpack.c.bf16 %v930, %v877
    %v949 = vld [vmem:[#allocation5] sm:$0xf]
    %v950 = vld [vmem:[#allocation5 + $0x4] sm:$0xf]
    %v951 = vld [vmem:[#allocation5 + $0x8] sm:$0xf]
    %v952 = vld [vmem:[#allocation5 + $0xc] sm:$0xf]
    %v953 = vld [vmem:[#allocation5 + $0x10] sm:$0xf]
    %v954 = vld [vmem:[#allocation5 + $0x14] sm:$0xf]
    %v955 = vld [vmem:[#allocation5 + $0x18] sm:$0xf]
    %v956 = vld [vmem:[#allocation5 + $0x1c] sm:$0xf]
    %v957 = vld [vmem:[#allocation5 + $0x20] sm:$0xf]
    %v958 = vld [vmem:[#allocation5 + $0x24] sm:$0xf]
    %v959 = vld [vmem:[#allocation5 + $0x28] sm:$0xf]
    %v960 = vld [vmem:[#allocation5 + $0x2c] sm:$0xf]
    %v961 = vld [vmem:[#allocation5 + $0x30] sm:$0xf]
    %v962 = vld [vmem:[#allocation5 + $0x34] sm:$0xf]
    %v963 = vld [vmem:[#allocation5 + $0x38] sm:$0xf]
    %v964 = vld [vmem:[#allocation5 + $0x3c] sm:$0xf]
    %v965 = vld [vmem:[#allocation5 + $0x40] sm:$0xf]
    %v966 = vld [vmem:[#allocation5 + $0x44] sm:$0xf]
    %v967 = vld [vmem:[#allocation5 + $0x48] sm:$0xf]
    %v968 = vld [vmem:[#allocation5 + $0x4c] sm:$0xf]
    %v969 = vld [vmem:[#allocation5 + $0x50] sm:$0xf]
    %v970 = vld [vmem:[#allocation5 + $0x54] sm:$0xf]
    %v971 = vld [vmem:[#allocation5 + $0x58] sm:$0xf]
    %v972 = vld [vmem:[#allocation5 + $0x5c] sm:$0xf]
    %v973 = vld [vmem:[#allocation5 + $0x60] sm:$0xf]
    %v974 = vld [vmem:[#allocation5 + $0x64] sm:$0xf]
    %v975 = vld [vmem:[#allocation5 + $0x68] sm:$0xf]
    %v976 = vld [vmem:[#allocation5 + $0x6c] sm:$0xf]
    %v977 = vld [vmem:[#allocation5 + $0x70] sm:$0xf]
    %v978 = vld [vmem:[#allocation5 + $0x74] sm:$0xf]
    %v979 = vld [vmem:[#allocation5 + $0x78] sm:$0xf]
    %v980 = vld [vmem:[#allocation5 + $0x7c] sm:$0xf]
    %v981 = vld [vmem:[#allocation5 + $0x80] sm:$0xf]
    %v982 = vld [vmem:[#allocation5 + $0x84] sm:$0xf]
    %v983 = vld [vmem:[#allocation5 + $0x88] sm:$0xf]
    %v984 = vld [vmem:[#allocation5 + $0x8c] sm:$0xf]
    %v985 = vld [vmem:[#allocation5 + $0x90] sm:$0xf]
    %v986 = vld [vmem:[#allocation5 + $0x94] sm:$0xf]
    %v987 = vld [vmem:[#allocation5 + $0x98] sm:$0xf]
    %v988 = vld [vmem:[#allocation5 + $0x9c] sm:$0xf]
    %v989 = vld [vmem:[#allocation5 + $0xa0] sm:$0xf]
    %v990 = vld [vmem:[#allocation5 + $0xa4] sm:$0xf]
    %v991 = vld [vmem:[#allocation5 + $0xa8] sm:$0xf]
    %v992 = vld [vmem:[#allocation5 + $0xac] sm:$0xf]
    %v993 = vld [vmem:[#allocation5 + $0xb0] sm:$0xf]
    %v994 = vld [vmem:[#allocation5 + $0xb4] sm:$0xf]
    %v995 = vld [vmem:[#allocation5 + $0xb8] sm:$0xf]
    %v996 = vld [vmem:[#allocation5 + $0xbc] sm:$0xf]
    %v997 = vld [vmem:[#allocation5 + $0xc0] sm:$0xf]
    %v998 = vld [vmem:[#allocation5 + $0xc4] sm:$0xf]
    %v999 = vld [vmem:[#allocation5 + $0xc8] sm:$0xf]
    %v1000 = vld [vmem:[#allocation5 + $0xcc] sm:$0xf]
    %v1001 = vld [vmem:[#allocation5 + $0xd0] sm:$0xf]
    %v1002 = vld [vmem:[#allocation5 + $0xd4] sm:$0xf]
    %v1003 = vld [vmem:[#allocation5 + $0xd8] sm:$0xf]
    %v1004 = vld [vmem:[#allocation5 + $0xdc] sm:$0xf]
    %v1005 = vld [vmem:[#allocation5 + $0xe0] sm:$0xf]
    %v1006 = vld [vmem:[#allocation5 + $0xe4] sm:$0xf]
    %v1007 = vld [vmem:[#allocation5 + $0xe8] sm:$0xf]
    %v1008 = vld [vmem:[#allocation5 + $0xec] sm:$0xf]
    %v1009 = vld [vmem:[#allocation5 + $0xf0] sm:$0xf]
    %v1010 = vld [vmem:[#allocation5 + $0xf4] sm:$0xf]
    %v1011 = vld [vmem:[#allocation5 + $0xf8] sm:$0xf]
    %v1012 = vld [vmem:[#allocation5 + $0xfc] sm:$0xf]
    %v1013 = vld [vmem:[#allocation5 + $0x100] sm:$0xf]
    %v1014 = vld [vmem:[#allocation5 + $0x104] sm:$0xf]
    %v1015 = vld [vmem:[#allocation5 + $0x108] sm:$0xf]
    %v1016 = vld [vmem:[#allocation5 + $0x10c] sm:$0xf]
    %v1017 = vld [vmem:[#allocation5 + $0x110] sm:$0xf]
    %v1018 = vld [vmem:[#allocation5 + $0x114] sm:$0xf]
    %v1019 = vld [vmem:[#allocation5 + $0x118] sm:$0xf]
    %v1020 = vld [vmem:[#allocation5 + $0x11c] sm:$0xf]
    %v1021 = vld [vmem:[#allocation5 + $0x120] sm:$0xf]
    %v1022 = vld [vmem:[#allocation5 + $0x124] sm:$0xf]
    %v1023 = vld [vmem:[#allocation5 + $0x128] sm:$0xf]
    %v1024 = vld [vmem:[#allocation5 + $0x12c] sm:$0xf]
    %v1025 = vld [vmem:[#allocation5 + $0x130] sm:$0xf]
    %v1026 = vld [vmem:[#allocation5 + $0x134] sm:$0xf]
    %v1027 = vld [vmem:[#allocation5 + $0x138] sm:$0xf]
    %v1028 = vld [vmem:[#allocation5 + $0x13c] sm:$0xf]
    %v1029 = vld [vmem:[#allocation5 + $0x140] sm:$0xf]
    %v1030 = vld [vmem:[#allocation5 + $0x144] sm:$0xf]
    %v1031 = vld [vmem:[#allocation5 + $0x148] sm:$0xf]
    %v1032 = vld [vmem:[#allocation5 + $0x14c] sm:$0xf]
    %v1033 = vld [vmem:[#allocation5 + $0x150] sm:$0xf]
    %v1034 = vld [vmem:[#allocation5 + $0x154] sm:$0xf]
    %v1035 = vld [vmem:[#allocation5 + $0x158] sm:$0xf]
    %v1036 = vld [vmem:[#allocation5 + $0x15c] sm:$0xf]
    %v1037 = vld [vmem:[#allocation5 + $0x160] sm:$0xf]
    %v1038 = vld [vmem:[#allocation5 + $0x164] sm:$0xf]
    %v1039 = vld [vmem:[#allocation5 + $0x168] sm:$0xf]
    %v1040 = vld [vmem:[#allocation5 + $0x16c] sm:$0xf]
    %v1041 = vld [vmem:[#allocation5 + $0x170] sm:$0xf]
    %v1042 = vld [vmem:[#allocation5 + $0x174] sm:$0xf]
    %v1043 = vld [vmem:[#allocation5 + $0x178] sm:$0xf]
    %v1044 = vld [vmem:[#allocation5 + $0x17c] sm:$0xf]
    %v1045 = vld [vmem:[%s5] sm:$0x1]
    %v1047 = vlaneseq
    %v1048 = vshrl.u32 %v1047, 7
    %v1049 = vsub.s32 0, %v1048
    %v1050 = vrot.slane %v1045, %v1049
    %v1148 = vunpack.c.l.b16 %v949
    %v1149 = vunpack.c.l.b16 %v950
    %v1150 = vunpack.c.l.b16 %v951
    %v1151 = vunpack.c.l.b16 %v952
    %v1152 = vunpack.c.l.b16 %v953
    %v1153 = vunpack.c.l.b16 %v954
    %v1154 = vunpack.c.l.b16 %v955
    %v1155 = vunpack.c.l.b16 %v956
    %v1156 = vunpack.c.l.b16 %v957
    %v1157 = vunpack.c.l.b16 %v958
    %v1158 = vunpack.c.l.b16 %v959
    %v1159 = vunpack.c.l.b16 %v960
    %v1160 = vunpack.c.l.b16 %v961
    %v1161 = vunpack.c.l.b16 %v962
    %v1162 = vunpack.c.l.b16 %v963
    %v1163 = vunpack.c.l.b16 %v964
    %v1164 = vunpack.c.l.b16 %v965
    %v1165 = vunpack.c.l.b16 %v966
    %v1166 = vunpack.c.l.b16 %v967
    %v1167 = vunpack.c.l.b16 %v968
    %v1168 = vunpack.c.l.b16 %v969
    %v1169 = vunpack.c.l.b16 %v970
    %v1170 = vunpack.c.l.b16 %v971
    %v1171 = vunpack.c.l.b16 %v972
    %v1172 = vunpack.c.l.b16 %v973
    %v1173 = vunpack.c.l.b16 %v974
    %v1174 = vunpack.c.l.b16 %v975
    %v1175 = vunpack.c.l.b16 %v976
    %v1176 = vunpack.c.l.b16 %v977
    %v1177 = vunpack.c.l.b16 %v978
    %v1178 = vunpack.c.l.b16 %v979
    %v1179 = vunpack.c.l.b16 %v980
    %v1180 = vunpack.c.l.b16 %v981
    %v1181 = vunpack.c.l.b16 %v982
    %v1182 = vunpack.c.l.b16 %v983
    %v1183 = vunpack.c.l.b16 %v984
    %v1184 = vunpack.c.l.b16 %v985
    %v1185 = vunpack.c.l.b16 %v986
    %v1186 = vunpack.c.l.b16 %v987
    %v1187 = vunpack.c.l.b16 %v988
    %v1188 = vunpack.c.l.b16 %v989
    %v1189 = vunpack.c.l.b16 %v990
    %v1190 = vunpack.c.l.b16 %v991
    %v1191 = vunpack.c.l.b16 %v992
    %v1192 = vunpack.c.l.b16 %v993
    %v1193 = vunpack.c.l.b16 %v994
    %v1194 = vunpack.c.l.b16 %v995
    %v1195 = vunpack.c.l.b16 %v996
    %v1196 = vunpack.c.l.b16 %v997
    %v1197 = vunpack.c.l.b16 %v998
    %v1198 = vunpack.c.l.b16 %v999
    %v1199 = vunpack.c.l.b16 %v1000
    %v1200 = vunpack.c.l.b16 %v1001
    %v1201 = vunpack.c.l.b16 %v1002
    %v1202 = vunpack.c.l.b16 %v1003
    %v1203 = vunpack.c.l.b16 %v1004
    %v1204 = vunpack.c.l.b16 %v1005
    %v1205 = vunpack.c.l.b16 %v1006
    %v1206 = vunpack.c.l.b16 %v1007
    %v1207 = vunpack.c.l.b16 %v1008
    %v1208 = vunpack.c.l.b16 %v1009
    %v1209 = vunpack.c.l.b16 %v1010
    %v1210 = vunpack.c.l.b16 %v1011
    %v1211 = vunpack.c.l.b16 %v1012
    %v1212 = vunpack.c.l.b16 %v1013
    %v1213 = vunpack.c.l.b16 %v1014
    %v1214 = vunpack.c.l.b16 %v1015
    %v1215 = vunpack.c.l.b16 %v1016
    %v1216 = vunpack.c.l.b16 %v1017
    %v1217 = vunpack.c.l.b16 %v1018
    %v1218 = vunpack.c.l.b16 %v1019
    %v1219 = vunpack.c.l.b16 %v1020
    %v1220 = vunpack.c.l.b16 %v1021
    %v1221 = vunpack.c.l.b16 %v1022
    %v1222 = vunpack.c.l.b16 %v1023
    %v1223 = vunpack.c.l.b16 %v1024
    %v1224 = vunpack.c.l.b16 %v1025
    %v1225 = vunpack.c.l.b16 %v1026
    %v1226 = vunpack.c.l.b16 %v1027
    %v1227 = vunpack.c.l.b16 %v1028
    %v1228 = vunpack.c.l.b16 %v1029
    %v1229 = vunpack.c.l.b16 %v1030
    %v1230 = vunpack.c.l.b16 %v1031
    %v1231 = vunpack.c.l.b16 %v1032
    %v1232 = vunpack.c.l.b16 %v1033
    %v1233 = vunpack.c.l.b16 %v1034
    %v1234 = vunpack.c.l.b16 %v1035
    %v1235 = vunpack.c.l.b16 %v1036
    %v1236 = vunpack.c.l.b16 %v1037
    %v1237 = vunpack.c.l.b16 %v1038
    %v1238 = vunpack.c.l.b16 %v1039
    %v1239 = vunpack.c.l.b16 %v1040
    %v1240 = vunpack.c.l.b16 %v1041
    %v1241 = vunpack.c.l.b16 %v1042
    %v1242 = vunpack.c.l.b16 %v1043
    %v1243 = vunpack.c.l.b16 %v1044
    %v1244 = vpack.c.b16 %v1149, %v1148
    %v1245 = vpack.c.b16 %v1151, %v1150
    %v1246 = vpack.c.b16 %v1153, %v1152
    %v1247 = vpack.c.b16 %v1155, %v1154
    %v1248 = vpack.c.b16 %v1157, %v1156
    %v1249 = vpack.c.b16 %v1159, %v1158
    %v1250 = vpack.c.b16 %v1161, %v1160
    %v1251 = vpack.c.b16 %v1163, %v1162
    %v1252 = vpack.c.b16 %v1165, %v1164
    %v1253 = vpack.c.b16 %v1167, %v1166
    %v1254 = vpack.c.b16 %v1169, %v1168
    %v1255 = vpack.c.b16 %v1171, %v1170
    %v1256 = vpack.c.b16 %v1173, %v1172
    %v1257 = vpack.c.b16 %v1175, %v1174
    %v1258 = vpack.c.b16 %v1177, %v1176
    %v1259 = vpack.c.b16 %v1179, %v1178
    %v1260 = vpack.c.b16 %v1181, %v1180
    %v1261 = vpack.c.b16 %v1183, %v1182
    %v1262 = vpack.c.b16 %v1185, %v1184
    %v1263 = vpack.c.b16 %v1187, %v1186
    %v1264 = vpack.c.b16 %v1189, %v1188
    %v1265 = vpack.c.b16 %v1191, %v1190
    %v1266 = vpack.c.b16 %v1193, %v1192
    %v1267 = vpack.c.b16 %v1195, %v1194
    %v1268 = vpack.c.b16 %v1197, %v1196
    %v1269 = vpack.c.b16 %v1199, %v1198
    %v1270 = vpack.c.b16 %v1201, %v1200
    %v1271 = vpack.c.b16 %v1203, %v1202
    %v1272 = vpack.c.b16 %v1205, %v1204
    %v1273 = vpack.c.b16 %v1207, %v1206
    %v1274 = vpack.c.b16 %v1209, %v1208
    %v1275 = vpack.c.b16 %v1211, %v1210
    %v1276 = vpack.c.b16 %v1213, %v1212
    %v1277 = vpack.c.b16 %v1215, %v1214
    %v1278 = vpack.c.b16 %v1217, %v1216
    %v1279 = vpack.c.b16 %v1219, %v1218
    %v1280 = vpack.c.b16 %v1221, %v1220
    %v1281 = vpack.c.b16 %v1223, %v1222
    %v1282 = vpack.c.b16 %v1225, %v1224
    %v1283 = vpack.c.b16 %v1227, %v1226
    %v1284 = vpack.c.b16 %v1229, %v1228
    %v1285 = vpack.c.b16 %v1231, %v1230
    %v1286 = vpack.c.b16 %v1233, %v1232
    %v1287 = vpack.c.b16 %v1235, %v1234
    %v1288 = vpack.c.b16 %v1237, %v1236
    %v1289 = vpack.c.b16 %v1239, %v1238
    %v1290 = vpack.c.b16 %v1241, %v1240
    %v1291 = vpack.c.b16 %v1243, %v1242
    %1340 = vmatprep.subr.bf16.mxu0 0
    %1341 = vmatpush1.bf16.msra.mxu0 %v1251
    %1342 = vmatprep.subr.bf16.mxu0 0
    %1343 = vmatpush1.bf16.msra.mxu0 %v1250
    %1344 = vmatprep.subr.bf16.mxu0 0
    %1345 = vmatpush1.bf16.msra.mxu0 %v1249
    %1346 = vmatprep.subr.bf16.mxu0 0
    %1347 = vmatpush1.bf16.msra.mxu0 %v1248
    %1348 = vmatprep.subr.bf16.mxu0 0
    %1349 = vmatpush1.bf16.msra.mxu0 %v1247
    %1350 = vmatprep.subr.bf16.mxu0 0
    %1351 = vmatpush1.bf16.msra.mxu0 %v1246
    %1352 = vmatprep.subr.bf16.mxu0 0
    %1353 = vmatpush1.bf16.msra.mxu0 %v1245
    %1354 = vmatprep.subr.bf16.mxu0 0
    %1355 = vmatpush1.bf16.msra.mxu0 %v1244
    %1356 = vmatprep.subr.bf16.mxu0 0
    %1357 = vmatpush2.bf16.msra.mxu0 %v1259
    %1358 = vmatprep.subr.bf16.mxu0 0
    %1359 = vmatpush2.bf16.msra.mxu0 %v1258
    %1360 = vmatprep.subr.bf16.mxu0 0
    %1361 = vmatpush2.bf16.msra.mxu0 %v1257
    %1362 = vmatprep.subr.bf16.mxu0 0
    %1363 = vmatpush2.bf16.msra.mxu0 %v1256
    %1364 = vmatprep.subr.bf16.mxu0 0
    %1365 = vmatpush2.bf16.msra.mxu0 %v1255
    %1366 = vmatprep.subr.bf16.mxu0 0
    %1367 = vmatpush2.bf16.msra.mxu0 %v1254
    %1368 = vmatprep.subr.bf16.mxu0 0
    %1369 = vmatpush2.bf16.msra.mxu0 %v1253
    %1370 = vmatprep.subr.bf16.mxu0 0
    %1371 = vmatpush2.bf16.msra.mxu0 %v1252
    %1372 = vmatprep.mubr.bf16.mxu0 %v944
    %1373 = vmatmul.mubr.bf16.gmra.mxu0 %v943
    %v1374 = vpop.f32.mrf.mxu0
    %v1375 = vadd.f32 %v1050, %v1374
    %v1376 = vpop.f32.mrf.mxu0
    %v1377 = vpop.f32.mrf.mxu0
    %v1378 = vadd.f32 %v1050, %v1377
    %v1379 = vpop.f32.mrf.mxu0
    %1380 = vdwg.mxu0
    %1381 = vmatprep.subr.bf16.mxu0 0
    %1382 = vmatpush1.bf16.msra.mxu0 %v1267
    %1383 = vmatprep.subr.bf16.mxu0 0
    %1384 = vmatpush1.bf16.msra.mxu0 %v1266
    %1385 = vmatprep.subr.bf16.mxu0 0
    %1386 = vmatpush1.bf16.msra.mxu0 %v1265
    %1387 = vmatprep.subr.bf16.mxu0 0
    %1388 = vmatpush1.bf16.msra.mxu0 %v1264
    %1389 = vmatprep.subr.bf16.mxu0 0
    %1390 = vmatpush1.bf16.msra.mxu0 %v1263
    %1391 = vmatprep.subr.bf16.mxu0 0
    %1392 = vmatpush1.bf16.msra.mxu0 %v1262
    %1393 = vmatprep.subr.bf16.mxu0 0
    %1394 = vmatpush1.bf16.msra.mxu0 %v1261
    %1395 = vmatprep.subr.bf16.mxu0 0
    %1396 = vmatpush1.bf16.msra.mxu0 %v1260
    %1397 = vmatprep.subr.bf16.mxu0 0
    %1398 = vmatpush2.bf16.msra.mxu0 %v1275
    %1399 = vmatprep.subr.bf16.mxu0 0
    %1400 = vmatpush2.bf16.msra.mxu0 %v1274
    %1401 = vmatprep.subr.bf16.mxu0 0
    %1402 = vmatpush2.bf16.msra.mxu0 %v1273
    %1403 = vmatprep.subr.bf16.mxu0 0
    %1404 = vmatpush2.bf16.msra.mxu0 %v1272
    %1405 = vmatprep.subr.bf16.mxu0 0
    %1406 = vmatpush2.bf16.msra.mxu0 %v1271
    %1407 = vmatprep.subr.bf16.mxu0 0
    %1408 = vmatpush2.bf16.msra.mxu0 %v1270
    %1409 = vmatprep.subr.bf16.mxu0 0
    %1410 = vmatpush2.bf16.msra.mxu0 %v1269
    %1411 = vmatprep.subr.bf16.mxu0 0
    %1412 = vmatpush2.bf16.msra.mxu0 %v1268
    %1413 = vmatprep.mubr.bf16.mxu0 %v946
    %1414 = vmatmul.mubr.bf16.gmra.mxu0 %v945
    %v1415 = vpop.f32.mrf.mxu0
    %v1416 = vadd.f32 %v1375, %v1415
    %v1417 = vpop.f32.mrf.mxu0
    %v1418 = vpop.f32.mrf.mxu0
    %v1419 = vadd.f32 %v1378, %v1418
    %v1420 = vpop.f32.mrf.mxu0
    %1421 = vdwg.mxu0
    %1422 = vmatprep.subr.bf16.mxu0 0
    %1423 = vmatpush1.bf16.msra.mxu0 %v1283
    %1424 = vmatprep.subr.bf16.mxu0 0
    %1425 = vmatpush1.bf16.msra.mxu0 %v1282
    %1426 = vmatprep.subr.bf16.mxu0 0
    %1427 = vmatpush1.bf16.msra.mxu0 %v1281
    %1428 = vmatprep.subr.bf16.mxu0 0
    %1429 = vmatpush1.bf16.msra.mxu0 %v1280
    %1430 = vmatprep.subr.bf16.mxu0 0
    %1431 = vmatpush1.bf16.msra.mxu0 %v1279
    %1432 = vmatprep.subr.bf16.mxu0 0
    %1433 = vmatpush1.bf16.msra.mxu0 %v1278
    %1434 = vmatprep.subr.bf16.mxu0 0
    %1435 = vmatpush1.bf16.msra.mxu0 %v1277
    %1436 = vmatprep.subr.bf16.mxu0 0
    %1437 = vmatpush1.bf16.msra.mxu0 %v1276
    %1438 = vmatprep.subr.bf16.mxu0 0
    %1439 = vmatpush2.bf16.msra.mxu0 %v1291
    %1440 = vmatprep.subr.bf16.mxu0 0
    %1441 = vmatpush2.bf16.msra.mxu0 %v1290
    %1442 = vmatprep.subr.bf16.mxu0 0
    %1443 = vmatpush2.bf16.msra.mxu0 %v1289
    %1444 = vmatprep.subr.bf16.mxu0 0
    %1445 = vmatpush2.bf16.msra.mxu0 %v1288
    %1446 = vmatprep.subr.bf16.mxu0 0
    %1447 = vmatpush2.bf16.msra.mxu0 %v1287
    %1448 = vmatprep.subr.bf16.mxu0 0
    %1449 = vmatpush2.bf16.msra.mxu0 %v1286
    %1450 = vmatprep.subr.bf16.mxu0 0
    %1451 = vmatpush2.bf16.msra.mxu0 %v1285
    %1452 = vmatprep.subr.bf16.mxu0 0
    %1453 = vmatpush2.bf16.msra.mxu0 %v1284
    %1454 = vmatprep.mubr.bf16.mxu0 %v948
    %1455 = vmatmul.mubr.bf16.gmra.mxu0 %v947
    %v1456 = vpop.f32.mrf.mxu0
    %v1457 = vadd.f32 %v1416, %v1456
    %v1458 = vpop.f32.mrf.mxu0
    %v1459 = vpop.f32.mrf.mxu0
    %v1460 = vadd.f32 %v1419, %v1459
    %v1461 = vpop.f32.mrf.mxu0
    %1462 = vdwg.mxu0
    %v1463 = vmax.f32 %v1457, 0.0
    %v1464 = vmax.f32 %v1460, 0.0
    %1465 = vrot.lane.b32.xlu0 0.0, 32
    %v1466 = vpop.permute.xlu0 %1465
    %v1468 = vsel %vm444, %v386, %v1466
    %v1478 = vcombine.low %v445, %v446
    %v1479 = vcombine.low %v447, %v448
    %v1481 = vunpack.c.l.s4 1983009808
    %v1482 = vunpack.c.0.s8 %v1481
    %v1483 = vlaneseq
    %v1484 = vshrl.u32 %v1483, 7
    %v1485 = vsub.s32 %v1482, %v1484
    %v1486 = vrot.slane %v1478, %v1485
    %v1488 = vunpack.c.l.s4 1983009808
    %v1489 = vunpack.c.0.s8 %v1488
    %v1490 = vlaneseq
    %v1491 = vshrl.u32 %v1490, 7
    %v1492 = vsub.s32 %v1489, %v1491
    %v1493 = vrot.slane %v1479, %v1492
    %v1494 = vcombine.low %v1486, %v1493
    %v1495 = vcombine.low %v449, %v450
    %v1496 = vcombine.low %v451, %v452
    %v1498 = vunpack.c.l.s4 1983009808
    %v1499 = vunpack.c.0.s8 %v1498
    %v1500 = vlaneseq
    %v1501 = vshrl.u32 %v1500, 7
    %v1502 = vsub.s32 %v1499, %v1501
    %v1503 = vrot.slane %v1495, %v1502
    %v1505 = vunpack.c.l.s4 1983009808
    %v1506 = vunpack.c.0.s8 %v1505
    %v1507 = vlaneseq
    %v1508 = vshrl.u32 %v1507, 7
    %v1509 = vsub.s32 %v1506, %v1508
    %v1510 = vrot.slane %v1496, %v1509
    %v1511 = vcombine.low %v1503, %v1510
    %v1513 = vunpack.c.l.s4 1983009808
    %v1514 = vunpack.c.0.s8 %v1513
    %v1515 = vlaneseq
    %v1516 = vshrl.u32 %v1515, 7
    %v1517 = vsub.s32 %v1514, %v1516
    %v1518 = vrot.slane %v1468, %v1517
    %v1522 = vpack.c.bf16 %v1511, %v1494
    %v1523 = vpack.c.bf16 %v1518, %v1518
    %v1524 = vld [vmem:[#allocation7] sm:$0xff]
    %v1525 = vld [vmem:[#allocation7 + $0x8] sm:$0xff]
    %v1526 = vld [vmem:[#allocation7 + $0x10] sm:$0xff]
    %v1527 = vld [vmem:[#allocation7 + $0x18] sm:$0xff]
    %v1528 = vld [vmem:[#allocation7 + $0x20] sm:$0xff]
    %v1529 = vld [vmem:[#allocation7 + $0x28] sm:$0xff]
    %v1530 = vld [vmem:[#allocation7 + $0x30] sm:$0xff]
    %v1531 = vld [vmem:[#allocation7 + $0x38] sm:$0xff]
    %v1532 = vld [vmem:[#allocation8] sm:$0x3]
    %v1534 = vlaneseq
    %v1535 = vshrl.u32 %v1534, 7
    %v1536 = vsub.s32 0, %v1535
    %v1537 = vrot.slane %v1532, %v1536
    %v1538 = vlaneseq
    %v1539 = vshrl.u32 %v1538, 7
    %v1540 = vsub.s32 1, %v1539
    %v1541 = vrot.slane %v1532, %v1540
    %v1552 = vunpack.c.l.b16 %v1524
    %v1553 = vunpack.c.h.b16 %v1524
    %v1554 = vunpack.c.l.b16 %v1525
    %v1555 = vunpack.c.h.b16 %v1525
    %v1556 = vunpack.c.l.b16 %v1526
    %v1557 = vunpack.c.h.b16 %v1526
    %v1558 = vunpack.c.l.b16 %v1527
    %v1559 = vunpack.c.h.b16 %v1527
    %v1560 = vunpack.c.l.b16 %v1528
    %v1561 = vunpack.c.h.b16 %v1528
    %v1562 = vunpack.c.l.b16 %v1529
    %v1563 = vunpack.c.h.b16 %v1529
    %v1564 = vunpack.c.l.b16 %v1530
    %v1565 = vunpack.c.h.b16 %v1530
    %v1566 = vunpack.c.l.b16 %v1531
    %v1567 = vunpack.c.h.b16 %v1531
    %v1568 = vpack.c.b16 %v1554, %v1552
    %v1569 = vpack.c.b16 %v1555, %v1553
    %v1570 = vpack.c.b16 %v1558, %v1556
    %v1571 = vpack.c.b16 %v1559, %v1557
    %v1572 = vpack.c.b16 %v1562, %v1560
    %v1573 = vpack.c.b16 %v1563, %v1561
    %v1574 = vpack.c.b16 %v1566, %v1564
    %v1575 = vpack.c.b16 %v1567, %v1565
    %v1585 = vsel %vm453, %v1522, 0
    %v1588 = vsel %vm453, %v1523, 0
    %1590 = vmatprep.subr.bf16.mxu0 0
    %1591 = vmatpush1.bf16.msra.mxu0 0
    %1592 = vmatprep.subr.bf16.mxu0 0
    %1593 = vmatpush1.bf16.msra.mxu0 0
    %1594 = vmatprep.subr.bf16.mxu0 0
    %1595 = vmatpush1.bf16.msra.mxu0 0
    %1596 = vmatprep.subr.bf16.mxu0 0
    %1597 = vmatpush1.bf16.msra.mxu0 0
    %1598 = vmatprep.subr.bf16.mxu0 %v1575
    %1599 = vmatpush1.bf16.msra.mxu0 %v1574
    %1600 = vmatprep.subr.bf16.mxu0 %v1573
    %1601 = vmatpush1.bf16.msra.mxu0 %v1572
    %1602 = vmatprep.subr.bf16.mxu0 %v1571
    %1603 = vmatpush1.bf16.msra.mxu0 %v1570
    %1604 = vmatprep.subr.bf16.mxu0 %v1569
    %1605 = vmatpush1.bf16.msra.mxu0 %v1568
    %1606 = vmatprep.subr.bf16.mxu0 0
    %1607 = vmatpush2.bf16.msra.mxu0 0
    %1608 = vmatprep.subr.bf16.mxu0 0
    %1609 = vmatpush2.bf16.msra.mxu0 0
    %1610 = vmatprep.subr.bf16.mxu0 0
    %1611 = vmatpush2.bf16.msra.mxu0 0
    %1612 = vmatprep.subr.bf16.mxu0 0
    %1613 = vmatpush2.bf16.msra.mxu0 0
    %1614 = vmatprep.subr.bf16.mxu0 0
    %1615 = vmatpush2.bf16.msra.mxu0 0
    %1616 = vmatprep.subr.bf16.mxu0 0
    %1617 = vmatpush2.bf16.msra.mxu0 0
    %1618 = vmatprep.subr.bf16.mxu0 0
    %1619 = vmatpush2.bf16.msra.mxu0 0
    %1620 = vmatprep.subr.bf16.mxu0 0
    %1621 = vmatpush2.bf16.msra.mxu0 0
    %1622 = vmatprep.mubr.bf16.mxu0 0
    %1623 = vmatmul.mubr.bf16.gmra.mxu0 %v1585
    %v1624 = vpop.f32.mrf.mxu0
    %v1625 = vadd.f32 %v1537, %v1624
    %v1626 = vpop.f32.mrf.mxu0
    %v1627 = vadd.f32 %v1541, %v1626
    %v1628 = vpop.f32.mrf.mxu0
    %v1629 = vadd.f32 %v1537, %v1628
    %v1630 = vpop.f32.mrf.mxu0
    %v1631 = vadd.f32 %v1541, %v1630
    %1632 = vmatprep.mubr.bf16.mxu0 0
    %1633 = vmatmul.mubr.bf16.gmra.mxu0 %v1588
    %v1634 = vpop.f32.mrf.mxu0
    %v1635 = vadd.f32 %v1537, %v1634
    %v1636 = vpop.f32.mrf.mxu0
    %v1637 = vadd.f32 %v1541, %v1636
    %v1638 = vpop.f32.mrf.mxu0
    %v1639 = vpop.f32.mrf.mxu0
    %1640 = vdwg.mxu0
    %v1641 = vmax.f32 %v1625, 0.0
    %v1642 = vmax.f32 %v1627, 0.0
    %v1643 = vmax.f32 %v1629, 0.0
    %v1644 = vmax.f32 %v1631, 0.0
    %v1645 = vmax.f32 %v1635, 0.0
    %v1646 = vmax.f32 %v1637, 0.0
    %v1653 = vcombine.low %v1641, %v1642
    %v1654 = vcombine.high %v1641, %v1642
    %v1656 = vunpack.c.l.s4 1983009808
    %v1657 = vunpack.c.0.s8 %v1656
    %v1658 = vlaneseq
    %v1659 = vshrl.u32 %v1658, 7
    %v1660 = vsub.s32 %v1657, %v1659
    %v1661 = vrot.slane %v1653, %v1660
    %v1663 = vunpack.c.l.s4 1983009808
    %v1664 = vunpack.c.0.s8 %v1663
    %v1665 = vlaneseq
    %v1666 = vshrl.u32 %v1665, 7
    %v1667 = vsub.s32 %v1664, %v1666
    %v1668 = vrot.slane %v1654, %v1667
    %v1669 = vcombine.high %v1661, %v1661
    %v1670 = vcombine.high %v1668, %v1668
    %v1671 = vcombine.low %v1643, %v1644
    %v1672 = vcombine.high %v1643, %v1644
    %v1674 = vunpack.c.l.s4 1983009808
    %v1675 = vunpack.c.0.s8 %v1674
    %v1676 = vlaneseq
    %v1677 = vshrl.u32 %v1676, 7
    %v1678 = vsub.s32 %v1675, %v1677
    %v1679 = vrot.slane %v1671, %v1678
    %v1681 = vunpack.c.l.s4 1983009808
    %v1682 = vunpack.c.0.s8 %v1681
    %v1683 = vlaneseq
    %v1684 = vshrl.u32 %v1683, 7
    %v1685 = vsub.s32 %v1682, %v1684
    %v1686 = vrot.slane %v1672, %v1685
    %v1687 = vcombine.high %v1679, %v1679
    %v1688 = vcombine.high %v1686, %v1686
    %v1689 = vcombine.low %v1645, %v1646
    %v1691 = vunpack.c.l.s4 1983009808
    %v1692 = vunpack.c.0.s8 %v1691
    %v1693 = vlaneseq
    %v1694 = vshrl.u32 %v1693, 7
    %v1695 = vsub.s32 %v1692, %v1694
    %v1696 = vrot.slane %v1689, %v1695
    %v1698 = vunpack.c.l.s4 1983009808
    %v1699 = vunpack.c.0.s8 %v1698
    %v1700 = vlaneseq
    %v1701 = vshrl.u32 %v1700, 7
    %v1702 = vsub.s32 %v1699, %v1701
    %v1703 = vrot.slane %v1661, %v1702
    %v1704 = vcombine.high %v1703, %v1703
    %v1706 = vunpack.c.l.s4 1983009808
    %v1707 = vunpack.c.0.s8 %v1706
    %v1708 = vlaneseq
    %v1709 = vshrl.u32 %v1708, 7
    %v1710 = vsub.s32 %v1707, %v1709
    %v1711 = vrot.slane %v1669, %v1710
    %v1712 = vcombine.high %v1711, %v1711
    %v1714 = vunpack.c.l.s4 1983009808
    %v1715 = vunpack.c.0.s8 %v1714
    %v1716 = vlaneseq
    %v1717 = vshrl.u32 %v1716, 7
    %v1718 = vsub.s32 %v1715, %v1717
    %v1719 = vrot.slane %v1668, %v1718
    %v1720 = vcombine.high %v1719, %v1719
    %v1722 = vunpack.c.l.s4 1983009808
    %v1723 = vunpack.c.0.s8 %v1722
    %v1724 = vlaneseq
    %v1725 = vshrl.u32 %v1724, 7
    %v1726 = vsub.s32 %v1723, %v1725
    %v1727 = vrot.slane %v1670, %v1726
    %v1728 = vcombine.high %v1727, %v1727
    %v1730 = vunpack.c.l.s4 1983009808
    %v1731 = vunpack.c.0.s8 %v1730
    %v1732 = vlaneseq
    %v1733 = vshrl.u32 %v1732, 7
    %v1734 = vsub.s32 %v1731, %v1733
    %v1735 = vrot.slane %v1679, %v1734
    %v1736 = vcombine.high %v1735, %v1735
    %v1738 = vunpack.c.l.s4 1983009808
    %v1739 = vunpack.c.0.s8 %v1738
    %v1740 = vlaneseq
    %v1741 = vshrl.u32 %v1740, 7
    %v1742 = vsub.s32 %v1739, %v1741
    %v1743 = vrot.slane %v1687, %v1742
    %v1744 = vcombine.high %v1743, %v1743
    %v1746 = vunpack.c.l.s4 1983009808
    %v1747 = vunpack.c.0.s8 %v1746
    %v1748 = vlaneseq
    %v1749 = vshrl.u32 %v1748, 7
    %v1750 = vsub.s32 %v1747, %v1749
    %v1751 = vrot.slane %v1686, %v1750
    %v1752 = vcombine.high %v1751, %v1751
    %v1754 = vunpack.c.l.s4 1983009808
    %v1755 = vunpack.c.0.s8 %v1754
    %v1756 = vlaneseq
    %v1757 = vshrl.u32 %v1756, 7
    %v1758 = vsub.s32 %v1755, %v1757
    %v1759 = vrot.slane %v1688, %v1758
    %v1760 = vcombine.high %v1759, %v1759
    %v1762 = vunpack.c.l.s4 1983009808
    %v1763 = vunpack.c.0.s8 %v1762
    %v1764 = vlaneseq
    %v1765 = vshrl.u32 %v1764, 7
    %v1766 = vsub.s32 %v1763, %v1765
    %v1767 = vrot.slane %v1696, %v1766
    %v1768 = vcombine.high %v1767, %v1767
    %v1769 = vcombine.low %v1703, %v1704
    %v1771 = vunpack.c.l.s4 1983009808
    %v1772 = vunpack.c.0.s8 %v1771
    %v1773 = vlaneseq
    %v1774 = vshrl.u32 %v1773, 7
    %v1775 = vsub.s32 %v1772, %v1774
    %v1776 = vrot.slane %v1769, %v1775
    %v1777 = vcombine.low %v754, %v1776
    %v1778 = vcombine.low %v1711, %v1712
    %v1780 = vunpack.c.l.s4 1983009808
    %v1781 = vunpack.c.0.s8 %v1780
    %v1782 = vlaneseq
    %v1783 = vshrl.u32 %v1782, 7
    %v1784 = vsub.s32 %v1781, %v1783
    %v1785 = vrot.slane %v1778, %v1784
    %v1786 = vcombine.low %v1776, %v1785
    %v1787 = vcombine.low %v1719, %v1720
    %v1789 = vunpack.c.l.s4 1983009808
    %v1790 = vunpack.c.0.s8 %v1789
    %v1791 = vlaneseq
    %v1792 = vshrl.u32 %v1791, 7
    %v1793 = vsub.s32 %v1790, %v1792
    %v1794 = vrot.slane %v1787, %v1793
    %v1795 = vcombine.low %v1785, %v1794
    %v1796 = vcombine.low %v1727, %v1728
    %v1798 = vunpack.c.l.s4 1983009808
    %v1799 = vunpack.c.0.s8 %v1798
    %v1800 = vlaneseq
    %v1801 = vshrl.u32 %v1800, 7
    %v1802 = vsub.s32 %v1799, %v1801
    %v1803 = vrot.slane %v1796, %v1802
    %v1804 = vcombine.low %v1794, %v1803
    %v1805 = vcombine.low %v1735, %v1736
    %v1807 = vunpack.c.l.s4 1983009808
    %v1808 = vunpack.c.0.s8 %v1807
    %v1809 = vlaneseq
    %v1810 = vshrl.u32 %v1809, 7
    %v1811 = vsub.s32 %v1808, %v1810
    %v1812 = vrot.slane %v1805, %v1811
    %v1813 = vcombine.low %v1803, %v1812
    %v1814 = vcombine.low %v1743, %v1744
    %v1816 = vunpack.c.l.s4 1983009808
    %v1817 = vunpack.c.0.s8 %v1816
    %v1818 = vlaneseq
    %v1819 = vshrl.u32 %v1818, 7
    %v1820 = vsub.s32 %v1817, %v1819
    %v1821 = vrot.slane %v1814, %v1820
    %v1822 = vcombine.low %v1812, %v1821
    %v1823 = vcombine.low %v1751, %v1752
    %v1825 = vunpack.c.l.s4 1983009808
    %v1826 = vunpack.c.0.s8 %v1825
    %v1827 = vlaneseq
    %v1828 = vshrl.u32 %v1827, 7
    %v1829 = vsub.s32 %v1826, %v1828
    %v1830 = vrot.slane %v1823, %v1829
    %v1831 = vcombine.low %v1821, %v1830
    %v1832 = vcombine.low %v1759, %v1760
    %v1834 = vunpack.c.l.s4 1983009808
    %v1835 = vunpack.c.0.s8 %v1834
    %v1836 = vlaneseq
    %v1837 = vshrl.u32 %v1836, 7
    %v1838 = vsub.s32 %v1835, %v1837
    %v1839 = vrot.slane %v1832, %v1838
    %v1840 = vcombine.low %v1830, %v1839
    %v1841 = vcombine.low %v1767, %v1768
    %v1843 = vunpack.c.l.s4 1983009808
    %v1844 = vunpack.c.0.s8 %v1843
    %v1845 = vlaneseq
    %v1846 = vshrl.u32 %v1845, 7
    %v1847 = vsub.s32 %v1844, %v1846
    %v1848 = vrot.slane %v1841, %v1847
    %v1849 = vcombine.low %v1839, %v1848
    %v1850 = vcombine.low %v1848, %v754
    %v1851 = vcombine.low %v1777, %v1786
    %v1852 = vcombine.high %v1777, %v1786
    %v1853 = vcombine.low %v1795, %v1804
    %v1854 = vcombine.high %v1795, %v1804
    %v1856 = vunpack.c.l.s4 1983009808
    %v1857 = vunpack.c.0.s8 %v1856
    %v1858 = vlaneseq
    %v1859 = vshrl.u32 %v1858, 7
    %v1860 = vsub.s32 %v1857, %v1859
    %v1861 = vrot.slane %v1851, %v1860
    %v1863 = vunpack.c.l.s4 1983009808
    %v1864 = vunpack.c.0.s8 %v1863
    %v1865 = vlaneseq
    %v1866 = vshrl.u32 %v1865, 7
    %v1867 = vsub.s32 %v1864, %v1866
    %v1868 = vrot.slane %v1852, %v1867
    %v1870 = vunpack.c.l.s4 1983009808
    %v1871 = vunpack.c.0.s8 %v1870
    %v1872 = vlaneseq
    %v1873 = vshrl.u32 %v1872, 7
    %v1874 = vsub.s32 %v1871, %v1873
    %v1875 = vrot.slane %v1853, %v1874
    %v1877 = vunpack.c.l.s4 1983009808
    %v1878 = vunpack.c.0.s8 %v1877
    %v1879 = vlaneseq
    %v1880 = vshrl.u32 %v1879, 7
    %v1881 = vsub.s32 %v1878, %v1880
    %v1882 = vrot.slane %v1854, %v1881
    %v1883 = vcombine.low %v1861, %v1875
    %v1884 = vcombine.high %v1861, %v1875
    %v1885 = vcombine.low %v1868, %v1882
    %v1886 = vcombine.high %v1868, %v1882
    %v1887 = vcombine.low %v1813, %v1822
    %v1888 = vcombine.high %v1813, %v1822
    %v1889 = vcombine.low %v1831, %v1840
    %v1890 = vcombine.high %v1831, %v1840
    %v1892 = vunpack.c.l.s4 1983009808
    %v1893 = vunpack.c.0.s8 %v1892
    %v1894 = vlaneseq
    %v1895 = vshrl.u32 %v1894, 7
    %v1896 = vsub.s32 %v1893, %v1895
    %v1897 = vrot.slane %v1887, %v1896
    %v1899 = vunpack.c.l.s4 1983009808
    %v1900 = vunpack.c.0.s8 %v1899
    %v1901 = vlaneseq
    %v1902 = vshrl.u32 %v1901, 7
    %v1903 = vsub.s32 %v1900, %v1902
    %v1904 = vrot.slane %v1888, %v1903
    %v1906 = vunpack.c.l.s4 1983009808
    %v1907 = vunpack.c.0.s8 %v1906
    %v1908 = vlaneseq
    %v1909 = vshrl.u32 %v1908, 7
    %v1910 = vsub.s32 %v1907, %v1909
    %v1911 = vrot.slane %v1889, %v1910
    %v1913 = vunpack.c.l.s4 1983009808
    %v1914 = vunpack.c.0.s8 %v1913
    %v1915 = vlaneseq
    %v1916 = vshrl.u32 %v1915, 7
    %v1917 = vsub.s32 %v1914, %v1916
    %v1918 = vrot.slane %v1890, %v1917
    %v1919 = vcombine.low %v1897, %v1911
    %v1920 = vcombine.high %v1897, %v1911
    %v1921 = vcombine.low %v1904, %v1918
    %v1922 = vcombine.high %v1904, %v1918
    %v1923 = vcombine.low %v1849, %v1850
    %v1924 = vcombine.high %v1849, %v1850
    %v1926 = vunpack.c.l.s4 1983009808
    %v1927 = vunpack.c.0.s8 %v1926
    %v1928 = vlaneseq
    %v1929 = vshrl.u32 %v1928, 7
    %v1930 = vsub.s32 %v1927, %v1929
    %v1931 = vrot.slane %v1923, %v1930
    %v1933 = vunpack.c.l.s4 1983009808
    %v1934 = vunpack.c.0.s8 %v1933
    %v1935 = vlaneseq
    %v1936 = vshrl.u32 %v1935, 7
    %v1937 = vsub.s32 %v1934, %v1936
    %v1938 = vrot.slane %v1924, %v1937
    %v1939 = vcombine.high %v1931, %v1931
    %v1940 = vcombine.high %v1938, %v1938
    %v1953 = vpack.c.bf16 %v1919, %v1883
    %v1954 = vpack.c.bf16 %v1920, %v1884
    %v1955 = vpack.c.bf16 %v1921, %v1885
    %v1956 = vpack.c.bf16 %v1922, %v1886
    %v1957 = vpack.c.bf16 %v1931, %v1931
    %v1958 = vpack.c.bf16 %v1939, %v1939
    %v1959 = vpack.c.bf16 %v1938, %v1938
    %v1960 = vpack.c.bf16 %v1940, %v1940
    %v1961 = vld [vmem:[#allocation10] sm:$0xf]
    %v1962 = vld [vmem:[#allocation10 + $0x4] sm:$0xf]
    %v1963 = vld [vmem:[#allocation10 + $0x8] sm:$0xf]
    %v1964 = vld [vmem:[#allocation10 + $0xc] sm:$0xf]
    %v1965 = vld [vmem:[#allocation10 + $0x10] sm:$0xf]
    %v1966 = vld [vmem:[#allocation10 + $0x14] sm:$0xf]
    %v1967 = vld [vmem:[#allocation10 + $0x18] sm:$0xf]
    %v1968 = vld [vmem:[#allocation10 + $0x1c] sm:$0xf]
    %v1969 = vld [vmem:[#allocation10 + $0x20] sm:$0xf]
    %v1970 = vld [vmem:[#allocation10 + $0x24] sm:$0xf]
    %v1971 = vld [vmem:[#allocation10 + $0x28] sm:$0xf]
    %v1972 = vld [vmem:[#allocation10 + $0x2c] sm:$0xf]
    %v1973 = vld [vmem:[#allocation10 + $0x30] sm:$0xf]
    %v1974 = vld [vmem:[#allocation10 + $0x34] sm:$0xf]
    %v1975 = vld [vmem:[#allocation10 + $0x38] sm:$0xf]
    %v1976 = vld [vmem:[#allocation10 + $0x3c] sm:$0xf]
    %v1977 = vld [vmem:[#allocation10 + $0x40] sm:$0xf]
    %v1978 = vld [vmem:[#allocation10 + $0x44] sm:$0xf]
    %v1979 = vld [vmem:[#allocation10 + $0x48] sm:$0xf]
    %v1980 = vld [vmem:[#allocation10 + $0x4c] sm:$0xf]
    %v1981 = vld [vmem:[#allocation10 + $0x50] sm:$0xf]
    %v1982 = vld [vmem:[#allocation10 + $0x54] sm:$0xf]
    %v1983 = vld [vmem:[#allocation10 + $0x58] sm:$0xf]
    %v1984 = vld [vmem:[#allocation10 + $0x5c] sm:$0xf]
    %v1985 = vld [vmem:[#allocation10 + $0x60] sm:$0xf]
    %v1986 = vld [vmem:[#allocation10 + $0x64] sm:$0xf]
    %v1987 = vld [vmem:[#allocation10 + $0x68] sm:$0xf]
    %v1988 = vld [vmem:[#allocation10 + $0x6c] sm:$0xf]
    %v1989 = vld [vmem:[#allocation10 + $0x70] sm:$0xf]
    %v1990 = vld [vmem:[#allocation10 + $0x74] sm:$0xf]
    %v1991 = vld [vmem:[#allocation10 + $0x78] sm:$0xf]
    %v1992 = vld [vmem:[#allocation10 + $0x7c] sm:$0xf]
    %v1993 = vld [vmem:[#allocation10 + $0x80] sm:$0xf]
    %v1994 = vld [vmem:[#allocation10 + $0x84] sm:$0xf]
    %v1995 = vld [vmem:[#allocation10 + $0x88] sm:$0xf]
    %v1996 = vld [vmem:[#allocation10 + $0x8c] sm:$0xf]
    %v1997 = vld [vmem:[#allocation10 + $0x90] sm:$0xf]
    %v1998 = vld [vmem:[#allocation10 + $0x94] sm:$0xf]
    %v1999 = vld [vmem:[#allocation10 + $0x98] sm:$0xf]
    %v2000 = vld [vmem:[#allocation10 + $0x9c] sm:$0xf]
    %v2001 = vld [vmem:[#allocation10 + $0xa0] sm:$0xf]
    %v2002 = vld [vmem:[#allocation10 + $0xa4] sm:$0xf]
    %v2003 = vld [vmem:[#allocation10 + $0xa8] sm:$0xf]
    %v2004 = vld [vmem:[#allocation10 + $0xac] sm:$0xf]
    %v2005 = vld [vmem:[#allocation10 + $0xb0] sm:$0xf]
    %v2006 = vld [vmem:[#allocation10 + $0xb4] sm:$0xf]
    %v2007 = vld [vmem:[#allocation10 + $0xb8] sm:$0xf]
    %v2008 = vld [vmem:[#allocation10 + $0xbc] sm:$0xf]
    %v2009 = vld [vmem:[#allocation10 + $0xc0] sm:$0xf]
    %v2010 = vld [vmem:[#allocation10 + $0xc4] sm:$0xf]
    %v2011 = vld [vmem:[#allocation10 + $0xc8] sm:$0xf]
    %v2012 = vld [vmem:[#allocation10 + $0xcc] sm:$0xf]
    %v2013 = vld [vmem:[#allocation10 + $0xd0] sm:$0xf]
    %v2014 = vld [vmem:[#allocation10 + $0xd4] sm:$0xf]
    %v2015 = vld [vmem:[#allocation10 + $0xd8] sm:$0xf]
    %v2016 = vld [vmem:[#allocation10 + $0xdc] sm:$0xf]
    %v2017 = vld [vmem:[#allocation10 + $0xe0] sm:$0xf]
    %v2018 = vld [vmem:[#allocation10 + $0xe4] sm:$0xf]
    %v2019 = vld [vmem:[#allocation10 + $0xe8] sm:$0xf]
    %v2020 = vld [vmem:[#allocation10 + $0xec] sm:$0xf]
    %v2021 = vld [vmem:[#allocation10 + $0xf0] sm:$0xf]
    %v2022 = vld [vmem:[#allocation10 + $0xf4] sm:$0xf]
    %v2023 = vld [vmem:[#allocation10 + $0xf8] sm:$0xf]
    %v2024 = vld [vmem:[#allocation10 + $0xfc] sm:$0xf]
    %v2025 = vld [vmem:[#allocation11] sm:$0x1]
    %v2027 = vlaneseq
    %v2028 = vshrl.u32 %v2027, 7
    %v2029 = vsub.s32 0, %v2028
    %v2030 = vrot.slane %v2025, %v2029
    %v2096 = vunpack.c.l.b16 %v1961
    %v2097 = vunpack.c.l.b16 %v1962
    %v2098 = vunpack.c.l.b16 %v1963
    %v2099 = vunpack.c.l.b16 %v1964
    %v2100 = vunpack.c.l.b16 %v1965
    %v2101 = vunpack.c.l.b16 %v1966
    %v2102 = vunpack.c.l.b16 %v1967
    %v2103 = vunpack.c.l.b16 %v1968
    %v2104 = vunpack.c.l.b16 %v1969
    %v2105 = vunpack.c.l.b16 %v1970
    %v2106 = vunpack.c.l.b16 %v1971
    %v2107 = vunpack.c.l.b16 %v1972
    %v2108 = vunpack.c.l.b16 %v1973
    %v2109 = vunpack.c.l.b16 %v1974
    %v2110 = vunpack.c.l.b16 %v1975
    %v2111 = vunpack.c.l.b16 %v1976
    %v2112 = vunpack.c.l.b16 %v1977
    %v2113 = vunpack.c.l.b16 %v1978
    %v2114 = vunpack.c.l.b16 %v1979
    %v2115 = vunpack.c.l.b16 %v1980
    %v2116 = vunpack.c.l.b16 %v1981
    %v2117 = vunpack.c.l.b16 %v1982
    %v2118 = vunpack.c.l.b16 %v1983
    %v2119 = vunpack.c.l.b16 %v1984
    %v2120 = vunpack.c.l.b16 %v1985
    %v2121 = vunpack.c.l.b16 %v1986
    %v2122 = vunpack.c.l.b16 %v1987
    %v2123 = vunpack.c.l.b16 %v1988
    %v2124 = vunpack.c.l.b16 %v1989
    %v2125 = vunpack.c.l.b16 %v1990
    %v2126 = vunpack.c.l.b16 %v1991
    %v2127 = vunpack.c.l.b16 %v1992
    %v2128 = vunpack.c.l.b16 %v1993
    %v2129 = vunpack.c.l.b16 %v1994
    %v2130 = vunpack.c.l.b16 %v1995
    %v2131 = vunpack.c.l.b16 %v1996
    %v2132 = vunpack.c.l.b16 %v1997
    %v2133 = vunpack.c.l.b16 %v1998
    %v2134 = vunpack.c.l.b16 %v1999
    %v2135 = vunpack.c.l.b16 %v2000
    %v2136 = vunpack.c.l.b16 %v2001
    %v2137 = vunpack.c.l.b16 %v2002
    %v2138 = vunpack.c.l.b16 %v2003
    %v2139 = vunpack.c.l.b16 %v2004
    %v2140 = vunpack.c.l.b16 %v2005
    %v2141 = vunpack.c.l.b16 %v2006
    %v2142 = vunpack.c.l.b16 %v2007
    %v2143 = vunpack.c.l.b16 %v2008
    %v2144 = vunpack.c.l.b16 %v2009
    %v2145 = vunpack.c.l.b16 %v2010
    %v2146 = vunpack.c.l.b16 %v2011
    %v2147 = vunpack.c.l.b16 %v2012
    %v2148 = vunpack.c.l.b16 %v2013
    %v2149 = vunpack.c.l.b16 %v2014
    %v2150 = vunpack.c.l.b16 %v2015
    %v2151 = vunpack.c.l.b16 %v2016
    %v2152 = vunpack.c.l.b16 %v2017
    %v2153 = vunpack.c.l.b16 %v2018
    %v2154 = vunpack.c.l.b16 %v2019
    %v2155 = vunpack.c.l.b16 %v2020
    %v2156 = vunpack.c.l.b16 %v2021
    %v2157 = vunpack.c.l.b16 %v2022
    %v2158 = vunpack.c.l.b16 %v2023
    %v2159 = vunpack.c.l.b16 %v2024
    %v2160 = vpack.c.b16 %v2097, %v2096
    %v2161 = vpack.c.b16 %v2099, %v2098
    %v2162 = vpack.c.b16 %v2101, %v2100
    %v2163 = vpack.c.b16 %v2103, %v2102
    %v2164 = vpack.c.b16 %v2105, %v2104
    %v2165 = vpack.c.b16 %v2107, %v2106
    %v2166 = vpack.c.b16 %v2109, %v2108
    %v2167 = vpack.c.b16 %v2111, %v2110
    %v2168 = vpack.c.b16 %v2113, %v2112
    %v2169 = vpack.c.b16 %v2115, %v2114
    %v2170 = vpack.c.b16 %v2117, %v2116
    %v2171 = vpack.c.b16 %v2119, %v2118
    %v2172 = vpack.c.b16 %v2121, %v2120
    %v2173 = vpack.c.b16 %v2123, %v2122
    %v2174 = vpack.c.b16 %v2125, %v2124
    %v2175 = vpack.c.b16 %v2127, %v2126
    %v2176 = vpack.c.b16 %v2129, %v2128
    %v2177 = vpack.c.b16 %v2131, %v2130
    %v2178 = vpack.c.b16 %v2133, %v2132
    %v2179 = vpack.c.b16 %v2135, %v2134
    %v2180 = vpack.c.b16 %v2137, %v2136
    %v2181 = vpack.c.b16 %v2139, %v2138
    %v2182 = vpack.c.b16 %v2141, %v2140
    %v2183 = vpack.c.b16 %v2143, %v2142
    %v2184 = vpack.c.b16 %v2145, %v2144
    %v2185 = vpack.c.b16 %v2147, %v2146
    %v2186 = vpack.c.b16 %v2149, %v2148
    %v2187 = vpack.c.b16 %v2151, %v2150
    %v2188 = vpack.c.b16 %v2153, %v2152
    %v2189 = vpack.c.b16 %v2155, %v2154
    %v2190 = vpack.c.b16 %v2157, %v2156
    %v2191 = vpack.c.b16 %v2159, %v2158
    %2224 = vmatprep.subr.bf16.mxu0 0
    %2225 = vmatpush1.bf16.msra.mxu0 %v2167
    %2226 = vmatprep.subr.bf16.mxu0 0
    %2227 = vmatpush1.bf16.msra.mxu0 %v2166
    %2228 = vmatprep.subr.bf16.mxu0 0
    %2229 = vmatpush1.bf16.msra.mxu0 %v2165
    %2230 = vmatprep.subr.bf16.mxu0 0
    %2231 = vmatpush1.bf16.msra.mxu0 %v2164
    %2232 = vmatprep.subr.bf16.mxu0 0
    %2233 = vmatpush1.bf16.msra.mxu0 %v2163
    %2234 = vmatprep.subr.bf16.mxu0 0
    %2235 = vmatpush1.bf16.msra.mxu0 %v2162
    %2236 = vmatprep.subr.bf16.mxu0 0
    %2237 = vmatpush1.bf16.msra.mxu0 %v2161
    %2238 = vmatprep.subr.bf16.mxu0 0
    %2239 = vmatpush1.bf16.msra.mxu0 %v2160
    %2240 = vmatprep.subr.bf16.mxu0 0
    %2241 = vmatpush2.bf16.msra.mxu0 %v2175
    %2242 = vmatprep.subr.bf16.mxu0 0
    %2243 = vmatpush2.bf16.msra.mxu0 %v2174
    %2244 = vmatprep.subr.bf16.mxu0 0
    %2245 = vmatpush2.bf16.msra.mxu0 %v2173
    %2246 = vmatprep.subr.bf16.mxu0 0
    %2247 = vmatpush2.bf16.msra.mxu0 %v2172
    %2248 = vmatprep.subr.bf16.mxu0 0
    %2249 = vmatpush2.bf16.msra.mxu0 %v2171
    %2250 = vmatprep.subr.bf16.mxu0 0
    %2251 = vmatpush2.bf16.msra.mxu0 %v2170
    %2252 = vmatprep.subr.bf16.mxu0 0
    %2253 = vmatpush2.bf16.msra.mxu0 %v2169
    %2254 = vmatprep.subr.bf16.mxu0 0
    %2255 = vmatpush2.bf16.msra.mxu0 %v2168
    %2256 = vmatprep.mubr.bf16.mxu0 %v1954
    %2257 = vmatmul.mubr.bf16.gmra.mxu0 %v1953
    %v2258 = vpop.f32.mrf.mxu0
    %v2259 = vadd.f32 %v2030, %v2258
    %v2260 = vpop.f32.mrf.mxu0
    %v2261 = vpop.f32.mrf.mxu0
    %v2262 = vadd.f32 %v2030, %v2261
    %v2263 = vpop.f32.mrf.mxu0
    %2264 = vmatprep.mubr.bf16.mxu0 %v1958
    %2265 = vmatmul.mubr.bf16.gmra.mxu0 %v1957
    %v2266 = vpop.f32.mrf.mxu0
    %v2267 = vadd.f32 %v2030, %v2266
    %v2268 = vpop.f32.mrf.mxu0
    %v2269 = vpop.f32.mrf.mxu0
    %v2270 = vpop.f32.mrf.mxu0
    %2271 = vdwg.mxu0
    %2272 = vmatprep.subr.bf16.mxu0 0
    %2273 = vmatpush1.bf16.msra.mxu0 %v2183
    %2274 = vmatprep.subr.bf16.mxu0 0
    %2275 = vmatpush1.bf16.msra.mxu0 %v2182
    %2276 = vmatprep.subr.bf16.mxu0 0
    %2277 = vmatpush1.bf16.msra.mxu0 %v2181
    %2278 = vmatprep.subr.bf16.mxu0 0
    %2279 = vmatpush1.bf16.msra.mxu0 %v2180
    %2280 = vmatprep.subr.bf16.mxu0 0
    %2281 = vmatpush1.bf16.msra.mxu0 %v2179
    %2282 = vmatprep.subr.bf16.mxu0 0
    %2283 = vmatpush1.bf16.msra.mxu0 %v2178
    %2284 = vmatprep.subr.bf16.mxu0 0
    %2285 = vmatpush1.bf16.msra.mxu0 %v2177
    %2286 = vmatprep.subr.bf16.mxu0 0
    %2287 = vmatpush1.bf16.msra.mxu0 %v2176
    %2288 = vmatprep.subr.bf16.mxu0 0
    %2289 = vmatpush2.bf16.msra.mxu0 %v2191
    %2290 = vmatprep.subr.bf16.mxu0 0
    %2291 = vmatpush2.bf16.msra.mxu0 %v2190
    %2292 = vmatprep.subr.bf16.mxu0 0
    %2293 = vmatpush2.bf16.msra.mxu0 %v2189
    %2294 = vmatprep.subr.bf16.mxu0 0
    %2295 = vmatpush2.bf16.msra.mxu0 %v2188
    %2296 = vmatprep.subr.bf16.mxu0 0
    %2297 = vmatpush2.bf16.msra.mxu0 %v2187
    %2298 = vmatprep.subr.bf16.mxu0 0
    %2299 = vmatpush2.bf16.msra.mxu0 %v2186
    %2300 = vmatprep.subr.bf16.mxu0 0
    %2301 = vmatpush2.bf16.msra.mxu0 %v2185
    %2302 = vmatprep.subr.bf16.mxu0 0
    %2303 = vmatpush2.bf16.msra.mxu0 %v2184
    %2304 = vmatprep.mubr.bf16.mxu0 %v1956
    %2305 = vmatmul.mubr.bf16.gmra.mxu0 %v1955
    %v2306 = vpop.f32.mrf.mxu0
    %v2307 = vadd.f32 %v2259, %v2306
    %v2308 = vpop.f32.mrf.mxu0
    %v2309 = vpop.f32.mrf.mxu0
    %v2310 = vadd.f32 %v2262, %v2309
    %v2311 = vpop.f32.mrf.mxu0
    %2312 = vmatprep.mubr.bf16.mxu0 %v1960
    %2313 = vmatmul.mubr.bf16.gmra.mxu0 %v1959
    %v2314 = vpop.f32.mrf.mxu0
    %v2315 = vadd.f32 %v2267, %v2314
    %v2316 = vpop.f32.mrf.mxu0
    %v2317 = vpop.f32.mrf.mxu0
    %v2318 = vpop.f32.mrf.mxu0
    %2319 = vdwg.mxu0
    %v2320 = vmax.f32 %v2307, 0.0
    %v2321 = vmax.f32 %v2310, 0.0
    %v2322 = vmax.f32 %v2315, 0.0
    %v2323 = vpack.c.bf16 %v1464, %v1463
    %v2324 = vld [vmem:[#allocation13] sm:$0xff]
    %v2325 = vld [vmem:[#allocation13 + $0x8] sm:$0xff]
    %v2326 = vld [vmem:[#allocation13 + $0x10] sm:$0xff]
    %v2327 = vld [vmem:[#allocation13 + $0x18] sm:$0xff]
    %v2328 = vld [vmem:[#allocation13 + $0x20] sm:$0xff]
    %v2329 = vld [vmem:[#allocation13 + $0x28] sm:$0xff]
    %v2330 = vld [vmem:[#allocation13 + $0x30] sm:$0xff]
    %v2331 = vld [vmem:[#allocation13 + $0x38] sm:$0xff]
    %v2332 = vld [vmem:[#allocation13 + $0x40] sm:$0xff]
    %v2333 = vld [vmem:[#allocation13 + $0x48] sm:$0xff]
    %v2334 = vld [vmem:[#allocation13 + $0x50] sm:$0xff]
    %v2335 = vld [vmem:[#allocation13 + $0x58] sm:$0xff]
    %v2336 = vld [vmem:[#allocation13 + $0x60] sm:$0xff]
    %v2337 = vld [vmem:[#allocation13 + $0x68] sm:$0xff]
    %v2338 = vld [vmem:[#allocation13 + $0x70] sm:$0xff]
    %v2339 = vld [vmem:[#allocation13 + $0x78] sm:$0xff]
    %v2340 = vld [vmem:[#allocation13 + $0x80] sm:$0xff]
    %v2341 = vld [vmem:[#allocation13 + $0x88] sm:$0xff]
    %v2342 = vld [vmem:[#allocation13 + $0x90] sm:$0xff]
    %v2343 = vld [vmem:[#allocation13 + $0x98] sm:$0xff]
    %v2344 = vld [vmem:[#allocation13 + $0xa0] sm:$0xff]
    %v2345 = vld [vmem:[#allocation13 + $0xa8] sm:$0xff]
    %v2346 = vld [vmem:[#allocation13 + $0xb0] sm:$0xff]
    %v2347 = vld [vmem:[#allocation13 + $0xb8] sm:$0xff]
    %v2348 = vld [vmem:[#allocation13 + $0xc0] sm:$0xff]
    %v2349 = vld [vmem:[#allocation13 + $0xc8] sm:$0xff]
    %v2350 = vld [vmem:[#allocation13 + $0xd0] sm:$0xff]
    %v2351 = vld [vmem:[#allocation13 + $0xd8] sm:$0xff]
    %v2352 = vld [vmem:[#allocation13 + $0xe0] sm:$0xff]
    %v2353 = vld [vmem:[#allocation13 + $0xe8] sm:$0xff]
    %v2354 = vld [vmem:[#allocation13 + $0xf0] sm:$0xff]
    %v2355 = vld [vmem:[#allocation13 + $0xf8] sm:$0xff]
    %v2356 = vld [vmem:[#allocation13 + $0x100] sm:$0xff]
    %v2357 = vld [vmem:[#allocation13 + $0x108] sm:$0xff]
    %v2358 = vld [vmem:[#allocation13 + $0x110] sm:$0xff]
    %v2359 = vld [vmem:[#allocation13 + $0x118] sm:$0xff]
    %v2360 = vld [vmem:[#allocation13 + $0x120] sm:$0xff]
    %v2361 = vld [vmem:[#allocation13 + $0x128] sm:$0xff]
    %v2362 = vld [vmem:[#allocation13 + $0x130] sm:$0xff]
    %v2363 = vld [vmem:[#allocation13 + $0x138] sm:$0xff]
    %v2364 = vld [vmem:[#allocation13 + $0x140] sm:$0xff]
    %v2365 = vld [vmem:[#allocation13 + $0x148] sm:$0xff]
    %v2366 = vld [vmem:[#allocation13 + $0x150] sm:$0xff]
    %v2367 = vld [vmem:[#allocation13 + $0x158] sm:$0xff]
    %v2368 = vld [vmem:[#allocation13 + $0x160] sm:$0xff]
    %v2369 = vld [vmem:[#allocation13 + $0x168] sm:$0xff]
    %v2370 = vld [vmem:[#allocation13 + $0x170] sm:$0xff]
    %v2371 = vld [vmem:[#allocation13 + $0x178] sm:$0xff]
    %v2372 = vld [vmem:[#allocation13 + $0x180] sm:$0xff]
    %v2373 = vld [vmem:[#allocation13 + $0x188] sm:$0xff]
    %v2374 = vld [vmem:[#allocation13 + $0x190] sm:$0xff]
    %v2375 = vld [vmem:[#allocation13 + $0x198] sm:$0xff]
    %v2376 = vld [vmem:[#allocation13 + $0x1a0] sm:$0xff]
    %v2377 = vld [vmem:[#allocation13 + $0x1a8] sm:$0xff]
    %v2378 = vld [vmem:[#allocation13 + $0x1b0] sm:$0xff]
    %v2379 = vld [vmem:[#allocation13 + $0x1b8] sm:$0xff]
    %v2380 = vld [vmem:[#allocation13 + $0x1c0] sm:$0xff]
    %v2381 = vld [vmem:[#allocation13 + $0x1c8] sm:$0xff]
    %v2382 = vld [vmem:[#allocation13 + $0x1d0] sm:$0xff]
    %v2383 = vld [vmem:[#allocation13 + $0x1d8] sm:$0xff]
    %v2384 = vld [vmem:[#allocation13 + $0x1e0] sm:$0xff]
    %v2385 = vld [vmem:[#allocation13 + $0x1e8] sm:$0xff]
    %v2386 = vld [vmem:[#allocation13 + $0x1f0] sm:$0xff]
    %v2387 = vld [vmem:[#allocation13 + $0x1f8] sm:$0xff]
    %v2388 = vld [vmem:[%s13] sm:$0xff]
    %v2390 = vlaneseq
    %v2391 = vshrl.u32 %v2390, 7
    %v2392 = vsub.s32 0, %v2391
    %v2393 = vrot.slane %v2388, %v2392
    %v2394 = vlaneseq
    %v2395 = vshrl.u32 %v2394, 7
    %v2396 = vsub.s32 1, %v2395
    %v2397 = vrot.slane %v2388, %v2396
    %v2398 = vlaneseq
    %v2399 = vshrl.u32 %v2398, 7
    %v2400 = vsub.s32 2, %v2399
    %v2401 = vrot.slane %v2388, %v2400
    %v2402 = vlaneseq
    %v2403 = vshrl.u32 %v2402, 7
    %v2404 = vsub.s32 3, %v2403
    %v2405 = vrot.slane %v2388, %v2404
    %v2406 = vlaneseq
    %v2407 = vshrl.u32 %v2406, 7
    %v2408 = vsub.s32 4, %v2407
    %v2409 = vrot.slane %v2388, %v2408
    %v2410 = vlaneseq
    %v2411 = vshrl.u32 %v2410, 7
    %v2412 = vsub.s32 5, %v2411
    %v2413 = vrot.slane %v2388, %v2412
    %v2414 = vlaneseq
    %v2415 = vshrl.u32 %v2414, 7
    %v2416 = vsub.s32 6, %v2415
    %v2417 = vrot.slane %v2388, %v2416
    %v2418 = vlaneseq
    %v2419 = vshrl.u32 %v2418, 7
    %v2420 = vsub.s32 7, %v2419
    %v2421 = vrot.slane %v2388, %v2420
    %v2494 = vunpack.c.l.b16 %v2324
    %v2495 = vunpack.c.h.b16 %v2324
    %v2496 = vunpack.c.l.b16 %v2325
    %v2497 = vunpack.c.h.b16 %v2325
    %v2498 = vunpack.c.l.b16 %v2326
    %v2499 = vunpack.c.h.b16 %v2326
    %v2500 = vunpack.c.l.b16 %v2327
    %v2501 = vunpack.c.h.b16 %v2327
    %v2502 = vunpack.c.l.b16 %v2328
    %v2503 = vunpack.c.h.b16 %v2328
    %v2504 = vunpack.c.l.b16 %v2329
    %v2505 = vunpack.c.h.b16 %v2329
    %v2506 = vunpack.c.l.b16 %v2330
    %v2507 = vunpack.c.h.b16 %v2330
    %v2508 = vunpack.c.l.b16 %v2331
    %v2509 = vunpack.c.h.b16 %v2331
    %v2510 = vunpack.c.l.b16 %v2332
    %v2511 = vunpack.c.h.b16 %v2332
    %v2512 = vunpack.c.l.b16 %v2333
    %v2513 = vunpack.c.h.b16 %v2333
    %v2514 = vunpack.c.l.b16 %v2334
    %v2515 = vunpack.c.h.b16 %v2334
    %v2516 = vunpack.c.l.b16 %v2335
    %v2517 = vunpack.c.h.b16 %v2335
    %v2518 = vunpack.c.l.b16 %v2336
    %v2519 = vunpack.c.h.b16 %v2336
    %v2520 = vunpack.c.l.b16 %v2337
    %v2521 = vunpack.c.h.b16 %v2337
    %v2522 = vunpack.c.l.b16 %v2338
    %v2523 = vunpack.c.h.b16 %v2338
    %v2524 = vunpack.c.l.b16 %v2339
    %v2525 = vunpack.c.h.b16 %v2339
    %v2526 = vunpack.c.l.b16 %v2340
    %v2527 = vunpack.c.h.b16 %v2340
    %v2528 = vunpack.c.l.b16 %v2341
    %v2529 = vunpack.c.h.b16 %v2341
    %v2530 = vunpack.c.l.b16 %v2342
    %v2531 = vunpack.c.h.b16 %v2342
    %v2532 = vunpack.c.l.b16 %v2343
    %v2533 = vunpack.c.h.b16 %v2343
    %v2534 = vunpack.c.l.b16 %v2344
    %v2535 = vunpack.c.h.b16 %v2344
    %v2536 = vunpack.c.l.b16 %v2345
    %v2537 = vunpack.c.h.b16 %v2345
    %v2538 = vunpack.c.l.b16 %v2346
    %v2539 = vunpack.c.h.b16 %v2346
    %v2540 = vunpack.c.l.b16 %v2347
    %v2541 = vunpack.c.h.b16 %v2347
    %v2542 = vunpack.c.l.b16 %v2348
    %v2543 = vunpack.c.h.b16 %v2348
    %v2544 = vunpack.c.l.b16 %v2349
    %v2545 = vunpack.c.h.b16 %v2349
    %v2546 = vunpack.c.l.b16 %v2350
    %v2547 = vunpack.c.h.b16 %v2350
    %v2548 = vunpack.c.l.b16 %v2351
    %v2549 = vunpack.c.h.b16 %v2351
    %v2550 = vunpack.c.l.b16 %v2352
    %v2551 = vunpack.c.h.b16 %v2352
    %v2552 = vunpack.c.l.b16 %v2353
    %v2553 = vunpack.c.h.b16 %v2353
    %v2554 = vunpack.c.l.b16 %v2354
    %v2555 = vunpack.c.h.b16 %v2354
    %v2556 = vunpack.c.l.b16 %v2355
    %v2557 = vunpack.c.h.b16 %v2355
    %v2558 = vunpack.c.l.b16 %v2356
    %v2559 = vunpack.c.h.b16 %v2356
    %v2560 = vunpack.c.l.b16 %v2357
    %v2561 = vunpack.c.h.b16 %v2357
    %v2562 = vunpack.c.l.b16 %v2358
    %v2563 = vunpack.c.h.b16 %v2358
    %v2564 = vunpack.c.l.b16 %v2359
    %v2565 = vunpack.c.h.b16 %v2359
    %v2566 = vunpack.c.l.b16 %v2360
    %v2567 = vunpack.c.h.b16 %v2360
    %v2568 = vunpack.c.l.b16 %v2361
    %v2569 = vunpack.c.h.b16 %v2361
    %v2570 = vunpack.c.l.b16 %v2362
    %v2571 = vunpack.c.h.b16 %v2362
    %v2572 = vunpack.c.l.b16 %v2363
    %v2573 = vunpack.c.h.b16 %v2363
    %v2574 = vunpack.c.l.b16 %v2364
    %v2575 = vunpack.c.h.b16 %v2364
    %v2576 = vunpack.c.l.b16 %v2365
    %v2577 = vunpack.c.h.b16 %v2365
    %v2578 = vunpack.c.l.b16 %v2366
    %v2579 = vunpack.c.h.b16 %v2366
    %v2580 = vunpack.c.l.b16 %v2367
    %v2581 = vunpack.c.h.b16 %v2367
    %v2582 = vunpack.c.l.b16 %v2368
    %v2583 = vunpack.c.h.b16 %v2368
    %v2584 = vunpack.c.l.b16 %v2369
    %v2585 = vunpack.c.h.b16 %v2369
    %v2586 = vunpack.c.l.b16 %v2370
    %v2587 = vunpack.c.h.b16 %v2370
    %v2588 = vunpack.c.l.b16 %v2371
    %v2589 = vunpack.c.h.b16 %v2371
    %v2590 = vunpack.c.l.b16 %v2372
    %v2591 = vunpack.c.h.b16 %v2372
    %v2592 = vunpack.c.l.b16 %v2373
    %v2593 = vunpack.c.h.b16 %v2373
    %v2594 = vunpack.c.l.b16 %v2374
    %v2595 = vunpack.c.h.b16 %v2374
    %v2596 = vunpack.c.l.b16 %v2375
    %v2597 = vunpack.c.h.b16 %v2375
    %v2598 = vunpack.c.l.b16 %v2376
    %v2599 = vunpack.c.h.b16 %v2376
    %v2600 = vunpack.c.l.b16 %v2377
    %v2601 = vunpack.c.h.b16 %v2377
    %v2602 = vunpack.c.l.b16 %v2378
    %v2603 = vunpack.c.h.b16 %v2378
    %v2604 = vunpack.c.l.b16 %v2379
    %v2605 = vunpack.c.h.b16 %v2379
    %v2606 = vunpack.c.l.b16 %v2380
    %v2607 = vunpack.c.h.b16 %v2380
    %v2608 = vunpack.c.l.b16 %v2381
    %v2609 = vunpack.c.h.b16 %v2381
    %v2610 = vunpack.c.l.b16 %v2382
    %v2611 = vunpack.c.h.b16 %v2382
    %v2612 = vunpack.c.l.b16 %v2383
    %v2613 = vunpack.c.h.b16 %v2383
    %v2614 = vunpack.c.l.b16 %v2384
    %v2615 = vunpack.c.h.b16 %v2384
    %v2616 = vunpack.c.l.b16 %v2385
    %v2617 = vunpack.c.h.b16 %v2385
    %v2618 = vunpack.c.l.b16 %v2386
    %v2619 = vunpack.c.h.b16 %v2386
    %v2620 = vunpack.c.l.b16 %v2387
    %v2621 = vunpack.c.h.b16 %v2387
    %v2622 = vpack.c.b16 %v2502, %v2494
    %v2623 = vpack.c.b16 %v2503, %v2495
    %v2624 = vpack.c.b16 %v2504, %v2496
    %v2625 = vpack.c.b16 %v2505, %v2497
    %v2626 = vpack.c.b16 %v2506, %v2498
    %v2627 = vpack.c.b16 %v2507, %v2499
    %v2628 = vpack.c.b16 %v2508, %v2500
    %v2629 = vpack.c.b16 %v2509, %v2501
    %v2630 = vpack.c.b16 %v2518, %v2510
    %v2631 = vpack.c.b16 %v2519, %v2511
    %v2632 = vpack.c.b16 %v2520, %v2512
    %v2633 = vpack.c.b16 %v2521, %v2513
    %v2634 = vpack.c.b16 %v2522, %v2514
    %v2635 = vpack.c.b16 %v2523, %v2515
    %v2636 = vpack.c.b16 %v2524, %v2516
    %v2637 = vpack.c.b16 %v2525, %v2517
    %v2638 = vpack.c.b16 %v2534, %v2526
    %v2639 = vpack.c.b16 %v2535, %v2527
    %v2640 = vpack.c.b16 %v2536, %v2528
    %v2641 = vpack.c.b16 %v2537, %v2529
    %v2642 = vpack.c.b16 %v2538, %v2530
    %v2643 = vpack.c.b16 %v2539, %v2531
    %v2644 = vpack.c.b16 %v2540, %v2532
    %v2645 = vpack.c.b16 %v2541, %v2533
    %v2646 = vpack.c.b16 %v2550, %v2542
    %v2647 = vpack.c.b16 %v2551, %v2543
    %v2648 = vpack.c.b16 %v2552, %v2544
    %v2649 = vpack.c.b16 %v2553, %v2545
    %v2650 = vpack.c.b16 %v2554, %v2546
    %v2651 = vpack.c.b16 %v2555, %v2547
    %v2652 = vpack.c.b16 %v2556, %v2548
    %v2653 = vpack.c.b16 %v2557, %v2549
    %v2654 = vpack.c.b16 %v2566, %v2558
    %v2655 = vpack.c.b16 %v2567, %v2559
    %v2656 = vpack.c.b16 %v2568, %v2560
    %v2657 = vpack.c.b16 %v2569, %v2561
    %v2658 = vpack.c.b16 %v2570, %v2562
    %v2659 = vpack.c.b16 %v2571, %v2563
    %v2660 = vpack.c.b16 %v2572, %v2564
    %v2661 = vpack.c.b16 %v2573, %v2565
    %v2662 = vpack.c.b16 %v2582, %v2574
    %v2663 = vpack.c.b16 %v2583, %v2575
    %v2664 = vpack.c.b16 %v2584, %v2576
    %v2665 = vpack.c.b16 %v2585, %v2577
    %v2666 = vpack.c.b16 %v2586, %v2578
    %v2667 = vpack.c.b16 %v2587, %v2579
    %v2668 = vpack.c.b16 %v2588, %v2580
    %v2669 = vpack.c.b16 %v2589, %v2581
    %v2670 = vpack.c.b16 %v2598, %v2590
    %v2671 = vpack.c.b16 %v2599, %v2591
    %v2672 = vpack.c.b16 %v2600, %v2592
    %v2673 = vpack.c.b16 %v2601, %v2593
    %v2674 = vpack.c.b16 %v2602, %v2594
    %v2675 = vpack.c.b16 %v2603, %v2595
    %v2676 = vpack.c.b16 %v2604, %v2596
    %v2677 = vpack.c.b16 %v2605, %v2597
    %v2678 = vpack.c.b16 %v2614, %v2606
    %v2679 = vpack.c.b16 %v2615, %v2607
    %v2680 = vpack.c.b16 %v2616, %v2608
    %v2681 = vpack.c.b16 %v2617, %v2609
    %v2682 = vpack.c.b16 %v2618, %v2610
    %v2683 = vpack.c.b16 %v2619, %v2611
    %v2684 = vpack.c.b16 %v2620, %v2612
    %v2685 = vpack.c.b16 %v2621, %v2613
    %2750 = vmatprep.subr.bf16.mxu0 %v2679
    %2751 = vmatpush1.bf16.msra.mxu0 %v2678
    %2752 = vmatprep.subr.bf16.mxu0 %v2671
    %2753 = vmatpush1.bf16.msra.mxu0 %v2670
    %2754 = vmatprep.subr.bf16.mxu0 %v2663
    %2755 = vmatpush1.bf16.msra.mxu0 %v2662
    %2756 = vmatprep.subr.bf16.mxu0 %v2655
    %2757 = vmatpush1.bf16.msra.mxu0 %v2654
    %2758 = vmatprep.subr.bf16.mxu0 %v2647
    %2759 = vmatpush1.bf16.msra.mxu0 %v2646
    %2760 = vmatprep.subr.bf16.mxu0 %v2639
    %2761 = vmatpush1.bf16.msra.mxu0 %v2638
    %2762 = vmatprep.subr.bf16.mxu0 %v2631
    %2763 = vmatpush1.bf16.msra.mxu0 %v2630
    %2764 = vmatprep.subr.bf16.mxu0 %v2623
    %2765 = vmatpush1.bf16.msra.mxu0 %v2622
    %2766 = vmatprep.subr.bf16.mxu0 0
    %2767 = vmatpush2.bf16.msra.mxu0 0
    %2768 = vmatprep.subr.bf16.mxu0 0
    %2769 = vmatpush2.bf16.msra.mxu0 0
    %2770 = vmatprep.subr.bf16.mxu0 0
    %2771 = vmatpush2.bf16.msra.mxu0 0
    %2772 = vmatprep.subr.bf16.mxu0 0
    %2773 = vmatpush2.bf16.msra.mxu0 0
    %2774 = vmatprep.subr.bf16.mxu0 0
    %2775 = vmatpush2.bf16.msra.mxu0 0
    %2776 = vmatprep.subr.bf16.mxu0 0
    %2777 = vmatpush2.bf16.msra.mxu0 0
    %2778 = vmatprep.subr.bf16.mxu0 0
    %2779 = vmatpush2.bf16.msra.mxu0 0
    %2780 = vmatprep.subr.bf16.mxu0 0
    %2781 = vmatpush2.bf16.msra.mxu0 0
    %2782 = vmatprep.mubr.bf16.mxu0 0
    %2783 = vmatmul.mubr.bf16.gmra.mxu0 %v2323
    %v2784 = vpop.f32.mrf.mxu0
    %v2785 = vadd.f32 %v2393, %v2784
    %v2786 = vpop.f32.mrf.mxu0
    %v2787 = vadd.f32 %v2397, %v2786
    %v2788 = vpop.f32.mrf.mxu0
    %v2789 = vadd.f32 %v2393, %v2788
    %v2790 = vpop.f32.mrf.mxu0
    %v2791 = vadd.f32 %v2397, %v2790
    %2792 = vdwg.mxu0
    %2793 = vmatprep.subr.bf16.mxu0 %v2681
    %2794 = vmatpush1.bf16.msra.mxu0 %v2680
    %2795 = vmatprep.subr.bf16.mxu0 %v2673
    %2796 = vmatpush1.bf16.msra.mxu0 %v2672
    %2797 = vmatprep.subr.bf16.mxu0 %v2665
    %2798 = vmatpush1.bf16.msra.mxu0 %v2664
    %2799 = vmatprep.subr.bf16.mxu0 %v2657
    %2800 = vmatpush1.bf16.msra.mxu0 %v2656
    %2801 = vmatprep.subr.bf16.mxu0 %v2649
    %2802 = vmatpush1.bf16.msra.mxu0 %v2648
    %2803 = vmatprep.subr.bf16.mxu0 %v2641
    %2804 = vmatpush1.bf16.msra.mxu0 %v2640
    %2805 = vmatprep.subr.bf16.mxu0 %v2633
    %2806 = vmatpush1.bf16.msra.mxu0 %v2632
    %2807 = vmatprep.subr.bf16.mxu0 %v2625
    %2808 = vmatpush1.bf16.msra.mxu0 %v2624
    %2809 = vmatprep.subr.bf16.mxu0 0
    %2810 = vmatpush2.bf16.msra.mxu0 0
    %2811 = vmatprep.subr.bf16.mxu0 0
    %2812 = vmatpush2.bf16.msra.mxu0 0
    %2813 = vmatprep.subr.bf16.mxu0 0
    %2814 = vmatpush2.bf16.msra.mxu0 0
    %2815 = vmatprep.subr.bf16.mxu0 0
    %2816 = vmatpush2.bf16.msra.mxu0 0
    %2817 = vmatprep.subr.bf16.mxu0 0
    %2818 = vmatpush2.bf16.msra.mxu0 0
    %2819 = vmatprep.subr.bf16.mxu0 0
    %2820 = vmatpush2.bf16.msra.mxu0 0
    %2821 = vmatprep.subr.bf16.mxu0 0
    %2822 = vmatpush2.bf16.msra.mxu0 0
    %2823 = vmatprep.subr.bf16.mxu0 0
    %2824 = vmatpush2.bf16.msra.mxu0 0
    %2825 = vmatprep.mubr.bf16.mxu0 0
    %2826 = vmatmul.mubr.bf16.gmra.mxu0 %v2323
    %v2827 = vpop.f32.mrf.mxu0
    %v2828 = vadd.f32 %v2401, %v2827
    %v2829 = vpop.f32.mrf.mxu0
    %v2830 = vadd.f32 %v2405, %v2829
    %v2831 = vpop.f32.mrf.mxu0
    %v2832 = vadd.f32 %v2401, %v2831
    %v2833 = vpop.f32.mrf.mxu0
    %v2834 = vadd.f32 %v2405, %v2833
    %2835 = vdwg.mxu0
    %2836 = vmatprep.subr.bf16.mxu0 %v2683
    %2837 = vmatpush1.bf16.msra.mxu0 %v2682
    %2838 = vmatprep.subr.bf16.mxu0 %v2675
    %2839 = vmatpush1.bf16.msra.mxu0 %v2674
    %2840 = vmatprep.subr.bf16.mxu0 %v2667
    %2841 = vmatpush1.bf16.msra.mxu0 %v2666
    %2842 = vmatprep.subr.bf16.mxu0 %v2659
    %2843 = vmatpush1.bf16.msra.mxu0 %v2658
    %2844 = vmatprep.subr.bf16.mxu0 %v2651
    %2845 = vmatpush1.bf16.msra.mxu0 %v2650
    %2846 = vmatprep.subr.bf16.mxu0 %v2643
    %2847 = vmatpush1.bf16.msra.mxu0 %v2642
    %2848 = vmatprep.subr.bf16.mxu0 %v2635
    %2849 = vmatpush1.bf16.msra.mxu0 %v2634
    %2850 = vmatprep.subr.bf16.mxu0 %v2627
    %2851 = vmatpush1.bf16.msra.mxu0 %v2626
    %2852 = vmatprep.subr.bf16.mxu0 0
    %2853 = vmatpush2.bf16.msra.mxu0 0
    %2854 = vmatprep.subr.bf16.mxu0 0
    %2855 = vmatpush2.bf16.msra.mxu0 0
    %2856 = vmatprep.subr.bf16.mxu0 0
    %2857 = vmatpush2.bf16.msra.mxu0 0
    %2858 = vmatprep.subr.bf16.mxu0 0
    %2859 = vmatpush2.bf16.msra.mxu0 0
    %2860 = vmatprep.subr.bf16.mxu0 0
    %2861 = vmatpush2.bf16.msra.mxu0 0
    %2862 = vmatprep.subr.bf16.mxu0 0
    %2863 = vmatpush2.bf16.msra.mxu0 0
    %2864 = vmatprep.subr.bf16.mxu0 0
    %2865 = vmatpush2.bf16.msra.mxu0 0
    %2866 = vmatprep.subr.bf16.mxu0 0
    %2867 = vmatpush2.bf16.msra.mxu0 0
    %2868 = vmatprep.mubr.bf16.mxu0 0
    %2869 = vmatmul.mubr.bf16.gmra.mxu0 %v2323
    %v2870 = vpop.f32.mrf.mxu0
    %v2871 = vadd.f32 %v2409, %v2870
    %v2872 = vpop.f32.mrf.mxu0
    %v2873 = vadd.f32 %v2413, %v2872
    %v2874 = vpop.f32.mrf.mxu0
    %v2875 = vadd.f32 %v2409, %v2874
    %v2876 = vpop.f32.mrf.mxu0
    %v2877 = vadd.f32 %v2413, %v2876
    %2878 = vdwg.mxu0
    %2879 = vmatprep.subr.bf16.mxu0 %v2685
    %2880 = vmatpush1.bf16.msra.mxu0 %v2684
    %2881 = vmatprep.subr.bf16.mxu0 %v2677
    %2882 = vmatpush1.bf16.msra.mxu0 %v2676
    %2883 = vmatprep.subr.bf16.mxu0 %v2669
    %2884 = vmatpush1.bf16.msra.mxu0 %v2668
    %2885 = vmatprep.subr.bf16.mxu0 %v2661
    %2886 = vmatpush1.bf16.msra.mxu0 %v2660
    %2887 = vmatprep.subr.bf16.mxu0 %v2653
    %2888 = vmatpush1.bf16.msra.mxu0 %v2652
    %2889 = vmatprep.subr.bf16.mxu0 %v2645
    %2890 = vmatpush1.bf16.msra.mxu0 %v2644
    %2891 = vmatprep.subr.bf16.mxu0 %v2637
    %2892 = vmatpush1.bf16.msra.mxu0 %v2636
    %2893 = vmatprep.subr.bf16.mxu0 %v2629
    %2894 = vmatpush1.bf16.msra.mxu0 %v2628
    %2895 = vmatprep.subr.bf16.mxu0 0
    %2896 = vmatpush2.bf16.msra.mxu0 0
    %2897 = vmatprep.subr.bf16.mxu0 0
    %2898 = vmatpush2.bf16.msra.mxu0 0
    %2899 = vmatprep.subr.bf16.mxu0 0
    %2900 = vmatpush2.bf16.msra.mxu0 0
    %2901 = vmatprep.subr.bf16.mxu0 0
    %2902 = vmatpush2.bf16.msra.mxu0 0
    %2903 = vmatprep.subr.bf16.mxu0 0
    %2904 = vmatpush2.bf16.msra.mxu0 0
    %2905 = vmatprep.subr.bf16.mxu0 0
    %2906 = vmatpush2.bf16.msra.mxu0 0
    %2907 = vmatprep.subr.bf16.mxu0 0
    %2908 = vmatpush2.bf16.msra.mxu0 0
    %2909 = vmatprep.subr.bf16.mxu0 0
    %2910 = vmatpush2.bf16.msra.mxu0 0
    %2911 = vmatprep.mubr.bf16.mxu0 0
    %2912 = vmatmul.mubr.bf16.gmra.mxu0 %v2323
    %v2913 = vpop.f32.mrf.mxu0
    %v2914 = vadd.f32 %v2417, %v2913
    %v2915 = vpop.f32.mrf.mxu0
    %v2916 = vadd.f32 %v2421, %v2915
    %v2917 = vpop.f32.mrf.mxu0
    %v2918 = vadd.f32 %v2417, %v2917
    %v2919 = vpop.f32.mrf.mxu0
    %v2920 = vadd.f32 %v2421, %v2919
    %2921 = vdwg.mxu0
    %v2922 = vld [vmem:[#allocation14] sm:$0xff]
    %v2923 = vld [vmem:[#allocation14 + $0x8] sm:$0xff]
    %v2924 = vld [vmem:[#allocation14 + $0x10] sm:$0xff]
    %v2925 = vld [vmem:[#allocation14 + $0x18] sm:$0xff]
    %v2926 = vld [vmem:[#allocation14 + $0x20] sm:$0xff]
    %v2927 = vld [vmem:[#allocation14 + $0x28] sm:$0xff]
    %v2928 = vld [vmem:[#allocation14 + $0x30] sm:$0xff]
    %v2929 = vld [vmem:[#allocation14 + $0x38] sm:$0xff]
    %v2930 = vld [vmem:[#allocation14 + $0x40] sm:$0xff]
    %v2931 = vld [vmem:[#allocation14 + $0x48] sm:$0xff]
    %v2932 = vld [vmem:[#allocation14 + $0x50] sm:$0xff]
    %v2933 = vld [vmem:[#allocation14 + $0x58] sm:$0xff]
    %v2934 = vld [vmem:[#allocation14 + $0x60] sm:$0xff]
    %v2935 = vld [vmem:[#allocation14 + $0x68] sm:$0xff]
    %v2936 = vld [vmem:[#allocation14 + $0x70] sm:$0xff]
    %v2937 = vld [vmem:[#allocation14 + $0x78] sm:$0xff]
    %v2938 = vld [vmem:[#allocation14 + $0x80] sm:$0xff]
    %v2939 = vld [vmem:[#allocation14 + $0x88] sm:$0xff]
    %v2940 = vld [vmem:[#allocation14 + $0x90] sm:$0xff]
    %v2941 = vld [vmem:[#allocation14 + $0x98] sm:$0xff]
    %v2942 = vld [vmem:[#allocation14 + $0xa0] sm:$0xff]
    %v2943 = vld [vmem:[#allocation14 + $0xa8] sm:$0xff]
    %v2944 = vld [vmem:[#allocation14 + $0xb0] sm:$0xff]
    %v2945 = vld [vmem:[#allocation14 + $0xb8] sm:$0xff]
    %v2946 = vld [vmem:[#allocation14 + $0xc0] sm:$0xff]
    %v2947 = vld [vmem:[#allocation14 + $0xc8] sm:$0xff]
    %v2948 = vld [vmem:[#allocation14 + $0xd0] sm:$0xff]
    %v2949 = vld [vmem:[#allocation14 + $0xd8] sm:$0xff]
    %v2950 = vld [vmem:[#allocation14 + $0xe0] sm:$0xff]
    %v2951 = vld [vmem:[#allocation14 + $0xe8] sm:$0xff]
    %v2952 = vld [vmem:[#allocation14 + $0xf0] sm:$0xff]
    %v2953 = vld [vmem:[#allocation14 + $0xf8] sm:$0xff]
    %v2954 = vld [vmem:[#allocation16] sm:$0xff]
    %v2955 = vld [vmem:[#allocation16 + $0x8] sm:$0xff]
    %v2956 = vld [vmem:[#allocation16 + $0x10] sm:$0xff]
    %v2957 = vld [vmem:[#allocation16 + $0x18] sm:$0xff]
    %v2958 = vld [vmem:[#allocation16 + $0x20] sm:$0xff]
    %v2959 = vld [vmem:[#allocation16 + $0x28] sm:$0xff]
    %v2960 = vld [vmem:[#allocation16 + $0x30] sm:$0xff]
    %v2961 = vld [vmem:[#allocation16 + $0x38] sm:$0xff]
    %v2962 = vld [vmem:[#allocation16 + $0x40] sm:$0xff]
    %v2963 = vld [vmem:[#allocation16 + $0x48] sm:$0xff]
    %v2964 = vld [vmem:[#allocation16 + $0x50] sm:$0xff]
    %v2965 = vld [vmem:[#allocation16 + $0x58] sm:$0xff]
    %v2966 = vld [vmem:[#allocation16 + $0x60] sm:$0xff]
    %v2967 = vld [vmem:[#allocation16 + $0x68] sm:$0xff]
    %v2968 = vld [vmem:[#allocation16 + $0x70] sm:$0xff]
    %v2969 = vld [vmem:[#allocation16 + $0x78] sm:$0xff]
    %v2970 = vld [vmem:[#allocation16 + $0x80] sm:$0xff]
    %v2971 = vld [vmem:[#allocation16 + $0x88] sm:$0xff]
    %v2972 = vld [vmem:[#allocation16 + $0x90] sm:$0xff]
    %v2973 = vld [vmem:[#allocation16 + $0x98] sm:$0xff]
    %v2974 = vld [vmem:[#allocation16 + $0xa0] sm:$0xff]
    %v2975 = vld [vmem:[#allocation16 + $0xa8] sm:$0xff]
    %v2976 = vld [vmem:[#allocation16 + $0xb0] sm:$0xff]
    %v2977 = vld [vmem:[#allocation16 + $0xb8] sm:$0xff]
    %v2978 = vld [vmem:[#allocation16 + $0xc0] sm:$0xff]
    %v2979 = vld [vmem:[#allocation16 + $0xc8] sm:$0xff]
    %v2980 = vld [vmem:[#allocation16 + $0xd0] sm:$0xff]
    %v2981 = vld [vmem:[#allocation16 + $0xd8] sm:$0xff]
    %v2982 = vld [vmem:[#allocation16 + $0xe0] sm:$0xff]
    %v2983 = vld [vmem:[#allocation16 + $0xe8] sm:$0xff]
    %v2984 = vld [vmem:[#allocation16 + $0xf0] sm:$0xff]
    %v2985 = vld [vmem:[#allocation16 + $0xf8] sm:$0xff]
    %v3018 = vunpack.c.l.b16 %v2922
    %v3019 = vunpack.c.h.b16 %v2922
    %v3020 = vunpack.c.l.b16 %v2923
    %v3021 = vunpack.c.h.b16 %v2923
    %v3022 = vunpack.c.l.b16 %v2924
    %v3023 = vunpack.c.h.b16 %v2924
    %v3024 = vunpack.c.l.b16 %v2925
    %v3025 = vunpack.c.h.b16 %v2925
    %v3026 = vunpack.c.l.b16 %v2926
    %v3027 = vunpack.c.h.b16 %v2926
    %v3028 = vunpack.c.l.b16 %v2927
    %v3029 = vunpack.c.h.b16 %v2927
    %v3030 = vunpack.c.l.b16 %v2928
    %v3031 = vunpack.c.h.b16 %v2928
    %v3032 = vunpack.c.l.b16 %v2929
    %v3033 = vunpack.c.h.b16 %v2929
    %v3034 = vunpack.c.l.b16 %v2930
    %v3035 = vunpack.c.h.b16 %v2930
    %v3036 = vunpack.c.l.b16 %v2931
    %v3037 = vunpack.c.h.b16 %v2931
    %v3038 = vunpack.c.l.b16 %v2932
    %v3039 = vunpack.c.h.b16 %v2932
    %v3040 = vunpack.c.l.b16 %v2933
    %v3041 = vunpack.c.h.b16 %v2933
    %v3042 = vunpack.c.l.b16 %v2934
    %v3043 = vunpack.c.h.b16 %v2934
    %v3044 = vunpack.c.l.b16 %v2935
    %v3045 = vunpack.c.h.b16 %v2935
    %v3046 = vunpack.c.l.b16 %v2936
    %v3047 = vunpack.c.h.b16 %v2936
    %v3048 = vunpack.c.l.b16 %v2937
    %v3049 = vunpack.c.h.b16 %v2937
    %v3050 = vunpack.c.l.b16 %v2938
    %v3051 = vunpack.c.h.b16 %v2938
    %v3052 = vunpack.c.l.b16 %v2939
    %v3053 = vunpack.c.h.b16 %v2939
    %v3054 = vunpack.c.l.b16 %v2940
    %v3055 = vunpack.c.h.b16 %v2940
    %v3056 = vunpack.c.l.b16 %v2941
    %v3057 = vunpack.c.h.b16 %v2941
    %v3058 = vunpack.c.l.b16 %v2942
    %v3059 = vunpack.c.h.b16 %v2942
    %v3060 = vunpack.c.l.b16 %v2943
    %v3061 = vunpack.c.h.b16 %v2943
    %v3062 = vunpack.c.l.b16 %v2944
    %v3063 = vunpack.c.h.b16 %v2944
    %v3064 = vunpack.c.l.b16 %v2945
    %v3065 = vunpack.c.h.b16 %v2945
    %v3066 = vunpack.c.l.b16 %v2946
    %v3067 = vunpack.c.h.b16 %v2946
    %v3068 = vunpack.c.l.b16 %v2947
    %v3069 = vunpack.c.h.b16 %v2947
    %v3070 = vunpack.c.l.b16 %v2948
    %v3071 = vunpack.c.h.b16 %v2948
    %v3072 = vunpack.c.l.b16 %v2949
    %v3073 = vunpack.c.h.b16 %v2949
    %v3074 = vunpack.c.l.b16 %v2950
    %v3075 = vunpack.c.h.b16 %v2950
    %v3076 = vunpack.c.l.b16 %v2951
    %v3077 = vunpack.c.h.b16 %v2951
    %v3078 = vunpack.c.l.b16 %v2952
    %v3079 = vunpack.c.h.b16 %v2952
    %v3080 = vunpack.c.l.b16 %v2953
    %v3081 = vunpack.c.h.b16 %v2953
    %v3082 = vpack.c.b16 %v3022, %v3018
    %v3083 = vpack.c.b16 %v3023, %v3019
    %v3084 = vpack.c.b16 %v3024, %v3020
    %v3085 = vpack.c.b16 %v3025, %v3021
    %v3086 = vpack.c.b16 %v3030, %v3026
    %v3087 = vpack.c.b16 %v3031, %v3027
    %v3088 = vpack.c.b16 %v3032, %v3028
    %v3089 = vpack.c.b16 %v3033, %v3029
    %v3090 = vpack.c.b16 %v3038, %v3034
    %v3091 = vpack.c.b16 %v3039, %v3035
    %v3092 = vpack.c.b16 %v3040, %v3036
    %v3093 = vpack.c.b16 %v3041, %v3037
    %v3094 = vpack.c.b16 %v3046, %v3042
    %v3095 = vpack.c.b16 %v3047, %v3043
    %v3096 = vpack.c.b16 %v3048, %v3044
    %v3097 = vpack.c.b16 %v3049, %v3045
    %v3098 = vpack.c.b16 %v3054, %v3050
    %v3099 = vpack.c.b16 %v3055, %v3051
    %v3100 = vpack.c.b16 %v3056, %v3052
    %v3101 = vpack.c.b16 %v3057, %v3053
    %v3102 = vpack.c.b16 %v3062, %v3058
    %v3103 = vpack.c.b16 %v3063, %v3059
    %v3104 = vpack.c.b16 %v3064, %v3060
    %v3105 = vpack.c.b16 %v3065, %v3061
    %v3106 = vpack.c.b16 %v3070, %v3066
    %v3107 = vpack.c.b16 %v3071, %v3067
    %v3108 = vpack.c.b16 %v3072, %v3068
    %v3109 = vpack.c.b16 %v3073, %v3069
    %v3110 = vpack.c.b16 %v3078, %v3074
    %v3111 = vpack.c.b16 %v3079, %v3075
    %v3112 = vpack.c.b16 %v3080, %v3076
    %v3113 = vpack.c.b16 %v3081, %v3077
    %3146 = vmatprep.subr.bf16.mxu0 %v3111
    %3147 = vmatpush1.bf16.msra.mxu0 %v3110
    %3148 = vmatprep.subr.bf16.mxu0 %v3107
    %3149 = vmatpush1.bf16.msra.mxu0 %v3106
    %3150 = vmatprep.subr.bf16.mxu0 %v3103
    %3151 = vmatpush1.bf16.msra.mxu0 %v3102
    %3152 = vmatprep.subr.bf16.mxu0 %v3099
    %3153 = vmatpush1.bf16.msra.mxu0 %v3098
    %3154 = vmatprep.subr.bf16.mxu0 %v3095
    %3155 = vmatpush1.bf16.msra.mxu0 %v3094
    %3156 = vmatprep.subr.bf16.mxu0 %v3091
    %3157 = vmatpush1.bf16.msra.mxu0 %v3090
    %3158 = vmatprep.subr.bf16.mxu0 %v3087
    %3159 = vmatpush1.bf16.msra.mxu0 %v3086
    %3160 = vmatprep.subr.bf16.mxu0 %v3083
    %3161 = vmatpush1.bf16.msra.mxu0 %v3082
    %3162 = vmatprep.subr.bf16.mxu0 0
    %3163 = vmatpush2.bf16.msra.mxu0 0
    %3164 = vmatprep.subr.bf16.mxu0 0
    %3165 = vmatpush2.bf16.msra.mxu0 0
    %3166 = vmatprep.subr.bf16.mxu0 0
    %3167 = vmatpush2.bf16.msra.mxu0 0
    %3168 = vmatprep.subr.bf16.mxu0 0
    %3169 = vmatpush2.bf16.msra.mxu0 0
    %3170 = vmatprep.subr.bf16.mxu0 0
    %3171 = vmatpush2.bf16.msra.mxu0 0
    %3172 = vmatprep.subr.bf16.mxu0 0
    %3173 = vmatpush2.bf16.msra.mxu0 0
    %3174 = vmatprep.subr.bf16.mxu0 0
    %3175 = vmatpush2.bf16.msra.mxu0 0
    %3176 = vmatprep.subr.bf16.mxu0 0
    %3177 = vmatpush2.bf16.msra.mxu0 0
    %3178 = vmatprep.mubr.bf16.mxu0 0
    %3179 = vmatmul.mubr.bf16.gmra.mxu0 0
    %v3180 = vpop.f32.mrf.mxu0
    %v3181 = vadd.f32 0.0, %v3180
    %v3182 = vpop.f32.mrf.mxu0
    %v3183 = vadd.f32 0.0, %v3182
    %v3184 = vpop.f32.mrf.mxu0
    %v3185 = vpop.f32.mrf.mxu0
    %3186 = vdwg.mxu0
    %3187 = vmatprep.subr.bf16.mxu0 %v3113
    %3188 = vmatpush1.bf16.msra.mxu0 %v3112
    %3189 = vmatprep.subr.bf16.mxu0 %v3109
    %3190 = vmatpush1.bf16.msra.mxu0 %v3108
    %3191 = vmatprep.subr.bf16.mxu0 %v3105
    %3192 = vmatpush1.bf16.msra.mxu0 %v3104
    %3193 = vmatprep.subr.bf16.mxu0 %v3101
    %3194 = vmatpush1.bf16.msra.mxu0 %v3100
    %3195 = vmatprep.subr.bf16.mxu0 %v3097
    %3196 = vmatpush1.bf16.msra.mxu0 %v3096
    %3197 = vmatprep.subr.bf16.mxu0 %v3093
    %3198 = vmatpush1.bf16.msra.mxu0 %v3092
    %3199 = vmatprep.subr.bf16.mxu0 %v3089
    %3200 = vmatpush1.bf16.msra.mxu0 %v3088
    %3201 = vmatprep.subr.bf16.mxu0 %v3085
    %3202 = vmatpush1.bf16.msra.mxu0 %v3084
    %3203 = vmatprep.subr.bf16.mxu0 0
    %3204 = vmatpush2.bf16.msra.mxu0 0
    %3205 = vmatprep.subr.bf16.mxu0 0
    %3206 = vmatpush2.bf16.msra.mxu0 0
    %3207 = vmatprep.subr.bf16.mxu0 0
    %3208 = vmatpush2.bf16.msra.mxu0 0
    %3209 = vmatprep.subr.bf16.mxu0 0
    %3210 = vmatpush2.bf16.msra.mxu0 0
    %3211 = vmatprep.subr.bf16.mxu0 0
    %3212 = vmatpush2.bf16.msra.mxu0 0
    %3213 = vmatprep.subr.bf16.mxu0 0
    %3214 = vmatpush2.bf16.msra.mxu0 0
    %3215 = vmatprep.subr.bf16.mxu0 0
    %3216 = vmatpush2.bf16.msra.mxu0 0
    %3217 = vmatprep.subr.bf16.mxu0 0
    %3218 = vmatpush2.bf16.msra.mxu0 0
    %3219 = vmatprep.mubr.bf16.mxu0 0
    %3220 = vmatmul.mubr.bf16.gmra.mxu0 0
    %v3221 = vpop.f32.mrf.mxu0
    %v3222 = vadd.f32 0.0, %v3221
    %v3223 = vpop.f32.mrf.mxu0
    %v3224 = vadd.f32 0.0, %v3223
    %v3225 = vpop.f32.mrf.mxu0
    %v3226 = vpop.f32.mrf.mxu0
    %3227 = vdwg.mxu0
    %v3228 = vadd.f32 %v2785, %v3181
    %v3229 = vadd.f32 %v2787, %v3183
    %v3230 = vadd.f32 %v2828, %v3222
    %v3231 = vadd.f32 %v2830, %v3224
    %v3232 = vsub.f32 0.0, %v3228
    %v3233 = vmul.f32 %v3232, 1.442695
    %v3234 = vpow.pop %v3233
    %v3235 = vadd.f32 %v3234, 1.0
    %v3236 = vrcp.pop %v3235
    %v3237 = vmul.f32 1.0, %v3236
    %v3238 = vsub.f32 0.0, %v3229
    %v3239 = vmul.f32 %v3238, 1.442695
    %v3240 = vpow.pop %v3239
    %v3241 = vadd.f32 %v3240, 1.0
    %v3242 = vrcp.pop %v3241
    %v3243 = vmul.f32 1.0, %v3242
    %v3244 = vtanh.pop %v3230
    %v3245 = vsub.f32 0.0, %v3231
    %v3246 = vmul.f32 %v3245, 1.442695
    %v3247 = vpow.pop %v3246
    %v3248 = vadd.f32 %v3247, 1.0
    %v3249 = vrcp.pop %v3248
    %v3250 = vmul.f32 1.0, %v3249
    %v3251 = vmul.f32 %v3243, 0.0
    %v3252 = vmul.f32 %v3237, %v3244
    %v3253 = vadd.f32 %v3251, %v3252
    %v3254 = vtanh.pop %v3253
    %v3255 = vmul.f32 %v3250, %v3254
    %v3288 = vunpack.c.l.b16 %v2954
    %v3289 = vunpack.c.h.b16 %v2954
    %v3290 = vunpack.c.l.b16 %v2955
    %v3291 = vunpack.c.h.b16 %v2955
    %v3292 = vunpack.c.l.b16 %v2956
    %v3293 = vunpack.c.h.b16 %v2956
    %v3294 = vunpack.c.l.b16 %v2957
    %v3295 = vunpack.c.h.b16 %v2957
    %v3296 = vunpack.c.l.b16 %v2958
    %v3297 = vunpack.c.h.b16 %v2958
    %v3298 = vunpack.c.l.b16 %v2959
    %v3299 = vunpack.c.h.b16 %v2959
    %v3300 = vunpack.c.l.b16 %v2960
    %v3301 = vunpack.c.h.b16 %v2960
    %v3302 = vunpack.c.l.b16 %v2961
    %v3303 = vunpack.c.h.b16 %v2961
    %v3304 = vunpack.c.l.b16 %v2962
    %v3305 = vunpack.c.h.b16 %v2962
    %v3306 = vunpack.c.l.b16 %v2963
    %v3307 = vunpack.c.h.b16 %v2963
    %v3308 = vunpack.c.l.b16 %v2964
    %v3309 = vunpack.c.h.b16 %v2964
    %v3310 = vunpack.c.l.b16 %v2965
    %v3311 = vunpack.c.h.b16 %v2965
    %v3312 = vunpack.c.l.b16 %v2966
    %v3313 = vunpack.c.h.b16 %v2966
    %v3314 = vunpack.c.l.b16 %v2967
    %v3315 = vunpack.c.h.b16 %v2967
    %v3316 = vunpack.c.l.b16 %v2968
    %v3317 = vunpack.c.h.b16 %v2968
    %v3318 = vunpack.c.l.b16 %v2969
    %v3319 = vunpack.c.h.b16 %v2969
    %v3320 = vunpack.c.l.b16 %v2970
    %v3321 = vunpack.c.h.b16 %v2970
    %v3322 = vunpack.c.l.b16 %v2971
    %v3323 = vunpack.c.h.b16 %v2971
    %v3324 = vunpack.c.l.b16 %v2972
    %v3325 = vunpack.c.h.b16 %v2972
    %v3326 = vunpack.c.l.b16 %v2973
    %v3327 = vunpack.c.h.b16 %v2973
    %v3328 = vunpack.c.l.b16 %v2974
    %v3329 = vunpack.c.h.b16 %v2974
    %v3330 = vunpack.c.l.b16 %v2975
    %v3331 = vunpack.c.h.b16 %v2975
    %v3332 = vunpack.c.l.b16 %v2976
    %v3333 = vunpack.c.h.b16 %v2976
    %v3334 = vunpack.c.l.b16 %v2977
    %v3335 = vunpack.c.h.b16 %v2977
    %v3336 = vunpack.c.l.b16 %v2978
    %v3337 = vunpack.c.h.b16 %v2978
    %v3338 = vunpack.c.l.b16 %v2979
    %v3339 = vunpack.c.h.b16 %v2979
    %v3340 = vunpack.c.l.b16 %v2980
    %v3341 = vunpack.c.h.b16 %v2980
    %v3342 = vunpack.c.l.b16 %v2981
    %v3343 = vunpack.c.h.b16 %v2981
    %v3344 = vunpack.c.l.b16 %v2982
    %v3345 = vunpack.c.h.b16 %v2982
    %v3346 = vunpack.c.l.b16 %v2983
    %v3347 = vunpack.c.h.b16 %v2983
    %v3348 = vunpack.c.l.b16 %v2984
    %v3349 = vunpack.c.h.b16 %v2984
    %v3350 = vunpack.c.l.b16 %v2985
    %v3351 = vunpack.c.h.b16 %v2985
    %v3352 = vpack.c.b16 %v3292, %v3288
    %v3353 = vpack.c.b16 %v3293, %v3289
    %v3354 = vpack.c.b16 %v3294, %v3290
    %v3355 = vpack.c.b16 %v3295, %v3291
    %v3356 = vpack.c.b16 %v3300, %v3296
    %v3357 = vpack.c.b16 %v3301, %v3297
    %v3358 = vpack.c.b16 %v3302, %v3298
    %v3359 = vpack.c.b16 %v3303, %v3299
    %v3360 = vpack.c.b16 %v3308, %v3304
    %v3361 = vpack.c.b16 %v3309, %v3305
    %v3362 = vpack.c.b16 %v3310, %v3306
    %v3363 = vpack.c.b16 %v3311, %v3307
    %v3364 = vpack.c.b16 %v3316, %v3312
    %v3365 = vpack.c.b16 %v3317, %v3313
    %v3366 = vpack.c.b16 %v3318, %v3314
    %v3367 = vpack.c.b16 %v3319, %v3315
    %v3368 = vpack.c.b16 %v3324, %v3320
    %v3369 = vpack.c.b16 %v3325, %v3321
    %v3370 = vpack.c.b16 %v3326, %v3322
    %v3371 = vpack.c.b16 %v3327, %v3323
    %v3372 = vpack.c.b16 %v3332, %v3328
    %v3373 = vpack.c.b16 %v3333, %v3329
    %v3374 = vpack.c.b16 %v3334, %v3330
    %v3375 = vpack.c.b16 %v3335, %v3331
    %v3376 = vpack.c.b16 %v3340, %v3336
    %v3377 = vpack.c.b16 %v3341, %v3337
    %v3378 = vpack.c.b16 %v3342, %v3338
    %v3379 = vpack.c.b16 %v3343, %v3339
    %v3380 = vpack.c.b16 %v3348, %v3344
    %v3381 = vpack.c.b16 %v3349, %v3345
    %v3382 = vpack.c.b16 %v3350, %v3346
    %v3383 = vpack.c.b16 %v3351, %v3347
    %3416 = vmatprep.subr.bf16.mxu0 %v3381
    %3417 = vmatpush1.bf16.msra.mxu0 %v3380
    %3418 = vmatprep.subr.bf16.mxu0 %v3377
    %3419 = vmatpush1.bf16.msra.mxu0 %v3376
    %3420 = vmatprep.subr.bf16.mxu0 %v3373
    %3421 = vmatpush1.bf16.msra.mxu0 %v3372
    %3422 = vmatprep.subr.bf16.mxu0 %v3369
    %3423 = vmatpush1.bf16.msra.mxu0 %v3368
    %3424 = vmatprep.subr.bf16.mxu0 %v3365
    %3425 = vmatpush1.bf16.msra.mxu0 %v3364
    %3426 = vmatprep.subr.bf16.mxu0 %v3361
    %3427 = vmatpush1.bf16.msra.mxu0 %v3360
    %3428 = vmatprep.subr.bf16.mxu0 %v3357
    %3429 = vmatpush1.bf16.msra.mxu0 %v3356
    %3430 = vmatprep.subr.bf16.mxu0 %v3353
    %3431 = vmatpush1.bf16.msra.mxu0 %v3352
    %3432 = vmatprep.subr.bf16.mxu0 0
    %3433 = vmatpush2.bf16.msra.mxu0 0
    %3434 = vmatprep.subr.bf16.mxu0 0
    %3435 = vmatpush2.bf16.msra.mxu0 0
    %3436 = vmatprep.subr.bf16.mxu0 0
    %3437 = vmatpush2.bf16.msra.mxu0 0
    %3438 = vmatprep.subr.bf16.mxu0 0
    %3439 = vmatpush2.bf16.msra.mxu0 0
    %3440 = vmatprep.subr.bf16.mxu0 0
    %3441 = vmatpush2.bf16.msra.mxu0 0
    %3442 = vmatprep.subr.bf16.mxu0 0
    %3443 = vmatpush2.bf16.msra.mxu0 0
    %3444 = vmatprep.subr.bf16.mxu0 0
    %3445 = vmatpush2.bf16.msra.mxu0 0
    %3446 = vmatprep.subr.bf16.mxu0 0
    %3447 = vmatpush2.bf16.msra.mxu0 0
    %3448 = vmatprep.mubr.bf16.mxu0 0
    %3449 = vmatmul.mubr.bf16.gmra.mxu0 0
    %v3450 = vpop.f32.mrf.mxu0
    %v3451 = vadd.f32 0.0, %v3450
    %v3452 = vpop.f32.mrf.mxu0
    %v3453 = vadd.f32 0.0, %v3452
    %v3454 = vpop.f32.mrf.mxu0
    %v3455 = vpop.f32.mrf.mxu0
    %3456 = vdwg.mxu0
    %3457 = vmatprep.subr.bf16.mxu0 %v3383
    %3458 = vmatpush1.bf16.msra.mxu0 %v3382
    %3459 = vmatprep.subr.bf16.mxu0 %v3379
    %3460 = vmatpush1.bf16.msra.mxu0 %v3378
    %3461 = vmatprep.subr.bf16.mxu0 %v3375
    %3462 = vmatpush1.bf16.msra.mxu0 %v3374
    %3463 = vmatprep.subr.bf16.mxu0 %v3371
    %3464 = vmatpush1.bf16.msra.mxu0 %v3370
    %3465 = vmatprep.subr.bf16.mxu0 %v3367
    %3466 = vmatpush1.bf16.msra.mxu0 %v3366
    %3467 = vmatprep.subr.bf16.mxu0 %v3363
    %3468 = vmatpush1.bf16.msra.mxu0 %v3362
    %3469 = vmatprep.subr.bf16.mxu0 %v3359
    %3470 = vmatpush1.bf16.msra.mxu0 %v3358
    %3471 = vmatprep.subr.bf16.mxu0 %v3355
    %3472 = vmatpush1.bf16.msra.mxu0 %v3354
    %3473 = vmatprep.subr.bf16.mxu0 0
    %3474 = vmatpush2.bf16.msra.mxu0 0
    %3475 = vmatprep.subr.bf16.mxu0 0
    %3476 = vmatpush2.bf16.msra.mxu0 0
    %3477 = vmatprep.subr.bf16.mxu0 0
    %3478 = vmatpush2.bf16.msra.mxu0 0
    %3479 = vmatprep.subr.bf16.mxu0 0
    %3480 = vmatpush2.bf16.msra.mxu0 0
    %3481 = vmatprep.subr.bf16.mxu0 0
    %3482 = vmatpush2.bf16.msra.mxu0 0
    %3483 = vmatprep.subr.bf16.mxu0 0
    %3484 = vmatpush2.bf16.msra.mxu0 0
    %3485 = vmatprep.subr.bf16.mxu0 0
    %3486 = vmatpush2.bf16.msra.mxu0 0
    %3487 = vmatprep.subr.bf16.mxu0 0
    %3488 = vmatpush2.bf16.msra.mxu0 0
    %3489 = vmatprep.mubr.bf16.mxu0 0
    %3490 = vmatmul.mubr.bf16.gmra.mxu0 0
    %v3491 = vpop.f32.mrf.mxu0
    %v3492 = vadd.f32 0.0, %v3491
    %v3493 = vpop.f32.mrf.mxu0
    %v3494 = vadd.f32 0.0, %v3493
    %v3495 = vpop.f32.mrf.mxu0
    %v3496 = vpop.f32.mrf.mxu0
    %3497 = vdwg.mxu0
    %v3502 = vrot.slane %v3451, 2
    %v3503 = vrot.slane %v3453, 2
    %v3504 = vrot.slane %v3492, 2
    %v3505 = vrot.slane %v3494, 2
    %v3510 = vadd.f32 %v2875, %v3502
    %v3511 = vadd.f32 %v2877, %v3503
    %v3512 = vadd.f32 %v2918, %v3504
    %v3513 = vadd.f32 %v2920, %v3505
    %v3514 = vsub.f32 0.0, %v3510
    %v3515 = vmul.f32 %v3514, 1.442695
    %v3516 = vpow.pop %v3515
    %v3517 = vadd.f32 %v3516, 1.0
    %v3518 = vrcp.pop %v3517
    %v3519 = vmul.f32 1.0, %v3518
    %v3520 = vsub.f32 0.0, %v3511
    %v3521 = vmul.f32 %v3520, 1.442695
    %v3522 = vpow.pop %v3521
    %v3523 = vadd.f32 %v3522, 1.0
    %v3524 = vrcp.pop %v3523
    %v3525 = vmul.f32 1.0, %v3524
    %v3526 = vtanh.pop %v3512
    %v3527 = vsub.f32 0.0, %v3513
    %v3528 = vmul.f32 %v3527, 1.442695
    %v3529 = vpow.pop %v3528
    %v3530 = vadd.f32 %v3529, 1.0
    %v3531 = vrcp.pop %v3530
    %v3532 = vmul.f32 1.0, %v3531
    %v3533 = vmul.f32 %v3525, 0.0
    %v3534 = vmul.f32 %v3519, %v3526
    %v3535 = vadd.f32 %v3533, %v3534
    %v3536 = vtanh.pop %v3535
    %v3537 = vmul.f32 %v3532, %v3536
    %v3538 = vpack.c.bf16 %v3255, %v3255
    %3539 = vmatprep.subr.bf16.mxu0 %v3111
    %3540 = vmatpush1.bf16.msra.mxu0 %v3110
    %3541 = vmatprep.subr.bf16.mxu0 %v3107
    %3542 = vmatpush1.bf16.msra.mxu0 %v3106
    %3543 = vmatprep.subr.bf16.mxu0 %v3103
    %3544 = vmatpush1.bf16.msra.mxu0 %v3102
    %3545 = vmatprep.subr.bf16.mxu0 %v3099
    %3546 = vmatpush1.bf16.msra.mxu0 %v3098
    %3547 = vmatprep.subr.bf16.mxu0 %v3095
    %3548 = vmatpush1.bf16.msra.mxu0 %v3094
    %3549 = vmatprep.subr.bf16.mxu0 %v3091
    %3550 = vmatpush1.bf16.msra.mxu0 %v3090
    %3551 = vmatprep.subr.bf16.mxu0 %v3087
    %3552 = vmatpush1.bf16.msra.mxu0 %v3086
    %3553 = vmatprep.subr.bf16.mxu0 %v3083
    %3554 = vmatpush1.bf16.msra.mxu0 %v3082
    %3555 = vmatprep.subr.bf16.mxu0 0
    %3556 = vmatpush2.bf16.msra.mxu0 0
    %3557 = vmatprep.subr.bf16.mxu0 0
    %3558 = vmatpush2.bf16.msra.mxu0 0
    %3559 = vmatprep.subr.bf16.mxu0 0
    %3560 = vmatpush2.bf16.msra.mxu0 0
    %3561 = vmatprep.subr.bf16.mxu0 0
    %3562 = vmatpush2.bf16.msra.mxu0 0
    %3563 = vmatprep.subr.bf16.mxu0 0
    %3564 = vmatpush2.bf16.msra.mxu0 0
    %3565 = vmatprep.subr.bf16.mxu0 0
    %3566 = vmatpush2.bf16.msra.mxu0 0
    %3567 = vmatprep.subr.bf16.mxu0 0
    %3568 = vmatpush2.bf16.msra.mxu0 0
    %3569 = vmatprep.subr.bf16.mxu0 0
    %3570 = vmatpush2.bf16.msra.mxu0 0
    %3571 = vmatprep.mubr.bf16.mxu0 0
    %3572 = vmatmul.mubr.bf16.gmra.mxu0 %v3538
    %v3573 = vpop.f32.mrf.mxu0
    %v3574 = vadd.f32 0.0, %v3573
    %v3575 = vpop.f32.mrf.mxu0
    %v3576 = vadd.f32 0.0, %v3575
    %v3577 = vpop.f32.mrf.mxu0
    %v3578 = vpop.f32.mrf.mxu0
    %3579 = vdwg.mxu0
    %3580 = vmatprep.subr.bf16.mxu0 %v3113
    %3581 = vmatpush1.bf16.msra.mxu0 %v3112
    %3582 = vmatprep.subr.bf16.mxu0 %v3109
    %3583 = vmatpush1.bf16.msra.mxu0 %v3108
    %3584 = vmatprep.subr.bf16.mxu0 %v3105
    %3585 = vmatpush1.bf16.msra.mxu0 %v3104
    %3586 = vmatprep.subr.bf16.mxu0 %v3101
    %3587 = vmatpush1.bf16.msra.mxu0 %v3100
    %3588 = vmatprep.subr.bf16.mxu0 %v3097
    %3589 = vmatpush1.bf16.msra.mxu0 %v3096
    %3590 = vmatprep.subr.bf16.mxu0 %v3093
    %3591 = vmatpush1.bf16.msra.mxu0 %v3092
    %3592 = vmatprep.subr.bf16.mxu0 %v3089
    %3593 = vmatpush1.bf16.msra.mxu0 %v3088
    %3594 = vmatprep.subr.bf16.mxu0 %v3085
    %3595 = vmatpush1.bf16.msra.mxu0 %v3084
    %3596 = vmatprep.subr.bf16.mxu0 0
    %3597 = vmatpush2.bf16.msra.mxu0 0
    %3598 = vmatprep.subr.bf16.mxu0 0
    %3599 = vmatpush2.bf16.msra.mxu0 0
    %3600 = vmatprep.subr.bf16.mxu0 0
    %3601 = vmatpush2.bf16.msra.mxu0 0
    %3602 = vmatprep.subr.bf16.mxu0 0
    %3603 = vmatpush2.bf16.msra.mxu0 0
    %3604 = vmatprep.subr.bf16.mxu0 0
    %3605 = vmatpush2.bf16.msra.mxu0 0
    %3606 = vmatprep.subr.bf16.mxu0 0
    %3607 = vmatpush2.bf16.msra.mxu0 0
    %3608 = vmatprep.subr.bf16.mxu0 0
    %3609 = vmatpush2.bf16.msra.mxu0 0
    %3610 = vmatprep.subr.bf16.mxu0 0
    %3611 = vmatpush2.bf16.msra.mxu0 0
    %3612 = vmatprep.mubr.bf16.mxu0 0
    %3613 = vmatmul.mubr.bf16.gmra.mxu0 %v3538
    %v3614 = vpop.f32.mrf.mxu0
    %v3615 = vadd.f32 0.0, %v3614
    %v3616 = vpop.f32.mrf.mxu0
    %v3617 = vadd.f32 0.0, %v3616
    %v3618 = vpop.f32.mrf.mxu0
    %v3619 = vpop.f32.mrf.mxu0
    %3620 = vdwg.mxu0
    %v3625 = vrot.slane %v3574, 6
    %v3626 = vrot.slane %v3576, 6
    %v3627 = vrot.slane %v3615, 6
    %v3628 = vrot.slane %v3617, 6
    %v3633 = vadd.f32 %v2785, %v3625
    %v3634 = vadd.f32 %v2787, %v3626
    %v3635 = vadd.f32 %v2828, %v3627
    %v3636 = vadd.f32 %v2830, %v3628
    %v3637 = vsub.f32 0.0, %v3633
    %v3638 = vmul.f32 %v3637, 1.442695
    %v3639 = vpow.pop %v3638
    %v3640 = vadd.f32 %v3639, 1.0
    %v3641 = vrcp.pop %v3640
    %v3642 = vmul.f32 1.0, %v3641
    %v3643 = vsub.f32 0.0, %v3634
    %v3644 = vmul.f32 %v3643, 1.442695
    %v3645 = vpow.pop %v3644
    %v3646 = vadd.f32 %v3645, 1.0
    %v3647 = vrcp.pop %v3646
    %v3648 = vmul.f32 1.0, %v3647
    %v3649 = vtanh.pop %v3635
    %v3650 = vsub.f32 0.0, %v3636
    %v3651 = vmul.f32 %v3650, 1.442695
    %v3652 = vpow.pop %v3651
    %v3653 = vadd.f32 %v3652, 1.0
    %v3654 = vrcp.pop %v3653
    %v3655 = vmul.f32 1.0, %v3654
    %v3657 = vrot.slane %v3253, 6
    %v3659 = vmul.f32 %v3648, %v3657
    %v3660 = vmul.f32 %v3642, %v3649
    %v3661 = vadd.f32 %v3659, %v3660
    %v3662 = vtanh.pop %v3661
    %v3663 = vmul.f32 %v3655, %v3662
    %v3664 = vpack.c.bf16 %v3537, %v3537
    %v3666 = vrot.slane %v3664, 3
    %3668 = vmatprep.subr.bf16.mxu0 %v3381
    %3669 = vmatpush1.bf16.msra.mxu0 %v3380
    %3670 = vmatprep.subr.bf16.mxu0 %v3377
    %3671 = vmatpush1.bf16.msra.mxu0 %v3376
    %3672 = vmatprep.subr.bf16.mxu0 %v3373
    %3673 = vmatpush1.bf16.msra.mxu0 %v3372
    %3674 = vmatprep.subr.bf16.mxu0 %v3369
    %3675 = vmatpush1.bf16.msra.mxu0 %v3368
    %3676 = vmatprep.subr.bf16.mxu0 %v3365
    %3677 = vmatpush1.bf16.msra.mxu0 %v3364
    %3678 = vmatprep.subr.bf16.mxu0 %v3361
    %3679 = vmatpush1.bf16.msra.mxu0 %v3360
    %3680 = vmatprep.subr.bf16.mxu0 %v3357
    %3681 = vmatpush1.bf16.msra.mxu0 %v3356
    %3682 = vmatprep.subr.bf16.mxu0 %v3353
    %3683 = vmatpush1.bf16.msra.mxu0 %v3352
    %3684 = vmatprep.subr.bf16.mxu0 0
    %3685 = vmatpush2.bf16.msra.mxu0 0
    %3686 = vmatprep.subr.bf16.mxu0 0
    %3687 = vmatpush2.bf16.msra.mxu0 0
    %3688 = vmatprep.subr.bf16.mxu0 0
    %3689 = vmatpush2.bf16.msra.mxu0 0
    %3690 = vmatprep.subr.bf16.mxu0 0
    %3691 = vmatpush2.bf16.msra.mxu0 0
    %3692 = vmatprep.subr.bf16.mxu0 0
    %3693 = vmatpush2.bf16.msra.mxu0 0
    %3694 = vmatprep.subr.bf16.mxu0 0
    %3695 = vmatpush2.bf16.msra.mxu0 0
    %3696 = vmatprep.subr.bf16.mxu0 0
    %3697 = vmatpush2.bf16.msra.mxu0 0
    %3698 = vmatprep.subr.bf16.mxu0 0
    %3699 = vmatpush2.bf16.msra.mxu0 0
    %3700 = vmatprep.mubr.bf16.mxu0 0
    %3701 = vmatmul.mubr.bf16.gmra.mxu0 %v3666
    %v3702 = vpop.f32.mrf.mxu0
    %v3703 = vadd.f32 0.0, %v3702
    %v3704 = vpop.f32.mrf.mxu0
    %v3705 = vadd.f32 0.0, %v3704
    %v3706 = vpop.f32.mrf.mxu0
    %v3707 = vpop.f32.mrf.mxu0
    %3708 = vdwg.mxu0
    %3709 = vmatprep.subr.bf16.mxu0 %v3383
    %3710 = vmatpush1.bf16.msra.mxu0 %v3382
    %3711 = vmatprep.subr.bf16.mxu0 %v3379
    %3712 = vmatpush1.bf16.msra.mxu0 %v3378
    %3713 = vmatprep.subr.bf16.mxu0 %v3375
    %3714 = vmatpush1.bf16.msra.mxu0 %v3374
    %3715 = vmatprep.subr.bf16.mxu0 %v3371
    %3716 = vmatpush1.bf16.msra.mxu0 %v3370
    %3717 = vmatprep.subr.bf16.mxu0 %v3367
    %3718 = vmatpush1.bf16.msra.mxu0 %v3366
    %3719 = vmatprep.subr.bf16.mxu0 %v3363
    %3720 = vmatpush1.bf16.msra.mxu0 %v3362
    %3721 = vmatprep.subr.bf16.mxu0 %v3359
    %3722 = vmatpush1.bf16.msra.mxu0 %v3358
    %3723 = vmatprep.subr.bf16.mxu0 %v3355
    %3724 = vmatpush1.bf16.msra.mxu0 %v3354
    %3725 = vmatprep.subr.bf16.mxu0 0
    %3726 = vmatpush2.bf16.msra.mxu0 0
    %3727 = vmatprep.subr.bf16.mxu0 0
    %3728 = vmatpush2.bf16.msra.mxu0 0
    %3729 = vmatprep.subr.bf16.mxu0 0
    %3730 = vmatpush2.bf16.msra.mxu0 0
    %3731 = vmatprep.subr.bf16.mxu0 0
    %3732 = vmatpush2.bf16.msra.mxu0 0
    %3733 = vmatprep.subr.bf16.mxu0 0
    %3734 = vmatpush2.bf16.msra.mxu0 0
    %3735 = vmatprep.subr.bf16.mxu0 0
    %3736 = vmatpush2.bf16.msra.mxu0 0
    %3737 = vmatprep.subr.bf16.mxu0 0
    %3738 = vmatpush2.bf16.msra.mxu0 0
    %3739 = vmatprep.subr.bf16.mxu0 0
    %3740 = vmatpush2.bf16.msra.mxu0 0
    %3741 = vmatprep.mubr.bf16.mxu0 0
    %3742 = vmatmul.mubr.bf16.gmra.mxu0 %v3666
    %v3743 = vpop.f32.mrf.mxu0
    %v3744 = vadd.f32 0.0, %v3743
    %v3745 = vpop.f32.mrf.mxu0
    %v3746 = vadd.f32 0.0, %v3745
    %v3747 = vpop.f32.mrf.mxu0
    %v3748 = vpop.f32.mrf.mxu0
    %3749 = vdwg.mxu0
    %v3754 = vrot.slane %v3703, 4
    %v3755 = vrot.slane %v3705, 4
    %v3756 = vrot.slane %v3744, 4
    %v3757 = vrot.slane %v3746, 4
    %v3762 = vadd.f32 %v2875, %v3754
    %v3763 = vadd.f32 %v2877, %v3755
    %v3764 = vadd.f32 %v2918, %v3756
    %v3765 = vadd.f32 %v2920, %v3757
    %v3766 = vsub.f32 0.0, %v3762
    %v3767 = vmul.f32 %v3766, 1.442695
    %v3768 = vpow.pop %v3767
    %v3769 = vadd.f32 %v3768, 1.0
    %v3770 = vrcp.pop %v3769
    %v3771 = vmul.f32 1.0, %v3770
    %v3772 = vsub.f32 0.0, %v3763
    %v3773 = vmul.f32 %v3772, 1.442695
    %v3774 = vpow.pop %v3773
    %v3775 = vadd.f32 %v3774, 1.0
    %v3776 = vrcp.pop %v3775
    %v3777 = vmul.f32 1.0, %v3776
    %v3778 = vtanh.pop %v3764
    %v3779 = vsub.f32 0.0, %v3765
    %v3780 = vmul.f32 %v3779, 1.442695
    %v3781 = vpow.pop %v3780
    %v3782 = vadd.f32 %v3781, 1.0
    %v3783 = vrcp.pop %v3782
    %v3784 = vmul.f32 1.0, %v3783
    %v3786 = vrot.slane %v3535, 2
    %v3788 = vmul.f32 %v3777, %v3786
    %v3789 = vmul.f32 %v3771, %v3778
    %v3790 = vadd.f32 %v3788, %v3789
    %v3791 = vtanh.pop %v3790
    %v3792 = vmul.f32 %v3784, %v3791
    %v3793 = vpack.c.bf16 %v3663, %v3663
    %v3795 = vrot.slane %v3793, 1
    %3797 = vmatprep.subr.bf16.mxu0 %v3111
    %3798 = vmatpush1.bf16.msra.mxu0 %v3110
    %3799 = vmatprep.subr.bf16.mxu0 %v3107
    %3800 = vmatpush1.bf16.msra.mxu0 %v3106
    %3801 = vmatprep.subr.bf16.mxu0 %v3103
    %3802 = vmatpush1.bf16.msra.mxu0 %v3102
    %3803 = vmatprep.subr.bf16.mxu0 %v3099
    %3804 = vmatpush1.bf16.msra.mxu0 %v3098
    %3805 = vmatprep.subr.bf16.mxu0 %v3095
    %3806 = vmatpush1.bf16.msra.mxu0 %v3094
    %3807 = vmatprep.subr.bf16.mxu0 %v3091
    %3808 = vmatpush1.bf16.msra.mxu0 %v3090
    %3809 = vmatprep.subr.bf16.mxu0 %v3087
    %3810 = vmatpush1.bf16.msra.mxu0 %v3086
    %3811 = vmatprep.subr.bf16.mxu0 %v3083
    %3812 = vmatpush1.bf16.msra.mxu0 %v3082
    %3813 = vmatprep.subr.bf16.mxu0 0
    %3814 = vmatpush2.bf16.msra.mxu0 0
    %3815 = vmatprep.subr.bf16.mxu0 0
    %3816 = vmatpush2.bf16.msra.mxu0 0
    %3817 = vmatprep.subr.bf16.mxu0 0
    %3818 = vmatpush2.bf16.msra.mxu0 0
    %3819 = vmatprep.subr.bf16.mxu0 0
    %3820 = vmatpush2.bf16.msra.mxu0 0
    %3821 = vmatprep.subr.bf16.mxu0 0
    %3822 = vmatpush2.bf16.msra.mxu0 0
    %3823 = vmatprep.subr.bf16.mxu0 0
    %3824 = vmatpush2.bf16.msra.mxu0 0
    %3825 = vmatprep.subr.bf16.mxu0 0
    %3826 = vmatpush2.bf16.msra.mxu0 0
    %3827 = vmatprep.subr.bf16.mxu0 0
    %3828 = vmatpush2.bf16.msra.mxu0 0
    %3829 = vmatprep.mubr.bf16.mxu0 0
    %3830 = vmatmul.mubr.bf16.gmra.mxu0 %v3795
    %v3831 = vpop.f32.mrf.mxu0
    %v3832 = vadd.f32 0.0, %v3831
    %v3833 = vpop.f32.mrf.mxu0
    %v3834 = vadd.f32 0.0, %v3833
    %v3835 = vpop.f32.mrf.mxu0
    %v3836 = vpop.f32.mrf.mxu0
    %3837 = vdwg.mxu0
    %3838 = vmatprep.subr.bf16.mxu0 %v3113
    %3839 = vmatpush1.bf16.msra.mxu0 %v3112
    %3840 = vmatprep.subr.bf16.mxu0 %v3109
    %3841 = vmatpush1.bf16.msra.mxu0 %v3108
    %3842 = vmatprep.subr.bf16.mxu0 %v3105
    %3843 = vmatpush1.bf16.msra.mxu0 %v3104
    %3844 = vmatprep.subr.bf16.mxu0 %v3101
    %3845 = vmatpush1.bf16.msra.mxu0 %v3100
    %3846 = vmatprep.subr.bf16.mxu0 %v3097
    %3847 = vmatpush1.bf16.msra.mxu0 %v3096
    %3848 = vmatprep.subr.bf16.mxu0 %v3093
    %3849 = vmatpush1.bf16.msra.mxu0 %v3092
    %3850 = vmatprep.subr.bf16.mxu0 %v3089
    %3851 = vmatpush1.bf16.msra.mxu0 %v3088
    %3852 = vmatprep.subr.bf16.mxu0 %v3085
    %3853 = vmatpush1.bf16.msra.mxu0 %v3084
    %3854 = vmatprep.subr.bf16.mxu0 0
    %3855 = vmatpush2.bf16.msra.mxu0 0
    %3856 = vmatprep.subr.bf16.mxu0 0
    %3857 = vmatpush2.bf16.msra.mxu0 0
    %3858 = vmatprep.subr.bf16.mxu0 0
    %3859 = vmatpush2.bf16.msra.mxu0 0
    %3860 = vmatprep.subr.bf16.mxu0 0
    %3861 = vmatpush2.bf16.msra.mxu0 0
    %3862 = vmatprep.subr.bf16.mxu0 0
    %3863 = vmatpush2.bf16.msra.mxu0 0
    %3864 = vmatprep.subr.bf16.mxu0 0
    %3865 = vmatpush2.bf16.msra.mxu0 0
    %3866 = vmatprep.subr.bf16.mxu0 0
    %3867 = vmatpush2.bf16.msra.mxu0 0
    %3868 = vmatprep.subr.bf16.mxu0 0
    %3869 = vmatpush2.bf16.msra.mxu0 0
    %3870 = vmatprep.mubr.bf16.mxu0 0
    %3871 = vmatmul.mubr.bf16.gmra.mxu0 %v3795
    %v3872 = vpop.f32.mrf.mxu0
    %v3873 = vadd.f32 0.0, %v3872
    %v3874 = vpop.f32.mrf.mxu0
    %v3875 = vadd.f32 0.0, %v3874
    %v3876 = vpop.f32.mrf.mxu0
    %v3877 = vpop.f32.mrf.mxu0
    %3878 = vdwg.mxu0
    %v3883 = vrot.slane %v3832, 4
    %v3884 = vrot.slane %v3834, 4
    %v3885 = vrot.slane %v3873, 4
    %v3886 = vrot.slane %v3875, 4
    %v3891 = vadd.f32 %v2785, %v3883
    %v3892 = vadd.f32 %v2787, %v3884
    %v3893 = vadd.f32 %v2828, %v3885
    %v3894 = vadd.f32 %v2830, %v3886
    %v3895 = vsub.f32 0.0, %v3891
    %v3896 = vmul.f32 %v3895, 1.442695
    %v3897 = vpow.pop %v3896
    %v3898 = vadd.f32 %v3897, 1.0
    %v3899 = vrcp.pop %v3898
    %v3900 = vmul.f32 1.0, %v3899
    %v3901 = vsub.f32 0.0, %v3892
    %v3902 = vmul.f32 %v3901, 1.442695
    %v3903 = vpow.pop %v3902
    %v3904 = vadd.f32 %v3903, 1.0
    %v3905 = vrcp.pop %v3904
    %v3906 = vmul.f32 1.0, %v3905
    %v3907 = vtanh.pop %v3893
    %v3908 = vsub.f32 0.0, %v3894
    %v3909 = vmul.f32 %v3908, 1.442695
    %v3910 = vpow.pop %v3909
    %v3911 = vadd.f32 %v3910, 1.0
    %v3912 = vrcp.pop %v3911
    %v3913 = vmul.f32 1.0, %v3912
    %v3915 = vrot.slane %v3661, 6
    %v3917 = vmul.f32 %v3906, %v3915
    %v3918 = vmul.f32 %v3900, %v3907
    %v3919 = vadd.f32 %v3917, %v3918
    %v3920 = vtanh.pop %v3919
    %v3921 = vmul.f32 %v3913, %v3920
    %v3922 = vpack.c.bf16 %v3792, %v3792
    %v3924 = vrot.slane %v3922, 2
    %3926 = vmatprep.subr.bf16.mxu0 %v3381
    %3927 = vmatpush1.bf16.msra.mxu0 %v3380
    %3928 = vmatprep.subr.bf16.mxu0 %v3377
    %3929 = vmatpush1.bf16.msra.mxu0 %v3376
    %3930 = vmatprep.subr.bf16.mxu0 %v3373
    %3931 = vmatpush1.bf16.msra.mxu0 %v3372
    %3932 = vmatprep.subr.bf16.mxu0 %v3369
    %3933 = vmatpush1.bf16.msra.mxu0 %v3368
    %3934 = vmatprep.subr.bf16.mxu0 %v3365
    %3935 = vmatpush1.bf16.msra.mxu0 %v3364
    %3936 = vmatprep.subr.bf16.mxu0 %v3361
    %3937 = vmatpush1.bf16.msra.mxu0 %v3360
    %3938 = vmatprep.subr.bf16.mxu0 %v3357
    %3939 = vmatpush1.bf16.msra.mxu0 %v3356
    %3940 = vmatprep.subr.bf16.mxu0 %v3353
    %3941 = vmatpush1.bf16.msra.mxu0 %v3352
    %3942 = vmatprep.subr.bf16.mxu0 0
    %3943 = vmatpush2.bf16.msra.mxu0 0
    %3944 = vmatprep.subr.bf16.mxu0 0
    %3945 = vmatpush2.bf16.msra.mxu0 0
    %3946 = vmatprep.subr.bf16.mxu0 0
    %3947 = vmatpush2.bf16.msra.mxu0 0
    %3948 = vmatprep.subr.bf16.mxu0 0
    %3949 = vmatpush2.bf16.msra.mxu0 0
    %3950 = vmatprep.subr.bf16.mxu0 0
    %3951 = vmatpush2.bf16.msra.mxu0 0
    %3952 = vmatprep.subr.bf16.mxu0 0
    %3953 = vmatpush2.bf16.msra.mxu0 0
    %3954 = vmatprep.subr.bf16.mxu0 0
    %3955 = vmatpush2.bf16.msra.mxu0 0
    %3956 = vmatprep.subr.bf16.mxu0 0
    %3957 = vmatpush2.bf16.msra.mxu0 0
    %3958 = vmatprep.mubr.bf16.mxu0 0
    %3959 = vmatmul.mubr.bf16.gmra.mxu0 %v3924
    %v3960 = vpop.f32.mrf.mxu0
    %v3961 = vadd.f32 0.0, %v3960
    %v3962 = vpop.f32.mrf.mxu0
    %v3963 = vadd.f32 0.0, %v3962
    %v3964 = vpop.f32.mrf.mxu0
    %v3965 = vpop.f32.mrf.mxu0
    %3966 = vdwg.mxu0
    %3967 = vmatprep.subr.bf16.mxu0 %v3383
    %3968 = vmatpush1.bf16.msra.mxu0 %v3382
    %3969 = vmatprep.subr.bf16.mxu0 %v3379
    %3970 = vmatpush1.bf16.msra.mxu0 %v3378
    %3971 = vmatprep.subr.bf16.mxu0 %v3375
    %3972 = vmatpush1.bf16.msra.mxu0 %v3374
    %3973 = vmatprep.subr.bf16.mxu0 %v3371
    %3974 = vmatpush1.bf16.msra.mxu0 %v3370
    %3975 = vmatprep.subr.bf16.mxu0 %v3367
    %3976 = vmatpush1.bf16.msra.mxu0 %v3366
    %3977 = vmatprep.subr.bf16.mxu0 %v3363
    %3978 = vmatpush1.bf16.msra.mxu0 %v3362
    %3979 = vmatprep.subr.bf16.mxu0 %v3359
    %3980 = vmatpush1.bf16.msra.mxu0 %v3358
    %3981 = vmatprep.subr.bf16.mxu0 %v3355
    %3982 = vmatpush1.bf16.msra.mxu0 %v3354
    %3983 = vmatprep.subr.bf16.mxu0 0
    %3984 = vmatpush2.bf16.msra.mxu0 0
    %3985 = vmatprep.subr.bf16.mxu0 0
    %3986 = vmatpush2.bf16.msra.mxu0 0
    %3987 = vmatprep.subr.bf16.mxu0 0
    %3988 = vmatpush2.bf16.msra.mxu0 0
    %3989 = vmatprep.subr.bf16.mxu0 0
    %3990 = vmatpush2.bf16.msra.mxu0 0
    %3991 = vmatprep.subr.bf16.mxu0 0
    %3992 = vmatpush2.bf16.msra.mxu0 0
    %3993 = vmatprep.subr.bf16.mxu0 0
    %3994 = vmatpush2.bf16.msra.mxu0 0
    %3995 = vmatprep.subr.bf16.mxu0 0
    %3996 = vmatpush2.bf16.msra.mxu0 0
    %3997 = vmatprep.subr.bf16.mxu0 0
    %3998 = vmatpush2.bf16.msra.mxu0 0
    %3999 = vmatprep.mubr.bf16.mxu0 0
    %4000 = vmatmul.mubr.bf16.gmra.mxu0 %v3924
    %v4001 = vpop.f32.mrf.mxu0
    %v4002 = vadd.f32 0.0, %v4001
    %v4003 = vpop.f32.mrf.mxu0
    %v4004 = vadd.f32 0.0, %v4003
    %v4005 = vpop.f32.mrf.mxu0
    %v4006 = vpop.f32.mrf.mxu0
    %4007 = vdwg.mxu0
    %v4012 = vrot.slane %v3961, 6
    %v4013 = vrot.slane %v3963, 6
    %v4014 = vrot.slane %v4002, 6
    %v4015 = vrot.slane %v4004, 6
    %v4020 = vadd.f32 %v2875, %v4012
    %v4021 = vadd.f32 %v2877, %v4013
    %v4022 = vadd.f32 %v2918, %v4014
    %v4023 = vadd.f32 %v2920, %v4015
    %v4024 = vsub.f32 0.0, %v4020
    %v4025 = vmul.f32 %v4024, 1.442695
    %v4026 = vpow.pop %v4025
    %v4027 = vadd.f32 %v4026, 1.0
    %v4028 = vrcp.pop %v4027
    %v4029 = vmul.f32 1.0, %v4028
    %v4030 = vsub.f32 0.0, %v4021
    %v4031 = vmul.f32 %v4030, 1.442695
    %v4032 = vpow.pop %v4031
    %v4033 = vadd.f32 %v4032, 1.0
    %v4034 = vrcp.pop %v4033
    %v4035 = vmul.f32 1.0, %v4034
    %v4036 = vtanh.pop %v4022
    %v4037 = vsub.f32 0.0, %v4023
    %v4038 = vmul.f32 %v4037, 1.442695
    %v4039 = vpow.pop %v4038
    %v4040 = vadd.f32 %v4039, 1.0
    %v4041 = vrcp.pop %v4040
    %v4042 = vmul.f32 1.0, %v4041
    %v4044 = vrot.slane %v3790, 2
    %v4046 = vmul.f32 %v4035, %v4044
    %v4047 = vmul.f32 %v4029, %v4036
    %v4048 = vadd.f32 %v4046, %v4047
    %v4049 = vtanh.pop %v4048
    %v4050 = vmul.f32 %v4042, %v4049
    %v4051 = vpack.c.bf16 %v3921, %v3921
    %v4053 = vrot.slane %v4051, 2
    %4055 = vmatprep.subr.bf16.mxu0 %v3111
    %4056 = vmatpush1.bf16.msra.mxu0 %v3110
    %4057 = vmatprep.subr.bf16.mxu0 %v3107
    %4058 = vmatpush1.bf16.msra.mxu0 %v3106
    %4059 = vmatprep.subr.bf16.mxu0 %v3103
    %4060 = vmatpush1.bf16.msra.mxu0 %v3102
    %4061 = vmatprep.subr.bf16.mxu0 %v3099
    %4062 = vmatpush1.bf16.msra.mxu0 %v3098
    %4063 = vmatprep.subr.bf16.mxu0 %v3095
    %4064 = vmatpush1.bf16.msra.mxu0 %v3094
    %4065 = vmatprep.subr.bf16.mxu0 %v3091
    %4066 = vmatpush1.bf16.msra.mxu0 %v3090
    %4067 = vmatprep.subr.bf16.mxu0 %v3087
    %4068 = vmatpush1.bf16.msra.mxu0 %v3086
    %4069 = vmatprep.subr.bf16.mxu0 %v3083
    %4070 = vmatpush1.bf16.msra.mxu0 %v3082
    %4071 = vmatprep.subr.bf16.mxu0 0
    %4072 = vmatpush2.bf16.msra.mxu0 0
    %4073 = vmatprep.subr.bf16.mxu0 0
    %4074 = vmatpush2.bf16.msra.mxu0 0
    %4075 = vmatprep.subr.bf16.mxu0 0
    %4076 = vmatpush2.bf16.msra.mxu0 0
    %4077 = vmatprep.subr.bf16.mxu0 0
    %4078 = vmatpush2.bf16.msra.mxu0 0
    %4079 = vmatprep.subr.bf16.mxu0 0
    %4080 = vmatpush2.bf16.msra.mxu0 0
    %4081 = vmatprep.subr.bf16.mxu0 0
    %4082 = vmatpush2.bf16.msra.mxu0 0
    %4083 = vmatprep.subr.bf16.mxu0 0
    %4084 = vmatpush2.bf16.msra.mxu0 0
    %4085 = vmatprep.subr.bf16.mxu0 0
    %4086 = vmatpush2.bf16.msra.mxu0 0
    %4087 = vmatprep.mubr.bf16.mxu0 0
    %4088 = vmatmul.mubr.bf16.gmra.mxu0 %v4053
    %v4089 = vpop.f32.mrf.mxu0
    %v4090 = vadd.f32 0.0, %v4089
    %v4091 = vpop.f32.mrf.mxu0
    %v4092 = vadd.f32 0.0, %v4091
    %v4093 = vpop.f32.mrf.mxu0
    %v4094 = vpop.f32.mrf.mxu0
    %4095 = vdwg.mxu0
    %4096 = vmatprep.subr.bf16.mxu0 %v3113
    %4097 = vmatpush1.bf16.msra.mxu0 %v3112
    %4098 = vmatprep.subr.bf16.mxu0 %v3109
    %4099 = vmatpush1.bf16.msra.mxu0 %v3108
    %4100 = vmatprep.subr.bf16.mxu0 %v3105
    %4101 = vmatpush1.bf16.msra.mxu0 %v3104
    %4102 = vmatprep.subr.bf16.mxu0 %v3101
    %4103 = vmatpush1.bf16.msra.mxu0 %v3100
    %4104 = vmatprep.subr.bf16.mxu0 %v3097
    %4105 = vmatpush1.bf16.msra.mxu0 %v3096
    %4106 = vmatprep.subr.bf16.mxu0 %v3093
    %4107 = vmatpush1.bf16.msra.mxu0 %v3092
    %4108 = vmatprep.subr.bf16.mxu0 %v3089
    %4109 = vmatpush1.bf16.msra.mxu0 %v3088
    %4110 = vmatprep.subr.bf16.mxu0 %v3085
    %4111 = vmatpush1.bf16.msra.mxu0 %v3084
    %4112 = vmatprep.subr.bf16.mxu0 0
    %4113 = vmatpush2.bf16.msra.mxu0 0
    %4114 = vmatprep.subr.bf16.mxu0 0
    %4115 = vmatpush2.bf16.msra.mxu0 0
    %4116 = vmatprep.subr.bf16.mxu0 0
    %4117 = vmatpush2.bf16.msra.mxu0 0
    %4118 = vmatprep.subr.bf16.mxu0 0
    %4119 = vmatpush2.bf16.msra.mxu0 0
    %4120 = vmatprep.subr.bf16.mxu0 0
    %4121 = vmatpush2.bf16.msra.mxu0 0
    %4122 = vmatprep.subr.bf16.mxu0 0
    %4123 = vmatpush2.bf16.msra.mxu0 0
    %4124 = vmatprep.subr.bf16.mxu0 0
    %4125 = vmatpush2.bf16.msra.mxu0 0
    %4126 = vmatprep.subr.bf16.mxu0 0
    %4127 = vmatpush2.bf16.msra.mxu0 0
    %4128 = vmatprep.mubr.bf16.mxu0 0
    %4129 = vmatmul.mubr.bf16.gmra.mxu0 %v4053
    %v4130 = vpop.f32.mrf.mxu0
    %v4131 = vadd.f32 0.0, %v4130
    %v4132 = vpop.f32.mrf.mxu0
    %v4133 = vadd.f32 0.0, %v4132
    %v4134 = vpop.f32.mrf.mxu0
    %v4135 = vpop.f32.mrf.mxu0
    %4136 = vdwg.mxu0
    %v4141 = vrot.slane %v4090, 2
    %v4142 = vrot.slane %v4092, 2
    %v4143 = vrot.slane %v4131, 2
    %v4144 = vrot.slane %v4133, 2
    %v4149 = vadd.f32 %v2785, %v4141
    %v4150 = vadd.f32 %v2787, %v4142
    %v4151 = vadd.f32 %v2828, %v4143
    %v4152 = vadd.f32 %v2830, %v4144
    %v4153 = vsub.f32 0.0, %v4149
    %v4154 = vmul.f32 %v4153, 1.442695
    %v4155 = vpow.pop %v4154
    %v4156 = vadd.f32 %v4155, 1.0
    %v4157 = vrcp.pop %v4156
    %v4158 = vmul.f32 1.0, %v4157
    %v4159 = vsub.f32 0.0, %v4150
    %v4160 = vmul.f32 %v4159, 1.442695
    %v4161 = vpow.pop %v4160
    %v4162 = vadd.f32 %v4161, 1.0
    %v4163 = vrcp.pop %v4162
    %v4164 = vmul.f32 1.0, %v4163
    %v4165 = vtanh.pop %v4151
    %v4166 = vsub.f32 0.0, %v4152
    %v4167 = vmul.f32 %v4166, 1.442695
    %v4168 = vpow.pop %v4167
    %v4169 = vadd.f32 %v4168, 1.0
    %v4170 = vrcp.pop %v4169
    %v4171 = vmul.f32 1.0, %v4170
    %v4173 = vrot.slane %v3919, 6
    %v4175 = vmul.f32 %v4164, %v4173
    %v4176 = vmul.f32 %v4158, %v4165
    %v4177 = vadd.f32 %v4175, %v4176
    %v4178 = vtanh.pop %v4177
    %v4179 = vmul.f32 %v4171, %v4178
    %v4180 = vpack.c.bf16 %v4050, %v4050
    %v4182 = vrot.slane %v4180, 1
    %4184 = vmatprep.subr.bf16.mxu0 %v3381
    %4185 = vmatpush1.bf16.msra.mxu0 %v3380
    %4186 = vmatprep.subr.bf16.mxu0 %v3377
    %4187 = vmatpush1.bf16.msra.mxu0 %v3376
    %4188 = vmatprep.subr.bf16.mxu0 %v3373
    %4189 = vmatpush1.bf16.msra.mxu0 %v3372
    %4190 = vmatprep.subr.bf16.mxu0 %v3369
    %4191 = vmatpush1.bf16.msra.mxu0 %v3368
    %4192 = vmatprep.subr.bf16.mxu0 %v3365
    %4193 = vmatpush1.bf16.msra.mxu0 %v3364
    %4194 = vmatprep.subr.bf16.mxu0 %v3361
    %4195 = vmatpush1.bf16.msra.mxu0 %v3360
    %4196 = vmatprep.subr.bf16.mxu0 %v3357
    %4197 = vmatpush1.bf16.msra.mxu0 %v3356
    %4198 = vmatprep.subr.bf16.mxu0 %v3353
    %4199 = vmatpush1.bf16.msra.mxu0 %v3352
    %4200 = vmatprep.subr.bf16.mxu0 0
    %4201 = vmatpush2.bf16.msra.mxu0 0
    %4202 = vmatprep.subr.bf16.mxu0 0
    %4203 = vmatpush2.bf16.msra.mxu0 0
    %4204 = vmatprep.subr.bf16.mxu0 0
    %4205 = vmatpush2.bf16.msra.mxu0 0
    %4206 = vmatprep.subr.bf16.mxu0 0
    %4207 = vmatpush2.bf16.msra.mxu0 0
    %4208 = vmatprep.subr.bf16.mxu0 0
    %4209 = vmatpush2.bf16.msra.mxu0 0
    %4210 = vmatprep.subr.bf16.mxu0 0
    %4211 = vmatpush2.bf16.msra.mxu0 0
    %4212 = vmatprep.subr.bf16.mxu0 0
    %4213 = vmatpush2.bf16.msra.mxu0 0
    %4214 = vmatprep.subr.bf16.mxu0 0
    %4215 = vmatpush2.bf16.msra.mxu0 0
    %4216 = vmatprep.mubr.bf16.mxu0 0
    %4217 = vmatmul.mubr.bf16.gmra.mxu0 %v4182
    %v4218 = vpop.f32.mrf.mxu0
    %v4219 = vadd.f32 0.0, %v4218
    %v4220 = vpop.f32.mrf.mxu0
    %v4221 = vadd.f32 0.0, %v4220
    %v4222 = vpop.f32.mrf.mxu0
    %v4223 = vpop.f32.mrf.mxu0
    %4224 = vdwg.mxu0
    %4225 = vmatprep.subr.bf16.mxu0 %v3383
    %4226 = vmatpush1.bf16.msra.mxu0 %v3382
    %4227 = vmatprep.subr.bf16.mxu0 %v3379
    %4228 = vmatpush1.bf16.msra.mxu0 %v3378
    %4229 = vmatprep.subr.bf16.mxu0 %v3375
    %4230 = vmatpush1.bf16.msra.mxu0 %v3374
    %4231 = vmatprep.subr.bf16.mxu0 %v3371
    %4232 = vmatpush1.bf16.msra.mxu0 %v3370
    %4233 = vmatprep.subr.bf16.mxu0 %v3367
    %4234 = vmatpush1.bf16.msra.mxu0 %v3366
    %4235 = vmatprep.subr.bf16.mxu0 %v3363
    %4236 = vmatpush1.bf16.msra.mxu0 %v3362
    %4237 = vmatprep.subr.bf16.mxu0 %v3359
    %4238 = vmatpush1.bf16.msra.mxu0 %v3358
    %4239 = vmatprep.subr.bf16.mxu0 %v3355
    %4240 = vmatpush1.bf16.msra.mxu0 %v3354
    %4241 = vmatprep.subr.bf16.mxu0 0
    %4242 = vmatpush2.bf16.msra.mxu0 0
    %4243 = vmatprep.subr.bf16.mxu0 0
    %4244 = vmatpush2.bf16.msra.mxu0 0
    %4245 = vmatprep.subr.bf16.mxu0 0
    %4246 = vmatpush2.bf16.msra.mxu0 0
    %4247 = vmatprep.subr.bf16.mxu0 0
    %4248 = vmatpush2.bf16.msra.mxu0 0
    %4249 = vmatprep.subr.bf16.mxu0 0
    %4250 = vmatpush2.bf16.msra.mxu0 0
    %4251 = vmatprep.subr.bf16.mxu0 0
    %4252 = vmatpush2.bf16.msra.mxu0 0
    %4253 = vmatprep.subr.bf16.mxu0 0
    %4254 = vmatpush2.bf16.msra.mxu0 0
    %4255 = vmatprep.subr.bf16.mxu0 0
    %4256 = vmatpush2.bf16.msra.mxu0 0
    %4257 = vmatprep.mubr.bf16.mxu0 0
    %4258 = vmatmul.mubr.bf16.gmra.mxu0 %v4182
    %v4259 = vpop.f32.mrf.mxu0
    %v4260 = vadd.f32 0.0, %v4259
    %v4261 = vpop.f32.mrf.mxu0
    %v4262 = vadd.f32 0.0, %v4261
    %v4263 = vpop.f32.mrf.mxu0
    %v4264 = vpop.f32.mrf.mxu0
    %4265 = vdwg.mxu0
    %v4266 = vadd.f32 %v2875, %v4219
    %v4267 = vadd.f32 %v2877, %v4221
    %v4268 = vadd.f32 %v2918, %v4260
    %v4269 = vadd.f32 %v2920, %v4262
    %v4270 = vsub.f32 0.0, %v4266
    %v4271 = vmul.f32 %v4270, 1.442695
    %v4272 = vpow.pop %v4271
    %v4273 = vadd.f32 %v4272, 1.0
    %v4274 = vrcp.pop %v4273
    %v4275 = vmul.f32 1.0, %v4274
    %v4276 = vsub.f32 0.0, %v4267
    %v4277 = vmul.f32 %v4276, 1.442695
    %v4278 = vpow.pop %v4277
    %v4279 = vadd.f32 %v4278, 1.0
    %v4280 = vrcp.pop %v4279
    %v4281 = vmul.f32 1.0, %v4280
    %v4282 = vtanh.pop %v4268
    %v4283 = vsub.f32 0.0, %v4269
    %v4284 = vmul.f32 %v4283, 1.442695
    %v4285 = vpow.pop %v4284
    %v4286 = vadd.f32 %v4285, 1.0
    %v4287 = vrcp.pop %v4286
    %v4288 = vmul.f32 1.0, %v4287
    %v4290 = vrot.slane %v4048, 2
    %v4292 = vmul.f32 %v4281, %v4290
    %v4293 = vmul.f32 %v4275, %v4282
    %v4294 = vadd.f32 %v4292, %v4293
    %v4295 = vtanh.pop %v4294
    %v4296 = vmul.f32 %v4288, %v4295
    %v4297 = vpack.c.bf16 %v4179, %v4179
    %v4299 = vrot.slane %v4297, 3
    %4301 = vmatprep.subr.bf16.mxu0 %v3111
    %4302 = vmatpush1.bf16.msra.mxu0 %v3110
    %4303 = vmatprep.subr.bf16.mxu0 %v3107
    %4304 = vmatpush1.bf16.msra.mxu0 %v3106
    %4305 = vmatprep.subr.bf16.mxu0 %v3103
    %4306 = vmatpush1.bf16.msra.mxu0 %v3102
    %4307 = vmatprep.subr.bf16.mxu0 %v3099
    %4308 = vmatpush1.bf16.msra.mxu0 %v3098
    %4309 = vmatprep.subr.bf16.mxu0 %v3095
    %4310 = vmatpush1.bf16.msra.mxu0 %v3094
    %4311 = vmatprep.subr.bf16.mxu0 %v3091
    %4312 = vmatpush1.bf16.msra.mxu0 %v3090
    %4313 = vmatprep.subr.bf16.mxu0 %v3087
    %4314 = vmatpush1.bf16.msra.mxu0 %v3086
    %4315 = vmatprep.subr.bf16.mxu0 %v3083
    %4316 = vmatpush1.bf16.msra.mxu0 %v3082
    %4317 = vmatprep.subr.bf16.mxu0 0
    %4318 = vmatpush2.bf16.msra.mxu0 0
    %4319 = vmatprep.subr.bf16.mxu0 0
    %4320 = vmatpush2.bf16.msra.mxu0 0
    %4321 = vmatprep.subr.bf16.mxu0 0
    %4322 = vmatpush2.bf16.msra.mxu0 0
    %4323 = vmatprep.subr.bf16.mxu0 0
    %4324 = vmatpush2.bf16.msra.mxu0 0
    %4325 = vmatprep.subr.bf16.mxu0 0
    %4326 = vmatpush2.bf16.msra.mxu0 0
    %4327 = vmatprep.subr.bf16.mxu0 0
    %4328 = vmatpush2.bf16.msra.mxu0 0
    %4329 = vmatprep.subr.bf16.mxu0 0
    %4330 = vmatpush2.bf16.msra.mxu0 0
    %4331 = vmatprep.subr.bf16.mxu0 0
    %4332 = vmatpush2.bf16.msra.mxu0 0
    %4333 = vmatprep.mubr.bf16.mxu0 0
    %4334 = vmatmul.mubr.bf16.gmra.mxu0 %v4299
    %v4335 = vpop.f32.mrf.mxu0
    %v4336 = vadd.f32 0.0, %v4335
    %v4337 = vpop.f32.mrf.mxu0
    %v4338 = vadd.f32 0.0, %v4337
    %v4339 = vpop.f32.mrf.mxu0
    %v4340 = vpop.f32.mrf.mxu0
    %4341 = vdwg.mxu0
    %4342 = vmatprep.subr.bf16.mxu0 %v3113
    %4343 = vmatpush1.bf16.msra.mxu0 %v3112
    %4344 = vmatprep.subr.bf16.mxu0 %v3109
    %4345 = vmatpush1.bf16.msra.mxu0 %v3108
    %4346 = vmatprep.subr.bf16.mxu0 %v3105
    %4347 = vmatpush1.bf16.msra.mxu0 %v3104
    %4348 = vmatprep.subr.bf16.mxu0 %v3101
    %4349 = vmatpush1.bf16.msra.mxu0 %v3100
    %4350 = vmatprep.subr.bf16.mxu0 %v3097
    %4351 = vmatpush1.bf16.msra.mxu0 %v3096
    %4352 = vmatprep.subr.bf16.mxu0 %v3093
    %4353 = vmatpush1.bf16.msra.mxu0 %v3092
    %4354 = vmatprep.subr.bf16.mxu0 %v3089
    %4355 = vmatpush1.bf16.msra.mxu0 %v3088
    %4356 = vmatprep.subr.bf16.mxu0 %v3085
    %4357 = vmatpush1.bf16.msra.mxu0 %v3084
    %4358 = vmatprep.subr.bf16.mxu0 0
    %4359 = vmatpush2.bf16.msra.mxu0 0
    %4360 = vmatprep.subr.bf16.mxu0 0
    %4361 = vmatpush2.bf16.msra.mxu0 0
    %4362 = vmatprep.subr.bf16.mxu0 0
    %4363 = vmatpush2.bf16.msra.mxu0 0
    %4364 = vmatprep.subr.bf16.mxu0 0
    %4365 = vmatpush2.bf16.msra.mxu0 0
    %4366 = vmatprep.subr.bf16.mxu0 0
    %4367 = vmatpush2.bf16.msra.mxu0 0
    %4368 = vmatprep.subr.bf16.mxu0 0
    %4369 = vmatpush2.bf16.msra.mxu0 0
    %4370 = vmatprep.subr.bf16.mxu0 0
    %4371 = vmatpush2.bf16.msra.mxu0 0
    %4372 = vmatprep.subr.bf16.mxu0 0
    %4373 = vmatpush2.bf16.msra.mxu0 0
    %4374 = vmatprep.mubr.bf16.mxu0 0
    %4375 = vmatmul.mubr.bf16.gmra.mxu0 %v4299
    %v4376 = vpop.f32.mrf.mxu0
    %v4377 = vadd.f32 0.0, %v4376
    %v4378 = vpop.f32.mrf.mxu0
    %v4379 = vadd.f32 0.0, %v4378
    %v4380 = vpop.f32.mrf.mxu0
    %v4381 = vpop.f32.mrf.mxu0
    %4382 = vdwg.mxu0
    %v4383 = vadd.f32 %v2789, %v4336
    %v4384 = vadd.f32 %v2791, %v4338
    %v4385 = vadd.f32 %v2832, %v4377
    %v4386 = vadd.f32 %v2834, %v4379
    %v4387 = vsub.f32 0.0, %v4383
    %v4388 = vmul.f32 %v4387, 1.442695
    %v4389 = vpow.pop %v4388
    %v4390 = vadd.f32 %v4389, 1.0
    %v4391 = vrcp.pop %v4390
    %v4392 = vmul.f32 1.0, %v4391
    %v4393 = vsub.f32 0.0, %v4384
    %v4394 = vmul.f32 %v4393, 1.442695
    %v4395 = vpow.pop %v4394
    %v4396 = vadd.f32 %v4395, 1.0
    %v4397 = vrcp.pop %v4396
    %v4398 = vmul.f32 1.0, %v4397
    %v4399 = vtanh.pop %v4385
    %v4400 = vsub.f32 0.0, %v4386
    %v4401 = vmul.f32 %v4400, 1.442695
    %v4402 = vpow.pop %v4401
    %v4403 = vadd.f32 %v4402, 1.0
    %v4404 = vrcp.pop %v4403
    %v4405 = vmul.f32 1.0, %v4404
    %v4407 = vrot.slane %v4177, 6
    %v4409 = vmul.f32 %v4398, %v4407
    %v4410 = vmul.f32 %v4392, %v4399
    %v4411 = vadd.f32 %v4409, %v4410
    %v4412 = vtanh.pop %v4411
    %v4413 = vmul.f32 %v4405, %v4412
    %v4414 = vpack.c.bf16 %v4296, %v4296
    %4415 = vmatprep.subr.bf16.mxu0 %v3381
    %4416 = vmatpush1.bf16.msra.mxu0 %v3380
    %4417 = vmatprep.subr.bf16.mxu0 %v3377
    %4418 = vmatpush1.bf16.msra.mxu0 %v3376
    %4419 = vmatprep.subr.bf16.mxu0 %v3373
    %4420 = vmatpush1.bf16.msra.mxu0 %v3372
    %4421 = vmatprep.subr.bf16.mxu0 %v3369
    %4422 = vmatpush1.bf16.msra.mxu0 %v3368
    %4423 = vmatprep.subr.bf16.mxu0 %v3365
    %4424 = vmatpush1.bf16.msra.mxu0 %v3364
    %4425 = vmatprep.subr.bf16.mxu0 %v3361
    %4426 = vmatpush1.bf16.msra.mxu0 %v3360
    %4427 = vmatprep.subr.bf16.mxu0 %v3357
    %4428 = vmatpush1.bf16.msra.mxu0 %v3356
    %4429 = vmatprep.subr.bf16.mxu0 %v3353
    %4430 = vmatpush1.bf16.msra.mxu0 %v3352
    %4431 = vmatprep.subr.bf16.mxu0 0
    %4432 = vmatpush2.bf16.msra.mxu0 0
    %4433 = vmatprep.subr.bf16.mxu0 0
    %4434 = vmatpush2.bf16.msra.mxu0 0
    %4435 = vmatprep.subr.bf16.mxu0 0
    %4436 = vmatpush2.bf16.msra.mxu0 0
    %4437 = vmatprep.subr.bf16.mxu0 0
    %4438 = vmatpush2.bf16.msra.mxu0 0
    %4439 = vmatprep.subr.bf16.mxu0 0
    %4440 = vmatpush2.bf16.msra.mxu0 0
    %4441 = vmatprep.subr.bf16.mxu0 0
    %4442 = vmatpush2.bf16.msra.mxu0 0
    %4443 = vmatprep.subr.bf16.mxu0 0
    %4444 = vmatpush2.bf16.msra.mxu0 0
    %4445 = vmatprep.subr.bf16.mxu0 0
    %4446 = vmatpush2.bf16.msra.mxu0 0
    %4447 = vmatprep.mubr.bf16.mxu0 0
    %4448 = vmatmul.mubr.bf16.gmra.mxu0 %v4414
    %v4449 = vpop.f32.mrf.mxu0
    %v4450 = vadd.f32 0.0, %v4449
    %v4451 = vpop.f32.mrf.mxu0
    %v4452 = vadd.f32 0.0, %v4451
    %v4453 = vpop.f32.mrf.mxu0
    %v4454 = vpop.f32.mrf.mxu0
    %4455 = vdwg.mxu0
    %4456 = vmatprep.subr.bf16.mxu0 %v3383
    %4457 = vmatpush1.bf16.msra.mxu0 %v3382
    %4458 = vmatprep.subr.bf16.mxu0 %v3379
    %4459 = vmatpush1.bf16.msra.mxu0 %v3378
    %4460 = vmatprep.subr.bf16.mxu0 %v3375
    %4461 = vmatpush1.bf16.msra.mxu0 %v3374
    %4462 = vmatprep.subr.bf16.mxu0 %v3371
    %4463 = vmatpush1.bf16.msra.mxu0 %v3370
    %4464 = vmatprep.subr.bf16.mxu0 %v3367
    %4465 = vmatpush1.bf16.msra.mxu0 %v3366
    %4466 = vmatprep.subr.bf16.mxu0 %v3363
    %4467 = vmatpush1.bf16.msra.mxu0 %v3362
    %4468 = vmatprep.subr.bf16.mxu0 %v3359
    %4469 = vmatpush1.bf16.msra.mxu0 %v3358
    %4470 = vmatprep.subr.bf16.mxu0 %v3355
    %4471 = vmatpush1.bf16.msra.mxu0 %v3354
    %4472 = vmatprep.subr.bf16.mxu0 0
    %4473 = vmatpush2.bf16.msra.mxu0 0
    %4474 = vmatprep.subr.bf16.mxu0 0
    %4475 = vmatpush2.bf16.msra.mxu0 0
    %4476 = vmatprep.subr.bf16.mxu0 0
    %4477 = vmatpush2.bf16.msra.mxu0 0
    %4478 = vmatprep.subr.bf16.mxu0 0
    %4479 = vmatpush2.bf16.msra.mxu0 0
    %4480 = vmatprep.subr.bf16.mxu0 0
    %4481 = vmatpush2.bf16.msra.mxu0 0
    %4482 = vmatprep.subr.bf16.mxu0 0
    %4483 = vmatpush2.bf16.msra.mxu0 0
    %4484 = vmatprep.subr.bf16.mxu0 0
    %4485 = vmatpush2.bf16.msra.mxu0 0
    %4486 = vmatprep.subr.bf16.mxu0 0
    %4487 = vmatpush2.bf16.msra.mxu0 0
    %4488 = vmatprep.mubr.bf16.mxu0 0
    %4489 = vmatmul.mubr.bf16.gmra.mxu0 %v4414
    %v4490 = vpop.f32.mrf.mxu0
    %v4491 = vadd.f32 0.0, %v4490
    %v4492 = vpop.f32.mrf.mxu0
    %v4493 = vadd.f32 0.0, %v4492
    %v4494 = vpop.f32.mrf.mxu0
    %v4495 = vpop.f32.mrf.mxu0
    %4496 = vdwg.mxu0
    %v4501 = vrot.slane %v4450, 2
    %v4502 = vrot.slane %v4452, 2
    %v4503 = vrot.slane %v4491, 2
    %v4504 = vrot.slane %v4493, 2
    %v4509 = vadd.f32 %v2871, %v4501
    %v4510 = vadd.f32 %v2873, %v4502
    %v4511 = vadd.f32 %v2914, %v4503
    %v4512 = vadd.f32 %v2916, %v4504
    %v4513 = vsub.f32 0.0, %v4509
    %v4514 = vmul.f32 %v4513, 1.442695
    %v4515 = vpow.pop %v4514
    %v4516 = vadd.f32 %v4515, 1.0
    %v4517 = vrcp.pop %v4516
    %v4518 = vmul.f32 1.0, %v4517
    %v4519 = vsub.f32 0.0, %v4510
    %v4520 = vmul.f32 %v4519, 1.442695
    %v4521 = vpow.pop %v4520
    %v4522 = vadd.f32 %v4521, 1.0
    %v4523 = vrcp.pop %v4522
    %v4524 = vmul.f32 1.0, %v4523
    %v4525 = vtanh.pop %v4511
    %v4526 = vsub.f32 0.0, %v4512
    %v4527 = vmul.f32 %v4526, 1.442695
    %v4528 = vpow.pop %v4527
    %v4529 = vadd.f32 %v4528, 1.0
    %v4530 = vrcp.pop %v4529
    %v4531 = vmul.f32 1.0, %v4530
    %v4533 = vrot.slane %v4294, 2
    %v4535 = vmul.f32 %v4524, %v4533
    %v4536 = vmul.f32 %v4518, %v4525
    %v4537 = vadd.f32 %v4535, %v4536
    %v4538 = vtanh.pop %v4537
    %v4539 = vmul.f32 %v4531, %v4538
    %v4540 = vpack.c.bf16 %v4413, %v4413
    %4541 = vmatprep.subr.bf16.mxu0 %v3111
    %4542 = vmatpush1.bf16.msra.mxu0 %v3110
    %4543 = vmatprep.subr.bf16.mxu0 %v3107
    %4544 = vmatpush1.bf16.msra.mxu0 %v3106
    %4545 = vmatprep.subr.bf16.mxu0 %v3103
    %4546 = vmatpush1.bf16.msra.mxu0 %v3102
    %4547 = vmatprep.subr.bf16.mxu0 %v3099
    %4548 = vmatpush1.bf16.msra.mxu0 %v3098
    %4549 = vmatprep.subr.bf16.mxu0 %v3095
    %4550 = vmatpush1.bf16.msra.mxu0 %v3094
    %4551 = vmatprep.subr.bf16.mxu0 %v3091
    %4552 = vmatpush1.bf16.msra.mxu0 %v3090
    %4553 = vmatprep.subr.bf16.mxu0 %v3087
    %4554 = vmatpush1.bf16.msra.mxu0 %v3086
    %4555 = vmatprep.subr.bf16.mxu0 %v3083
    %4556 = vmatpush1.bf16.msra.mxu0 %v3082
    %4557 = vmatprep.subr.bf16.mxu0 0
    %4558 = vmatpush2.bf16.msra.mxu0 0
    %4559 = vmatprep.subr.bf16.mxu0 0
    %4560 = vmatpush2.bf16.msra.mxu0 0
    %4561 = vmatprep.subr.bf16.mxu0 0
    %4562 = vmatpush2.bf16.msra.mxu0 0
    %4563 = vmatprep.subr.bf16.mxu0 0
    %4564 = vmatpush2.bf16.msra.mxu0 0
    %4565 = vmatprep.subr.bf16.mxu0 0
    %4566 = vmatpush2.bf16.msra.mxu0 0
    %4567 = vmatprep.subr.bf16.mxu0 0
    %4568 = vmatpush2.bf16.msra.mxu0 0
    %4569 = vmatprep.subr.bf16.mxu0 0
    %4570 = vmatpush2.bf16.msra.mxu0 0
    %4571 = vmatprep.subr.bf16.mxu0 0
    %4572 = vmatpush2.bf16.msra.mxu0 0
    %4573 = vmatprep.mubr.bf16.mxu0 0
    %4574 = vmatmul.mubr.bf16.gmra.mxu0 %v4540
    %v4575 = vpop.f32.mrf.mxu0
    %v4576 = vadd.f32 0.0, %v4575
    %v4577 = vpop.f32.mrf.mxu0
    %v4578 = vadd.f32 0.0, %v4577
    %v4579 = vpop.f32.mrf.mxu0
    %v4580 = vpop.f32.mrf.mxu0
    %4581 = vdwg.mxu0
    %4582 = vmatprep.subr.bf16.mxu0 %v3113
    %4583 = vmatpush1.bf16.msra.mxu0 %v3112
    %4584 = vmatprep.subr.bf16.mxu0 %v3109
    %4585 = vmatpush1.bf16.msra.mxu0 %v3108
    %4586 = vmatprep.subr.bf16.mxu0 %v3105
    %4587 = vmatpush1.bf16.msra.mxu0 %v3104
    %4588 = vmatprep.subr.bf16.mxu0 %v3101
    %4589 = vmatpush1.bf16.msra.mxu0 %v3100
    %4590 = vmatprep.subr.bf16.mxu0 %v3097
    %4591 = vmatpush1.bf16.msra.mxu0 %v3096
    %4592 = vmatprep.subr.bf16.mxu0 %v3093
    %4593 = vmatpush1.bf16.msra.mxu0 %v3092
    %4594 = vmatprep.subr.bf16.mxu0 %v3089
    %4595 = vmatpush1.bf16.msra.mxu0 %v3088
    %4596 = vmatprep.subr.bf16.mxu0 %v3085
    %4597 = vmatpush1.bf16.msra.mxu0 %v3084
    %4598 = vmatprep.subr.bf16.mxu0 0
    %4599 = vmatpush2.bf16.msra.mxu0 0
    %4600 = vmatprep.subr.bf16.mxu0 0
    %4601 = vmatpush2.bf16.msra.mxu0 0
    %4602 = vmatprep.subr.bf16.mxu0 0
    %4603 = vmatpush2.bf16.msra.mxu0 0
    %4604 = vmatprep.subr.bf16.mxu0 0
    %4605 = vmatpush2.bf16.msra.mxu0 0
    %4606 = vmatprep.subr.bf16.mxu0 0
    %4607 = vmatpush2.bf16.msra.mxu0 0
    %4608 = vmatprep.subr.bf16.mxu0 0
    %4609 = vmatpush2.bf16.msra.mxu0 0
    %4610 = vmatprep.subr.bf16.mxu0 0
    %4611 = vmatpush2.bf16.msra.mxu0 0
    %4612 = vmatprep.subr.bf16.mxu0 0
    %4613 = vmatpush2.bf16.msra.mxu0 0
    %4614 = vmatprep.mubr.bf16.mxu0 0
    %4615 = vmatmul.mubr.bf16.gmra.mxu0 %v4540
    %v4616 = vpop.f32.mrf.mxu0
    %v4617 = vadd.f32 0.0, %v4616
    %v4618 = vpop.f32.mrf.mxu0
    %v4619 = vadd.f32 0.0, %v4618
    %v4620 = vpop.f32.mrf.mxu0
    %v4621 = vpop.f32.mrf.mxu0
    %4622 = vdwg.mxu0
    %v4627 = vrot.slane %v4576, 6
    %v4628 = vrot.slane %v4578, 6
    %v4629 = vrot.slane %v4617, 6
    %v4630 = vrot.slane %v4619, 6
    %v4635 = vadd.f32 %v2789, %v4627
    %v4636 = vadd.f32 %v2791, %v4628
    %v4637 = vadd.f32 %v2832, %v4629
    %v4638 = vadd.f32 %v2834, %v4630
    %v4639 = vsub.f32 0.0, %v4635
    %v4640 = vmul.f32 %v4639, 1.442695
    %v4641 = vpow.pop %v4640
    %v4642 = vadd.f32 %v4641, 1.0
    %v4643 = vrcp.pop %v4642
    %v4644 = vmul.f32 1.0, %v4643
    %v4645 = vsub.f32 0.0, %v4636
    %v4646 = vmul.f32 %v4645, 1.442695
    %v4647 = vpow.pop %v4646
    %v4648 = vadd.f32 %v4647, 1.0
    %v4649 = vrcp.pop %v4648
    %v4650 = vmul.f32 1.0, %v4649
    %v4651 = vtanh.pop %v4637
    %v4652 = vsub.f32 0.0, %v4638
    %v4653 = vmul.f32 %v4652, 1.442695
    %v4654 = vpow.pop %v4653
    %v4655 = vadd.f32 %v4654, 1.0
    %v4656 = vrcp.pop %v4655
    %v4657 = vmul.f32 1.0, %v4656
    %v4659 = vrot.slane %v4411, 6
    %v4661 = vmul.f32 %v4650, %v4659
    %v4662 = vmul.f32 %v4644, %v4651
    %v4663 = vadd.f32 %v4661, %v4662
    %v4664 = vtanh.pop %v4663
    %v4665 = vmul.f32 %v4657, %v4664
    %v4666 = vpack.c.bf16 %v4539, %v4539
    %v4668 = vrot.slane %v4666, 3
    %4670 = vmatprep.subr.bf16.mxu0 %v3381
    %4671 = vmatpush1.bf16.msra.mxu0 %v3380
    %4672 = vmatprep.subr.bf16.mxu0 %v3377
    %4673 = vmatpush1.bf16.msra.mxu0 %v3376
    %4674 = vmatprep.subr.bf16.mxu0 %v3373
    %4675 = vmatpush1.bf16.msra.mxu0 %v3372
    %4676 = vmatprep.subr.bf16.mxu0 %v3369
    %4677 = vmatpush1.bf16.msra.mxu0 %v3368
    %4678 = vmatprep.subr.bf16.mxu0 %v3365
    %4679 = vmatpush1.bf16.msra.mxu0 %v3364
    %4680 = vmatprep.subr.bf16.mxu0 %v3361
    %4681 = vmatpush1.bf16.msra.mxu0 %v3360
    %4682 = vmatprep.subr.bf16.mxu0 %v3357
    %4683 = vmatpush1.bf16.msra.mxu0 %v3356
    %4684 = vmatprep.subr.bf16.mxu0 %v3353
    %4685 = vmatpush1.bf16.msra.mxu0 %v3352
    %4686 = vmatprep.subr.bf16.mxu0 0
    %4687 = vmatpush2.bf16.msra.mxu0 0
    %4688 = vmatprep.subr.bf16.mxu0 0
    %4689 = vmatpush2.bf16.msra.mxu0 0
    %4690 = vmatprep.subr.bf16.mxu0 0
    %4691 = vmatpush2.bf16.msra.mxu0 0
    %4692 = vmatprep.subr.bf16.mxu0 0
    %4693 = vmatpush2.bf16.msra.mxu0 0
    %4694 = vmatprep.subr.bf16.mxu0 0
    %4695 = vmatpush2.bf16.msra.mxu0 0
    %4696 = vmatprep.subr.bf16.mxu0 0
    %4697 = vmatpush2.bf16.msra.mxu0 0
    %4698 = vmatprep.subr.bf16.mxu0 0
    %4699 = vmatpush2.bf16.msra.mxu0 0
    %4700 = vmatprep.subr.bf16.mxu0 0
    %4701 = vmatpush2.bf16.msra.mxu0 0
    %4702 = vmatprep.mubr.bf16.mxu0 0
    %4703 = vmatmul.mubr.bf16.gmra.mxu0 %v4668
    %v4704 = vpop.f32.mrf.mxu0
    %v4705 = vadd.f32 0.0, %v4704
    %v4706 = vpop.f32.mrf.mxu0
    %v4707 = vadd.f32 0.0, %v4706
    %v4708 = vpop.f32.mrf.mxu0
    %v4709 = vpop.f32.mrf.mxu0
    %4710 = vdwg.mxu0
    %4711 = vmatprep.subr.bf16.mxu0 %v3383
    %4712 = vmatpush1.bf16.msra.mxu0 %v3382
    %4713 = vmatprep.subr.bf16.mxu0 %v3379
    %4714 = vmatpush1.bf16.msra.mxu0 %v3378
    %4715 = vmatprep.subr.bf16.mxu0 %v3375
    %4716 = vmatpush1.bf16.msra.mxu0 %v3374
    %4717 = vmatprep.subr.bf16.mxu0 %v3371
    %4718 = vmatpush1.bf16.msra.mxu0 %v3370
    %4719 = vmatprep.subr.bf16.mxu0 %v3367
    %4720 = vmatpush1.bf16.msra.mxu0 %v3366
    %4721 = vmatprep.subr.bf16.mxu0 %v3363
    %4722 = vmatpush1.bf16.msra.mxu0 %v3362
    %4723 = vmatprep.subr.bf16.mxu0 %v3359
    %4724 = vmatpush1.bf16.msra.mxu0 %v3358
    %4725 = vmatprep.subr.bf16.mxu0 %v3355
    %4726 = vmatpush1.bf16.msra.mxu0 %v3354
    %4727 = vmatprep.subr.bf16.mxu0 0
    %4728 = vmatpush2.bf16.msra.mxu0 0
    %4729 = vmatprep.subr.bf16.mxu0 0
    %4730 = vmatpush2.bf16.msra.mxu0 0
    %4731 = vmatprep.subr.bf16.mxu0 0
    %4732 = vmatpush2.bf16.msra.mxu0 0
    %4733 = vmatprep.subr.bf16.mxu0 0
    %4734 = vmatpush2.bf16.msra.mxu0 0
    %4735 = vmatprep.subr.bf16.mxu0 0
    %4736 = vmatpush2.bf16.msra.mxu0 0
    %4737 = vmatprep.subr.bf16.mxu0 0
    %4738 = vmatpush2.bf16.msra.mxu0 0
    %4739 = vmatprep.subr.bf16.mxu0 0
    %4740 = vmatpush2.bf16.msra.mxu0 0
    %4741 = vmatprep.subr.bf16.mxu0 0
    %4742 = vmatpush2.bf16.msra.mxu0 0
    %4743 = vmatprep.mubr.bf16.mxu0 0
    %4744 = vmatmul.mubr.bf16.gmra.mxu0 %v4668
    %v4745 = vpop.f32.mrf.mxu0
    %v4746 = vadd.f32 0.0, %v4745
    %v4747 = vpop.f32.mrf.mxu0
    %v4748 = vadd.f32 0.0, %v4747
    %v4749 = vpop.f32.mrf.mxu0
    %v4750 = vpop.f32.mrf.mxu0
    %4751 = vdwg.mxu0
    %v4756 = vrot.slane %v4705, 4
    %v4757 = vrot.slane %v4707, 4
    %v4758 = vrot.slane %v4746, 4
    %v4759 = vrot.slane %v4748, 4
    %v4764 = vadd.f32 %v2871, %v4756
    %v4765 = vadd.f32 %v2873, %v4757
    %v4766 = vadd.f32 %v2914, %v4758
    %v4767 = vadd.f32 %v2916, %v4759
    %v4768 = vsub.f32 0.0, %v4764
    %v4769 = vmul.f32 %v4768, 1.442695
    %v4770 = vpow.pop %v4769
    %v4771 = vadd.f32 %v4770, 1.0
    %v4772 = vrcp.pop %v4771
    %v4773 = vmul.f32 1.0, %v4772
    %v4774 = vsub.f32 0.0, %v4765
    %v4775 = vmul.f32 %v4774, 1.442695
    %v4776 = vpow.pop %v4775
    %v4777 = vadd.f32 %v4776, 1.0
    %v4778 = vrcp.pop %v4777
    %v4779 = vmul.f32 1.0, %v4778
    %v4780 = vtanh.pop %v4766
    %v4781 = vsub.f32 0.0, %v4767
    %v4782 = vmul.f32 %v4781, 1.442695
    %v4783 = vpow.pop %v4782
    %v4784 = vadd.f32 %v4783, 1.0
    %v4785 = vrcp.pop %v4784
    %v4786 = vmul.f32 1.0, %v4785
    %v4788 = vrot.slane %v4537, 2
    %v4790 = vmul.f32 %v4779, %v4788
    %v4791 = vmul.f32 %v4773, %v4780
    %v4792 = vadd.f32 %v4790, %v4791
    %v4793 = vtanh.pop %v4792
    %v4794 = vmul.f32 %v4786, %v4793
    %v4795 = vpack.c.bf16 %v4665, %v4665
    %v4797 = vrot.slane %v4795, 1
    %4799 = vmatprep.subr.bf16.mxu0 %v3111
    %4800 = vmatpush1.bf16.msra.mxu0 %v3110
    %4801 = vmatprep.subr.bf16.mxu0 %v3107
    %4802 = vmatpush1.bf16.msra.mxu0 %v3106
    %4803 = vmatprep.subr.bf16.mxu0 %v3103
    %4804 = vmatpush1.bf16.msra.mxu0 %v3102
    %4805 = vmatprep.subr.bf16.mxu0 %v3099
    %4806 = vmatpush1.bf16.msra.mxu0 %v3098
    %4807 = vmatprep.subr.bf16.mxu0 %v3095
    %4808 = vmatpush1.bf16.msra.mxu0 %v3094
    %4809 = vmatprep.subr.bf16.mxu0 %v3091
    %4810 = vmatpush1.bf16.msra.mxu0 %v3090
    %4811 = vmatprep.subr.bf16.mxu0 %v3087
    %4812 = vmatpush1.bf16.msra.mxu0 %v3086
    %4813 = vmatprep.subr.bf16.mxu0 %v3083
    %4814 = vmatpush1.bf16.msra.mxu0 %v3082
    %4815 = vmatprep.subr.bf16.mxu0 0
    %4816 = vmatpush2.bf16.msra.mxu0 0
    %4817 = vmatprep.subr.bf16.mxu0 0
    %4818 = vmatpush2.bf16.msra.mxu0 0
    %4819 = vmatprep.subr.bf16.mxu0 0
    %4820 = vmatpush2.bf16.msra.mxu0 0
    %4821 = vmatprep.subr.bf16.mxu0 0
    %4822 = vmatpush2.bf16.msra.mxu0 0
    %4823 = vmatprep.subr.bf16.mxu0 0
    %4824 = vmatpush2.bf16.msra.mxu0 0
    %4825 = vmatprep.subr.bf16.mxu0 0
    %4826 = vmatpush2.bf16.msra.mxu0 0
    %4827 = vmatprep.subr.bf16.mxu0 0
    %4828 = vmatpush2.bf16.msra.mxu0 0
    %4829 = vmatprep.subr.bf16.mxu0 0
    %4830 = vmatpush2.bf16.msra.mxu0 0
    %4831 = vmatprep.mubr.bf16.mxu0 0
    %4832 = vmatmul.mubr.bf16.gmra.mxu0 %v4797
    %v4833 = vpop.f32.mrf.mxu0
    %v4834 = vadd.f32 0.0, %v4833
    %v4835 = vpop.f32.mrf.mxu0
    %v4836 = vadd.f32 0.0, %v4835
    %v4837 = vpop.f32.mrf.mxu0
    %v4838 = vpop.f32.mrf.mxu0
    %4839 = vdwg.mxu0
    %4840 = vmatprep.subr.bf16.mxu0 %v3113
    %4841 = vmatpush1.bf16.msra.mxu0 %v3112
    %4842 = vmatprep.subr.bf16.mxu0 %v3109
    %4843 = vmatpush1.bf16.msra.mxu0 %v3108
    %4844 = vmatprep.subr.bf16.mxu0 %v3105
    %4845 = vmatpush1.bf16.msra.mxu0 %v3104
    %4846 = vmatprep.subr.bf16.mxu0 %v3101
    %4847 = vmatpush1.bf16.msra.mxu0 %v3100
    %4848 = vmatprep.subr.bf16.mxu0 %v3097
    %4849 = vmatpush1.bf16.msra.mxu0 %v3096
    %4850 = vmatprep.subr.bf16.mxu0 %v3093
    %4851 = vmatpush1.bf16.msra.mxu0 %v3092
    %4852 = vmatprep.subr.bf16.mxu0 %v3089
    %4853 = vmatpush1.bf16.msra.mxu0 %v3088
    %4854 = vmatprep.subr.bf16.mxu0 %v3085
    %4855 = vmatpush1.bf16.msra.mxu0 %v3084
    %4856 = vmatprep.subr.bf16.mxu0 0
    %4857 = vmatpush2.bf16.msra.mxu0 0
    %4858 = vmatprep.subr.bf16.mxu0 0
    %4859 = vmatpush2.bf16.msra.mxu0 0
    %4860 = vmatprep.subr.bf16.mxu0 0
    %4861 = vmatpush2.bf16.msra.mxu0 0
    %4862 = vmatprep.subr.bf16.mxu0 0
    %4863 = vmatpush2.bf16.msra.mxu0 0
    %4864 = vmatprep.subr.bf16.mxu0 0
    %4865 = vmatpush2.bf16.msra.mxu0 0
    %4866 = vmatprep.subr.bf16.mxu0 0
    %4867 = vmatpush2.bf16.msra.mxu0 0
    %4868 = vmatprep.subr.bf16.mxu0 0
    %4869 = vmatpush2.bf16.msra.mxu0 0
    %4870 = vmatprep.subr.bf16.mxu0 0
    %4871 = vmatpush2.bf16.msra.mxu0 0
    %4872 = vmatprep.mubr.bf16.mxu0 0
    %4873 = vmatmul.mubr.bf16.gmra.mxu0 %v4797
    %v4874 = vpop.f32.mrf.mxu0
    %v4875 = vadd.f32 0.0, %v4874
    %v4876 = vpop.f32.mrf.mxu0
    %v4877 = vadd.f32 0.0, %v4876
    %v4878 = vpop.f32.mrf.mxu0
    %v4879 = vpop.f32.mrf.mxu0
    %4880 = vdwg.mxu0
    %v4885 = vrot.slane %v4834, 4
    %v4886 = vrot.slane %v4836, 4
    %v4887 = vrot.slane %v4875, 4
    %v4888 = vrot.slane %v4877, 4
    %v4893 = vadd.f32 %v2789, %v4885
    %v4894 = vadd.f32 %v2791, %v4886
    %v4895 = vadd.f32 %v2832, %v4887
    %v4896 = vadd.f32 %v2834, %v4888
    %v4897 = vsub.f32 0.0, %v4893
    %v4898 = vmul.f32 %v4897, 1.442695
    %v4899 = vpow.pop %v4898
    %v4900 = vadd.f32 %v4899, 1.0
    %v4901 = vrcp.pop %v4900
    %v4902 = vmul.f32 1.0, %v4901
    %v4903 = vsub.f32 0.0, %v4894
    %v4904 = vmul.f32 %v4903, 1.442695
    %v4905 = vpow.pop %v4904
    %v4906 = vadd.f32 %v4905, 1.0
    %v4907 = vrcp.pop %v4906
    %v4908 = vmul.f32 1.0, %v4907
    %v4909 = vtanh.pop %v4895
    %v4910 = vsub.f32 0.0, %v4896
    %v4911 = vmul.f32 %v4910, 1.442695
    %v4912 = vpow.pop %v4911
    %v4913 = vadd.f32 %v4912, 1.0
    %v4914 = vrcp.pop %v4913
    %v4915 = vmul.f32 1.0, %v4914
    %v4917 = vrot.slane %v4663, 6
    %v4919 = vmul.f32 %v4908, %v4917
    %v4920 = vmul.f32 %v4902, %v4909
    %v4921 = vadd.f32 %v4919, %v4920
    %v4922 = vtanh.pop %v4921
    %v4923 = vmul.f32 %v4915, %v4922
    %v4924 = vpack.c.bf16 %v4794, %v4794
    %v4926 = vrot.slane %v4924, 2
    %4928 = vmatprep.subr.bf16.mxu0 %v3381
    %4929 = vmatpush1.bf16.msra.mxu0 %v3380
    %4930 = vmatprep.subr.bf16.mxu0 %v3377
    %4931 = vmatpush1.bf16.msra.mxu0 %v3376
    %4932 = vmatprep.subr.bf16.mxu0 %v3373
    %4933 = vmatpush1.bf16.msra.mxu0 %v3372
    %4934 = vmatprep.subr.bf16.mxu0 %v3369
    %4935 = vmatpush1.bf16.msra.mxu0 %v3368
    %4936 = vmatprep.subr.bf16.mxu0 %v3365
    %4937 = vmatpush1.bf16.msra.mxu0 %v3364
    %4938 = vmatprep.subr.bf16.mxu0 %v3361
    %4939 = vmatpush1.bf16.msra.mxu0 %v3360
    %4940 = vmatprep.subr.bf16.mxu0 %v3357
    %4941 = vmatpush1.bf16.msra.mxu0 %v3356
    %4942 = vmatprep.subr.bf16.mxu0 %v3353
    %4943 = vmatpush1.bf16.msra.mxu0 %v3352
    %4944 = vmatprep.subr.bf16.mxu0 0
    %4945 = vmatpush2.bf16.msra.mxu0 0
    %4946 = vmatprep.subr.bf16.mxu0 0
    %4947 = vmatpush2.bf16.msra.mxu0 0
    %4948 = vmatprep.subr.bf16.mxu0 0
    %4949 = vmatpush2.bf16.msra.mxu0 0
    %4950 = vmatprep.subr.bf16.mxu0 0
    %4951 = vmatpush2.bf16.msra.mxu0 0
    %4952 = vmatprep.subr.bf16.mxu0 0
    %4953 = vmatpush2.bf16.msra.mxu0 0
    %4954 = vmatprep.subr.bf16.mxu0 0
    %4955 = vmatpush2.bf16.msra.mxu0 0
    %4956 = vmatprep.subr.bf16.mxu0 0
    %4957 = vmatpush2.bf16.msra.mxu0 0
    %4958 = vmatprep.subr.bf16.mxu0 0
    %4959 = vmatpush2.bf16.msra.mxu0 0
    %4960 = vmatprep.mubr.bf16.mxu0 0
    %4961 = vmatmul.mubr.bf16.gmra.mxu0 %v4926
    %v4962 = vpop.f32.mrf.mxu0
    %v4963 = vadd.f32 0.0, %v4962
    %v4964 = vpop.f32.mrf.mxu0
    %v4965 = vadd.f32 0.0, %v4964
    %v4966 = vpop.f32.mrf.mxu0
    %v4967 = vpop.f32.mrf.mxu0
    %4968 = vdwg.mxu0
    %4969 = vmatprep.subr.bf16.mxu0 %v3383
    %4970 = vmatpush1.bf16.msra.mxu0 %v3382
    %4971 = vmatprep.subr.bf16.mxu0 %v3379
    %4972 = vmatpush1.bf16.msra.mxu0 %v3378
    %4973 = vmatprep.subr.bf16.mxu0 %v3375
    %4974 = vmatpush1.bf16.msra.mxu0 %v3374
    %4975 = vmatprep.subr.bf16.mxu0 %v3371
    %4976 = vmatpush1.bf16.msra.mxu0 %v3370
    %4977 = vmatprep.subr.bf16.mxu0 %v3367
    %4978 = vmatpush1.bf16.msra.mxu0 %v3366
    %4979 = vmatprep.subr.bf16.mxu0 %v3363
    %4980 = vmatpush1.bf16.msra.mxu0 %v3362
    %4981 = vmatprep.subr.bf16.mxu0 %v3359
    %4982 = vmatpush1.bf16.msra.mxu0 %v3358
    %4983 = vmatprep.subr.bf16.mxu0 %v3355
    %4984 = vmatpush1.bf16.msra.mxu0 %v3354
    %4985 = vmatprep.subr.bf16.mxu0 0
    %4986 = vmatpush2.bf16.msra.mxu0 0
    %4987 = vmatprep.subr.bf16.mxu0 0
    %4988 = vmatpush2.bf16.msra.mxu0 0
    %4989 = vmatprep.subr.bf16.mxu0 0
    %4990 = vmatpush2.bf16.msra.mxu0 0
    %4991 = vmatprep.subr.bf16.mxu0 0
    %4992 = vmatpush2.bf16.msra.mxu0 0
    %4993 = vmatprep.subr.bf16.mxu0 0
    %4994 = vmatpush2.bf16.msra.mxu0 0
    %4995 = vmatprep.subr.bf16.mxu0 0
    %4996 = vmatpush2.bf16.msra.mxu0 0
    %4997 = vmatprep.subr.bf16.mxu0 0
    %4998 = vmatpush2.bf16.msra.mxu0 0
    %4999 = vmatprep.subr.bf16.mxu0 0
    %5000 = vmatpush2.bf16.msra.mxu0 0
    %5001 = vmatprep.mubr.bf16.mxu0 0
    %5002 = vmatmul.mubr.bf16.gmra.mxu0 %v4926
    %v5003 = vpop.f32.mrf.mxu0
    %v5004 = vadd.f32 0.0, %v5003
    %v5005 = vpop.f32.mrf.mxu0
    %v5006 = vadd.f32 0.0, %v5005
    %v5007 = vpop.f32.mrf.mxu0
    %v5008 = vpop.f32.mrf.mxu0
    %5009 = vdwg.mxu0
    %v5014 = vrot.slane %v4963, 6
    %v5015 = vrot.slane %v4965, 6
    %v5016 = vrot.slane %v5004, 6
    %v5017 = vrot.slane %v5006, 6
    %v5022 = vadd.f32 %v2871, %v5014
    %v5023 = vadd.f32 %v2873, %v5015
    %v5024 = vadd.f32 %v2914, %v5016
    %v5025 = vadd.f32 %v2916, %v5017
    %v5026 = vsub.f32 0.0, %v5022
    %v5027 = vmul.f32 %v5026, 1.442695
    %v5028 = vpow.pop %v5027
    %v5029 = vadd.f32 %v5028, 1.0
    %v5030 = vrcp.pop %v5029
    %v5031 = vmul.f32 1.0, %v5030
    %v5032 = vsub.f32 0.0, %v5023
    %v5033 = vmul.f32 %v5032, 1.442695
    %v5034 = vpow.pop %v5033
    %v5035 = vadd.f32 %v5034, 1.0
    %v5036 = vrcp.pop %v5035
    %v5037 = vmul.f32 1.0, %v5036
    %v5038 = vtanh.pop %v5024
    %v5039 = vsub.f32 0.0, %v5025
    %v5040 = vmul.f32 %v5039, 1.442695
    %v5041 = vpow.pop %v5040
    %v5042 = vadd.f32 %v5041, 1.0
    %v5043 = vrcp.pop %v5042
    %v5044 = vmul.f32 1.0, %v5043
    %v5046 = vrot.slane %v4792, 2
    %v5048 = vmul.f32 %v5037, %v5046
    %v5049 = vmul.f32 %v5031, %v5038
    %v5050 = vadd.f32 %v5048, %v5049
    %v5051 = vtanh.pop %v5050
    %v5052 = vmul.f32 %v5044, %v5051
    %v5053 = vpack.c.bf16 %v4923, %v4923
    %v5055 = vrot.slane %v5053, 2
    %5057 = vmatprep.subr.bf16.mxu0 %v3111
    %5058 = vmatpush1.bf16.msra.mxu0 %v3110
    %5059 = vmatprep.subr.bf16.mxu0 %v3107
    %5060 = vmatpush1.bf16.msra.mxu0 %v3106
    %5061 = vmatprep.subr.bf16.mxu0 %v3103
    %5062 = vmatpush1.bf16.msra.mxu0 %v3102
    %5063 = vmatprep.subr.bf16.mxu0 %v3099
    %5064 = vmatpush1.bf16.msra.mxu0 %v3098
    %5065 = vmatprep.subr.bf16.mxu0 %v3095
    %5066 = vmatpush1.bf16.msra.mxu0 %v3094
    %5067 = vmatprep.subr.bf16.mxu0 %v3091
    %5068 = vmatpush1.bf16.msra.mxu0 %v3090
    %5069 = vmatprep.subr.bf16.mxu0 %v3087
    %5070 = vmatpush1.bf16.msra.mxu0 %v3086
    %5071 = vmatprep.subr.bf16.mxu0 %v3083
    %5072 = vmatpush1.bf16.msra.mxu0 %v3082
    %5073 = vmatprep.subr.bf16.mxu0 0
    %5074 = vmatpush2.bf16.msra.mxu0 0
    %5075 = vmatprep.subr.bf16.mxu0 0
    %5076 = vmatpush2.bf16.msra.mxu0 0
    %5077 = vmatprep.subr.bf16.mxu0 0
    %5078 = vmatpush2.bf16.msra.mxu0 0
    %5079 = vmatprep.subr.bf16.mxu0 0
    %5080 = vmatpush2.bf16.msra.mxu0 0
    %5081 = vmatprep.subr.bf16.mxu0 0
    %5082 = vmatpush2.bf16.msra.mxu0 0
    %5083 = vmatprep.subr.bf16.mxu0 0
    %5084 = vmatpush2.bf16.msra.mxu0 0
    %5085 = vmatprep.subr.bf16.mxu0 0
    %5086 = vmatpush2.bf16.msra.mxu0 0
    %5087 = vmatprep.subr.bf16.mxu0 0
    %5088 = vmatpush2.bf16.msra.mxu0 0
    %5089 = vmatprep.mubr.bf16.mxu0 0
    %5090 = vmatmul.mubr.bf16.gmra.mxu0 %v5055
    %v5091 = vpop.f32.mrf.mxu0
    %v5092 = vadd.f32 0.0, %v5091
    %v5093 = vpop.f32.mrf.mxu0
    %v5094 = vadd.f32 0.0, %v5093
    %v5095 = vpop.f32.mrf.mxu0
    %v5096 = vpop.f32.mrf.mxu0
    %5097 = vdwg.mxu0
    %5098 = vmatprep.subr.bf16.mxu0 %v3113
    %5099 = vmatpush1.bf16.msra.mxu0 %v3112
    %5100 = vmatprep.subr.bf16.mxu0 %v3109
    %5101 = vmatpush1.bf16.msra.mxu0 %v3108
    %5102 = vmatprep.subr.bf16.mxu0 %v3105
    %5103 = vmatpush1.bf16.msra.mxu0 %v3104
    %5104 = vmatprep.subr.bf16.mxu0 %v3101
    %5105 = vmatpush1.bf16.msra.mxu0 %v3100
    %5106 = vmatprep.subr.bf16.mxu0 %v3097
    %5107 = vmatpush1.bf16.msra.mxu0 %v3096
    %5108 = vmatprep.subr.bf16.mxu0 %v3093
    %5109 = vmatpush1.bf16.msra.mxu0 %v3092
    %5110 = vmatprep.subr.bf16.mxu0 %v3089
    %5111 = vmatpush1.bf16.msra.mxu0 %v3088
    %5112 = vmatprep.subr.bf16.mxu0 %v3085
    %5113 = vmatpush1.bf16.msra.mxu0 %v3084
    %5114 = vmatprep.subr.bf16.mxu0 0
    %5115 = vmatpush2.bf16.msra.mxu0 0
    %5116 = vmatprep.subr.bf16.mxu0 0
    %5117 = vmatpush2.bf16.msra.mxu0 0
    %5118 = vmatprep.subr.bf16.mxu0 0
    %5119 = vmatpush2.bf16.msra.mxu0 0
    %5120 = vmatprep.subr.bf16.mxu0 0
    %5121 = vmatpush2.bf16.msra.mxu0 0
    %5122 = vmatprep.subr.bf16.mxu0 0
    %5123 = vmatpush2.bf16.msra.mxu0 0
    %5124 = vmatprep.subr.bf16.mxu0 0
    %5125 = vmatpush2.bf16.msra.mxu0 0
    %5126 = vmatprep.subr.bf16.mxu0 0
    %5127 = vmatpush2.bf16.msra.mxu0 0
    %5128 = vmatprep.subr.bf16.mxu0 0
    %5129 = vmatpush2.bf16.msra.mxu0 0
    %5130 = vmatprep.mubr.bf16.mxu0 0
    %5131 = vmatmul.mubr.bf16.gmra.mxu0 %v5055
    %v5132 = vpop.f32.mrf.mxu0
    %v5133 = vadd.f32 0.0, %v5132
    %v5134 = vpop.f32.mrf.mxu0
    %v5135 = vadd.f32 0.0, %v5134
    %v5136 = vpop.f32.mrf.mxu0
    %v5137 = vpop.f32.mrf.mxu0
    %5138 = vdwg.mxu0
    %v5143 = vrot.slane %v5092, 2
    %v5144 = vrot.slane %v5094, 2
    %v5145 = vrot.slane %v5133, 2
    %v5146 = vrot.slane %v5135, 2
    %v5151 = vadd.f32 %v2789, %v5143
    %v5152 = vadd.f32 %v2791, %v5144
    %v5153 = vadd.f32 %v2832, %v5145
    %v5154 = vadd.f32 %v2834, %v5146
    %v5155 = vsub.f32 0.0, %v5151
    %v5156 = vmul.f32 %v5155, 1.442695
    %v5157 = vpow.pop %v5156
    %v5158 = vadd.f32 %v5157, 1.0
    %v5159 = vrcp.pop %v5158
    %v5160 = vmul.f32 1.0, %v5159
    %v5161 = vsub.f32 0.0, %v5152
    %v5162 = vmul.f32 %v5161, 1.442695
    %v5163 = vpow.pop %v5162
    %v5164 = vadd.f32 %v5163, 1.0
    %v5165 = vrcp.pop %v5164
    %v5166 = vmul.f32 1.0, %v5165
    %v5167 = vtanh.pop %v5153
    %v5168 = vsub.f32 0.0, %v5154
    %v5169 = vmul.f32 %v5168, 1.442695
    %v5170 = vpow.pop %v5169
    %v5171 = vadd.f32 %v5170, 1.0
    %v5172 = vrcp.pop %v5171
    %v5173 = vmul.f32 1.0, %v5172
    %v5175 = vrot.slane %v4921, 6
    %v5177 = vmul.f32 %v5166, %v5175
    %v5178 = vmul.f32 %v5160, %v5167
    %v5179 = vadd.f32 %v5177, %v5178
    %v5180 = vtanh.pop %v5179
    %v5181 = vmul.f32 %v5173, %v5180
    %v5182 = vpack.c.bf16 %v5052, %v5052
    %v5184 = vrot.slane %v5182, 1
    %5186 = vmatprep.subr.bf16.mxu0 %v3381
    %5187 = vmatpush1.bf16.msra.mxu0 %v3380
    %5188 = vmatprep.subr.bf16.mxu0 %v3377
    %5189 = vmatpush1.bf16.msra.mxu0 %v3376
    %5190 = vmatprep.subr.bf16.mxu0 %v3373
    %5191 = vmatpush1.bf16.msra.mxu0 %v3372
    %5192 = vmatprep.subr.bf16.mxu0 %v3369
    %5193 = vmatpush1.bf16.msra.mxu0 %v3368
    %5194 = vmatprep.subr.bf16.mxu0 %v3365
    %5195 = vmatpush1.bf16.msra.mxu0 %v3364
    %5196 = vmatprep.subr.bf16.mxu0 %v3361
    %5197 = vmatpush1.bf16.msra.mxu0 %v3360
    %5198 = vmatprep.subr.bf16.mxu0 %v3357
    %5199 = vmatpush1.bf16.msra.mxu0 %v3356
    %5200 = vmatprep.subr.bf16.mxu0 %v3353
    %5201 = vmatpush1.bf16.msra.mxu0 %v3352
    %5202 = vmatprep.subr.bf16.mxu0 0
    %5203 = vmatpush2.bf16.msra.mxu0 0
    %5204 = vmatprep.subr.bf16.mxu0 0
    %5205 = vmatpush2.bf16.msra.mxu0 0
    %5206 = vmatprep.subr.bf16.mxu0 0
    %5207 = vmatpush2.bf16.msra.mxu0 0
    %5208 = vmatprep.subr.bf16.mxu0 0
    %5209 = vmatpush2.bf16.msra.mxu0 0
    %5210 = vmatprep.subr.bf16.mxu0 0
    %5211 = vmatpush2.bf16.msra.mxu0 0
    %5212 = vmatprep.subr.bf16.mxu0 0
    %5213 = vmatpush2.bf16.msra.mxu0 0
    %5214 = vmatprep.subr.bf16.mxu0 0
    %5215 = vmatpush2.bf16.msra.mxu0 0
    %5216 = vmatprep.subr.bf16.mxu0 0
    %5217 = vmatpush2.bf16.msra.mxu0 0
    %5218 = vmatprep.mubr.bf16.mxu0 0
    %5219 = vmatmul.mubr.bf16.gmra.mxu0 %v5184
    %v5220 = vpop.f32.mrf.mxu0
    %v5221 = vadd.f32 0.0, %v5220
    %v5222 = vpop.f32.mrf.mxu0
    %v5223 = vadd.f32 0.0, %v5222
    %v5224 = vpop.f32.mrf.mxu0
    %v5225 = vpop.f32.mrf.mxu0
    %5226 = vdwg.mxu0
    %5227 = vmatprep.subr.bf16.mxu0 %v3383
    %5228 = vmatpush1.bf16.msra.mxu0 %v3382
    %5229 = vmatprep.subr.bf16.mxu0 %v3379
    %5230 = vmatpush1.bf16.msra.mxu0 %v3378
    %5231 = vmatprep.subr.bf16.mxu0 %v3375
    %5232 = vmatpush1.bf16.msra.mxu0 %v3374
    %5233 = vmatprep.subr.bf16.mxu0 %v3371
    %5234 = vmatpush1.bf16.msra.mxu0 %v3370
    %5235 = vmatprep.subr.bf16.mxu0 %v3367
    %5236 = vmatpush1.bf16.msra.mxu0 %v3366
    %5237 = vmatprep.subr.bf16.mxu0 %v3363
    %5238 = vmatpush1.bf16.msra.mxu0 %v3362
    %5239 = vmatprep.subr.bf16.mxu0 %v3359
    %5240 = vmatpush1.bf16.msra.mxu0 %v3358
    %5241 = vmatprep.subr.bf16.mxu0 %v3355
    %5242 = vmatpush1.bf16.msra.mxu0 %v3354
    %5243 = vmatprep.subr.bf16.mxu0 0
    %5244 = vmatpush2.bf16.msra.mxu0 0
    %5245 = vmatprep.subr.bf16.mxu0 0
    %5246 = vmatpush2.bf16.msra.mxu0 0
    %5247 = vmatprep.subr.bf16.mxu0 0
    %5248 = vmatpush2.bf16.msra.mxu0 0
    %5249 = vmatprep.subr.bf16.mxu0 0
    %5250 = vmatpush2.bf16.msra.mxu0 0
    %5251 = vmatprep.subr.bf16.mxu0 0
    %5252 = vmatpush2.bf16.msra.mxu0 0
    %5253 = vmatprep.subr.bf16.mxu0 0
    %5254 = vmatpush2.bf16.msra.mxu0 0
    %5255 = vmatprep.subr.bf16.mxu0 0
    %5256 = vmatpush2.bf16.msra.mxu0 0
    %5257 = vmatprep.subr.bf16.mxu0 0
    %5258 = vmatpush2.bf16.msra.mxu0 0
    %5259 = vmatprep.mubr.bf16.mxu0 0
    %5260 = vmatmul.mubr.bf16.gmra.mxu0 %v5184
    %v5261 = vpop.f32.mrf.mxu0
    %v5262 = vadd.f32 0.0, %v5261
    %v5263 = vpop.f32.mrf.mxu0
    %v5264 = vadd.f32 0.0, %v5263
    %v5265 = vpop.f32.mrf.mxu0
    %v5266 = vpop.f32.mrf.mxu0
    %5267 = vdwg.mxu0
    %v5268 = vadd.f32 %v2871, %v5221
    %v5269 = vadd.f32 %v2873, %v5223
    %v5270 = vadd.f32 %v2914, %v5262
    %v5271 = vadd.f32 %v2916, %v5264
    %v5272 = vsub.f32 0.0, %v5268
    %v5273 = vmul.f32 %v5272, 1.442695
    %v5274 = vpow.pop %v5273
    %v5275 = vadd.f32 %v5274, 1.0
    %v5276 = vrcp.pop %v5275
    %v5277 = vmul.f32 1.0, %v5276
    %v5278 = vsub.f32 0.0, %v5269
    %v5279 = vmul.f32 %v5278, 1.442695
    %v5280 = vpow.pop %v5279
    %v5281 = vadd.f32 %v5280, 1.0
    %v5282 = vrcp.pop %v5281
    %v5283 = vmul.f32 1.0, %v5282
    %v5284 = vtanh.pop %v5270
    %v5285 = vsub.f32 0.0, %v5271
    %v5286 = vmul.f32 %v5285, 1.442695
    %v5287 = vpow.pop %v5286
    %v5288 = vadd.f32 %v5287, 1.0
    %v5289 = vrcp.pop %v5288
    %v5290 = vmul.f32 1.0, %v5289
    %v5292 = vrot.slane %v5050, 2
    %v5294 = vmul.f32 %v5283, %v5292
    %v5295 = vmul.f32 %v5277, %v5284
    %v5296 = vadd.f32 %v5294, %v5295
    %v5297 = vtanh.pop %v5296
    %v5298 = vmul.f32 %v5290, %v5297
    %v5299 = vpack.c.bf16 %v2321, %v2320
    %v5300 = vpack.c.bf16 %v2322, %v2322
    %v5301 = vld [vmem:[#allocation17] sm:$0xff]
    %v5302 = vld [vmem:[#allocation17 + $0x8] sm:$0xff]
    %v5303 = vld [vmem:[#allocation17 + $0x10] sm:$0xff]
    %v5304 = vld [vmem:[#allocation17 + $0x18] sm:$0xff]
    %v5305 = vld [vmem:[#allocation17 + $0x20] sm:$0xff]
    %v5306 = vld [vmem:[#allocation17 + $0x28] sm:$0xff]
    %v5307 = vld [vmem:[#allocation17 + $0x30] sm:$0xff]
    %v5308 = vld [vmem:[#allocation17 + $0x38] sm:$0xff]
    %v5309 = vld [vmem:[#allocation17 + $0x40] sm:$0xff]
    %v5310 = vld [vmem:[#allocation17 + $0x48] sm:$0xff]
    %v5311 = vld [vmem:[#allocation17 + $0x50] sm:$0xff]
    %v5312 = vld [vmem:[#allocation17 + $0x58] sm:$0xff]
    %v5313 = vld [vmem:[#allocation17 + $0x60] sm:$0xff]
    %v5314 = vld [vmem:[#allocation17 + $0x68] sm:$0xff]
    %v5315 = vld [vmem:[#allocation17 + $0x70] sm:$0xff]
    %v5316 = vld [vmem:[#allocation17 + $0x78] sm:$0xff]
    %v5317 = vld [vmem:[#allocation17 + $0x80] sm:$0xff]
    %v5318 = vld [vmem:[#allocation17 + $0x88] sm:$0xff]
    %v5319 = vld [vmem:[#allocation17 + $0x90] sm:$0xff]
    %v5320 = vld [vmem:[#allocation17 + $0x98] sm:$0xff]
    %v5321 = vld [vmem:[#allocation17 + $0xa0] sm:$0xff]
    %v5322 = vld [vmem:[#allocation17 + $0xa8] sm:$0xff]
    %v5323 = vld [vmem:[#allocation17 + $0xb0] sm:$0xff]
    %v5324 = vld [vmem:[#allocation17 + $0xb8] sm:$0xff]
    %v5325 = vld [vmem:[#allocation17 + $0xc0] sm:$0xff]
    %v5326 = vld [vmem:[#allocation17 + $0xc8] sm:$0xff]
    %v5327 = vld [vmem:[#allocation17 + $0xd0] sm:$0xff]
    %v5328 = vld [vmem:[#allocation17 + $0xd8] sm:$0xff]
    %v5329 = vld [vmem:[#allocation17 + $0xe0] sm:$0xff]
    %v5330 = vld [vmem:[#allocation17 + $0xe8] sm:$0xff]
    %v5331 = vld [vmem:[#allocation17 + $0xf0] sm:$0xff]
    %v5332 = vld [vmem:[#allocation17 + $0xf8] sm:$0xff]
    %v5333 = vld [vmem:[#allocation17 + $0x100] sm:$0xff]
    %v5334 = vld [vmem:[#allocation17 + $0x108] sm:$0xff]
    %v5335 = vld [vmem:[#allocation17 + $0x110] sm:$0xff]
    %v5336 = vld [vmem:[#allocation17 + $0x118] sm:$0xff]
    %v5337 = vld [vmem:[#allocation17 + $0x120] sm:$0xff]
    %v5338 = vld [vmem:[#allocation17 + $0x128] sm:$0xff]
    %v5339 = vld [vmem:[#allocation17 + $0x130] sm:$0xff]
    %v5340 = vld [vmem:[#allocation17 + $0x138] sm:$0xff]
    %v5341 = vld [vmem:[#allocation17 + $0x140] sm:$0xff]
    %v5342 = vld [vmem:[#allocation17 + $0x148] sm:$0xff]
    %v5343 = vld [vmem:[#allocation17 + $0x150] sm:$0xff]
    %v5344 = vld [vmem:[#allocation17 + $0x158] sm:$0xff]
    %v5345 = vld [vmem:[#allocation17 + $0x160] sm:$0xff]
    %v5346 = vld [vmem:[#allocation17 + $0x168] sm:$0xff]
    %v5347 = vld [vmem:[#allocation17 + $0x170] sm:$0xff]
    %v5348 = vld [vmem:[#allocation17 + $0x178] sm:$0xff]
    %v5349 = vld [vmem:[#allocation17 + $0x180] sm:$0xff]
    %v5350 = vld [vmem:[#allocation17 + $0x188] sm:$0xff]
    %v5351 = vld [vmem:[#allocation17 + $0x190] sm:$0xff]
    %v5352 = vld [vmem:[#allocation17 + $0x198] sm:$0xff]
    %v5353 = vld [vmem:[#allocation17 + $0x1a0] sm:$0xff]
    %v5354 = vld [vmem:[#allocation17 + $0x1a8] sm:$0xff]
    %v5355 = vld [vmem:[#allocation17 + $0x1b0] sm:$0xff]
    %v5356 = vld [vmem:[#allocation17 + $0x1b8] sm:$0xff]
    %v5357 = vld [vmem:[#allocation17 + $0x1c0] sm:$0xff]
    %v5358 = vld [vmem:[#allocation17 + $0x1c8] sm:$0xff]
    %v5359 = vld [vmem:[#allocation17 + $0x1d0] sm:$0xff]
    %v5360 = vld [vmem:[#allocation17 + $0x1d8] sm:$0xff]
    %v5361 = vld [vmem:[#allocation17 + $0x1e0] sm:$0xff]
    %v5362 = vld [vmem:[#allocation17 + $0x1e8] sm:$0xff]
    %v5363 = vld [vmem:[#allocation17 + $0x1f0] sm:$0xff]
    %v5364 = vld [vmem:[#allocation17 + $0x1f8] sm:$0xff]
    %v5365 = vld [vmem:[%s17] sm:$0xff]
    %v5367 = vlaneseq
    %v5368 = vshrl.u32 %v5367, 7
    %v5369 = vsub.s32 0, %v5368
    %v5370 = vrot.slane %v5365, %v5369
    %v5371 = vlaneseq
    %v5372 = vshrl.u32 %v5371, 7
    %v5373 = vsub.s32 1, %v5372
    %v5374 = vrot.slane %v5365, %v5373
    %v5375 = vlaneseq
    %v5376 = vshrl.u32 %v5375, 7
    %v5377 = vsub.s32 2, %v5376
    %v5378 = vrot.slane %v5365, %v5377
    %v5379 = vlaneseq
    %v5380 = vshrl.u32 %v5379, 7
    %v5381 = vsub.s32 3, %v5380
    %v5382 = vrot.slane %v5365, %v5381
    %v5383 = vlaneseq
    %v5384 = vshrl.u32 %v5383, 7
    %v5385 = vsub.s32 4, %v5384
    %v5386 = vrot.slane %v5365, %v5385
    %v5387 = vlaneseq
    %v5388 = vshrl.u32 %v5387, 7
    %v5389 = vsub.s32 5, %v5388
    %v5390 = vrot.slane %v5365, %v5389
    %v5391 = vlaneseq
    %v5392 = vshrl.u32 %v5391, 7
    %v5393 = vsub.s32 6, %v5392
    %v5394 = vrot.slane %v5365, %v5393
    %v5395 = vlaneseq
    %v5396 = vshrl.u32 %v5395, 7
    %v5397 = vsub.s32 7, %v5396
    %v5398 = vrot.slane %v5365, %v5397
    %v5471 = vunpack.c.l.b16 %v5301
    %v5472 = vunpack.c.h.b16 %v5301
    %v5473 = vunpack.c.l.b16 %v5302
    %v5474 = vunpack.c.h.b16 %v5302
    %v5475 = vunpack.c.l.b16 %v5303
    %v5476 = vunpack.c.h.b16 %v5303
    %v5477 = vunpack.c.l.b16 %v5304
    %v5478 = vunpack.c.h.b16 %v5304
    %v5479 = vunpack.c.l.b16 %v5305
    %v5480 = vunpack.c.h.b16 %v5305
    %v5481 = vunpack.c.l.b16 %v5306
    %v5482 = vunpack.c.h.b16 %v5306
    %v5483 = vunpack.c.l.b16 %v5307
    %v5484 = vunpack.c.h.b16 %v5307
    %v5485 = vunpack.c.l.b16 %v5308
    %v5486 = vunpack.c.h.b16 %v5308
    %v5487 = vunpack.c.l.b16 %v5309
    %v5488 = vunpack.c.h.b16 %v5309
    %v5489 = vunpack.c.l.b16 %v5310
    %v5490 = vunpack.c.h.b16 %v5310
    %v5491 = vunpack.c.l.b16 %v5311
    %v5492 = vunpack.c.h.b16 %v5311
    %v5493 = vunpack.c.l.b16 %v5312
    %v5494 = vunpack.c.h.b16 %v5312
    %v5495 = vunpack.c.l.b16 %v5313
    %v5496 = vunpack.c.h.b16 %v5313
    %v5497 = vunpack.c.l.b16 %v5314
    %v5498 = vunpack.c.h.b16 %v5314
    %v5499 = vunpack.c.l.b16 %v5315
    %v5500 = vunpack.c.h.b16 %v5315
    %v5501 = vunpack.c.l.b16 %v5316
    %v5502 = vunpack.c.h.b16 %v5316
    %v5503 = vunpack.c.l.b16 %v5317
    %v5504 = vunpack.c.h.b16 %v5317
    %v5505 = vunpack.c.l.b16 %v5318
    %v5506 = vunpack.c.h.b16 %v5318
    %v5507 = vunpack.c.l.b16 %v5319
    %v5508 = vunpack.c.h.b16 %v5319
    %v5509 = vunpack.c.l.b16 %v5320
    %v5510 = vunpack.c.h.b16 %v5320
    %v5511 = vunpack.c.l.b16 %v5321
    %v5512 = vunpack.c.h.b16 %v5321
    %v5513 = vunpack.c.l.b16 %v5322
    %v5514 = vunpack.c.h.b16 %v5322
    %v5515 = vunpack.c.l.b16 %v5323
    %v5516 = vunpack.c.h.b16 %v5323
    %v5517 = vunpack.c.l.b16 %v5324
    %v5518 = vunpack.c.h.b16 %v5324
    %v5519 = vunpack.c.l.b16 %v5325
    %v5520 = vunpack.c.h.b16 %v5325
    %v5521 = vunpack.c.l.b16 %v5326
    %v5522 = vunpack.c.h.b16 %v5326
    %v5523 = vunpack.c.l.b16 %v5327
    %v5524 = vunpack.c.h.b16 %v5327
    %v5525 = vunpack.c.l.b16 %v5328
    %v5526 = vunpack.c.h.b16 %v5328
    %v5527 = vunpack.c.l.b16 %v5329
    %v5528 = vunpack.c.h.b16 %v5329
    %v5529 = vunpack.c.l.b16 %v5330
    %v5530 = vunpack.c.h.b16 %v5330
    %v5531 = vunpack.c.l.b16 %v5331
    %v5532 = vunpack.c.h.b16 %v5331
    %v5533 = vunpack.c.l.b16 %v5332
    %v5534 = vunpack.c.h.b16 %v5332
    %v5535 = vunpack.c.l.b16 %v5333
    %v5536 = vunpack.c.h.b16 %v5333
    %v5537 = vunpack.c.l.b16 %v5334
    %v5538 = vunpack.c.h.b16 %v5334
    %v5539 = vunpack.c.l.b16 %v5335
    %v5540 = vunpack.c.h.b16 %v5335
    %v5541 = vunpack.c.l.b16 %v5336
    %v5542 = vunpack.c.h.b16 %v5336
    %v5543 = vunpack.c.l.b16 %v5337
    %v5544 = vunpack.c.h.b16 %v5337
    %v5545 = vunpack.c.l.b16 %v5338
    %v5546 = vunpack.c.h.b16 %v5338
    %v5547 = vunpack.c.l.b16 %v5339
    %v5548 = vunpack.c.h.b16 %v5339
    %v5549 = vunpack.c.l.b16 %v5340
    %v5550 = vunpack.c.h.b16 %v5340
    %v5551 = vunpack.c.l.b16 %v5341
    %v5552 = vunpack.c.h.b16 %v5341
    %v5553 = vunpack.c.l.b16 %v5342
    %v5554 = vunpack.c.h.b16 %v5342
    %v5555 = vunpack.c.l.b16 %v5343
    %v5556 = vunpack.c.h.b16 %v5343
    %v5557 = vunpack.c.l.b16 %v5344
    %v5558 = vunpack.c.h.b16 %v5344
    %v5559 = vunpack.c.l.b16 %v5345
    %v5560 = vunpack.c.h.b16 %v5345
    %v5561 = vunpack.c.l.b16 %v5346
    %v5562 = vunpack.c.h.b16 %v5346
    %v5563 = vunpack.c.l.b16 %v5347
    %v5564 = vunpack.c.h.b16 %v5347
    %v5565 = vunpack.c.l.b16 %v5348
    %v5566 = vunpack.c.h.b16 %v5348
    %v5567 = vunpack.c.l.b16 %v5349
    %v5568 = vunpack.c.h.b16 %v5349
    %v5569 = vunpack.c.l.b16 %v5350
    %v5570 = vunpack.c.h.b16 %v5350
    %v5571 = vunpack.c.l.b16 %v5351
    %v5572 = vunpack.c.h.b16 %v5351
    %v5573 = vunpack.c.l.b16 %v5352
    %v5574 = vunpack.c.h.b16 %v5352
    %v5575 = vunpack.c.l.b16 %v5353
    %v5576 = vunpack.c.h.b16 %v5353
    %v5577 = vunpack.c.l.b16 %v5354
    %v5578 = vunpack.c.h.b16 %v5354
    %v5579 = vunpack.c.l.b16 %v5355
    %v5580 = vunpack.c.h.b16 %v5355
    %v5581 = vunpack.c.l.b16 %v5356
    %v5582 = vunpack.c.h.b16 %v5356
    %v5583 = vunpack.c.l.b16 %v5357
    %v5584 = vunpack.c.h.b16 %v5357
    %v5585 = vunpack.c.l.b16 %v5358
    %v5586 = vunpack.c.h.b16 %v5358
    %v5587 = vunpack.c.l.b16 %v5359
    %v5588 = vunpack.c.h.b16 %v5359
    %v5589 = vunpack.c.l.b16 %v5360
    %v5590 = vunpack.c.h.b16 %v5360
    %v5591 = vunpack.c.l.b16 %v5361
    %v5592 = vunpack.c.h.b16 %v5361
    %v5593 = vunpack.c.l.b16 %v5362
    %v5594 = vunpack.c.h.b16 %v5362
    %v5595 = vunpack.c.l.b16 %v5363
    %v5596 = vunpack.c.h.b16 %v5363
    %v5597 = vunpack.c.l.b16 %v5364
    %v5598 = vunpack.c.h.b16 %v5364
    %v5599 = vpack.c.b16 %v5479, %v5471
    %v5600 = vpack.c.b16 %v5480, %v5472
    %v5601 = vpack.c.b16 %v5481, %v5473
    %v5602 = vpack.c.b16 %v5482, %v5474
    %v5603 = vpack.c.b16 %v5483, %v5475
    %v5604 = vpack.c.b16 %v5484, %v5476
    %v5605 = vpack.c.b16 %v5485, %v5477
    %v5606 = vpack.c.b16 %v5486, %v5478
    %v5607 = vpack.c.b16 %v5495, %v5487
    %v5608 = vpack.c.b16 %v5496, %v5488
    %v5609 = vpack.c.b16 %v5497, %v5489
    %v5610 = vpack.c.b16 %v5498, %v5490
    %v5611 = vpack.c.b16 %v5499, %v5491
    %v5612 = vpack.c.b16 %v5500, %v5492
    %v5613 = vpack.c.b16 %v5501, %v5493
    %v5614 = vpack.c.b16 %v5502, %v5494
    %v5615 = vpack.c.b16 %v5511, %v5503
    %v5616 = vpack.c.b16 %v5512, %v5504
    %v5617 = vpack.c.b16 %v5513, %v5505
    %v5618 = vpack.c.b16 %v5514, %v5506
    %v5619 = vpack.c.b16 %v5515, %v5507
    %v5620 = vpack.c.b16 %v5516, %v5508
    %v5621 = vpack.c.b16 %v5517, %v5509
    %v5622 = vpack.c.b16 %v5518, %v5510
    %v5623 = vpack.c.b16 %v5527, %v5519
    %v5624 = vpack.c.b16 %v5528, %v5520
    %v5625 = vpack.c.b16 %v5529, %v5521
    %v5626 = vpack.c.b16 %v5530, %v5522
    %v5627 = vpack.c.b16 %v5531, %v5523
    %v5628 = vpack.c.b16 %v5532, %v5524
    %v5629 = vpack.c.b16 %v5533, %v5525
    %v5630 = vpack.c.b16 %v5534, %v5526
    %v5631 = vpack.c.b16 %v5543, %v5535
    %v5632 = vpack.c.b16 %v5544, %v5536
    %v5633 = vpack.c.b16 %v5545, %v5537
    %v5634 = vpack.c.b16 %v5546, %v5538
    %v5635 = vpack.c.b16 %v5547, %v5539
    %v5636 = vpack.c.b16 %v5548, %v5540
    %v5637 = vpack.c.b16 %v5549, %v5541
    %v5638 = vpack.c.b16 %v5550, %v5542
    %v5639 = vpack.c.b16 %v5559, %v5551
    %v5640 = vpack.c.b16 %v5560, %v5552
    %v5641 = vpack.c.b16 %v5561, %v5553
    %v5642 = vpack.c.b16 %v5562, %v5554
    %v5643 = vpack.c.b16 %v5563, %v5555
    %v5644 = vpack.c.b16 %v5564, %v5556
    %v5645 = vpack.c.b16 %v5565, %v5557
    %v5646 = vpack.c.b16 %v5566, %v5558
    %v5647 = vpack.c.b16 %v5575, %v5567
    %v5648 = vpack.c.b16 %v5576, %v5568
    %v5649 = vpack.c.b16 %v5577, %v5569
    %v5650 = vpack.c.b16 %v5578, %v5570
    %v5651 = vpack.c.b16 %v5579, %v5571
    %v5652 = vpack.c.b16 %v5580, %v5572
    %v5653 = vpack.c.b16 %v5581, %v5573
    %v5654 = vpack.c.b16 %v5582, %v5574
    %v5655 = vpack.c.b16 %v5591, %v5583
    %v5656 = vpack.c.b16 %v5592, %v5584
    %v5657 = vpack.c.b16 %v5593, %v5585
    %v5658 = vpack.c.b16 %v5594, %v5586
    %v5659 = vpack.c.b16 %v5595, %v5587
    %v5660 = vpack.c.b16 %v5596, %v5588
    %v5661 = vpack.c.b16 %v5597, %v5589
    %v5662 = vpack.c.b16 %v5598, %v5590
    %5727 = vmatprep.subr.bf16.mxu0 %v5656
    %5728 = vmatpush1.bf16.msra.mxu0 %v5655
    %5729 = vmatprep.subr.bf16.mxu0 %v5648
    %5730 = vmatpush1.bf16.msra.mxu0 %v5647
    %5731 = vmatprep.subr.bf16.mxu0 %v5640
    %5732 = vmatpush1.bf16.msra.mxu0 %v5639
    %5733 = vmatprep.subr.bf16.mxu0 %v5632
    %5734 = vmatpush1.bf16.msra.mxu0 %v5631
    %5735 = vmatprep.subr.bf16.mxu0 %v5624
    %5736 = vmatpush1.bf16.msra.mxu0 %v5623
    %5737 = vmatprep.subr.bf16.mxu0 %v5616
    %5738 = vmatpush1.bf16.msra.mxu0 %v5615
    %5739 = vmatprep.subr.bf16.mxu0 %v5608
    %5740 = vmatpush1.bf16.msra.mxu0 %v5607
    %5741 = vmatprep.subr.bf16.mxu0 %v5600
    %5742 = vmatpush1.bf16.msra.mxu0 %v5599
    %5743 = vmatprep.subr.bf16.mxu0 0
    %5744 = vmatpush2.bf16.msra.mxu0 0
    %5745 = vmatprep.subr.bf16.mxu0 0
    %5746 = vmatpush2.bf16.msra.mxu0 0
    %5747 = vmatprep.subr.bf16.mxu0 0
    %5748 = vmatpush2.bf16.msra.mxu0 0
    %5749 = vmatprep.subr.bf16.mxu0 0
    %5750 = vmatpush2.bf16.msra.mxu0 0
    %5751 = vmatprep.subr.bf16.mxu0 0
    %5752 = vmatpush2.bf16.msra.mxu0 0
    %5753 = vmatprep.subr.bf16.mxu0 0
    %5754 = vmatpush2.bf16.msra.mxu0 0
    %5755 = vmatprep.subr.bf16.mxu0 0
    %5756 = vmatpush2.bf16.msra.mxu0 0
    %5757 = vmatprep.subr.bf16.mxu0 0
    %5758 = vmatpush2.bf16.msra.mxu0 0
    %5759 = vmatprep.mubr.bf16.mxu0 0
    %5760 = vmatmul.mubr.bf16.gmra.mxu0 %v5299
    %v5761 = vpop.f32.mrf.mxu0
    %v5762 = vadd.f32 %v5370, %v5761
    %v5763 = vpop.f32.mrf.mxu0
    %v5764 = vadd.f32 %v5374, %v5763
    %v5765 = vpop.f32.mrf.mxu0
    %v5766 = vadd.f32 %v5370, %v5765
    %v5767 = vpop.f32.mrf.mxu0
    %v5768 = vadd.f32 %v5374, %v5767
    %5769 = vmatprep.mubr.bf16.mxu0 0
    %5770 = vmatmul.mubr.bf16.gmra.mxu0 %v5300
    %v5771 = vpop.f32.mrf.mxu0
    %v5772 = vadd.f32 %v5370, %v5771
    %v5773 = vpop.f32.mrf.mxu0
    %v5774 = vadd.f32 %v5374, %v5773
    %v5775 = vpop.f32.mrf.mxu0
    %v5776 = vpop.f32.mrf.mxu0
    %5777 = vdwg.mxu0
    %5778 = vmatprep.subr.bf16.mxu0 %v5658
    %5779 = vmatpush1.bf16.msra.mxu0 %v5657
    %5780 = vmatprep.subr.bf16.mxu0 %v5650
    %5781 = vmatpush1.bf16.msra.mxu0 %v5649
    %5782 = vmatprep.subr.bf16.mxu0 %v5642
    %5783 = vmatpush1.bf16.msra.mxu0 %v5641
    %5784 = vmatprep.subr.bf16.mxu0 %v5634
    %5785 = vmatpush1.bf16.msra.mxu0 %v5633
    %5786 = vmatprep.subr.bf16.mxu0 %v5626
    %5787 = vmatpush1.bf16.msra.mxu0 %v5625
    %5788 = vmatprep.subr.bf16.mxu0 %v5618
    %5789 = vmatpush1.bf16.msra.mxu0 %v5617
    %5790 = vmatprep.subr.bf16.mxu0 %v5610
    %5791 = vmatpush1.bf16.msra.mxu0 %v5609
    %5792 = vmatprep.subr.bf16.mxu0 %v5602
    %5793 = vmatpush1.bf16.msra.mxu0 %v5601
    %5794 = vmatprep.subr.bf16.mxu0 0
    %5795 = vmatpush2.bf16.msra.mxu0 0
    %5796 = vmatprep.subr.bf16.mxu0 0
    %5797 = vmatpush2.bf16.msra.mxu0 0
    %5798 = vmatprep.subr.bf16.mxu0 0
    %5799 = vmatpush2.bf16.msra.mxu0 0
    %5800 = vmatprep.subr.bf16.mxu0 0
    %5801 = vmatpush2.bf16.msra.mxu0 0
    %5802 = vmatprep.subr.bf16.mxu0 0
    %5803 = vmatpush2.bf16.msra.mxu0 0
    %5804 = vmatprep.subr.bf16.mxu0 0
    %5805 = vmatpush2.bf16.msra.mxu0 0
    %5806 = vmatprep.subr.bf16.mxu0 0
    %5807 = vmatpush2.bf16.msra.mxu0 0
    %5808 = vmatprep.subr.bf16.mxu0 0
    %5809 = vmatpush2.bf16.msra.mxu0 0
    %5810 = vmatprep.mubr.bf16.mxu0 0
    %5811 = vmatmul.mubr.bf16.gmra.mxu0 %v5299
    %v5812 = vpop.f32.mrf.mxu0
    %v5813 = vadd.f32 %v5378, %v5812
    %v5814 = vpop.f32.mrf.mxu0
    %v5815 = vadd.f32 %v5382, %v5814
    %v5816 = vpop.f32.mrf.mxu0
    %v5817 = vadd.f32 %v5378, %v5816
    %v5818 = vpop.f32.mrf.mxu0
    %v5819 = vadd.f32 %v5382, %v5818
    %5820 = vmatprep.mubr.bf16.mxu0 0
    %5821 = vmatmul.mubr.bf16.gmra.mxu0 %v5300
    %v5822 = vpop.f32.mrf.mxu0
    %v5823 = vadd.f32 %v5378, %v5822
    %v5824 = vpop.f32.mrf.mxu0
    %v5825 = vadd.f32 %v5382, %v5824
    %v5826 = vpop.f32.mrf.mxu0
    %v5827 = vpop.f32.mrf.mxu0
    %5828 = vdwg.mxu0
    %5829 = vmatprep.subr.bf16.mxu0 %v5660
    %5830 = vmatpush1.bf16.msra.mxu0 %v5659
    %5831 = vmatprep.subr.bf16.mxu0 %v5652
    %5832 = vmatpush1.bf16.msra.mxu0 %v5651
    %5833 = vmatprep.subr.bf16.mxu0 %v5644
    %5834 = vmatpush1.bf16.msra.mxu0 %v5643
    %5835 = vmatprep.subr.bf16.mxu0 %v5636
    %5836 = vmatpush1.bf16.msra.mxu0 %v5635
    %5837 = vmatprep.subr.bf16.mxu0 %v5628
    %5838 = vmatpush1.bf16.msra.mxu0 %v5627
    %5839 = vmatprep.subr.bf16.mxu0 %v5620
    %5840 = vmatpush1.bf16.msra.mxu0 %v5619
    %5841 = vmatprep.subr.bf16.mxu0 %v5612
    %5842 = vmatpush1.bf16.msra.mxu0 %v5611
    %5843 = vmatprep.subr.bf16.mxu0 %v5604
    %5844 = vmatpush1.bf16.msra.mxu0 %v5603
    %5845 = vmatprep.subr.bf16.mxu0 0
    %5846 = vmatpush2.bf16.msra.mxu0 0
    %5847 = vmatprep.subr.bf16.mxu0 0
    %5848 = vmatpush2.bf16.msra.mxu0 0
    %5849 = vmatprep.subr.bf16.mxu0 0
    %5850 = vmatpush2.bf16.msra.mxu0 0
    %5851 = vmatprep.subr.bf16.mxu0 0
    %5852 = vmatpush2.bf16.msra.mxu0 0
    %5853 = vmatprep.subr.bf16.mxu0 0
    %5854 = vmatpush2.bf16.msra.mxu0 0
    %5855 = vmatprep.subr.bf16.mxu0 0
    %5856 = vmatpush2.bf16.msra.mxu0 0
    %5857 = vmatprep.subr.bf16.mxu0 0
    %5858 = vmatpush2.bf16.msra.mxu0 0
    %5859 = vmatprep.subr.bf16.mxu0 0
    %5860 = vmatpush2.bf16.msra.mxu0 0
    %5861 = vmatprep.mubr.bf16.mxu0 0
    %5862 = vmatmul.mubr.bf16.gmra.mxu0 %v5299
    %v5863 = vpop.f32.mrf.mxu0
    %v5864 = vadd.f32 %v5386, %v5863
    %v5865 = vpop.f32.mrf.mxu0
    %v5866 = vadd.f32 %v5390, %v5865
    %v5867 = vpop.f32.mrf.mxu0
    %v5868 = vadd.f32 %v5386, %v5867
    %v5869 = vpop.f32.mrf.mxu0
    %v5870 = vadd.f32 %v5390, %v5869
    %5871 = vmatprep.mubr.bf16.mxu0 0
    %5872 = vmatmul.mubr.bf16.gmra.mxu0 %v5300
    %v5873 = vpop.f32.mrf.mxu0
    %v5874 = vadd.f32 %v5386, %v5873
    %v5875 = vpop.f32.mrf.mxu0
    %v5876 = vadd.f32 %v5390, %v5875
    %v5877 = vpop.f32.mrf.mxu0
    %v5878 = vpop.f32.mrf.mxu0
    %5879 = vdwg.mxu0
    %5880 = vmatprep.subr.bf16.mxu0 %v5662
    %5881 = vmatpush1.bf16.msra.mxu0 %v5661
    %5882 = vmatprep.subr.bf16.mxu0 %v5654
    %5883 = vmatpush1.bf16.msra.mxu0 %v5653
    %5884 = vmatprep.subr.bf16.mxu0 %v5646
    %5885 = vmatpush1.bf16.msra.mxu0 %v5645
    %5886 = vmatprep.subr.bf16.mxu0 %v5638
    %5887 = vmatpush1.bf16.msra.mxu0 %v5637
    %5888 = vmatprep.subr.bf16.mxu0 %v5630
    %5889 = vmatpush1.bf16.msra.mxu0 %v5629
    %5890 = vmatprep.subr.bf16.mxu0 %v5622
    %5891 = vmatpush1.bf16.msra.mxu0 %v5621
    %5892 = vmatprep.subr.bf16.mxu0 %v5614
    %5893 = vmatpush1.bf16.msra.mxu0 %v5613
    %5894 = vmatprep.subr.bf16.mxu0 %v5606
    %5895 = vmatpush1.bf16.msra.mxu0 %v5605
    %5896 = vmatprep.subr.bf16.mxu0 0
    %5897 = vmatpush2.bf16.msra.mxu0 0
    %5898 = vmatprep.subr.bf16.mxu0 0
    %5899 = vmatpush2.bf16.msra.mxu0 0
    %5900 = vmatprep.subr.bf16.mxu0 0
    %5901 = vmatpush2.bf16.msra.mxu0 0
    %5902 = vmatprep.subr.bf16.mxu0 0
    %5903 = vmatpush2.bf16.msra.mxu0 0
    %5904 = vmatprep.subr.bf16.mxu0 0
    %5905 = vmatpush2.bf16.msra.mxu0 0
    %5906 = vmatprep.subr.bf16.mxu0 0
    %5907 = vmatpush2.bf16.msra.mxu0 0
    %5908 = vmatprep.subr.bf16.mxu0 0
    %5909 = vmatpush2.bf16.msra.mxu0 0
    %5910 = vmatprep.subr.bf16.mxu0 0
    %5911 = vmatpush2.bf16.msra.mxu0 0
    %5912 = vmatprep.mubr.bf16.mxu0 0
    %5913 = vmatmul.mubr.bf16.gmra.mxu0 %v5299
    %v5914 = vpop.f32.mrf.mxu0
    %v5915 = vadd.f32 %v5394, %v5914
    %v5916 = vpop.f32.mrf.mxu0
    %v5917 = vadd.f32 %v5398, %v5916
    %v5918 = vpop.f32.mrf.mxu0
    %v5919 = vadd.f32 %v5394, %v5918
    %v5920 = vpop.f32.mrf.mxu0
    %v5921 = vadd.f32 %v5398, %v5920
    %5922 = vmatprep.mubr.bf16.mxu0 0
    %5923 = vmatmul.mubr.bf16.gmra.mxu0 %v5300
    %v5924 = vpop.f32.mrf.mxu0
    %v5925 = vadd.f32 %v5394, %v5924
    %v5926 = vpop.f32.mrf.mxu0
    %v5927 = vadd.f32 %v5398, %v5926
    %v5928 = vpop.f32.mrf.mxu0
    %v5929 = vpop.f32.mrf.mxu0
    %5930 = vdwg.mxu0
    %v5931 = vld [vmem:[#allocation19] sm:$0xff]
    %v5932 = vld [vmem:[#allocation19 + $0x8] sm:$0xff]
    %v5933 = vld [vmem:[#allocation19 + $0x10] sm:$0xff]
    %v5934 = vld [vmem:[#allocation19 + $0x18] sm:$0xff]
    %v5935 = vld [vmem:[#allocation19 + $0x20] sm:$0xff]
    %v5936 = vld [vmem:[#allocation19 + $0x28] sm:$0xff]
    %v5937 = vld [vmem:[#allocation19 + $0x30] sm:$0xff]
    %v5938 = vld [vmem:[#allocation19 + $0x38] sm:$0xff]
    %v5939 = vld [vmem:[#allocation19 + $0x40] sm:$0xff]
    %v5940 = vld [vmem:[#allocation19 + $0x48] sm:$0xff]
    %v5941 = vld [vmem:[#allocation19 + $0x50] sm:$0xff]
    %v5942 = vld [vmem:[#allocation19 + $0x58] sm:$0xff]
    %v5943 = vld [vmem:[#allocation19 + $0x60] sm:$0xff]
    %v5944 = vld [vmem:[#allocation19 + $0x68] sm:$0xff]
    %v5945 = vld [vmem:[#allocation19 + $0x70] sm:$0xff]
    %v5946 = vld [vmem:[#allocation19 + $0x78] sm:$0xff]
    %v5947 = vld [vmem:[#allocation19 + $0x80] sm:$0xff]
    %v5948 = vld [vmem:[#allocation19 + $0x88] sm:$0xff]
    %v5949 = vld [vmem:[#allocation19 + $0x90] sm:$0xff]
    %v5950 = vld [vmem:[#allocation19 + $0x98] sm:$0xff]
    %v5951 = vld [vmem:[#allocation19 + $0xa0] sm:$0xff]
    %v5952 = vld [vmem:[#allocation19 + $0xa8] sm:$0xff]
    %v5953 = vld [vmem:[#allocation19 + $0xb0] sm:$0xff]
    %v5954 = vld [vmem:[#allocation19 + $0xb8] sm:$0xff]
    %v5955 = vld [vmem:[#allocation19 + $0xc0] sm:$0xff]
    %v5956 = vld [vmem:[#allocation19 + $0xc8] sm:$0xff]
    %v5957 = vld [vmem:[#allocation19 + $0xd0] sm:$0xff]
    %v5958 = vld [vmem:[#allocation19 + $0xd8] sm:$0xff]
    %v5959 = vld [vmem:[#allocation19 + $0xe0] sm:$0xff]
    %v5960 = vld [vmem:[#allocation19 + $0xe8] sm:$0xff]
    %v5961 = vld [vmem:[#allocation19 + $0xf0] sm:$0xff]
    %v5962 = vld [vmem:[#allocation19 + $0xf8] sm:$0xff]
    %v5963 = vld [vmem:[#allocation20] sm:$0xff]
    %v5964 = vld [vmem:[#allocation20 + $0x8] sm:$0xff]
    %v5965 = vld [vmem:[#allocation20 + $0x10] sm:$0xff]
    %v5966 = vld [vmem:[#allocation20 + $0x18] sm:$0xff]
    %v5967 = vld [vmem:[#allocation20 + $0x20] sm:$0xff]
    %v5968 = vld [vmem:[#allocation20 + $0x28] sm:$0xff]
    %v5969 = vld [vmem:[#allocation20 + $0x30] sm:$0xff]
    %v5970 = vld [vmem:[#allocation20 + $0x38] sm:$0xff]
    %v5971 = vld [vmem:[#allocation20 + $0x40] sm:$0xff]
    %v5972 = vld [vmem:[#allocation20 + $0x48] sm:$0xff]
    %v5973 = vld [vmem:[#allocation20 + $0x50] sm:$0xff]
    %v5974 = vld [vmem:[#allocation20 + $0x58] sm:$0xff]
    %v5975 = vld [vmem:[#allocation20 + $0x60] sm:$0xff]
    %v5976 = vld [vmem:[#allocation20 + $0x68] sm:$0xff]
    %v5977 = vld [vmem:[#allocation20 + $0x70] sm:$0xff]
    %v5978 = vld [vmem:[#allocation20 + $0x78] sm:$0xff]
    %v5979 = vld [vmem:[#allocation20 + $0x80] sm:$0xff]
    %v5980 = vld [vmem:[#allocation20 + $0x88] sm:$0xff]
    %v5981 = vld [vmem:[#allocation20 + $0x90] sm:$0xff]
    %v5982 = vld [vmem:[#allocation20 + $0x98] sm:$0xff]
    %v5983 = vld [vmem:[#allocation20 + $0xa0] sm:$0xff]
    %v5984 = vld [vmem:[#allocation20 + $0xa8] sm:$0xff]
    %v5985 = vld [vmem:[#allocation20 + $0xb0] sm:$0xff]
    %v5986 = vld [vmem:[#allocation20 + $0xb8] sm:$0xff]
    %v5987 = vld [vmem:[#allocation20 + $0xc0] sm:$0xff]
    %v5988 = vld [vmem:[#allocation20 + $0xc8] sm:$0xff]
    %v5989 = vld [vmem:[#allocation20 + $0xd0] sm:$0xff]
    %v5990 = vld [vmem:[#allocation20 + $0xd8] sm:$0xff]
    %v5991 = vld [vmem:[#allocation20 + $0xe0] sm:$0xff]
    %v5992 = vld [vmem:[#allocation20 + $0xe8] sm:$0xff]
    %v5993 = vld [vmem:[#allocation20 + $0xf0] sm:$0xff]
    %v5994 = vld [vmem:[#allocation20 + $0xf8] sm:$0xff]
    %v6027 = vunpack.c.l.b16 %v5931
    %v6028 = vunpack.c.h.b16 %v5931
    %v6029 = vunpack.c.l.b16 %v5932
    %v6030 = vunpack.c.h.b16 %v5932
    %v6031 = vunpack.c.l.b16 %v5933
    %v6032 = vunpack.c.h.b16 %v5933
    %v6033 = vunpack.c.l.b16 %v5934
    %v6034 = vunpack.c.h.b16 %v5934
    %v6035 = vunpack.c.l.b16 %v5935
    %v6036 = vunpack.c.h.b16 %v5935
    %v6037 = vunpack.c.l.b16 %v5936
    %v6038 = vunpack.c.h.b16 %v5936
    %v6039 = vunpack.c.l.b16 %v5937
    %v6040 = vunpack.c.h.b16 %v5937
    %v6041 = vunpack.c.l.b16 %v5938
    %v6042 = vunpack.c.h.b16 %v5938
    %v6043 = vunpack.c.l.b16 %v5939
    %v6044 = vunpack.c.h.b16 %v5939
    %v6045 = vunpack.c.l.b16 %v5940
    %v6046 = vunpack.c.h.b16 %v5940
    %v6047 = vunpack.c.l.b16 %v5941
    %v6048 = vunpack.c.h.b16 %v5941
    %v6049 = vunpack.c.l.b16 %v5942
    %v6050 = vunpack.c.h.b16 %v5942
    %v6051 = vunpack.c.l.b16 %v5943
    %v6052 = vunpack.c.h.b16 %v5943
    %v6053 = vunpack.c.l.b16 %v5944
    %v6054 = vunpack.c.h.b16 %v5944
    %v6055 = vunpack.c.l.b16 %v5945
    %v6056 = vunpack.c.h.b16 %v5945
    %v6057 = vunpack.c.l.b16 %v5946
    %v6058 = vunpack.c.h.b16 %v5946
    %v6059 = vunpack.c.l.b16 %v5947
    %v6060 = vunpack.c.h.b16 %v5947
    %v6061 = vunpack.c.l.b16 %v5948
    %v6062 = vunpack.c.h.b16 %v5948
    %v6063 = vunpack.c.l.b16 %v5949
    %v6064 = vunpack.c.h.b16 %v5949
    %v6065 = vunpack.c.l.b16 %v5950
    %v6066 = vunpack.c.h.b16 %v5950
    %v6067 = vunpack.c.l.b16 %v5951
    %v6068 = vunpack.c.h.b16 %v5951
    %v6069 = vunpack.c.l.b16 %v5952
    %v6070 = vunpack.c.h.b16 %v5952
    %v6071 = vunpack.c.l.b16 %v5953
    %v6072 = vunpack.c.h.b16 %v5953
    %v6073 = vunpack.c.l.b16 %v5954
    %v6074 = vunpack.c.h.b16 %v5954
    %v6075 = vunpack.c.l.b16 %v5955
    %v6076 = vunpack.c.h.b16 %v5955
    %v6077 = vunpack.c.l.b16 %v5956
    %v6078 = vunpack.c.h.b16 %v5956
    %v6079 = vunpack.c.l.b16 %v5957
    %v6080 = vunpack.c.h.b16 %v5957
    %v6081 = vunpack.c.l.b16 %v5958
    %v6082 = vunpack.c.h.b16 %v5958
    %v6083 = vunpack.c.l.b16 %v5959
    %v6084 = vunpack.c.h.b16 %v5959
    %v6085 = vunpack.c.l.b16 %v5960
    %v6086 = vunpack.c.h.b16 %v5960
    %v6087 = vunpack.c.l.b16 %v5961
    %v6088 = vunpack.c.h.b16 %v5961
    %v6089 = vunpack.c.l.b16 %v5962
    %v6090 = vunpack.c.h.b16 %v5962
    %v6091 = vpack.c.b16 %v6031, %v6027
    %v6092 = vpack.c.b16 %v6032, %v6028
    %v6093 = vpack.c.b16 %v6033, %v6029
    %v6094 = vpack.c.b16 %v6034, %v6030
    %v6095 = vpack.c.b16 %v6039, %v6035
    %v6096 = vpack.c.b16 %v6040, %v6036
    %v6097 = vpack.c.b16 %v6041, %v6037
    %v6098 = vpack.c.b16 %v6042, %v6038
    %v6099 = vpack.c.b16 %v6047, %v6043
    %v6100 = vpack.c.b16 %v6048, %v6044
    %v6101 = vpack.c.b16 %v6049, %v6045
    %v6102 = vpack.c.b16 %v6050, %v6046
    %v6103 = vpack.c.b16 %v6055, %v6051
    %v6104 = vpack.c.b16 %v6056, %v6052
    %v6105 = vpack.c.b16 %v6057, %v6053
    %v6106 = vpack.c.b16 %v6058, %v6054
    %v6107 = vpack.c.b16 %v6063, %v6059
    %v6108 = vpack.c.b16 %v6064, %v6060
    %v6109 = vpack.c.b16 %v6065, %v6061
    %v6110 = vpack.c.b16 %v6066, %v6062
    %v6111 = vpack.c.b16 %v6071, %v6067
    %v6112 = vpack.c.b16 %v6072, %v6068
    %v6113 = vpack.c.b16 %v6073, %v6069
    %v6114 = vpack.c.b16 %v6074, %v6070
    %v6115 = vpack.c.b16 %v6079, %v6075
    %v6116 = vpack.c.b16 %v6080, %v6076
    %v6117 = vpack.c.b16 %v6081, %v6077
    %v6118 = vpack.c.b16 %v6082, %v6078
    %v6119 = vpack.c.b16 %v6087, %v6083
    %v6120 = vpack.c.b16 %v6088, %v6084
    %v6121 = vpack.c.b16 %v6089, %v6085
    %v6122 = vpack.c.b16 %v6090, %v6086
    %6155 = vmatprep.subr.bf16.mxu0 %v6120
    %6156 = vmatpush1.bf16.msra.mxu0 %v6119
    %6157 = vmatprep.subr.bf16.mxu0 %v6116
    %6158 = vmatpush1.bf16.msra.mxu0 %v6115
    %6159 = vmatprep.subr.bf16.mxu0 %v6112
    %6160 = vmatpush1.bf16.msra.mxu0 %v6111
    %6161 = vmatprep.subr.bf16.mxu0 %v6108
    %6162 = vmatpush1.bf16.msra.mxu0 %v6107
    %6163 = vmatprep.subr.bf16.mxu0 %v6104
    %6164 = vmatpush1.bf16.msra.mxu0 %v6103
    %6165 = vmatprep.subr.bf16.mxu0 %v6100
    %6166 = vmatpush1.bf16.msra.mxu0 %v6099
    %6167 = vmatprep.subr.bf16.mxu0 %v6096
    %6168 = vmatpush1.bf16.msra.mxu0 %v6095
    %6169 = vmatprep.subr.bf16.mxu0 %v6092
    %6170 = vmatpush1.bf16.msra.mxu0 %v6091
    %6171 = vmatprep.subr.bf16.mxu0 0
    %6172 = vmatpush2.bf16.msra.mxu0 0
    %6173 = vmatprep.subr.bf16.mxu0 0
    %6174 = vmatpush2.bf16.msra.mxu0 0
    %6175 = vmatprep.subr.bf16.mxu0 0
    %6176 = vmatpush2.bf16.msra.mxu0 0
    %6177 = vmatprep.subr.bf16.mxu0 0
    %6178 = vmatpush2.bf16.msra.mxu0 0
    %6179 = vmatprep.subr.bf16.mxu0 0
    %6180 = vmatpush2.bf16.msra.mxu0 0
    %6181 = vmatprep.subr.bf16.mxu0 0
    %6182 = vmatpush2.bf16.msra.mxu0 0
    %6183 = vmatprep.subr.bf16.mxu0 0
    %6184 = vmatpush2.bf16.msra.mxu0 0
    %6185 = vmatprep.subr.bf16.mxu0 0
    %6186 = vmatpush2.bf16.msra.mxu0 0
    %6187 = vmatprep.mubr.bf16.mxu0 0
    %6188 = vmatmul.mubr.bf16.gmra.mxu0 0
    %v6189 = vpop.f32.mrf.mxu0
    %v6190 = vadd.f32 0.0, %v6189
    %v6191 = vpop.f32.mrf.mxu0
    %v6192 = vadd.f32 0.0, %v6191
    %v6193 = vpop.f32.mrf.mxu0
    %v6194 = vpop.f32.mrf.mxu0
    %6195 = vdwg.mxu0
    %6196 = vmatprep.subr.bf16.mxu0 %v6122
    %6197 = vmatpush1.bf16.msra.mxu0 %v6121
    %6198 = vmatprep.subr.bf16.mxu0 %v6118
    %6199 = vmatpush1.bf16.msra.mxu0 %v6117
    %6200 = vmatprep.subr.bf16.mxu0 %v6114
    %6201 = vmatpush1.bf16.msra.mxu0 %v6113
    %6202 = vmatprep.subr.bf16.mxu0 %v6110
    %6203 = vmatpush1.bf16.msra.mxu0 %v6109
    %6204 = vmatprep.subr.bf16.mxu0 %v6106
    %6205 = vmatpush1.bf16.msra.mxu0 %v6105
    %6206 = vmatprep.subr.bf16.mxu0 %v6102
    %6207 = vmatpush1.bf16.msra.mxu0 %v6101
    %6208 = vmatprep.subr.bf16.mxu0 %v6098
    %6209 = vmatpush1.bf16.msra.mxu0 %v6097
    %6210 = vmatprep.subr.bf16.mxu0 %v6094
    %6211 = vmatpush1.bf16.msra.mxu0 %v6093
    %6212 = vmatprep.subr.bf16.mxu0 0
    %6213 = vmatpush2.bf16.msra.mxu0 0
    %6214 = vmatprep.subr.bf16.mxu0 0
    %6215 = vmatpush2.bf16.msra.mxu0 0
    %6216 = vmatprep.subr.bf16.mxu0 0
    %6217 = vmatpush2.bf16.msra.mxu0 0
    %6218 = vmatprep.subr.bf16.mxu0 0
    %6219 = vmatpush2.bf16.msra.mxu0 0
    %6220 = vmatprep.subr.bf16.mxu0 0
    %6221 = vmatpush2.bf16.msra.mxu0 0
    %6222 = vmatprep.subr.bf16.mxu0 0
    %6223 = vmatpush2.bf16.msra.mxu0 0
    %6224 = vmatprep.subr.bf16.mxu0 0
    %6225 = vmatpush2.bf16.msra.mxu0 0
    %6226 = vmatprep.subr.bf16.mxu0 0
    %6227 = vmatpush2.bf16.msra.mxu0 0
    %6228 = vmatprep.mubr.bf16.mxu0 0
    %6229 = vmatmul.mubr.bf16.gmra.mxu0 0
    %v6230 = vpop.f32.mrf.mxu0
    %v6231 = vadd.f32 0.0, %v6230
    %v6232 = vpop.f32.mrf.mxu0
    %v6233 = vadd.f32 0.0, %v6232
    %v6234 = vpop.f32.mrf.mxu0
    %v6235 = vpop.f32.mrf.mxu0
    %6236 = vdwg.mxu0
    %v6237 = vadd.f32 %v5762, %v6190
    %v6238 = vadd.f32 %v5764, %v6192
    %v6239 = vadd.f32 %v5813, %v6231
    %v6240 = vadd.f32 %v5815, %v6233
    %v6241 = vsub.f32 0.0, %v6237
    %v6242 = vmul.f32 %v6241, 1.442695
    %v6243 = vpow.pop %v6242
    %v6244 = vadd.f32 %v6243, 1.0
    %v6245 = vrcp.pop %v6244
    %v6246 = vmul.f32 1.0, %v6245
    %v6247 = vsub.f32 0.0, %v6238
    %v6248 = vmul.f32 %v6247, 1.442695
    %v6249 = vpow.pop %v6248
    %v6250 = vadd.f32 %v6249, 1.0
    %v6251 = vrcp.pop %v6250
    %v6252 = vmul.f32 1.0, %v6251
    %v6253 = vtanh.pop %v6239
    %v6254 = vsub.f32 0.0, %v6240
    %v6255 = vmul.f32 %v6254, 1.442695
    %v6256 = vpow.pop %v6255
    %v6257 = vadd.f32 %v6256, 1.0
    %v6258 = vrcp.pop %v6257
    %v6259 = vmul.f32 1.0, %v6258
    %v6260 = vmul.f32 %v6252, 0.0
    %v6261 = vmul.f32 %v6246, %v6253
    %v6262 = vadd.f32 %v6260, %v6261
    %v6263 = vtanh.pop %v6262
    %v6264 = vmul.f32 %v6259, %v6263
    %v6297 = vunpack.c.l.b16 %v5963
    %v6298 = vunpack.c.h.b16 %v5963
    %v6299 = vunpack.c.l.b16 %v5964
    %v6300 = vunpack.c.h.b16 %v5964
    %v6301 = vunpack.c.l.b16 %v5965
    %v6302 = vunpack.c.h.b16 %v5965
    %v6303 = vunpack.c.l.b16 %v5966
    %v6304 = vunpack.c.h.b16 %v5966
    %v6305 = vunpack.c.l.b16 %v5967
    %v6306 = vunpack.c.h.b16 %v5967
    %v6307 = vunpack.c.l.b16 %v5968
    %v6308 = vunpack.c.h.b16 %v5968
    %v6309 = vunpack.c.l.b16 %v5969
    %v6310 = vunpack.c.h.b16 %v5969
    %v6311 = vunpack.c.l.b16 %v5970
    %v6312 = vunpack.c.h.b16 %v5970
    %v6313 = vunpack.c.l.b16 %v5971
    %v6314 = vunpack.c.h.b16 %v5971
    %v6315 = vunpack.c.l.b16 %v5972
    %v6316 = vunpack.c.h.b16 %v5972
    %v6317 = vunpack.c.l.b16 %v5973
    %v6318 = vunpack.c.h.b16 %v5973
    %v6319 = vunpack.c.l.b16 %v5974
    %v6320 = vunpack.c.h.b16 %v5974
    %v6321 = vunpack.c.l.b16 %v5975
    %v6322 = vunpack.c.h.b16 %v5975
    %v6323 = vunpack.c.l.b16 %v5976
    %v6324 = vunpack.c.h.b16 %v5976
    %v6325 = vunpack.c.l.b16 %v5977
    %v6326 = vunpack.c.h.b16 %v5977
    %v6327 = vunpack.c.l.b16 %v5978
    %v6328 = vunpack.c.h.b16 %v5978
    %v6329 = vunpack.c.l.b16 %v5979
    %v6330 = vunpack.c.h.b16 %v5979
    %v6331 = vunpack.c.l.b16 %v5980
    %v6332 = vunpack.c.h.b16 %v5980
    %v6333 = vunpack.c.l.b16 %v5981
    %v6334 = vunpack.c.h.b16 %v5981
    %v6335 = vunpack.c.l.b16 %v5982
    %v6336 = vunpack.c.h.b16 %v5982
    %v6337 = vunpack.c.l.b16 %v5983
    %v6338 = vunpack.c.h.b16 %v5983
    %v6339 = vunpack.c.l.b16 %v5984
    %v6340 = vunpack.c.h.b16 %v5984
    %v6341 = vunpack.c.l.b16 %v5985
    %v6342 = vunpack.c.h.b16 %v5985
    %v6343 = vunpack.c.l.b16 %v5986
    %v6344 = vunpack.c.h.b16 %v5986
    %v6345 = vunpack.c.l.b16 %v5987
    %v6346 = vunpack.c.h.b16 %v5987
    %v6347 = vunpack.c.l.b16 %v5988
    %v6348 = vunpack.c.h.b16 %v5988
    %v6349 = vunpack.c.l.b16 %v5989
    %v6350 = vunpack.c.h.b16 %v5989
    %v6351 = vunpack.c.l.b16 %v5990
    %v6352 = vunpack.c.h.b16 %v5990
    %v6353 = vunpack.c.l.b16 %v5991
    %v6354 = vunpack.c.h.b16 %v5991
    %v6355 = vunpack.c.l.b16 %v5992
    %v6356 = vunpack.c.h.b16 %v5992
    %v6357 = vunpack.c.l.b16 %v5993
    %v6358 = vunpack.c.h.b16 %v5993
    %v6359 = vunpack.c.l.b16 %v5994
    %v6360 = vunpack.c.h.b16 %v5994
    %v6361 = vpack.c.b16 %v6301, %v6297
    %v6362 = vpack.c.b16 %v6302, %v6298
    %v6363 = vpack.c.b16 %v6303, %v6299
    %v6364 = vpack.c.b16 %v6304, %v6300
    %v6365 = vpack.c.b16 %v6309, %v6305
    %v6366 = vpack.c.b16 %v6310, %v6306
    %v6367 = vpack.c.b16 %v6311, %v6307
    %v6368 = vpack.c.b16 %v6312, %v6308
    %v6369 = vpack.c.b16 %v6317, %v6313
    %v6370 = vpack.c.b16 %v6318, %v6314
    %v6371 = vpack.c.b16 %v6319, %v6315
    %v6372 = vpack.c.b16 %v6320, %v6316
    %v6373 = vpack.c.b16 %v6325, %v6321
    %v6374 = vpack.c.b16 %v6326, %v6322
    %v6375 = vpack.c.b16 %v6327, %v6323
    %v6376 = vpack.c.b16 %v6328, %v6324
    %v6377 = vpack.c.b16 %v6333, %v6329
    %v6378 = vpack.c.b16 %v6334, %v6330
    %v6379 = vpack.c.b16 %v6335, %v6331
    %v6380 = vpack.c.b16 %v6336, %v6332
    %v6381 = vpack.c.b16 %v6341, %v6337
    %v6382 = vpack.c.b16 %v6342, %v6338
    %v6383 = vpack.c.b16 %v6343, %v6339
    %v6384 = vpack.c.b16 %v6344, %v6340
    %v6385 = vpack.c.b16 %v6349, %v6345
    %v6386 = vpack.c.b16 %v6350, %v6346
    %v6387 = vpack.c.b16 %v6351, %v6347
    %v6388 = vpack.c.b16 %v6352, %v6348
    %v6389 = vpack.c.b16 %v6357, %v6353
    %v6390 = vpack.c.b16 %v6358, %v6354
    %v6391 = vpack.c.b16 %v6359, %v6355
    %v6392 = vpack.c.b16 %v6360, %v6356
    %6425 = vmatprep.subr.bf16.mxu0 %v6390
    %6426 = vmatpush1.bf16.msra.mxu0 %v6389
    %6427 = vmatprep.subr.bf16.mxu0 %v6386
    %6428 = vmatpush1.bf16.msra.mxu0 %v6385
    %6429 = vmatprep.subr.bf16.mxu0 %v6382
    %6430 = vmatpush1.bf16.msra.mxu0 %v6381
    %6431 = vmatprep.subr.bf16.mxu0 %v6378
    %6432 = vmatpush1.bf16.msra.mxu0 %v6377
    %6433 = vmatprep.subr.bf16.mxu0 %v6374
    %6434 = vmatpush1.bf16.msra.mxu0 %v6373
    %6435 = vmatprep.subr.bf16.mxu0 %v6370
    %6436 = vmatpush1.bf16.msra.mxu0 %v6369
    %6437 = vmatprep.subr.bf16.mxu0 %v6366
    %6438 = vmatpush1.bf16.msra.mxu0 %v6365
    %6439 = vmatprep.subr.bf16.mxu0 %v6362
    %6440 = vmatpush1.bf16.msra.mxu0 %v6361
    %6441 = vmatprep.subr.bf16.mxu0 0
    %6442 = vmatpush2.bf16.msra.mxu0 0
    %6443 = vmatprep.subr.bf16.mxu0 0
    %6444 = vmatpush2.bf16.msra.mxu0 0
    %6445 = vmatprep.subr.bf16.mxu0 0
    %6446 = vmatpush2.bf16.msra.mxu0 0
    %6447 = vmatprep.subr.bf16.mxu0 0
    %6448 = vmatpush2.bf16.msra.mxu0 0
    %6449 = vmatprep.subr.bf16.mxu0 0
    %6450 = vmatpush2.bf16.msra.mxu0 0
    %6451 = vmatprep.subr.bf16.mxu0 0
    %6452 = vmatpush2.bf16.msra.mxu0 0
    %6453 = vmatprep.subr.bf16.mxu0 0
    %6454 = vmatpush2.bf16.msra.mxu0 0
    %6455 = vmatprep.subr.bf16.mxu0 0
    %6456 = vmatpush2.bf16.msra.mxu0 0
    %6457 = vmatprep.mubr.bf16.mxu0 0
    %6458 = vmatmul.mubr.bf16.gmra.mxu0 0
    %v6459 = vpop.f32.mrf.mxu0
    %v6460 = vadd.f32 0.0, %v6459
    %v6461 = vpop.f32.mrf.mxu0
    %v6462 = vadd.f32 0.0, %v6461
    %v6463 = vpop.f32.mrf.mxu0
    %v6464 = vpop.f32.mrf.mxu0
    %6465 = vdwg.mxu0
    %6466 = vmatprep.subr.bf16.mxu0 %v6392
    %6467 = vmatpush1.bf16.msra.mxu0 %v6391
    %6468 = vmatprep.subr.bf16.mxu0 %v6388
    %6469 = vmatpush1.bf16.msra.mxu0 %v6387
    %6470 = vmatprep.subr.bf16.mxu0 %v6384
    %6471 = vmatpush1.bf16.msra.mxu0 %v6383
    %6472 = vmatprep.subr.bf16.mxu0 %v6380
    %6473 = vmatpush1.bf16.msra.mxu0 %v6379
    %6474 = vmatprep.subr.bf16.mxu0 %v6376
    %6475 = vmatpush1.bf16.msra.mxu0 %v6375
    %6476 = vmatprep.subr.bf16.mxu0 %v6372
    %6477 = vmatpush1.bf16.msra.mxu0 %v6371
    %6478 = vmatprep.subr.bf16.mxu0 %v6368
    %6479 = vmatpush1.bf16.msra.mxu0 %v6367
    %6480 = vmatprep.subr.bf16.mxu0 %v6364
    %6481 = vmatpush1.bf16.msra.mxu0 %v6363
    %6482 = vmatprep.subr.bf16.mxu0 0
    %6483 = vmatpush2.bf16.msra.mxu0 0
    %6484 = vmatprep.subr.bf16.mxu0 0
    %6485 = vmatpush2.bf16.msra.mxu0 0
    %6486 = vmatprep.subr.bf16.mxu0 0
    %6487 = vmatpush2.bf16.msra.mxu0 0
    %6488 = vmatprep.subr.bf16.mxu0 0
    %6489 = vmatpush2.bf16.msra.mxu0 0
    %6490 = vmatprep.subr.bf16.mxu0 0
    %6491 = vmatpush2.bf16.msra.mxu0 0
    %6492 = vmatprep.subr.bf16.mxu0 0
    %6493 = vmatpush2.bf16.msra.mxu0 0
    %6494 = vmatprep.subr.bf16.mxu0 0
    %6495 = vmatpush2.bf16.msra.mxu0 0
    %6496 = vmatprep.subr.bf16.mxu0 0
    %6497 = vmatpush2.bf16.msra.mxu0 0
    %6498 = vmatprep.mubr.bf16.mxu0 0
    %6499 = vmatmul.mubr.bf16.gmra.mxu0 0
    %v6500 = vpop.f32.mrf.mxu0
    %v6501 = vadd.f32 0.0, %v6500
    %v6502 = vpop.f32.mrf.mxu0
    %v6503 = vadd.f32 0.0, %v6502
    %v6504 = vpop.f32.mrf.mxu0
    %v6505 = vpop.f32.mrf.mxu0
    %6506 = vdwg.mxu0
    %v6511 = vrot.slane %v6460, 6
    %v6512 = vrot.slane %v6462, 6
    %v6513 = vrot.slane %v6501, 6
    %v6514 = vrot.slane %v6503, 6
    %v6519 = vadd.f32 %v5874, %v6511
    %v6520 = vadd.f32 %v5876, %v6512
    %v6521 = vadd.f32 %v5925, %v6513
    %v6522 = vadd.f32 %v5927, %v6514
    %v6523 = vsub.f32 0.0, %v6519
    %v6524 = vmul.f32 %v6523, 1.442695
    %v6525 = vpow.pop %v6524
    %v6526 = vadd.f32 %v6525, 1.0
    %v6527 = vrcp.pop %v6526
    %v6528 = vmul.f32 1.0, %v6527
    %v6529 = vsub.f32 0.0, %v6520
    %v6530 = vmul.f32 %v6529, 1.442695
    %v6531 = vpow.pop %v6530
    %v6532 = vadd.f32 %v6531, 1.0
    %v6533 = vrcp.pop %v6532
    %v6534 = vmul.f32 1.0, %v6533
    %v6535 = vtanh.pop %v6521
    %v6536 = vsub.f32 0.0, %v6522
    %v6537 = vmul.f32 %v6536, 1.442695
    %v6538 = vpow.pop %v6537
    %v6539 = vadd.f32 %v6538, 1.0
    %v6540 = vrcp.pop %v6539
    %v6541 = vmul.f32 1.0, %v6540
    %v6542 = vmul.f32 %v6534, 0.0
    %v6543 = vmul.f32 %v6528, %v6535
    %v6544 = vadd.f32 %v6542, %v6543
    %v6545 = vtanh.pop %v6544
    %v6546 = vmul.f32 %v6541, %v6545
    %v6547 = vpack.c.bf16 %v6264, %v6264
    %6548 = vmatprep.subr.bf16.mxu0 %v6120
    %6549 = vmatpush1.bf16.msra.mxu0 %v6119
    %6550 = vmatprep.subr.bf16.mxu0 %v6116
    %6551 = vmatpush1.bf16.msra.mxu0 %v6115
    %6552 = vmatprep.subr.bf16.mxu0 %v6112
    %6553 = vmatpush1.bf16.msra.mxu0 %v6111
    %6554 = vmatprep.subr.bf16.mxu0 %v6108
    %6555 = vmatpush1.bf16.msra.mxu0 %v6107
    %6556 = vmatprep.subr.bf16.mxu0 %v6104
    %6557 = vmatpush1.bf16.msra.mxu0 %v6103
    %6558 = vmatprep.subr.bf16.mxu0 %v6100
    %6559 = vmatpush1.bf16.msra.mxu0 %v6099
    %6560 = vmatprep.subr.bf16.mxu0 %v6096
    %6561 = vmatpush1.bf16.msra.mxu0 %v6095
    %6562 = vmatprep.subr.bf16.mxu0 %v6092
    %6563 = vmatpush1.bf16.msra.mxu0 %v6091
    %6564 = vmatprep.subr.bf16.mxu0 0
    %6565 = vmatpush2.bf16.msra.mxu0 0
    %6566 = vmatprep.subr.bf16.mxu0 0
    %6567 = vmatpush2.bf16.msra.mxu0 0
    %6568 = vmatprep.subr.bf16.mxu0 0
    %6569 = vmatpush2.bf16.msra.mxu0 0
    %6570 = vmatprep.subr.bf16.mxu0 0
    %6571 = vmatpush2.bf16.msra.mxu0 0
    %6572 = vmatprep.subr.bf16.mxu0 0
    %6573 = vmatpush2.bf16.msra.mxu0 0
    %6574 = vmatprep.subr.bf16.mxu0 0
    %6575 = vmatpush2.bf16.msra.mxu0 0
    %6576 = vmatprep.subr.bf16.mxu0 0
    %6577 = vmatpush2.bf16.msra.mxu0 0
    %6578 = vmatprep.subr.bf16.mxu0 0
    %6579 = vmatpush2.bf16.msra.mxu0 0
    %6580 = vmatprep.mubr.bf16.mxu0 0
    %6581 = vmatmul.mubr.bf16.gmra.mxu0 %v6547
    %v6582 = vpop.f32.mrf.mxu0
    %v6583 = vadd.f32 0.0, %v6582
    %v6584 = vpop.f32.mrf.mxu0
    %v6585 = vadd.f32 0.0, %v6584
    %v6586 = vpop.f32.mrf.mxu0
    %v6587 = vpop.f32.mrf.mxu0
    %6588 = vdwg.mxu0
    %6589 = vmatprep.subr.bf16.mxu0 %v6122
    %6590 = vmatpush1.bf16.msra.mxu0 %v6121
    %6591 = vmatprep.subr.bf16.mxu0 %v6118
    %6592 = vmatpush1.bf16.msra.mxu0 %v6117
    %6593 = vmatprep.subr.bf16.mxu0 %v6114
    %6594 = vmatpush1.bf16.msra.mxu0 %v6113
    %6595 = vmatprep.subr.bf16.mxu0 %v6110
    %6596 = vmatpush1.bf16.msra.mxu0 %v6109
    %6597 = vmatprep.subr.bf16.mxu0 %v6106
    %6598 = vmatpush1.bf16.msra.mxu0 %v6105
    %6599 = vmatprep.subr.bf16.mxu0 %v6102
    %6600 = vmatpush1.bf16.msra.mxu0 %v6101
    %6601 = vmatprep.subr.bf16.mxu0 %v6098
    %6602 = vmatpush1.bf16.msra.mxu0 %v6097
    %6603 = vmatprep.subr.bf16.mxu0 %v6094
    %6604 = vmatpush1.bf16.msra.mxu0 %v6093
    %6605 = vmatprep.subr.bf16.mxu0 0
    %6606 = vmatpush2.bf16.msra.mxu0 0
    %6607 = vmatprep.subr.bf16.mxu0 0
    %6608 = vmatpush2.bf16.msra.mxu0 0
    %6609 = vmatprep.subr.bf16.mxu0 0
    %6610 = vmatpush2.bf16.msra.mxu0 0
    %6611 = vmatprep.subr.bf16.mxu0 0
    %6612 = vmatpush2.bf16.msra.mxu0 0
    %6613 = vmatprep.subr.bf16.mxu0 0
    %6614 = vmatpush2.bf16.msra.mxu0 0
    %6615 = vmatprep.subr.bf16.mxu0 0
    %6616 = vmatpush2.bf16.msra.mxu0 0
    %6617 = vmatprep.subr.bf16.mxu0 0
    %6618 = vmatpush2.bf16.msra.mxu0 0
    %6619 = vmatprep.subr.bf16.mxu0 0
    %6620 = vmatpush2.bf16.msra.mxu0 0
    %6621 = vmatprep.mubr.bf16.mxu0 0
    %6622 = vmatmul.mubr.bf16.gmra.mxu0 %v6547
    %v6623 = vpop.f32.mrf.mxu0
    %v6624 = vadd.f32 0.0, %v6623
    %v6625 = vpop.f32.mrf.mxu0
    %v6626 = vadd.f32 0.0, %v6625
    %v6627 = vpop.f32.mrf.mxu0
    %v6628 = vpop.f32.mrf.mxu0
    %6629 = vdwg.mxu0
    %v6634 = vrot.slane %v6583, 6
    %v6635 = vrot.slane %v6585, 6
    %v6636 = vrot.slane %v6624, 6
    %v6637 = vrot.slane %v6626, 6
    %v6642 = vadd.f32 %v5762, %v6634
    %v6643 = vadd.f32 %v5764, %v6635
    %v6644 = vadd.f32 %v5813, %v6636
    %v6645 = vadd.f32 %v5815, %v6637
    %v6646 = vsub.f32 0.0, %v6642
    %v6647 = vmul.f32 %v6646, 1.442695
    %v6648 = vpow.pop %v6647
    %v6649 = vadd.f32 %v6648, 1.0
    %v6650 = vrcp.pop %v6649
    %v6651 = vmul.f32 1.0, %v6650
    %v6652 = vsub.f32 0.0, %v6643
    %v6653 = vmul.f32 %v6652, 1.442695
    %v6654 = vpow.pop %v6653
    %v6655 = vadd.f32 %v6654, 1.0
    %v6656 = vrcp.pop %v6655
    %v6657 = vmul.f32 1.0, %v6656
    %v6658 = vtanh.pop %v6644
    %v6659 = vsub.f32 0.0, %v6645
    %v6660 = vmul.f32 %v6659, 1.442695
    %v6661 = vpow.pop %v6660
    %v6662 = vadd.f32 %v6661, 1.0
    %v6663 = vrcp.pop %v6662
    %v6664 = vmul.f32 1.0, %v6663
    %v6666 = vrot.slane %v6262, 6
    %v6668 = vmul.f32 %v6657, %v6666
    %v6669 = vmul.f32 %v6651, %v6658
    %v6670 = vadd.f32 %v6668, %v6669
    %v6671 = vtanh.pop %v6670
    %v6672 = vmul.f32 %v6664, %v6671
    %v6673 = vpack.c.bf16 %v6546, %v6546
    %v6675 = vrot.slane %v6673, 1
    %6677 = vmatprep.subr.bf16.mxu0 %v6390
    %6678 = vmatpush1.bf16.msra.mxu0 %v6389
    %6679 = vmatprep.subr.bf16.mxu0 %v6386
    %6680 = vmatpush1.bf16.msra.mxu0 %v6385
    %6681 = vmatprep.subr.bf16.mxu0 %v6382
    %6682 = vmatpush1.bf16.msra.mxu0 %v6381
    %6683 = vmatprep.subr.bf16.mxu0 %v6378
    %6684 = vmatpush1.bf16.msra.mxu0 %v6377
    %6685 = vmatprep.subr.bf16.mxu0 %v6374
    %6686 = vmatpush1.bf16.msra.mxu0 %v6373
    %6687 = vmatprep.subr.bf16.mxu0 %v6370
    %6688 = vmatpush1.bf16.msra.mxu0 %v6369
    %6689 = vmatprep.subr.bf16.mxu0 %v6366
    %6690 = vmatpush1.bf16.msra.mxu0 %v6365
    %6691 = vmatprep.subr.bf16.mxu0 %v6362
    %6692 = vmatpush1.bf16.msra.mxu0 %v6361
    %6693 = vmatprep.subr.bf16.mxu0 0
    %6694 = vmatpush2.bf16.msra.mxu0 0
    %6695 = vmatprep.subr.bf16.mxu0 0
    %6696 = vmatpush2.bf16.msra.mxu0 0
    %6697 = vmatprep.subr.bf16.mxu0 0
    %6698 = vmatpush2.bf16.msra.mxu0 0
    %6699 = vmatprep.subr.bf16.mxu0 0
    %6700 = vmatpush2.bf16.msra.mxu0 0
    %6701 = vmatprep.subr.bf16.mxu0 0
    %6702 = vmatpush2.bf16.msra.mxu0 0
    %6703 = vmatprep.subr.bf16.mxu0 0
    %6704 = vmatpush2.bf16.msra.mxu0 0
    %6705 = vmatprep.subr.bf16.mxu0 0
    %6706 = vmatpush2.bf16.msra.mxu0 0
    %6707 = vmatprep.subr.bf16.mxu0 0
    %6708 = vmatpush2.bf16.msra.mxu0 0
    %6709 = vmatprep.mubr.bf16.mxu0 0
    %6710 = vmatmul.mubr.bf16.gmra.mxu0 %v6675
    %v6711 = vpop.f32.mrf.mxu0
    %v6712 = vadd.f32 0.0, %v6711
    %v6713 = vpop.f32.mrf.mxu0
    %v6714 = vadd.f32 0.0, %v6713
    %v6715 = vpop.f32.mrf.mxu0
    %v6716 = vpop.f32.mrf.mxu0
    %6717 = vdwg.mxu0
    %6718 = vmatprep.subr.bf16.mxu0 %v6392
    %6719 = vmatpush1.bf16.msra.mxu0 %v6391
    %6720 = vmatprep.subr.bf16.mxu0 %v6388
    %6721 = vmatpush1.bf16.msra.mxu0 %v6387
    %6722 = vmatprep.subr.bf16.mxu0 %v6384
    %6723 = vmatpush1.bf16.msra.mxu0 %v6383
    %6724 = vmatprep.subr.bf16.mxu0 %v6380
    %6725 = vmatpush1.bf16.msra.mxu0 %v6379
    %6726 = vmatprep.subr.bf16.mxu0 %v6376
    %6727 = vmatpush1.bf16.msra.mxu0 %v6375
    %6728 = vmatprep.subr.bf16.mxu0 %v6372
    %6729 = vmatpush1.bf16.msra.mxu0 %v6371
    %6730 = vmatprep.subr.bf16.mxu0 %v6368
    %6731 = vmatpush1.bf16.msra.mxu0 %v6367
    %6732 = vmatprep.subr.bf16.mxu0 %v6364
    %6733 = vmatpush1.bf16.msra.mxu0 %v6363
    %6734 = vmatprep.subr.bf16.mxu0 0
    %6735 = vmatpush2.bf16.msra.mxu0 0
    %6736 = vmatprep.subr.bf16.mxu0 0
    %6737 = vmatpush2.bf16.msra.mxu0 0
    %6738 = vmatprep.subr.bf16.mxu0 0
    %6739 = vmatpush2.bf16.msra.mxu0 0
    %6740 = vmatprep.subr.bf16.mxu0 0
    %6741 = vmatpush2.bf16.msra.mxu0 0
    %6742 = vmatprep.subr.bf16.mxu0 0
    %6743 = vmatpush2.bf16.msra.mxu0 0
    %6744 = vmatprep.subr.bf16.mxu0 0
    %6745 = vmatpush2.bf16.msra.mxu0 0
    %6746 = vmatprep.subr.bf16.mxu0 0
    %6747 = vmatpush2.bf16.msra.mxu0 0
    %6748 = vmatprep.subr.bf16.mxu0 0
    %6749 = vmatpush2.bf16.msra.mxu0 0
    %6750 = vmatprep.mubr.bf16.mxu0 0
    %6751 = vmatmul.mubr.bf16.gmra.mxu0 %v6675
    %v6752 = vpop.f32.mrf.mxu0
    %v6753 = vadd.f32 0.0, %v6752
    %v6754 = vpop.f32.mrf.mxu0
    %v6755 = vadd.f32 0.0, %v6754
    %v6756 = vpop.f32.mrf.mxu0
    %v6757 = vpop.f32.mrf.mxu0
    %6758 = vdwg.mxu0
    %v6759 = vadd.f32 %v5874, %v6712
    %v6760 = vadd.f32 %v5876, %v6714
    %v6761 = vadd.f32 %v5925, %v6753
    %v6762 = vadd.f32 %v5927, %v6755
    %v6763 = vsub.f32 0.0, %v6759
    %v6764 = vmul.f32 %v6763, 1.442695
    %v6765 = vpow.pop %v6764
    %v6766 = vadd.f32 %v6765, 1.0
    %v6767 = vrcp.pop %v6766
    %v6768 = vmul.f32 1.0, %v6767
    %v6769 = vsub.f32 0.0, %v6760
    %v6770 = vmul.f32 %v6769, 1.442695
    %v6771 = vpow.pop %v6770
    %v6772 = vadd.f32 %v6771, 1.0
    %v6773 = vrcp.pop %v6772
    %v6774 = vmul.f32 1.0, %v6773
    %v6775 = vtanh.pop %v6761
    %v6776 = vsub.f32 0.0, %v6762
    %v6777 = vmul.f32 %v6776, 1.442695
    %v6778 = vpow.pop %v6777
    %v6779 = vadd.f32 %v6778, 1.0
    %v6780 = vrcp.pop %v6779
    %v6781 = vmul.f32 1.0, %v6780
    %v6783 = vrot.slane %v6544, 2
    %v6785 = vmul.f32 %v6774, %v6783
    %v6786 = vmul.f32 %v6768, %v6775
    %v6787 = vadd.f32 %v6785, %v6786
    %v6788 = vtanh.pop %v6787
    %v6789 = vmul.f32 %v6781, %v6788
    %v6790 = vpack.c.bf16 %v6672, %v6672
    %v6792 = vrot.slane %v6790, 1
    %6794 = vmatprep.subr.bf16.mxu0 %v6120
    %6795 = vmatpush1.bf16.msra.mxu0 %v6119
    %6796 = vmatprep.subr.bf16.mxu0 %v6116
    %6797 = vmatpush1.bf16.msra.mxu0 %v6115
    %6798 = vmatprep.subr.bf16.mxu0 %v6112
    %6799 = vmatpush1.bf16.msra.mxu0 %v6111
    %6800 = vmatprep.subr.bf16.mxu0 %v6108
    %6801 = vmatpush1.bf16.msra.mxu0 %v6107
    %6802 = vmatprep.subr.bf16.mxu0 %v6104
    %6803 = vmatpush1.bf16.msra.mxu0 %v6103
    %6804 = vmatprep.subr.bf16.mxu0 %v6100
    %6805 = vmatpush1.bf16.msra.mxu0 %v6099
    %6806 = vmatprep.subr.bf16.mxu0 %v6096
    %6807 = vmatpush1.bf16.msra.mxu0 %v6095
    %6808 = vmatprep.subr.bf16.mxu0 %v6092
    %6809 = vmatpush1.bf16.msra.mxu0 %v6091
    %6810 = vmatprep.subr.bf16.mxu0 0
    %6811 = vmatpush2.bf16.msra.mxu0 0
    %6812 = vmatprep.subr.bf16.mxu0 0
    %6813 = vmatpush2.bf16.msra.mxu0 0
    %6814 = vmatprep.subr.bf16.mxu0 0
    %6815 = vmatpush2.bf16.msra.mxu0 0
    %6816 = vmatprep.subr.bf16.mxu0 0
    %6817 = vmatpush2.bf16.msra.mxu0 0
    %6818 = vmatprep.subr.bf16.mxu0 0
    %6819 = vmatpush2.bf16.msra.mxu0 0
    %6820 = vmatprep.subr.bf16.mxu0 0
    %6821 = vmatpush2.bf16.msra.mxu0 0
    %6822 = vmatprep.subr.bf16.mxu0 0
    %6823 = vmatpush2.bf16.msra.mxu0 0
    %6824 = vmatprep.subr.bf16.mxu0 0
    %6825 = vmatpush2.bf16.msra.mxu0 0
    %6826 = vmatprep.mubr.bf16.mxu0 0
    %6827 = vmatmul.mubr.bf16.gmra.mxu0 %v6792
    %v6828 = vpop.f32.mrf.mxu0
    %v6829 = vadd.f32 0.0, %v6828
    %v6830 = vpop.f32.mrf.mxu0
    %v6831 = vadd.f32 0.0, %v6830
    %v6832 = vpop.f32.mrf.mxu0
    %v6833 = vpop.f32.mrf.mxu0
    %6834 = vdwg.mxu0
    %6835 = vmatprep.subr.bf16.mxu0 %v6122
    %6836 = vmatpush1.bf16.msra.mxu0 %v6121
    %6837 = vmatprep.subr.bf16.mxu0 %v6118
    %6838 = vmatpush1.bf16.msra.mxu0 %v6117
    %6839 = vmatprep.subr.bf16.mxu0 %v6114
    %6840 = vmatpush1.bf16.msra.mxu0 %v6113
    %6841 = vmatprep.subr.bf16.mxu0 %v6110
    %6842 = vmatpush1.bf16.msra.mxu0 %v6109
    %6843 = vmatprep.subr.bf16.mxu0 %v6106
    %6844 = vmatpush1.bf16.msra.mxu0 %v6105
    %6845 = vmatprep.subr.bf16.mxu0 %v6102
    %6846 = vmatpush1.bf16.msra.mxu0 %v6101
    %6847 = vmatprep.subr.bf16.mxu0 %v6098
    %6848 = vmatpush1.bf16.msra.mxu0 %v6097
    %6849 = vmatprep.subr.bf16.mxu0 %v6094
    %6850 = vmatpush1.bf16.msra.mxu0 %v6093
    %6851 = vmatprep.subr.bf16.mxu0 0
    %6852 = vmatpush2.bf16.msra.mxu0 0
    %6853 = vmatprep.subr.bf16.mxu0 0
    %6854 = vmatpush2.bf16.msra.mxu0 0
    %6855 = vmatprep.subr.bf16.mxu0 0
    %6856 = vmatpush2.bf16.msra.mxu0 0
    %6857 = vmatprep.subr.bf16.mxu0 0
    %6858 = vmatpush2.bf16.msra.mxu0 0
    %6859 = vmatprep.subr.bf16.mxu0 0
    %6860 = vmatpush2.bf16.msra.mxu0 0
    %6861 = vmatprep.subr.bf16.mxu0 0
    %6862 = vmatpush2.bf16.msra.mxu0 0
    %6863 = vmatprep.subr.bf16.mxu0 0
    %6864 = vmatpush2.bf16.msra.mxu0 0
    %6865 = vmatprep.subr.bf16.mxu0 0
    %6866 = vmatpush2.bf16.msra.mxu0 0
    %6867 = vmatprep.mubr.bf16.mxu0 0
    %6868 = vmatmul.mubr.bf16.gmra.mxu0 %v6792
    %v6869 = vpop.f32.mrf.mxu0
    %v6870 = vadd.f32 0.0, %v6869
    %v6871 = vpop.f32.mrf.mxu0
    %v6872 = vadd.f32 0.0, %v6871
    %v6873 = vpop.f32.mrf.mxu0
    %v6874 = vpop.f32.mrf.mxu0
    %6875 = vdwg.mxu0
    %v6880 = vrot.slane %v6829, 4
    %v6881 = vrot.slane %v6831, 4
    %v6882 = vrot.slane %v6870, 4
    %v6883 = vrot.slane %v6872, 4
    %v6888 = vadd.f32 %v5762, %v6880
    %v6889 = vadd.f32 %v5764, %v6881
    %v6890 = vadd.f32 %v5813, %v6882
    %v6891 = vadd.f32 %v5815, %v6883
    %v6892 = vsub.f32 0.0, %v6888
    %v6893 = vmul.f32 %v6892, 1.442695
    %v6894 = vpow.pop %v6893
    %v6895 = vadd.f32 %v6894, 1.0
    %v6896 = vrcp.pop %v6895
    %v6897 = vmul.f32 1.0, %v6896
    %v6898 = vsub.f32 0.0, %v6889
    %v6899 = vmul.f32 %v6898, 1.442695
    %v6900 = vpow.pop %v6899
    %v6901 = vadd.f32 %v6900, 1.0
    %v6902 = vrcp.pop %v6901
    %v6903 = vmul.f32 1.0, %v6902
    %v6904 = vtanh.pop %v6890
    %v6905 = vsub.f32 0.0, %v6891
    %v6906 = vmul.f32 %v6905, 1.442695
    %v6907 = vpow.pop %v6906
    %v6908 = vadd.f32 %v6907, 1.0
    %v6909 = vrcp.pop %v6908
    %v6910 = vmul.f32 1.0, %v6909
    %v6912 = vrot.slane %v6670, 6
    %v6914 = vmul.f32 %v6903, %v6912
    %v6915 = vmul.f32 %v6897, %v6904
    %v6916 = vadd.f32 %v6914, %v6915
    %v6917 = vtanh.pop %v6916
    %v6918 = vmul.f32 %v6910, %v6917
    %v6919 = vpack.c.bf16 %v6789, %v6789
    %6920 = vmatprep.subr.bf16.mxu0 %v6390
    %6921 = vmatpush1.bf16.msra.mxu0 %v6389
    %6922 = vmatprep.subr.bf16.mxu0 %v6386
    %6923 = vmatpush1.bf16.msra.mxu0 %v6385
    %6924 = vmatprep.subr.bf16.mxu0 %v6382
    %6925 = vmatpush1.bf16.msra.mxu0 %v6381
    %6926 = vmatprep.subr.bf16.mxu0 %v6378
    %6927 = vmatpush1.bf16.msra.mxu0 %v6377
    %6928 = vmatprep.subr.bf16.mxu0 %v6374
    %6929 = vmatpush1.bf16.msra.mxu0 %v6373
    %6930 = vmatprep.subr.bf16.mxu0 %v6370
    %6931 = vmatpush1.bf16.msra.mxu0 %v6369
    %6932 = vmatprep.subr.bf16.mxu0 %v6366
    %6933 = vmatpush1.bf16.msra.mxu0 %v6365
    %6934 = vmatprep.subr.bf16.mxu0 %v6362
    %6935 = vmatpush1.bf16.msra.mxu0 %v6361
    %6936 = vmatprep.subr.bf16.mxu0 0
    %6937 = vmatpush2.bf16.msra.mxu0 0
    %6938 = vmatprep.subr.bf16.mxu0 0
    %6939 = vmatpush2.bf16.msra.mxu0 0
    %6940 = vmatprep.subr.bf16.mxu0 0
    %6941 = vmatpush2.bf16.msra.mxu0 0
    %6942 = vmatprep.subr.bf16.mxu0 0
    %6943 = vmatpush2.bf16.msra.mxu0 0
    %6944 = vmatprep.subr.bf16.mxu0 0
    %6945 = vmatpush2.bf16.msra.mxu0 0
    %6946 = vmatprep.subr.bf16.mxu0 0
    %6947 = vmatpush2.bf16.msra.mxu0 0
    %6948 = vmatprep.subr.bf16.mxu0 0
    %6949 = vmatpush2.bf16.msra.mxu0 0
    %6950 = vmatprep.subr.bf16.mxu0 0
    %6951 = vmatpush2.bf16.msra.mxu0 0
    %6952 = vmatprep.mubr.bf16.mxu0 0
    %6953 = vmatmul.mubr.bf16.gmra.mxu0 %v6919
    %v6954 = vpop.f32.mrf.mxu0
    %v6955 = vadd.f32 0.0, %v6954
    %v6956 = vpop.f32.mrf.mxu0
    %v6957 = vadd.f32 0.0, %v6956
    %v6958 = vpop.f32.mrf.mxu0
    %v6959 = vpop.f32.mrf.mxu0
    %6960 = vdwg.mxu0
    %6961 = vmatprep.subr.bf16.mxu0 %v6392
    %6962 = vmatpush1.bf16.msra.mxu0 %v6391
    %6963 = vmatprep.subr.bf16.mxu0 %v6388
    %6964 = vmatpush1.bf16.msra.mxu0 %v6387
    %6965 = vmatprep.subr.bf16.mxu0 %v6384
    %6966 = vmatpush1.bf16.msra.mxu0 %v6383
    %6967 = vmatprep.subr.bf16.mxu0 %v6380
    %6968 = vmatpush1.bf16.msra.mxu0 %v6379
    %6969 = vmatprep.subr.bf16.mxu0 %v6376
    %6970 = vmatpush1.bf16.msra.mxu0 %v6375
    %6971 = vmatprep.subr.bf16.mxu0 %v6372
    %6972 = vmatpush1.bf16.msra.mxu0 %v6371
    %6973 = vmatprep.subr.bf16.mxu0 %v6368
    %6974 = vmatpush1.bf16.msra.mxu0 %v6367
    %6975 = vmatprep.subr.bf16.mxu0 %v6364
    %6976 = vmatpush1.bf16.msra.mxu0 %v6363
    %6977 = vmatprep.subr.bf16.mxu0 0
    %6978 = vmatpush2.bf16.msra.mxu0 0
    %6979 = vmatprep.subr.bf16.mxu0 0
    %6980 = vmatpush2.bf16.msra.mxu0 0
    %6981 = vmatprep.subr.bf16.mxu0 0
    %6982 = vmatpush2.bf16.msra.mxu0 0
    %6983 = vmatprep.subr.bf16.mxu0 0
    %6984 = vmatpush2.bf16.msra.mxu0 0
    %6985 = vmatprep.subr.bf16.mxu0 0
    %6986 = vmatpush2.bf16.msra.mxu0 0
    %6987 = vmatprep.subr.bf16.mxu0 0
    %6988 = vmatpush2.bf16.msra.mxu0 0
    %6989 = vmatprep.subr.bf16.mxu0 0
    %6990 = vmatpush2.bf16.msra.mxu0 0
    %6991 = vmatprep.subr.bf16.mxu0 0
    %6992 = vmatpush2.bf16.msra.mxu0 0
    %6993 = vmatprep.mubr.bf16.mxu0 0
    %6994 = vmatmul.mubr.bf16.gmra.mxu0 %v6919
    %v6995 = vpop.f32.mrf.mxu0
    %v6996 = vadd.f32 0.0, %v6995
    %v6997 = vpop.f32.mrf.mxu0
    %v6998 = vadd.f32 0.0, %v6997
    %v6999 = vpop.f32.mrf.mxu0
    %v7000 = vpop.f32.mrf.mxu0
    %7001 = vdwg.mxu0
    %v7006 = vrot.slane %v6955, 2
    %v7007 = vrot.slane %v6957, 2
    %v7008 = vrot.slane %v6996, 2
    %v7009 = vrot.slane %v6998, 2
    %v7014 = vadd.f32 %v5868, %v7006
    %v7015 = vadd.f32 %v5870, %v7007
    %v7016 = vadd.f32 %v5919, %v7008
    %v7017 = vadd.f32 %v5921, %v7009
    %v7018 = vsub.f32 0.0, %v7014
    %v7019 = vmul.f32 %v7018, 1.442695
    %v7020 = vpow.pop %v7019
    %v7021 = vadd.f32 %v7020, 1.0
    %v7022 = vrcp.pop %v7021
    %v7023 = vmul.f32 1.0, %v7022
    %v7024 = vsub.f32 0.0, %v7015
    %v7025 = vmul.f32 %v7024, 1.442695
    %v7026 = vpow.pop %v7025
    %v7027 = vadd.f32 %v7026, 1.0
    %v7028 = vrcp.pop %v7027
    %v7029 = vmul.f32 1.0, %v7028
    %v7030 = vtanh.pop %v7016
    %v7031 = vsub.f32 0.0, %v7017
    %v7032 = vmul.f32 %v7031, 1.442695
    %v7033 = vpow.pop %v7032
    %v7034 = vadd.f32 %v7033, 1.0
    %v7035 = vrcp.pop %v7034
    %v7036 = vmul.f32 1.0, %v7035
    %v7038 = vrot.slane %v6787, 2
    %v7040 = vmul.f32 %v7029, %v7038
    %v7041 = vmul.f32 %v7023, %v7030
    %v7042 = vadd.f32 %v7040, %v7041
    %v7043 = vtanh.pop %v7042
    %v7044 = vmul.f32 %v7036, %v7043
    %v7045 = vpack.c.bf16 %v6918, %v6918
    %v7047 = vrot.slane %v7045, 2
    %7049 = vmatprep.subr.bf16.mxu0 %v6120
    %7050 = vmatpush1.bf16.msra.mxu0 %v6119
    %7051 = vmatprep.subr.bf16.mxu0 %v6116
    %7052 = vmatpush1.bf16.msra.mxu0 %v6115
    %7053 = vmatprep.subr.bf16.mxu0 %v6112
    %7054 = vmatpush1.bf16.msra.mxu0 %v6111
    %7055 = vmatprep.subr.bf16.mxu0 %v6108
    %7056 = vmatpush1.bf16.msra.mxu0 %v6107
    %7057 = vmatprep.subr.bf16.mxu0 %v6104
    %7058 = vmatpush1.bf16.msra.mxu0 %v6103
    %7059 = vmatprep.subr.bf16.mxu0 %v6100
    %7060 = vmatpush1.bf16.msra.mxu0 %v6099
    %7061 = vmatprep.subr.bf16.mxu0 %v6096
    %7062 = vmatpush1.bf16.msra.mxu0 %v6095
    %7063 = vmatprep.subr.bf16.mxu0 %v6092
    %7064 = vmatpush1.bf16.msra.mxu0 %v6091
    %7065 = vmatprep.subr.bf16.mxu0 0
    %7066 = vmatpush2.bf16.msra.mxu0 0
    %7067 = vmatprep.subr.bf16.mxu0 0
    %7068 = vmatpush2.bf16.msra.mxu0 0
    %7069 = vmatprep.subr.bf16.mxu0 0
    %7070 = vmatpush2.bf16.msra.mxu0 0
    %7071 = vmatprep.subr.bf16.mxu0 0
    %7072 = vmatpush2.bf16.msra.mxu0 0
    %7073 = vmatprep.subr.bf16.mxu0 0
    %7074 = vmatpush2.bf16.msra.mxu0 0
    %7075 = vmatprep.subr.bf16.mxu0 0
    %7076 = vmatpush2.bf16.msra.mxu0 0
    %7077 = vmatprep.subr.bf16.mxu0 0
    %7078 = vmatpush2.bf16.msra.mxu0 0
    %7079 = vmatprep.subr.bf16.mxu0 0
    %7080 = vmatpush2.bf16.msra.mxu0 0
    %7081 = vmatprep.mubr.bf16.mxu0 0
    %7082 = vmatmul.mubr.bf16.gmra.mxu0 %v7047
    %v7083 = vpop.f32.mrf.mxu0
    %v7084 = vadd.f32 0.0, %v7083
    %v7085 = vpop.f32.mrf.mxu0
    %v7086 = vadd.f32 0.0, %v7085
    %v7087 = vpop.f32.mrf.mxu0
    %v7088 = vpop.f32.mrf.mxu0
    %7089 = vdwg.mxu0
    %7090 = vmatprep.subr.bf16.mxu0 %v6122
    %7091 = vmatpush1.bf16.msra.mxu0 %v6121
    %7092 = vmatprep.subr.bf16.mxu0 %v6118
    %7093 = vmatpush1.bf16.msra.mxu0 %v6117
    %7094 = vmatprep.subr.bf16.mxu0 %v6114
    %7095 = vmatpush1.bf16.msra.mxu0 %v6113
    %7096 = vmatprep.subr.bf16.mxu0 %v6110
    %7097 = vmatpush1.bf16.msra.mxu0 %v6109
    %7098 = vmatprep.subr.bf16.mxu0 %v6106
    %7099 = vmatpush1.bf16.msra.mxu0 %v6105
    %7100 = vmatprep.subr.bf16.mxu0 %v6102
    %7101 = vmatpush1.bf16.msra.mxu0 %v6101
    %7102 = vmatprep.subr.bf16.mxu0 %v6098
    %7103 = vmatpush1.bf16.msra.mxu0 %v6097
    %7104 = vmatprep.subr.bf16.mxu0 %v6094
    %7105 = vmatpush1.bf16.msra.mxu0 %v6093
    %7106 = vmatprep.subr.bf16.mxu0 0
    %7107 = vmatpush2.bf16.msra.mxu0 0
    %7108 = vmatprep.subr.bf16.mxu0 0
    %7109 = vmatpush2.bf16.msra.mxu0 0
    %7110 = vmatprep.subr.bf16.mxu0 0
    %7111 = vmatpush2.bf16.msra.mxu0 0
    %7112 = vmatprep.subr.bf16.mxu0 0
    %7113 = vmatpush2.bf16.msra.mxu0 0
    %7114 = vmatprep.subr.bf16.mxu0 0
    %7115 = vmatpush2.bf16.msra.mxu0 0
    %7116 = vmatprep.subr.bf16.mxu0 0
    %7117 = vmatpush2.bf16.msra.mxu0 0
    %7118 = vmatprep.subr.bf16.mxu0 0
    %7119 = vmatpush2.bf16.msra.mxu0 0
    %7120 = vmatprep.subr.bf16.mxu0 0
    %7121 = vmatpush2.bf16.msra.mxu0 0
    %7122 = vmatprep.mubr.bf16.mxu0 0
    %7123 = vmatmul.mubr.bf16.gmra.mxu0 %v7047
    %v7124 = vpop.f32.mrf.mxu0
    %v7125 = vadd.f32 0.0, %v7124
    %v7126 = vpop.f32.mrf.mxu0
    %v7127 = vadd.f32 0.0, %v7126
    %v7128 = vpop.f32.mrf.mxu0
    %v7129 = vpop.f32.mrf.mxu0
    %7130 = vdwg.mxu0
    %v7135 = vrot.slane %v7084, 2
    %v7136 = vrot.slane %v7086, 2
    %v7137 = vrot.slane %v7125, 2
    %v7138 = vrot.slane %v7127, 2
    %v7143 = vadd.f32 %v5762, %v7135
    %v7144 = vadd.f32 %v5764, %v7136
    %v7145 = vadd.f32 %v5813, %v7137
    %v7146 = vadd.f32 %v5815, %v7138
    %v7147 = vsub.f32 0.0, %v7143
    %v7148 = vmul.f32 %v7147, 1.442695
    %v7149 = vpow.pop %v7148
    %v7150 = vadd.f32 %v7149, 1.0
    %v7151 = vrcp.pop %v7150
    %v7152 = vmul.f32 1.0, %v7151
    %v7153 = vsub.f32 0.0, %v7144
    %v7154 = vmul.f32 %v7153, 1.442695
    %v7155 = vpow.pop %v7154
    %v7156 = vadd.f32 %v7155, 1.0
    %v7157 = vrcp.pop %v7156
    %v7158 = vmul.f32 1.0, %v7157
    %v7159 = vtanh.pop %v7145
    %v7160 = vsub.f32 0.0, %v7146
    %v7161 = vmul.f32 %v7160, 1.442695
    %v7162 = vpow.pop %v7161
    %v7163 = vadd.f32 %v7162, 1.0
    %v7164 = vrcp.pop %v7163
    %v7165 = vmul.f32 1.0, %v7164
    %v7167 = vrot.slane %v6916, 6
    %v7169 = vmul.f32 %v7158, %v7167
    %v7170 = vmul.f32 %v7152, %v7159
    %v7171 = vadd.f32 %v7169, %v7170
    %v7172 = vtanh.pop %v7171
    %v7173 = vmul.f32 %v7165, %v7172
    %v7174 = vpack.c.bf16 %v7044, %v7044
    %v7176 = vrot.slane %v7174, 3
    %7178 = vmatprep.subr.bf16.mxu0 %v6390
    %7179 = vmatpush1.bf16.msra.mxu0 %v6389
    %7180 = vmatprep.subr.bf16.mxu0 %v6386
    %7181 = vmatpush1.bf16.msra.mxu0 %v6385
    %7182 = vmatprep.subr.bf16.mxu0 %v6382
    %7183 = vmatpush1.bf16.msra.mxu0 %v6381
    %7184 = vmatprep.subr.bf16.mxu0 %v6378
    %7185 = vmatpush1.bf16.msra.mxu0 %v6377
    %7186 = vmatprep.subr.bf16.mxu0 %v6374
    %7187 = vmatpush1.bf16.msra.mxu0 %v6373
    %7188 = vmatprep.subr.bf16.mxu0 %v6370
    %7189 = vmatpush1.bf16.msra.mxu0 %v6369
    %7190 = vmatprep.subr.bf16.mxu0 %v6366
    %7191 = vmatpush1.bf16.msra.mxu0 %v6365
    %7192 = vmatprep.subr.bf16.mxu0 %v6362
    %7193 = vmatpush1.bf16.msra.mxu0 %v6361
    %7194 = vmatprep.subr.bf16.mxu0 0
    %7195 = vmatpush2.bf16.msra.mxu0 0
    %7196 = vmatprep.subr.bf16.mxu0 0
    %7197 = vmatpush2.bf16.msra.mxu0 0
    %7198 = vmatprep.subr.bf16.mxu0 0
    %7199 = vmatpush2.bf16.msra.mxu0 0
    %7200 = vmatprep.subr.bf16.mxu0 0
    %7201 = vmatpush2.bf16.msra.mxu0 0
    %7202 = vmatprep.subr.bf16.mxu0 0
    %7203 = vmatpush2.bf16.msra.mxu0 0
    %7204 = vmatprep.subr.bf16.mxu0 0
    %7205 = vmatpush2.bf16.msra.mxu0 0
    %7206 = vmatprep.subr.bf16.mxu0 0
    %7207 = vmatpush2.bf16.msra.mxu0 0
    %7208 = vmatprep.subr.bf16.mxu0 0
    %7209 = vmatpush2.bf16.msra.mxu0 0
    %7210 = vmatprep.mubr.bf16.mxu0 0
    %7211 = vmatmul.mubr.bf16.gmra.mxu0 %v7176
    %v7212 = vpop.f32.mrf.mxu0
    %v7213 = vadd.f32 0.0, %v7212
    %v7214 = vpop.f32.mrf.mxu0
    %v7215 = vadd.f32 0.0, %v7214
    %v7216 = vpop.f32.mrf.mxu0
    %v7217 = vpop.f32.mrf.mxu0
    %7218 = vdwg.mxu0
    %7219 = vmatprep.subr.bf16.mxu0 %v6392
    %7220 = vmatpush1.bf16.msra.mxu0 %v6391
    %7221 = vmatprep.subr.bf16.mxu0 %v6388
    %7222 = vmatpush1.bf16.msra.mxu0 %v6387
    %7223 = vmatprep.subr.bf16.mxu0 %v6384
    %7224 = vmatpush1.bf16.msra.mxu0 %v6383
    %7225 = vmatprep.subr.bf16.mxu0 %v6380
    %7226 = vmatpush1.bf16.msra.mxu0 %v6379
    %7227 = vmatprep.subr.bf16.mxu0 %v6376
    %7228 = vmatpush1.bf16.msra.mxu0 %v6375
    %7229 = vmatprep.subr.bf16.mxu0 %v6372
    %7230 = vmatpush1.bf16.msra.mxu0 %v6371
    %7231 = vmatprep.subr.bf16.mxu0 %v6368
    %7232 = vmatpush1.bf16.msra.mxu0 %v6367
    %7233 = vmatprep.subr.bf16.mxu0 %v6364
    %7234 = vmatpush1.bf16.msra.mxu0 %v6363
    %7235 = vmatprep.subr.bf16.mxu0 0
    %7236 = vmatpush2.bf16.msra.mxu0 0
    %7237 = vmatprep.subr.bf16.mxu0 0
    %7238 = vmatpush2.bf16.msra.mxu0 0
    %7239 = vmatprep.subr.bf16.mxu0 0
    %7240 = vmatpush2.bf16.msra.mxu0 0
    %7241 = vmatprep.subr.bf16.mxu0 0
    %7242 = vmatpush2.bf16.msra.mxu0 0
    %7243 = vmatprep.subr.bf16.mxu0 0
    %7244 = vmatpush2.bf16.msra.mxu0 0
    %7245 = vmatprep.subr.bf16.mxu0 0
    %7246 = vmatpush2.bf16.msra.mxu0 0
    %7247 = vmatprep.subr.bf16.mxu0 0
    %7248 = vmatpush2.bf16.msra.mxu0 0
    %7249 = vmatprep.subr.bf16.mxu0 0
    %7250 = vmatpush2.bf16.msra.mxu0 0
    %7251 = vmatprep.mubr.bf16.mxu0 0
    %7252 = vmatmul.mubr.bf16.gmra.mxu0 %v7176
    %v7253 = vpop.f32.mrf.mxu0
    %v7254 = vadd.f32 0.0, %v7253
    %v7255 = vpop.f32.mrf.mxu0
    %v7256 = vadd.f32 0.0, %v7255
    %v7257 = vpop.f32.mrf.mxu0
    %v7258 = vpop.f32.mrf.mxu0
    %7259 = vdwg.mxu0
    %v7264 = vrot.slane %v7213, 4
    %v7265 = vrot.slane %v7215, 4
    %v7266 = vrot.slane %v7254, 4
    %v7267 = vrot.slane %v7256, 4
    %v7272 = vadd.f32 %v5868, %v7264
    %v7273 = vadd.f32 %v5870, %v7265
    %v7274 = vadd.f32 %v5919, %v7266
    %v7275 = vadd.f32 %v5921, %v7267
    %v7276 = vsub.f32 0.0, %v7272
    %v7277 = vmul.f32 %v7276, 1.442695
    %v7278 = vpow.pop %v7277
    %v7279 = vadd.f32 %v7278, 1.0
    %v7280 = vrcp.pop %v7279
    %v7281 = vmul.f32 1.0, %v7280
    %v7282 = vsub.f32 0.0, %v7273
    %v7283 = vmul.f32 %v7282, 1.442695
    %v7284 = vpow.pop %v7283
    %v7285 = vadd.f32 %v7284, 1.0
    %v7286 = vrcp.pop %v7285
    %v7287 = vmul.f32 1.0, %v7286
    %v7288 = vtanh.pop %v7274
    %v7289 = vsub.f32 0.0, %v7275
    %v7290 = vmul.f32 %v7289, 1.442695
    %v7291 = vpow.pop %v7290
    %v7292 = vadd.f32 %v7291, 1.0
    %v7293 = vrcp.pop %v7292
    %v7294 = vmul.f32 1.0, %v7293
    %v7296 = vrot.slane %v7042, 2
    %v7298 = vmul.f32 %v7287, %v7296
    %v7299 = vmul.f32 %v7281, %v7288
    %v7300 = vadd.f32 %v7298, %v7299
    %v7301 = vtanh.pop %v7300
    %v7302 = vmul.f32 %v7294, %v7301
    %v7303 = vpack.c.bf16 %v7173, %v7173
    %v7305 = vrot.slane %v7303, 3
    %7307 = vmatprep.subr.bf16.mxu0 %v6120
    %7308 = vmatpush1.bf16.msra.mxu0 %v6119
    %7309 = vmatprep.subr.bf16.mxu0 %v6116
    %7310 = vmatpush1.bf16.msra.mxu0 %v6115
    %7311 = vmatprep.subr.bf16.mxu0 %v6112
    %7312 = vmatpush1.bf16.msra.mxu0 %v6111
    %7313 = vmatprep.subr.bf16.mxu0 %v6108
    %7314 = vmatpush1.bf16.msra.mxu0 %v6107
    %7315 = vmatprep.subr.bf16.mxu0 %v6104
    %7316 = vmatpush1.bf16.msra.mxu0 %v6103
    %7317 = vmatprep.subr.bf16.mxu0 %v6100
    %7318 = vmatpush1.bf16.msra.mxu0 %v6099
    %7319 = vmatprep.subr.bf16.mxu0 %v6096
    %7320 = vmatpush1.bf16.msra.mxu0 %v6095
    %7321 = vmatprep.subr.bf16.mxu0 %v6092
    %7322 = vmatpush1.bf16.msra.mxu0 %v6091
    %7323 = vmatprep.subr.bf16.mxu0 0
    %7324 = vmatpush2.bf16.msra.mxu0 0
    %7325 = vmatprep.subr.bf16.mxu0 0
    %7326 = vmatpush2.bf16.msra.mxu0 0
    %7327 = vmatprep.subr.bf16.mxu0 0
    %7328 = vmatpush2.bf16.msra.mxu0 0
    %7329 = vmatprep.subr.bf16.mxu0 0
    %7330 = vmatpush2.bf16.msra.mxu0 0
    %7331 = vmatprep.subr.bf16.mxu0 0
    %7332 = vmatpush2.bf16.msra.mxu0 0
    %7333 = vmatprep.subr.bf16.mxu0 0
    %7334 = vmatpush2.bf16.msra.mxu0 0
    %7335 = vmatprep.subr.bf16.mxu0 0
    %7336 = vmatpush2.bf16.msra.mxu0 0
    %7337 = vmatprep.subr.bf16.mxu0 0
    %7338 = vmatpush2.bf16.msra.mxu0 0
    %7339 = vmatprep.mubr.bf16.mxu0 0
    %7340 = vmatmul.mubr.bf16.gmra.mxu0 %v7305
    %v7341 = vpop.f32.mrf.mxu0
    %v7342 = vadd.f32 0.0, %v7341
    %v7343 = vpop.f32.mrf.mxu0
    %v7344 = vadd.f32 0.0, %v7343
    %v7345 = vpop.f32.mrf.mxu0
    %v7346 = vpop.f32.mrf.mxu0
    %7347 = vdwg.mxu0
    %7348 = vmatprep.subr.bf16.mxu0 %v6122
    %7349 = vmatpush1.bf16.msra.mxu0 %v6121
    %7350 = vmatprep.subr.bf16.mxu0 %v6118
    %7351 = vmatpush1.bf16.msra.mxu0 %v6117
    %7352 = vmatprep.subr.bf16.mxu0 %v6114
    %7353 = vmatpush1.bf16.msra.mxu0 %v6113
    %7354 = vmatprep.subr.bf16.mxu0 %v6110
    %7355 = vmatpush1.bf16.msra.mxu0 %v6109
    %7356 = vmatprep.subr.bf16.mxu0 %v6106
    %7357 = vmatpush1.bf16.msra.mxu0 %v6105
    %7358 = vmatprep.subr.bf16.mxu0 %v6102
    %7359 = vmatpush1.bf16.msra.mxu0 %v6101
    %7360 = vmatprep.subr.bf16.mxu0 %v6098
    %7361 = vmatpush1.bf16.msra.mxu0 %v6097
    %7362 = vmatprep.subr.bf16.mxu0 %v6094
    %7363 = vmatpush1.bf16.msra.mxu0 %v6093
    %7364 = vmatprep.subr.bf16.mxu0 0
    %7365 = vmatpush2.bf16.msra.mxu0 0
    %7366 = vmatprep.subr.bf16.mxu0 0
    %7367 = vmatpush2.bf16.msra.mxu0 0
    %7368 = vmatprep.subr.bf16.mxu0 0
    %7369 = vmatpush2.bf16.msra.mxu0 0
    %7370 = vmatprep.subr.bf16.mxu0 0
    %7371 = vmatpush2.bf16.msra.mxu0 0
    %7372 = vmatprep.subr.bf16.mxu0 0
    %7373 = vmatpush2.bf16.msra.mxu0 0
    %7374 = vmatprep.subr.bf16.mxu0 0
    %7375 = vmatpush2.bf16.msra.mxu0 0
    %7376 = vmatprep.subr.bf16.mxu0 0
    %7377 = vmatpush2.bf16.msra.mxu0 0
    %7378 = vmatprep.subr.bf16.mxu0 0
    %7379 = vmatpush2.bf16.msra.mxu0 0
    %7380 = vmatprep.mubr.bf16.mxu0 0
    %7381 = vmatmul.mubr.bf16.gmra.mxu0 %v7305
    %v7382 = vpop.f32.mrf.mxu0
    %v7383 = vadd.f32 0.0, %v7382
    %v7384 = vpop.f32.mrf.mxu0
    %v7385 = vadd.f32 0.0, %v7384
    %v7386 = vpop.f32.mrf.mxu0
    %v7387 = vpop.f32.mrf.mxu0
    %7388 = vdwg.mxu0
    %v7389 = vadd.f32 %v5766, %v7342
    %v7390 = vadd.f32 %v5768, %v7344
    %v7391 = vadd.f32 %v5817, %v7383
    %v7392 = vadd.f32 %v5819, %v7385
    %v7393 = vsub.f32 0.0, %v7389
    %v7394 = vmul.f32 %v7393, 1.442695
    %v7395 = vpow.pop %v7394
    %v7396 = vadd.f32 %v7395, 1.0
    %v7397 = vrcp.pop %v7396
    %v7398 = vmul.f32 1.0, %v7397
    %v7399 = vsub.f32 0.0, %v7390
    %v7400 = vmul.f32 %v7399, 1.442695
    %v7401 = vpow.pop %v7400
    %v7402 = vadd.f32 %v7401, 1.0
    %v7403 = vrcp.pop %v7402
    %v7404 = vmul.f32 1.0, %v7403
    %v7405 = vtanh.pop %v7391
    %v7406 = vsub.f32 0.0, %v7392
    %v7407 = vmul.f32 %v7406, 1.442695
    %v7408 = vpow.pop %v7407
    %v7409 = vadd.f32 %v7408, 1.0
    %v7410 = vrcp.pop %v7409
    %v7411 = vmul.f32 1.0, %v7410
    %v7413 = vrot.slane %v7171, 6
    %v7415 = vmul.f32 %v7404, %v7413
    %v7416 = vmul.f32 %v7398, %v7405
    %v7417 = vadd.f32 %v7415, %v7416
    %v7418 = vtanh.pop %v7417
    %v7419 = vmul.f32 %v7411, %v7418
    %v7420 = vpack.c.bf16 %v7302, %v7302
    %v7422 = vrot.slane %v7420, 2
    %7424 = vmatprep.subr.bf16.mxu0 %v6390
    %7425 = vmatpush1.bf16.msra.mxu0 %v6389
    %7426 = vmatprep.subr.bf16.mxu0 %v6386
    %7427 = vmatpush1.bf16.msra.mxu0 %v6385
    %7428 = vmatprep.subr.bf16.mxu0 %v6382
    %7429 = vmatpush1.bf16.msra.mxu0 %v6381
    %7430 = vmatprep.subr.bf16.mxu0 %v6378
    %7431 = vmatpush1.bf16.msra.mxu0 %v6377
    %7432 = vmatprep.subr.bf16.mxu0 %v6374
    %7433 = vmatpush1.bf16.msra.mxu0 %v6373
    %7434 = vmatprep.subr.bf16.mxu0 %v6370
    %7435 = vmatpush1.bf16.msra.mxu0 %v6369
    %7436 = vmatprep.subr.bf16.mxu0 %v6366
    %7437 = vmatpush1.bf16.msra.mxu0 %v6365
    %7438 = vmatprep.subr.bf16.mxu0 %v6362
    %7439 = vmatpush1.bf16.msra.mxu0 %v6361
    %7440 = vmatprep.subr.bf16.mxu0 0
    %7441 = vmatpush2.bf16.msra.mxu0 0
    %7442 = vmatprep.subr.bf16.mxu0 0
    %7443 = vmatpush2.bf16.msra.mxu0 0
    %7444 = vmatprep.subr.bf16.mxu0 0
    %7445 = vmatpush2.bf16.msra.mxu0 0
    %7446 = vmatprep.subr.bf16.mxu0 0
    %7447 = vmatpush2.bf16.msra.mxu0 0
    %7448 = vmatprep.subr.bf16.mxu0 0
    %7449 = vmatpush2.bf16.msra.mxu0 0
    %7450 = vmatprep.subr.bf16.mxu0 0
    %7451 = vmatpush2.bf16.msra.mxu0 0
    %7452 = vmatprep.subr.bf16.mxu0 0
    %7453 = vmatpush2.bf16.msra.mxu0 0
    %7454 = vmatprep.subr.bf16.mxu0 0
    %7455 = vmatpush2.bf16.msra.mxu0 0
    %7456 = vmatprep.mubr.bf16.mxu0 0
    %7457 = vmatmul.mubr.bf16.gmra.mxu0 %v7422
    %v7458 = vpop.f32.mrf.mxu0
    %v7459 = vadd.f32 0.0, %v7458
    %v7460 = vpop.f32.mrf.mxu0
    %v7461 = vadd.f32 0.0, %v7460
    %v7462 = vpop.f32.mrf.mxu0
    %v7463 = vpop.f32.mrf.mxu0
    %7464 = vdwg.mxu0
    %7465 = vmatprep.subr.bf16.mxu0 %v6392
    %7466 = vmatpush1.bf16.msra.mxu0 %v6391
    %7467 = vmatprep.subr.bf16.mxu0 %v6388
    %7468 = vmatpush1.bf16.msra.mxu0 %v6387
    %7469 = vmatprep.subr.bf16.mxu0 %v6384
    %7470 = vmatpush1.bf16.msra.mxu0 %v6383
    %7471 = vmatprep.subr.bf16.mxu0 %v6380
    %7472 = vmatpush1.bf16.msra.mxu0 %v6379
    %7473 = vmatprep.subr.bf16.mxu0 %v6376
    %7474 = vmatpush1.bf16.msra.mxu0 %v6375
    %7475 = vmatprep.subr.bf16.mxu0 %v6372
    %7476 = vmatpush1.bf16.msra.mxu0 %v6371
    %7477 = vmatprep.subr.bf16.mxu0 %v6368
    %7478 = vmatpush1.bf16.msra.mxu0 %v6367
    %7479 = vmatprep.subr.bf16.mxu0 %v6364
    %7480 = vmatpush1.bf16.msra.mxu0 %v6363
    %7481 = vmatprep.subr.bf16.mxu0 0
    %7482 = vmatpush2.bf16.msra.mxu0 0
    %7483 = vmatprep.subr.bf16.mxu0 0
    %7484 = vmatpush2.bf16.msra.mxu0 0
    %7485 = vmatprep.subr.bf16.mxu0 0
    %7486 = vmatpush2.bf16.msra.mxu0 0
    %7487 = vmatprep.subr.bf16.mxu0 0
    %7488 = vmatpush2.bf16.msra.mxu0 0
    %7489 = vmatprep.subr.bf16.mxu0 0
    %7490 = vmatpush2.bf16.msra.mxu0 0
    %7491 = vmatprep.subr.bf16.mxu0 0
    %7492 = vmatpush2.bf16.msra.mxu0 0
    %7493 = vmatprep.subr.bf16.mxu0 0
    %7494 = vmatpush2.bf16.msra.mxu0 0
    %7495 = vmatprep.subr.bf16.mxu0 0
    %7496 = vmatpush2.bf16.msra.mxu0 0
    %7497 = vmatprep.mubr.bf16.mxu0 0
    %7498 = vmatmul.mubr.bf16.gmra.mxu0 %v7422
    %v7499 = vpop.f32.mrf.mxu0
    %v7500 = vadd.f32 0.0, %v7499
    %v7501 = vpop.f32.mrf.mxu0
    %v7502 = vadd.f32 0.0, %v7501
    %v7503 = vpop.f32.mrf.mxu0
    %v7504 = vpop.f32.mrf.mxu0
    %7505 = vdwg.mxu0
    %v7510 = vrot.slane %v7459, 6
    %v7511 = vrot.slane %v7461, 6
    %v7512 = vrot.slane %v7500, 6
    %v7513 = vrot.slane %v7502, 6
    %v7518 = vadd.f32 %v5868, %v7510
    %v7519 = vadd.f32 %v5870, %v7511
    %v7520 = vadd.f32 %v5919, %v7512
    %v7521 = vadd.f32 %v5921, %v7513
    %v7522 = vsub.f32 0.0, %v7518
    %v7523 = vmul.f32 %v7522, 1.442695
    %v7524 = vpow.pop %v7523
    %v7525 = vadd.f32 %v7524, 1.0
    %v7526 = vrcp.pop %v7525
    %v7527 = vmul.f32 1.0, %v7526
    %v7528 = vsub.f32 0.0, %v7519
    %v7529 = vmul.f32 %v7528, 1.442695
    %v7530 = vpow.pop %v7529
    %v7531 = vadd.f32 %v7530, 1.0
    %v7532 = vrcp.pop %v7531
    %v7533 = vmul.f32 1.0, %v7532
    %v7534 = vtanh.pop %v7520
    %v7535 = vsub.f32 0.0, %v7521
    %v7536 = vmul.f32 %v7535, 1.442695
    %v7537 = vpow.pop %v7536
    %v7538 = vadd.f32 %v7537, 1.0
    %v7539 = vrcp.pop %v7538
    %v7540 = vmul.f32 1.0, %v7539
    %v7542 = vrot.slane %v7300, 2
    %v7544 = vmul.f32 %v7533, %v7542
    %v7545 = vmul.f32 %v7527, %v7534
    %v7546 = vadd.f32 %v7544, %v7545
    %v7547 = vtanh.pop %v7546
    %v7548 = vmul.f32 %v7540, %v7547
    %v7549 = vpack.c.bf16 %v7419, %v7419
    %7550 = vmatprep.subr.bf16.mxu0 %v6120
    %7551 = vmatpush1.bf16.msra.mxu0 %v6119
    %7552 = vmatprep.subr.bf16.mxu0 %v6116
    %7553 = vmatpush1.bf16.msra.mxu0 %v6115
    %7554 = vmatprep.subr.bf16.mxu0 %v6112
    %7555 = vmatpush1.bf16.msra.mxu0 %v6111
    %7556 = vmatprep.subr.bf16.mxu0 %v6108
    %7557 = vmatpush1.bf16.msra.mxu0 %v6107
    %7558 = vmatprep.subr.bf16.mxu0 %v6104
    %7559 = vmatpush1.bf16.msra.mxu0 %v6103
    %7560 = vmatprep.subr.bf16.mxu0 %v6100
    %7561 = vmatpush1.bf16.msra.mxu0 %v6099
    %7562 = vmatprep.subr.bf16.mxu0 %v6096
    %7563 = vmatpush1.bf16.msra.mxu0 %v6095
    %7564 = vmatprep.subr.bf16.mxu0 %v6092
    %7565 = vmatpush1.bf16.msra.mxu0 %v6091
    %7566 = vmatprep.subr.bf16.mxu0 0
    %7567 = vmatpush2.bf16.msra.mxu0 0
    %7568 = vmatprep.subr.bf16.mxu0 0
    %7569 = vmatpush2.bf16.msra.mxu0 0
    %7570 = vmatprep.subr.bf16.mxu0 0
    %7571 = vmatpush2.bf16.msra.mxu0 0
    %7572 = vmatprep.subr.bf16.mxu0 0
    %7573 = vmatpush2.bf16.msra.mxu0 0
    %7574 = vmatprep.subr.bf16.mxu0 0
    %7575 = vmatpush2.bf16.msra.mxu0 0
    %7576 = vmatprep.subr.bf16.mxu0 0
    %7577 = vmatpush2.bf16.msra.mxu0 0
    %7578 = vmatprep.subr.bf16.mxu0 0
    %7579 = vmatpush2.bf16.msra.mxu0 0
    %7580 = vmatprep.subr.bf16.mxu0 0
    %7581 = vmatpush2.bf16.msra.mxu0 0
    %7582 = vmatprep.mubr.bf16.mxu0 0
    %7583 = vmatmul.mubr.bf16.gmra.mxu0 %v7549
    %v7584 = vpop.f32.mrf.mxu0
    %v7585 = vadd.f32 0.0, %v7584
    %v7586 = vpop.f32.mrf.mxu0
    %v7587 = vadd.f32 0.0, %v7586
    %v7588 = vpop.f32.mrf.mxu0
    %v7589 = vpop.f32.mrf.mxu0
    %7590 = vdwg.mxu0
    %7591 = vmatprep.subr.bf16.mxu0 %v6122
    %7592 = vmatpush1.bf16.msra.mxu0 %v6121
    %7593 = vmatprep.subr.bf16.mxu0 %v6118
    %7594 = vmatpush1.bf16.msra.mxu0 %v6117
    %7595 = vmatprep.subr.bf16.mxu0 %v6114
    %7596 = vmatpush1.bf16.msra.mxu0 %v6113
    %7597 = vmatprep.subr.bf16.mxu0 %v6110
    %7598 = vmatpush1.bf16.msra.mxu0 %v6109
    %7599 = vmatprep.subr.bf16.mxu0 %v6106
    %7600 = vmatpush1.bf16.msra.mxu0 %v6105
    %7601 = vmatprep.subr.bf16.mxu0 %v6102
    %7602 = vmatpush1.bf16.msra.mxu0 %v6101
    %7603 = vmatprep.subr.bf16.mxu0 %v6098
    %7604 = vmatpush1.bf16.msra.mxu0 %v6097
    %7605 = vmatprep.subr.bf16.mxu0 %v6094
    %7606 = vmatpush1.bf16.msra.mxu0 %v6093
    %7607 = vmatprep.subr.bf16.mxu0 0
    %7608 = vmatpush2.bf16.msra.mxu0 0
    %7609 = vmatprep.subr.bf16.mxu0 0
    %7610 = vmatpush2.bf16.msra.mxu0 0
    %7611 = vmatprep.subr.bf16.mxu0 0
    %7612 = vmatpush2.bf16.msra.mxu0 0
    %7613 = vmatprep.subr.bf16.mxu0 0
    %7614 = vmatpush2.bf16.msra.mxu0 0
    %7615 = vmatprep.subr.bf16.mxu0 0
    %7616 = vmatpush2.bf16.msra.mxu0 0
    %7617 = vmatprep.subr.bf16.mxu0 0
    %7618 = vmatpush2.bf16.msra.mxu0 0
    %7619 = vmatprep.subr.bf16.mxu0 0
    %7620 = vmatpush2.bf16.msra.mxu0 0
    %7621 = vmatprep.subr.bf16.mxu0 0
    %7622 = vmatpush2.bf16.msra.mxu0 0
    %7623 = vmatprep.mubr.bf16.mxu0 0
    %7624 = vmatmul.mubr.bf16.gmra.mxu0 %v7549
    %v7625 = vpop.f32.mrf.mxu0
    %v7626 = vadd.f32 0.0, %v7625
    %v7627 = vpop.f32.mrf.mxu0
    %v7628 = vadd.f32 0.0, %v7627
    %v7629 = vpop.f32.mrf.mxu0
    %v7630 = vpop.f32.mrf.mxu0
    %7631 = vdwg.mxu0
    %v7636 = vrot.slane %v7585, 6
    %v7637 = vrot.slane %v7587, 6
    %v7638 = vrot.slane %v7626, 6
    %v7639 = vrot.slane %v7628, 6
    %v7644 = vadd.f32 %v5766, %v7636
    %v7645 = vadd.f32 %v5768, %v7637
    %v7646 = vadd.f32 %v5817, %v7638
    %v7647 = vadd.f32 %v5819, %v7639
    %v7648 = vsub.f32 0.0, %v7644
    %v7649 = vmul.f32 %v7648, 1.442695
    %v7650 = vpow.pop %v7649
    %v7651 = vadd.f32 %v7650, 1.0
    %v7652 = vrcp.pop %v7651
    %v7653 = vmul.f32 1.0, %v7652
    %v7654 = vsub.f32 0.0, %v7645
    %v7655 = vmul.f32 %v7654, 1.442695
    %v7656 = vpow.pop %v7655
    %v7657 = vadd.f32 %v7656, 1.0
    %v7658 = vrcp.pop %v7657
    %v7659 = vmul.f32 1.0, %v7658
    %v7660 = vtanh.pop %v7646
    %v7661 = vsub.f32 0.0, %v7647
    %v7662 = vmul.f32 %v7661, 1.442695
    %v7663 = vpow.pop %v7662
    %v7664 = vadd.f32 %v7663, 1.0
    %v7665 = vrcp.pop %v7664
    %v7666 = vmul.f32 1.0, %v7665
    %v7668 = vrot.slane %v7417, 6
    %v7670 = vmul.f32 %v7659, %v7668
    %v7671 = vmul.f32 %v7653, %v7660
    %v7672 = vadd.f32 %v7670, %v7671
    %v7673 = vtanh.pop %v7672
    %v7674 = vmul.f32 %v7666, %v7673
    %v7675 = vpack.c.bf16 %v7548, %v7548
    %v7677 = vrot.slane %v7675, 1
    %7679 = vmatprep.subr.bf16.mxu0 %v6390
    %7680 = vmatpush1.bf16.msra.mxu0 %v6389
    %7681 = vmatprep.subr.bf16.mxu0 %v6386
    %7682 = vmatpush1.bf16.msra.mxu0 %v6385
    %7683 = vmatprep.subr.bf16.mxu0 %v6382
    %7684 = vmatpush1.bf16.msra.mxu0 %v6381
    %7685 = vmatprep.subr.bf16.mxu0 %v6378
    %7686 = vmatpush1.bf16.msra.mxu0 %v6377
    %7687 = vmatprep.subr.bf16.mxu0 %v6374
    %7688 = vmatpush1.bf16.msra.mxu0 %v6373
    %7689 = vmatprep.subr.bf16.mxu0 %v6370
    %7690 = vmatpush1.bf16.msra.mxu0 %v6369
    %7691 = vmatprep.subr.bf16.mxu0 %v6366
    %7692 = vmatpush1.bf16.msra.mxu0 %v6365
    %7693 = vmatprep.subr.bf16.mxu0 %v6362
    %7694 = vmatpush1.bf16.msra.mxu0 %v6361
    %7695 = vmatprep.subr.bf16.mxu0 0
    %7696 = vmatpush2.bf16.msra.mxu0 0
    %7697 = vmatprep.subr.bf16.mxu0 0
    %7698 = vmatpush2.bf16.msra.mxu0 0
    %7699 = vmatprep.subr.bf16.mxu0 0
    %7700 = vmatpush2.bf16.msra.mxu0 0
    %7701 = vmatprep.subr.bf16.mxu0 0
    %7702 = vmatpush2.bf16.msra.mxu0 0
    %7703 = vmatprep.subr.bf16.mxu0 0
    %7704 = vmatpush2.bf16.msra.mxu0 0
    %7705 = vmatprep.subr.bf16.mxu0 0
    %7706 = vmatpush2.bf16.msra.mxu0 0
    %7707 = vmatprep.subr.bf16.mxu0 0
    %7708 = vmatpush2.bf16.msra.mxu0 0
    %7709 = vmatprep.subr.bf16.mxu0 0
    %7710 = vmatpush2.bf16.msra.mxu0 0
    %7711 = vmatprep.mubr.bf16.mxu0 0
    %7712 = vmatmul.mubr.bf16.gmra.mxu0 %v7677
    %v7713 = vpop.f32.mrf.mxu0
    %v7714 = vadd.f32 0.0, %v7713
    %v7715 = vpop.f32.mrf.mxu0
    %v7716 = vadd.f32 0.0, %v7715
    %v7717 = vpop.f32.mrf.mxu0
    %v7718 = vpop.f32.mrf.mxu0
    %7719 = vdwg.mxu0
    %7720 = vmatprep.subr.bf16.mxu0 %v6392
    %7721 = vmatpush1.bf16.msra.mxu0 %v6391
    %7722 = vmatprep.subr.bf16.mxu0 %v6388
    %7723 = vmatpush1.bf16.msra.mxu0 %v6387
    %7724 = vmatprep.subr.bf16.mxu0 %v6384
    %7725 = vmatpush1.bf16.msra.mxu0 %v6383
    %7726 = vmatprep.subr.bf16.mxu0 %v6380
    %7727 = vmatpush1.bf16.msra.mxu0 %v6379
    %7728 = vmatprep.subr.bf16.mxu0 %v6376
    %7729 = vmatpush1.bf16.msra.mxu0 %v6375
    %7730 = vmatprep.subr.bf16.mxu0 %v6372
    %7731 = vmatpush1.bf16.msra.mxu0 %v6371
    %7732 = vmatprep.subr.bf16.mxu0 %v6368
    %7733 = vmatpush1.bf16.msra.mxu0 %v6367
    %7734 = vmatprep.subr.bf16.mxu0 %v6364
    %7735 = vmatpush1.bf16.msra.mxu0 %v6363
    %7736 = vmatprep.subr.bf16.mxu0 0
    %7737 = vmatpush2.bf16.msra.mxu0 0
    %7738 = vmatprep.subr.bf16.mxu0 0
    %7739 = vmatpush2.bf16.msra.mxu0 0
    %7740 = vmatprep.subr.bf16.mxu0 0
    %7741 = vmatpush2.bf16.msra.mxu0 0
    %7742 = vmatprep.subr.bf16.mxu0 0
    %7743 = vmatpush2.bf16.msra.mxu0 0
    %7744 = vmatprep.subr.bf16.mxu0 0
    %7745 = vmatpush2.bf16.msra.mxu0 0
    %7746 = vmatprep.subr.bf16.mxu0 0
    %7747 = vmatpush2.bf16.msra.mxu0 0
    %7748 = vmatprep.subr.bf16.mxu0 0
    %7749 = vmatpush2.bf16.msra.mxu0 0
    %7750 = vmatprep.subr.bf16.mxu0 0
    %7751 = vmatpush2.bf16.msra.mxu0 0
    %7752 = vmatprep.mubr.bf16.mxu0 0
    %7753 = vmatmul.mubr.bf16.gmra.mxu0 %v7677
    %v7754 = vpop.f32.mrf.mxu0
    %v7755 = vadd.f32 0.0, %v7754
    %v7756 = vpop.f32.mrf.mxu0
    %v7757 = vadd.f32 0.0, %v7756
    %v7758 = vpop.f32.mrf.mxu0
    %v7759 = vpop.f32.mrf.mxu0
    %7760 = vdwg.mxu0
    %v7761 = vadd.f32 %v5868, %v7714
    %v7762 = vadd.f32 %v5870, %v7716
    %v7763 = vadd.f32 %v5919, %v7755
    %v7764 = vadd.f32 %v5921, %v7757
    %v7765 = vsub.f32 0.0, %v7761
    %v7766 = vmul.f32 %v7765, 1.442695
    %v7767 = vpow.pop %v7766
    %v7768 = vadd.f32 %v7767, 1.0
    %v7769 = vrcp.pop %v7768
    %v7770 = vmul.f32 1.0, %v7769
    %v7771 = vsub.f32 0.0, %v7762
    %v7772 = vmul.f32 %v7771, 1.442695
    %v7773 = vpow.pop %v7772
    %v7774 = vadd.f32 %v7773, 1.0
    %v7775 = vrcp.pop %v7774
    %v7776 = vmul.f32 1.0, %v7775
    %v7777 = vtanh.pop %v7763
    %v7778 = vsub.f32 0.0, %v7764
    %v7779 = vmul.f32 %v7778, 1.442695
    %v7780 = vpow.pop %v7779
    %v7781 = vadd.f32 %v7780, 1.0
    %v7782 = vrcp.pop %v7781
    %v7783 = vmul.f32 1.0, %v7782
    %v7785 = vrot.slane %v7546, 2
    %v7787 = vmul.f32 %v7776, %v7785
    %v7788 = vmul.f32 %v7770, %v7777
    %v7789 = vadd.f32 %v7787, %v7788
    %v7790 = vtanh.pop %v7789
    %v7791 = vmul.f32 %v7783, %v7790
    %v7792 = vpack.c.bf16 %v7674, %v7674
    %v7794 = vrot.slane %v7792, 1
    %7796 = vmatprep.subr.bf16.mxu0 %v6120
    %7797 = vmatpush1.bf16.msra.mxu0 %v6119
    %7798 = vmatprep.subr.bf16.mxu0 %v6116
    %7799 = vmatpush1.bf16.msra.mxu0 %v6115
    %7800 = vmatprep.subr.bf16.mxu0 %v6112
    %7801 = vmatpush1.bf16.msra.mxu0 %v6111
    %7802 = vmatprep.subr.bf16.mxu0 %v6108
    %7803 = vmatpush1.bf16.msra.mxu0 %v6107
    %7804 = vmatprep.subr.bf16.mxu0 %v6104
    %7805 = vmatpush1.bf16.msra.mxu0 %v6103
    %7806 = vmatprep.subr.bf16.mxu0 %v6100
    %7807 = vmatpush1.bf16.msra.mxu0 %v6099
    %7808 = vmatprep.subr.bf16.mxu0 %v6096
    %7809 = vmatpush1.bf16.msra.mxu0 %v6095
    %7810 = vmatprep.subr.bf16.mxu0 %v6092
    %7811 = vmatpush1.bf16.msra.mxu0 %v6091
    %7812 = vmatprep.subr.bf16.mxu0 0
    %7813 = vmatpush2.bf16.msra.mxu0 0
    %7814 = vmatprep.subr.bf16.mxu0 0
    %7815 = vmatpush2.bf16.msra.mxu0 0
    %7816 = vmatprep.subr.bf16.mxu0 0
    %7817 = vmatpush2.bf16.msra.mxu0 0
    %7818 = vmatprep.subr.bf16.mxu0 0
    %7819 = vmatpush2.bf16.msra.mxu0 0
    %7820 = vmatprep.subr.bf16.mxu0 0
    %7821 = vmatpush2.bf16.msra.mxu0 0
    %7822 = vmatprep.subr.bf16.mxu0 0
    %7823 = vmatpush2.bf16.msra.mxu0 0
    %7824 = vmatprep.subr.bf16.mxu0 0
    %7825 = vmatpush2.bf16.msra.mxu0 0
    %7826 = vmatprep.subr.bf16.mxu0 0
    %7827 = vmatpush2.bf16.msra.mxu0 0
    %7828 = vmatprep.mubr.bf16.mxu0 0
    %7829 = vmatmul.mubr.bf16.gmra.mxu0 %v7794
    %v7830 = vpop.f32.mrf.mxu0
    %v7831 = vadd.f32 0.0, %v7830
    %v7832 = vpop.f32.mrf.mxu0
    %v7833 = vadd.f32 0.0, %v7832
    %v7834 = vpop.f32.mrf.mxu0
    %v7835 = vpop.f32.mrf.mxu0
    %7836 = vdwg.mxu0
    %7837 = vmatprep.subr.bf16.mxu0 %v6122
    %7838 = vmatpush1.bf16.msra.mxu0 %v6121
    %7839 = vmatprep.subr.bf16.mxu0 %v6118
    %7840 = vmatpush1.bf16.msra.mxu0 %v6117
    %7841 = vmatprep.subr.bf16.mxu0 %v6114
    %7842 = vmatpush1.bf16.msra.mxu0 %v6113
    %7843 = vmatprep.subr.bf16.mxu0 %v6110
    %7844 = vmatpush1.bf16.msra.mxu0 %v6109
    %7845 = vmatprep.subr.bf16.mxu0 %v6106
    %7846 = vmatpush1.bf16.msra.mxu0 %v6105
    %7847 = vmatprep.subr.bf16.mxu0 %v6102
    %7848 = vmatpush1.bf16.msra.mxu0 %v6101
    %7849 = vmatprep.subr.bf16.mxu0 %v6098
    %7850 = vmatpush1.bf16.msra.mxu0 %v6097
    %7851 = vmatprep.subr.bf16.mxu0 %v6094
    %7852 = vmatpush1.bf16.msra.mxu0 %v6093
    %7853 = vmatprep.subr.bf16.mxu0 0
    %7854 = vmatpush2.bf16.msra.mxu0 0
    %7855 = vmatprep.subr.bf16.mxu0 0
    %7856 = vmatpush2.bf16.msra.mxu0 0
    %7857 = vmatprep.subr.bf16.mxu0 0
    %7858 = vmatpush2.bf16.msra.mxu0 0
    %7859 = vmatprep.subr.bf16.mxu0 0
    %7860 = vmatpush2.bf16.msra.mxu0 0
    %7861 = vmatprep.subr.bf16.mxu0 0
    %7862 = vmatpush2.bf16.msra.mxu0 0
    %7863 = vmatprep.subr.bf16.mxu0 0
    %7864 = vmatpush2.bf16.msra.mxu0 0
    %7865 = vmatprep.subr.bf16.mxu0 0
    %7866 = vmatpush2.bf16.msra.mxu0 0
    %7867 = vmatprep.subr.bf16.mxu0 0
    %7868 = vmatpush2.bf16.msra.mxu0 0
    %7869 = vmatprep.mubr.bf16.mxu0 0
    %7870 = vmatmul.mubr.bf16.gmra.mxu0 %v7794
    %v7871 = vpop.f32.mrf.mxu0
    %v7872 = vadd.f32 0.0, %v7871
    %v7873 = vpop.f32.mrf.mxu0
    %v7874 = vadd.f32 0.0, %v7873
    %v7875 = vpop.f32.mrf.mxu0
    %v7876 = vpop.f32.mrf.mxu0
    %7877 = vdwg.mxu0
    %v7882 = vrot.slane %v7831, 4
    %v7883 = vrot.slane %v7833, 4
    %v7884 = vrot.slane %v7872, 4
    %v7885 = vrot.slane %v7874, 4
    %v7890 = vadd.f32 %v5766, %v7882
    %v7891 = vadd.f32 %v5768, %v7883
    %v7892 = vadd.f32 %v5817, %v7884
    %v7893 = vadd.f32 %v5819, %v7885
    %v7894 = vsub.f32 0.0, %v7890
    %v7895 = vmul.f32 %v7894, 1.442695
    %v7896 = vpow.pop %v7895
    %v7897 = vadd.f32 %v7896, 1.0
    %v7898 = vrcp.pop %v7897
    %v7899 = vmul.f32 1.0, %v7898
    %v7900 = vsub.f32 0.0, %v7891
    %v7901 = vmul.f32 %v7900, 1.442695
    %v7902 = vpow.pop %v7901
    %v7903 = vadd.f32 %v7902, 1.0
    %v7904 = vrcp.pop %v7903
    %v7905 = vmul.f32 1.0, %v7904
    %v7906 = vtanh.pop %v7892
    %v7907 = vsub.f32 0.0, %v7893
    %v7908 = vmul.f32 %v7907, 1.442695
    %v7909 = vpow.pop %v7908
    %v7910 = vadd.f32 %v7909, 1.0
    %v7911 = vrcp.pop %v7910
    %v7912 = vmul.f32 1.0, %v7911
    %v7914 = vrot.slane %v7672, 6
    %v7916 = vmul.f32 %v7905, %v7914
    %v7917 = vmul.f32 %v7899, %v7906
    %v7918 = vadd.f32 %v7916, %v7917
    %v7919 = vtanh.pop %v7918
    %v7920 = vmul.f32 %v7912, %v7919
    %v7921 = vpack.c.bf16 %v7791, %v7791
    %7922 = vmatprep.subr.bf16.mxu0 %v6390
    %7923 = vmatpush1.bf16.msra.mxu0 %v6389
    %7924 = vmatprep.subr.bf16.mxu0 %v6386
    %7925 = vmatpush1.bf16.msra.mxu0 %v6385
    %7926 = vmatprep.subr.bf16.mxu0 %v6382
    %7927 = vmatpush1.bf16.msra.mxu0 %v6381
    %7928 = vmatprep.subr.bf16.mxu0 %v6378
    %7929 = vmatpush1.bf16.msra.mxu0 %v6377
    %7930 = vmatprep.subr.bf16.mxu0 %v6374
    %7931 = vmatpush1.bf16.msra.mxu0 %v6373
    %7932 = vmatprep.subr.bf16.mxu0 %v6370
    %7933 = vmatpush1.bf16.msra.mxu0 %v6369
    %7934 = vmatprep.subr.bf16.mxu0 %v6366
    %7935 = vmatpush1.bf16.msra.mxu0 %v6365
    %7936 = vmatprep.subr.bf16.mxu0 %v6362
    %7937 = vmatpush1.bf16.msra.mxu0 %v6361
    %7938 = vmatprep.subr.bf16.mxu0 0
    %7939 = vmatpush2.bf16.msra.mxu0 0
    %7940 = vmatprep.subr.bf16.mxu0 0
    %7941 = vmatpush2.bf16.msra.mxu0 0
    %7942 = vmatprep.subr.bf16.mxu0 0
    %7943 = vmatpush2.bf16.msra.mxu0 0
    %7944 = vmatprep.subr.bf16.mxu0 0
    %7945 = vmatpush2.bf16.msra.mxu0 0
    %7946 = vmatprep.subr.bf16.mxu0 0
    %7947 = vmatpush2.bf16.msra.mxu0 0
    %7948 = vmatprep.subr.bf16.mxu0 0
    %7949 = vmatpush2.bf16.msra.mxu0 0
    %7950 = vmatprep.subr.bf16.mxu0 0
    %7951 = vmatpush2.bf16.msra.mxu0 0
    %7952 = vmatprep.subr.bf16.mxu0 0
    %7953 = vmatpush2.bf16.msra.mxu0 0
    %7954 = vmatprep.mubr.bf16.mxu0 0
    %7955 = vmatmul.mubr.bf16.gmra.mxu0 %v7921
    %v7956 = vpop.f32.mrf.mxu0
    %v7957 = vadd.f32 0.0, %v7956
    %v7958 = vpop.f32.mrf.mxu0
    %v7959 = vadd.f32 0.0, %v7958
    %v7960 = vpop.f32.mrf.mxu0
    %v7961 = vpop.f32.mrf.mxu0
    %7962 = vdwg.mxu0
    %7963 = vmatprep.subr.bf16.mxu0 %v6392
    %7964 = vmatpush1.bf16.msra.mxu0 %v6391
    %7965 = vmatprep.subr.bf16.mxu0 %v6388
    %7966 = vmatpush1.bf16.msra.mxu0 %v6387
    %7967 = vmatprep.subr.bf16.mxu0 %v6384
    %7968 = vmatpush1.bf16.msra.mxu0 %v6383
    %7969 = vmatprep.subr.bf16.mxu0 %v6380
    %7970 = vmatpush1.bf16.msra.mxu0 %v6379
    %7971 = vmatprep.subr.bf16.mxu0 %v6376
    %7972 = vmatpush1.bf16.msra.mxu0 %v6375
    %7973 = vmatprep.subr.bf16.mxu0 %v6372
    %7974 = vmatpush1.bf16.msra.mxu0 %v6371
    %7975 = vmatprep.subr.bf16.mxu0 %v6368
    %7976 = vmatpush1.bf16.msra.mxu0 %v6367
    %7977 = vmatprep.subr.bf16.mxu0 %v6364
    %7978 = vmatpush1.bf16.msra.mxu0 %v6363
    %7979 = vmatprep.subr.bf16.mxu0 0
    %7980 = vmatpush2.bf16.msra.mxu0 0
    %7981 = vmatprep.subr.bf16.mxu0 0
    %7982 = vmatpush2.bf16.msra.mxu0 0
    %7983 = vmatprep.subr.bf16.mxu0 0
    %7984 = vmatpush2.bf16.msra.mxu0 0
    %7985 = vmatprep.subr.bf16.mxu0 0
    %7986 = vmatpush2.bf16.msra.mxu0 0
    %7987 = vmatprep.subr.bf16.mxu0 0
    %7988 = vmatpush2.bf16.msra.mxu0 0
    %7989 = vmatprep.subr.bf16.mxu0 0
    %7990 = vmatpush2.bf16.msra.mxu0 0
    %7991 = vmatprep.subr.bf16.mxu0 0
    %7992 = vmatpush2.bf16.msra.mxu0 0
    %7993 = vmatprep.subr.bf16.mxu0 0
    %7994 = vmatpush2.bf16.msra.mxu0 0
    %7995 = vmatprep.mubr.bf16.mxu0 0
    %7996 = vmatmul.mubr.bf16.gmra.mxu0 %v7921
    %v7997 = vpop.f32.mrf.mxu0
    %v7998 = vadd.f32 0.0, %v7997
    %v7999 = vpop.f32.mrf.mxu0
    %v8000 = vadd.f32 0.0, %v7999
    %v8001 = vpop.f32.mrf.mxu0
    %v8002 = vpop.f32.mrf.mxu0
    %8003 = vdwg.mxu0
    %v8008 = vrot.slane %v7957, 2
    %v8009 = vrot.slane %v7959, 2
    %v8010 = vrot.slane %v7998, 2
    %v8011 = vrot.slane %v8000, 2
    %v8016 = vadd.f32 %v5864, %v8008
    %v8017 = vadd.f32 %v5866, %v8009
    %v8018 = vadd.f32 %v5915, %v8010
    %v8019 = vadd.f32 %v5917, %v8011
    %v8020 = vsub.f32 0.0, %v8016
    %v8021 = vmul.f32 %v8020, 1.442695
    %v8022 = vpow.pop %v8021
    %v8023 = vadd.f32 %v8022, 1.0
    %v8024 = vrcp.pop %v8023
    %v8025 = vmul.f32 1.0, %v8024
    %v8026 = vsub.f32 0.0, %v8017
    %v8027 = vmul.f32 %v8026, 1.442695
    %v8028 = vpow.pop %v8027
    %v8029 = vadd.f32 %v8028, 1.0
    %v8030 = vrcp.pop %v8029
    %v8031 = vmul.f32 1.0, %v8030
    %v8032 = vtanh.pop %v8018
    %v8033 = vsub.f32 0.0, %v8019
    %v8034 = vmul.f32 %v8033, 1.442695
    %v8035 = vpow.pop %v8034
    %v8036 = vadd.f32 %v8035, 1.0
    %v8037 = vrcp.pop %v8036
    %v8038 = vmul.f32 1.0, %v8037
    %v8040 = vrot.slane %v7789, 2
    %v8042 = vmul.f32 %v8031, %v8040
    %v8043 = vmul.f32 %v8025, %v8032
    %v8044 = vadd.f32 %v8042, %v8043
    %v8045 = vtanh.pop %v8044
    %v8046 = vmul.f32 %v8038, %v8045
    %v8047 = vpack.c.bf16 %v7920, %v7920
    %v8049 = vrot.slane %v8047, 2
    %8051 = vmatprep.subr.bf16.mxu0 %v6120
    %8052 = vmatpush1.bf16.msra.mxu0 %v6119
    %8053 = vmatprep.subr.bf16.mxu0 %v6116
    %8054 = vmatpush1.bf16.msra.mxu0 %v6115
    %8055 = vmatprep.subr.bf16.mxu0 %v6112
    %8056 = vmatpush1.bf16.msra.mxu0 %v6111
    %8057 = vmatprep.subr.bf16.mxu0 %v6108
    %8058 = vmatpush1.bf16.msra.mxu0 %v6107
    %8059 = vmatprep.subr.bf16.mxu0 %v6104
    %8060 = vmatpush1.bf16.msra.mxu0 %v6103
    %8061 = vmatprep.subr.bf16.mxu0 %v6100
    %8062 = vmatpush1.bf16.msra.mxu0 %v6099
    %8063 = vmatprep.subr.bf16.mxu0 %v6096
    %8064 = vmatpush1.bf16.msra.mxu0 %v6095
    %8065 = vmatprep.subr.bf16.mxu0 %v6092
    %8066 = vmatpush1.bf16.msra.mxu0 %v6091
    %8067 = vmatprep.subr.bf16.mxu0 0
    %8068 = vmatpush2.bf16.msra.mxu0 0
    %8069 = vmatprep.subr.bf16.mxu0 0
    %8070 = vmatpush2.bf16.msra.mxu0 0
    %8071 = vmatprep.subr.bf16.mxu0 0
    %8072 = vmatpush2.bf16.msra.mxu0 0
    %8073 = vmatprep.subr.bf16.mxu0 0
    %8074 = vmatpush2.bf16.msra.mxu0 0
    %8075 = vmatprep.subr.bf16.mxu0 0
    %8076 = vmatpush2.bf16.msra.mxu0 0
    %8077 = vmatprep.subr.bf16.mxu0 0
    %8078 = vmatpush2.bf16.msra.mxu0 0
    %8079 = vmatprep.subr.bf16.mxu0 0
    %8080 = vmatpush2.bf16.msra.mxu0 0
    %8081 = vmatprep.subr.bf16.mxu0 0
    %8082 = vmatpush2.bf16.msra.mxu0 0
    %8083 = vmatprep.mubr.bf16.mxu0 0
    %8084 = vmatmul.mubr.bf16.gmra.mxu0 %v8049
    %v8085 = vpop.f32.mrf.mxu0
    %v8086 = vadd.f32 0.0, %v8085
    %v8087 = vpop.f32.mrf.mxu0
    %v8088 = vadd.f32 0.0, %v8087
    %v8089 = vpop.f32.mrf.mxu0
    %v8090 = vpop.f32.mrf.mxu0
    %8091 = vdwg.mxu0
    %8092 = vmatprep.subr.bf16.mxu0 %v6122
    %8093 = vmatpush1.bf16.msra.mxu0 %v6121
    %8094 = vmatprep.subr.bf16.mxu0 %v6118
    %8095 = vmatpush1.bf16.msra.mxu0 %v6117
    %8096 = vmatprep.subr.bf16.mxu0 %v6114
    %8097 = vmatpush1.bf16.msra.mxu0 %v6113
    %8098 = vmatprep.subr.bf16.mxu0 %v6110
    %8099 = vmatpush1.bf16.msra.mxu0 %v6109
    %8100 = vmatprep.subr.bf16.mxu0 %v6106
    %8101 = vmatpush1.bf16.msra.mxu0 %v6105
    %8102 = vmatprep.subr.bf16.mxu0 %v6102
    %8103 = vmatpush1.bf16.msra.mxu0 %v6101
    %8104 = vmatprep.subr.bf16.mxu0 %v6098
    %8105 = vmatpush1.bf16.msra.mxu0 %v6097
    %8106 = vmatprep.subr.bf16.mxu0 %v6094
    %8107 = vmatpush1.bf16.msra.mxu0 %v6093
    %8108 = vmatprep.subr.bf16.mxu0 0
    %8109 = vmatpush2.bf16.msra.mxu0 0
    %8110 = vmatprep.subr.bf16.mxu0 0
    %8111 = vmatpush2.bf16.msra.mxu0 0
    %8112 = vmatprep.subr.bf16.mxu0 0
    %8113 = vmatpush2.bf16.msra.mxu0 0
    %8114 = vmatprep.subr.bf16.mxu0 0
    %8115 = vmatpush2.bf16.msra.mxu0 0
    %8116 = vmatprep.subr.bf16.mxu0 0
    %8117 = vmatpush2.bf16.msra.mxu0 0
    %8118 = vmatprep.subr.bf16.mxu0 0
    %8119 = vmatpush2.bf16.msra.mxu0 0
    %8120 = vmatprep.subr.bf16.mxu0 0
    %8121 = vmatpush2.bf16.msra.mxu0 0
    %8122 = vmatprep.subr.bf16.mxu0 0
    %8123 = vmatpush2.bf16.msra.mxu0 0
    %8124 = vmatprep.mubr.bf16.mxu0 0
    %8125 = vmatmul.mubr.bf16.gmra.mxu0 %v8049
    %v8126 = vpop.f32.mrf.mxu0
    %v8127 = vadd.f32 0.0, %v8126
    %v8128 = vpop.f32.mrf.mxu0
    %v8129 = vadd.f32 0.0, %v8128
    %v8130 = vpop.f32.mrf.mxu0
    %v8131 = vpop.f32.mrf.mxu0
    %8132 = vdwg.mxu0
    %v8137 = vrot.slane %v8086, 2
    %v8138 = vrot.slane %v8088, 2
    %v8139 = vrot.slane %v8127, 2
    %v8140 = vrot.slane %v8129, 2
    %v8145 = vadd.f32 %v5766, %v8137
    %v8146 = vadd.f32 %v5768, %v8138
    %v8147 = vadd.f32 %v5817, %v8139
    %v8148 = vadd.f32 %v5819, %v8140
    %v8149 = vsub.f32 0.0, %v8145
    %v8150 = vmul.f32 %v8149, 1.442695
    %v8151 = vpow.pop %v8150
    %v8152 = vadd.f32 %v8151, 1.0
    %v8153 = vrcp.pop %v8152
    %v8154 = vmul.f32 1.0, %v8153
    %v8155 = vsub.f32 0.0, %v8146
    %v8156 = vmul.f32 %v8155, 1.442695
    %v8157 = vpow.pop %v8156
    %v8158 = vadd.f32 %v8157, 1.0
    %v8159 = vrcp.pop %v8158
    %v8160 = vmul.f32 1.0, %v8159
    %v8161 = vtanh.pop %v8147
    %v8162 = vsub.f32 0.0, %v8148
    %v8163 = vmul.f32 %v8162, 1.442695
    %v8164 = vpow.pop %v8163
    %v8165 = vadd.f32 %v8164, 1.0
    %v8166 = vrcp.pop %v8165
    %v8167 = vmul.f32 1.0, %v8166
    %v8169 = vrot.slane %v7918, 6
    %v8171 = vmul.f32 %v8160, %v8169
    %v8172 = vmul.f32 %v8154, %v8161
    %v8173 = vadd.f32 %v8171, %v8172
    %v8174 = vtanh.pop %v8173
    %v8175 = vmul.f32 %v8167, %v8174
    %v8176 = vpack.c.bf16 %v8046, %v8046
    %v8178 = vrot.slane %v8176, 3
    %8180 = vmatprep.subr.bf16.mxu0 %v6390
    %8181 = vmatpush1.bf16.msra.mxu0 %v6389
    %8182 = vmatprep.subr.bf16.mxu0 %v6386
    %8183 = vmatpush1.bf16.msra.mxu0 %v6385
    %8184 = vmatprep.subr.bf16.mxu0 %v6382
    %8185 = vmatpush1.bf16.msra.mxu0 %v6381
    %8186 = vmatprep.subr.bf16.mxu0 %v6378
    %8187 = vmatpush1.bf16.msra.mxu0 %v6377
    %8188 = vmatprep.subr.bf16.mxu0 %v6374
    %8189 = vmatpush1.bf16.msra.mxu0 %v6373
    %8190 = vmatprep.subr.bf16.mxu0 %v6370
    %8191 = vmatpush1.bf16.msra.mxu0 %v6369
    %8192 = vmatprep.subr.bf16.mxu0 %v6366
    %8193 = vmatpush1.bf16.msra.mxu0 %v6365
    %8194 = vmatprep.subr.bf16.mxu0 %v6362
    %8195 = vmatpush1.bf16.msra.mxu0 %v6361
    %8196 = vmatprep.subr.bf16.mxu0 0
    %8197 = vmatpush2.bf16.msra.mxu0 0
    %8198 = vmatprep.subr.bf16.mxu0 0
    %8199 = vmatpush2.bf16.msra.mxu0 0
    %8200 = vmatprep.subr.bf16.mxu0 0
    %8201 = vmatpush2.bf16.msra.mxu0 0
    %8202 = vmatprep.subr.bf16.mxu0 0
    %8203 = vmatpush2.bf16.msra.mxu0 0
    %8204 = vmatprep.subr.bf16.mxu0 0
    %8205 = vmatpush2.bf16.msra.mxu0 0
    %8206 = vmatprep.subr.bf16.mxu0 0
    %8207 = vmatpush2.bf16.msra.mxu0 0
    %8208 = vmatprep.subr.bf16.mxu0 0
    %8209 = vmatpush2.bf16.msra.mxu0 0
    %8210 = vmatprep.subr.bf16.mxu0 0
    %8211 = vmatpush2.bf16.msra.mxu0 0
    %8212 = vmatprep.mubr.bf16.mxu0 0
    %8213 = vmatmul.mubr.bf16.gmra.mxu0 %v8178
    %v8214 = vpop.f32.mrf.mxu0
    %v8215 = vadd.f32 0.0, %v8214
    %v8216 = vpop.f32.mrf.mxu0
    %v8217 = vadd.f32 0.0, %v8216
    %v8218 = vpop.f32.mrf.mxu0
    %v8219 = vpop.f32.mrf.mxu0
    %8220 = vdwg.mxu0
    %8221 = vmatprep.subr.bf16.mxu0 %v6392
    %8222 = vmatpush1.bf16.msra.mxu0 %v6391
    %8223 = vmatprep.subr.bf16.mxu0 %v6388
    %8224 = vmatpush1.bf16.msra.mxu0 %v6387
    %8225 = vmatprep.subr.bf16.mxu0 %v6384
    %8226 = vmatpush1.bf16.msra.mxu0 %v6383
    %8227 = vmatprep.subr.bf16.mxu0 %v6380
    %8228 = vmatpush1.bf16.msra.mxu0 %v6379
    %8229 = vmatprep.subr.bf16.mxu0 %v6376
    %8230 = vmatpush1.bf16.msra.mxu0 %v6375
    %8231 = vmatprep.subr.bf16.mxu0 %v6372
    %8232 = vmatpush1.bf16.msra.mxu0 %v6371
    %8233 = vmatprep.subr.bf16.mxu0 %v6368
    %8234 = vmatpush1.bf16.msra.mxu0 %v6367
    %8235 = vmatprep.subr.bf16.mxu0 %v6364
    %8236 = vmatpush1.bf16.msra.mxu0 %v6363
    %8237 = vmatprep.subr.bf16.mxu0 0
    %8238 = vmatpush2.bf16.msra.mxu0 0
    %8239 = vmatprep.subr.bf16.mxu0 0
    %8240 = vmatpush2.bf16.msra.mxu0 0
    %8241 = vmatprep.subr.bf16.mxu0 0
    %8242 = vmatpush2.bf16.msra.mxu0 0
    %8243 = vmatprep.subr.bf16.mxu0 0
    %8244 = vmatpush2.bf16.msra.mxu0 0
    %8245 = vmatprep.subr.bf16.mxu0 0
    %8246 = vmatpush2.bf16.msra.mxu0 0
    %8247 = vmatprep.subr.bf16.mxu0 0
    %8248 = vmatpush2.bf16.msra.mxu0 0
    %8249 = vmatprep.subr.bf16.mxu0 0
    %8250 = vmatpush2.bf16.msra.mxu0 0
    %8251 = vmatprep.subr.bf16.mxu0 0
    %8252 = vmatpush2.bf16.msra.mxu0 0
    %8253 = vmatprep.mubr.bf16.mxu0 0
    %8254 = vmatmul.mubr.bf16.gmra.mxu0 %v8178
    %v8255 = vpop.f32.mrf.mxu0
    %v8256 = vadd.f32 0.0, %v8255
    %v8257 = vpop.f32.mrf.mxu0
    %v8258 = vadd.f32 0.0, %v8257
    %v8259 = vpop.f32.mrf.mxu0
    %v8260 = vpop.f32.mrf.mxu0
    %8261 = vdwg.mxu0
    %v8266 = vrot.slane %v8215, 4
    %v8267 = vrot.slane %v8217, 4
    %v8268 = vrot.slane %v8256, 4
    %v8269 = vrot.slane %v8258, 4
    %v8274 = vadd.f32 %v5864, %v8266
    %v8275 = vadd.f32 %v5866, %v8267
    %v8276 = vadd.f32 %v5915, %v8268
    %v8277 = vadd.f32 %v5917, %v8269
    %v8278 = vsub.f32 0.0, %v8274
    %v8279 = vmul.f32 %v8278, 1.442695
    %v8280 = vpow.pop %v8279
    %v8281 = vadd.f32 %v8280, 1.0
    %v8282 = vrcp.pop %v8281
    %v8283 = vmul.f32 1.0, %v8282
    %v8284 = vsub.f32 0.0, %v8275
    %v8285 = vmul.f32 %v8284, 1.442695
    %v8286 = vpow.pop %v8285
    %v8287 = vadd.f32 %v8286, 1.0
    %v8288 = vrcp.pop %v8287
    %v8289 = vmul.f32 1.0, %v8288
    %v8290 = vtanh.pop %v8276
    %v8291 = vsub.f32 0.0, %v8277
    %v8292 = vmul.f32 %v8291, 1.442695
    %v8293 = vpow.pop %v8292
    %v8294 = vadd.f32 %v8293, 1.0
    %v8295 = vrcp.pop %v8294
    %v8296 = vmul.f32 1.0, %v8295
    %v8298 = vrot.slane %v8044, 2
    %v8300 = vmul.f32 %v8289, %v8298
    %v8301 = vmul.f32 %v8283, %v8290
    %v8302 = vadd.f32 %v8300, %v8301
    %v8303 = vtanh.pop %v8302
    %v8304 = vmul.f32 %v8296, %v8303
    %v8305 = vpack.c.bf16 %v8175, %v8175
    %v8307 = vrot.slane %v8305, 3
    %8309 = vmatprep.subr.bf16.mxu0 %v6120
    %8310 = vmatpush1.bf16.msra.mxu0 %v6119
    %8311 = vmatprep.subr.bf16.mxu0 %v6116
    %8312 = vmatpush1.bf16.msra.mxu0 %v6115
    %8313 = vmatprep.subr.bf16.mxu0 %v6112
    %8314 = vmatpush1.bf16.msra.mxu0 %v6111
    %8315 = vmatprep.subr.bf16.mxu0 %v6108
    %8316 = vmatpush1.bf16.msra.mxu0 %v6107
    %8317 = vmatprep.subr.bf16.mxu0 %v6104
    %8318 = vmatpush1.bf16.msra.mxu0 %v6103
    %8319 = vmatprep.subr.bf16.mxu0 %v6100
    %8320 = vmatpush1.bf16.msra.mxu0 %v6099
    %8321 = vmatprep.subr.bf16.mxu0 %v6096
    %8322 = vmatpush1.bf16.msra.mxu0 %v6095
    %8323 = vmatprep.subr.bf16.mxu0 %v6092
    %8324 = vmatpush1.bf16.msra.mxu0 %v6091
    %8325 = vmatprep.subr.bf16.mxu0 0
    %8326 = vmatpush2.bf16.msra.mxu0 0
    %8327 = vmatprep.subr.bf16.mxu0 0
    %8328 = vmatpush2.bf16.msra.mxu0 0
    %8329 = vmatprep.subr.bf16.mxu0 0
    %8330 = vmatpush2.bf16.msra.mxu0 0
    %8331 = vmatprep.subr.bf16.mxu0 0
    %8332 = vmatpush2.bf16.msra.mxu0 0
    %8333 = vmatprep.subr.bf16.mxu0 0
    %8334 = vmatpush2.bf16.msra.mxu0 0
    %8335 = vmatprep.subr.bf16.mxu0 0
    %8336 = vmatpush2.bf16.msra.mxu0 0
    %8337 = vmatprep.subr.bf16.mxu0 0
    %8338 = vmatpush2.bf16.msra.mxu0 0
    %8339 = vmatprep.subr.bf16.mxu0 0
    %8340 = vmatpush2.bf16.msra.mxu0 0
    %8341 = vmatprep.mubr.bf16.mxu0 0
    %8342 = vmatmul.mubr.bf16.gmra.mxu0 %v8307
    %v8343 = vpop.f32.mrf.mxu0
    %v8344 = vadd.f32 0.0, %v8343
    %v8345 = vpop.f32.mrf.mxu0
    %v8346 = vadd.f32 0.0, %v8345
    %v8347 = vpop.f32.mrf.mxu0
    %v8348 = vpop.f32.mrf.mxu0
    %8349 = vdwg.mxu0
    %8350 = vmatprep.subr.bf16.mxu0 %v6122
    %8351 = vmatpush1.bf16.msra.mxu0 %v6121
    %8352 = vmatprep.subr.bf16.mxu0 %v6118
    %8353 = vmatpush1.bf16.msra.mxu0 %v6117
    %8354 = vmatprep.subr.bf16.mxu0 %v6114
    %8355 = vmatpush1.bf16.msra.mxu0 %v6113
    %8356 = vmatprep.subr.bf16.mxu0 %v6110
    %8357 = vmatpush1.bf16.msra.mxu0 %v6109
    %8358 = vmatprep.subr.bf16.mxu0 %v6106
    %8359 = vmatpush1.bf16.msra.mxu0 %v6105
    %8360 = vmatprep.subr.bf16.mxu0 %v6102
    %8361 = vmatpush1.bf16.msra.mxu0 %v6101
    %8362 = vmatprep.subr.bf16.mxu0 %v6098
    %8363 = vmatpush1.bf16.msra.mxu0 %v6097
    %8364 = vmatprep.subr.bf16.mxu0 %v6094
    %8365 = vmatpush1.bf16.msra.mxu0 %v6093
    %8366 = vmatprep.subr.bf16.mxu0 0
    %8367 = vmatpush2.bf16.msra.mxu0 0
    %8368 = vmatprep.subr.bf16.mxu0 0
    %8369 = vmatpush2.bf16.msra.mxu0 0
    %8370 = vmatprep.subr.bf16.mxu0 0
    %8371 = vmatpush2.bf16.msra.mxu0 0
    %8372 = vmatprep.subr.bf16.mxu0 0
    %8373 = vmatpush2.bf16.msra.mxu0 0
    %8374 = vmatprep.subr.bf16.mxu0 0
    %8375 = vmatpush2.bf16.msra.mxu0 0
    %8376 = vmatprep.subr.bf16.mxu0 0
    %8377 = vmatpush2.bf16.msra.mxu0 0
    %8378 = vmatprep.subr.bf16.mxu0 0
    %8379 = vmatpush2.bf16.msra.mxu0 0
    %8380 = vmatprep.subr.bf16.mxu0 0
    %8381 = vmatpush2.bf16.msra.mxu0 0
    %8382 = vmatprep.mubr.bf16.mxu0 0
    %8383 = vmatmul.mubr.bf16.gmra.mxu0 %v8307
    %v8384 = vpop.f32.mrf.mxu0
    %v8385 = vadd.f32 0.0, %v8384
    %v8386 = vpop.f32.mrf.mxu0
    %v8387 = vadd.f32 0.0, %v8386
    %v8388 = vpop.f32.mrf.mxu0
    %v8389 = vpop.f32.mrf.mxu0
    %8390 = vdwg.mxu0
    %v8391 = vadd.f32 %v5772, %v8344
    %v8392 = vadd.f32 %v5774, %v8346
    %v8393 = vadd.f32 %v5823, %v8385
    %v8394 = vadd.f32 %v5825, %v8387
    %v8395 = vsub.f32 0.0, %v8391
    %v8396 = vmul.f32 %v8395, 1.442695
    %v8397 = vpow.pop %v8396
    %v8398 = vadd.f32 %v8397, 1.0
    %v8399 = vrcp.pop %v8398
    %v8400 = vmul.f32 1.0, %v8399
    %v8401 = vsub.f32 0.0, %v8392
    %v8402 = vmul.f32 %v8401, 1.442695
    %v8403 = vpow.pop %v8402
    %v8404 = vadd.f32 %v8403, 1.0
    %v8405 = vrcp.pop %v8404
    %v8406 = vmul.f32 1.0, %v8405
    %v8407 = vtanh.pop %v8393
    %v8408 = vsub.f32 0.0, %v8394
    %v8409 = vmul.f32 %v8408, 1.442695
    %v8410 = vpow.pop %v8409
    %v8411 = vadd.f32 %v8410, 1.0
    %v8412 = vrcp.pop %v8411
    %v8413 = vmul.f32 1.0, %v8412
    %v8415 = vrot.slane %v8173, 6
    %v8417 = vmul.f32 %v8406, %v8415
    %v8418 = vmul.f32 %v8400, %v8407
    %v8419 = vadd.f32 %v8417, %v8418
    %v8420 = vtanh.pop %v8419
    %v8421 = vmul.f32 %v8413, %v8420
    %v8422 = vpack.c.bf16 %v8304, %v8304
    %v8424 = vrot.slane %v8422, 2
    %8426 = vmatprep.subr.bf16.mxu0 %v6390
    %8427 = vmatpush1.bf16.msra.mxu0 %v6389
    %8428 = vmatprep.subr.bf16.mxu0 %v6386
    %8429 = vmatpush1.bf16.msra.mxu0 %v6385
    %8430 = vmatprep.subr.bf16.mxu0 %v6382
    %8431 = vmatpush1.bf16.msra.mxu0 %v6381
    %8432 = vmatprep.subr.bf16.mxu0 %v6378
    %8433 = vmatpush1.bf16.msra.mxu0 %v6377
    %8434 = vmatprep.subr.bf16.mxu0 %v6374
    %8435 = vmatpush1.bf16.msra.mxu0 %v6373
    %8436 = vmatprep.subr.bf16.mxu0 %v6370
    %8437 = vmatpush1.bf16.msra.mxu0 %v6369
    %8438 = vmatprep.subr.bf16.mxu0 %v6366
    %8439 = vmatpush1.bf16.msra.mxu0 %v6365
    %8440 = vmatprep.subr.bf16.mxu0 %v6362
    %8441 = vmatpush1.bf16.msra.mxu0 %v6361
    %8442 = vmatprep.subr.bf16.mxu0 0
    %8443 = vmatpush2.bf16.msra.mxu0 0
    %8444 = vmatprep.subr.bf16.mxu0 0
    %8445 = vmatpush2.bf16.msra.mxu0 0
    %8446 = vmatprep.subr.bf16.mxu0 0
    %8447 = vmatpush2.bf16.msra.mxu0 0
    %8448 = vmatprep.subr.bf16.mxu0 0
    %8449 = vmatpush2.bf16.msra.mxu0 0
    %8450 = vmatprep.subr.bf16.mxu0 0
    %8451 = vmatpush2.bf16.msra.mxu0 0
    %8452 = vmatprep.subr.bf16.mxu0 0
    %8453 = vmatpush2.bf16.msra.mxu0 0
    %8454 = vmatprep.subr.bf16.mxu0 0
    %8455 = vmatpush2.bf16.msra.mxu0 0
    %8456 = vmatprep.subr.bf16.mxu0 0
    %8457 = vmatpush2.bf16.msra.mxu0 0
    %8458 = vmatprep.mubr.bf16.mxu0 0
    %8459 = vmatmul.mubr.bf16.gmra.mxu0 %v8424
    %v8460 = vpop.f32.mrf.mxu0
    %v8461 = vadd.f32 0.0, %v8460
    %v8462 = vpop.f32.mrf.mxu0
    %v8463 = vadd.f32 0.0, %v8462
    %v8464 = vpop.f32.mrf.mxu0
    %v8465 = vpop.f32.mrf.mxu0
    %8466 = vdwg.mxu0
    %8467 = vmatprep.subr.bf16.mxu0 %v6392
    %8468 = vmatpush1.bf16.msra.mxu0 %v6391
    %8469 = vmatprep.subr.bf16.mxu0 %v6388
    %8470 = vmatpush1.bf16.msra.mxu0 %v6387
    %8471 = vmatprep.subr.bf16.mxu0 %v6384
    %8472 = vmatpush1.bf16.msra.mxu0 %v6383
    %8473 = vmatprep.subr.bf16.mxu0 %v6380
    %8474 = vmatpush1.bf16.msra.mxu0 %v6379
    %8475 = vmatprep.subr.bf16.mxu0 %v6376
    %8476 = vmatpush1.bf16.msra.mxu0 %v6375
    %8477 = vmatprep.subr.bf16.mxu0 %v6372
    %8478 = vmatpush1.bf16.msra.mxu0 %v6371
    %8479 = vmatprep.subr.bf16.mxu0 %v6368
    %8480 = vmatpush1.bf16.msra.mxu0 %v6367
    %8481 = vmatprep.subr.bf16.mxu0 %v6364
    %8482 = vmatpush1.bf16.msra.mxu0 %v6363
    %8483 = vmatprep.subr.bf16.mxu0 0
    %8484 = vmatpush2.bf16.msra.mxu0 0
    %8485 = vmatprep.subr.bf16.mxu0 0
    %8486 = vmatpush2.bf16.msra.mxu0 0
    %8487 = vmatprep.subr.bf16.mxu0 0
    %8488 = vmatpush2.bf16.msra.mxu0 0
    %8489 = vmatprep.subr.bf16.mxu0 0
    %8490 = vmatpush2.bf16.msra.mxu0 0
    %8491 = vmatprep.subr.bf16.mxu0 0
    %8492 = vmatpush2.bf16.msra.mxu0 0
    %8493 = vmatprep.subr.bf16.mxu0 0
    %8494 = vmatpush2.bf16.msra.mxu0 0
    %8495 = vmatprep.subr.bf16.mxu0 0
    %8496 = vmatpush2.bf16.msra.mxu0 0
    %8497 = vmatprep.subr.bf16.mxu0 0
    %8498 = vmatpush2.bf16.msra.mxu0 0
    %8499 = vmatprep.mubr.bf16.mxu0 0
    %8500 = vmatmul.mubr.bf16.gmra.mxu0 %v8424
    %v8501 = vpop.f32.mrf.mxu0
    %v8502 = vadd.f32 0.0, %v8501
    %v8503 = vpop.f32.mrf.mxu0
    %v8504 = vadd.f32 0.0, %v8503
    %v8505 = vpop.f32.mrf.mxu0
    %v8506 = vpop.f32.mrf.mxu0
    %8507 = vdwg.mxu0
    %v8512 = vrot.slane %v8461, 6
    %v8513 = vrot.slane %v8463, 6
    %v8514 = vrot.slane %v8502, 6
    %v8515 = vrot.slane %v8504, 6
    %v8520 = vadd.f32 %v5864, %v8512
    %v8521 = vadd.f32 %v5866, %v8513
    %v8522 = vadd.f32 %v5915, %v8514
    %v8523 = vadd.f32 %v5917, %v8515
    %v8524 = vsub.f32 0.0, %v8520
    %v8525 = vmul.f32 %v8524, 1.442695
    %v8526 = vpow.pop %v8525
    %v8527 = vadd.f32 %v8526, 1.0
    %v8528 = vrcp.pop %v8527
    %v8529 = vmul.f32 1.0, %v8528
    %v8530 = vsub.f32 0.0, %v8521
    %v8531 = vmul.f32 %v8530, 1.442695
    %v8532 = vpow.pop %v8531
    %v8533 = vadd.f32 %v8532, 1.0
    %v8534 = vrcp.pop %v8533
    %v8535 = vmul.f32 1.0, %v8534
    %v8536 = vtanh.pop %v8522
    %v8537 = vsub.f32 0.0, %v8523
    %v8538 = vmul.f32 %v8537, 1.442695
    %v8539 = vpow.pop %v8538
    %v8540 = vadd.f32 %v8539, 1.0
    %v8541 = vrcp.pop %v8540
    %v8542 = vmul.f32 1.0, %v8541
    %v8544 = vrot.slane %v8302, 2
    %v8546 = vmul.f32 %v8535, %v8544
    %v8547 = vmul.f32 %v8529, %v8536
    %v8548 = vadd.f32 %v8546, %v8547
    %v8549 = vtanh.pop %v8548
    %v8550 = vmul.f32 %v8542, %v8549
    %v8551 = vpack.c.bf16 %v8421, %v8421
    %8552 = vmatprep.subr.bf16.mxu0 %v6120
    %8553 = vmatpush1.bf16.msra.mxu0 %v6119
    %8554 = vmatprep.subr.bf16.mxu0 %v6116
    %8555 = vmatpush1.bf16.msra.mxu0 %v6115
    %8556 = vmatprep.subr.bf16.mxu0 %v6112
    %8557 = vmatpush1.bf16.msra.mxu0 %v6111
    %8558 = vmatprep.subr.bf16.mxu0 %v6108
    %8559 = vmatpush1.bf16.msra.mxu0 %v6107
    %8560 = vmatprep.subr.bf16.mxu0 %v6104
    %8561 = vmatpush1.bf16.msra.mxu0 %v6103
    %8562 = vmatprep.subr.bf16.mxu0 %v6100
    %8563 = vmatpush1.bf16.msra.mxu0 %v6099
    %8564 = vmatprep.subr.bf16.mxu0 %v6096
    %8565 = vmatpush1.bf16.msra.mxu0 %v6095
    %8566 = vmatprep.subr.bf16.mxu0 %v6092
    %8567 = vmatpush1.bf16.msra.mxu0 %v6091
    %8568 = vmatprep.subr.bf16.mxu0 0
    %8569 = vmatpush2.bf16.msra.mxu0 0
    %8570 = vmatprep.subr.bf16.mxu0 0
    %8571 = vmatpush2.bf16.msra.mxu0 0
    %8572 = vmatprep.subr.bf16.mxu0 0
    %8573 = vmatpush2.bf16.msra.mxu0 0
    %8574 = vmatprep.subr.bf16.mxu0 0
    %8575 = vmatpush2.bf16.msra.mxu0 0
    %8576 = vmatprep.subr.bf16.mxu0 0
    %8577 = vmatpush2.bf16.msra.mxu0 0
    %8578 = vmatprep.subr.bf16.mxu0 0
    %8579 = vmatpush2.bf16.msra.mxu0 0
    %8580 = vmatprep.subr.bf16.mxu0 0
    %8581 = vmatpush2.bf16.msra.mxu0 0
    %8582 = vmatprep.subr.bf16.mxu0 0
    %8583 = vmatpush2.bf16.msra.mxu0 0
    %8584 = vmatprep.mubr.bf16.mxu0 0
    %8585 = vmatmul.mubr.bf16.gmra.mxu0 %v8551
    %v8586 = vpop.f32.mrf.mxu0
    %v8587 = vadd.f32 0.0, %v8586
    %v8588 = vpop.f32.mrf.mxu0
    %v8589 = vadd.f32 0.0, %v8588
    %v8590 = vpop.f32.mrf.mxu0
    %v8591 = vpop.f32.mrf.mxu0
    %8592 = vdwg.mxu0
    %8593 = vmatprep.subr.bf16.mxu0 %v6122
    %8594 = vmatpush1.bf16.msra.mxu0 %v6121
    %8595 = vmatprep.subr.bf16.mxu0 %v6118
    %8596 = vmatpush1.bf16.msra.mxu0 %v6117
    %8597 = vmatprep.subr.bf16.mxu0 %v6114
    %8598 = vmatpush1.bf16.msra.mxu0 %v6113
    %8599 = vmatprep.subr.bf16.mxu0 %v6110
    %8600 = vmatpush1.bf16.msra.mxu0 %v6109
    %8601 = vmatprep.subr.bf16.mxu0 %v6106
    %8602 = vmatpush1.bf16.msra.mxu0 %v6105
    %8603 = vmatprep.subr.bf16.mxu0 %v6102
    %8604 = vmatpush1.bf16.msra.mxu0 %v6101
    %8605 = vmatprep.subr.bf16.mxu0 %v6098
    %8606 = vmatpush1.bf16.msra.mxu0 %v6097
    %8607 = vmatprep.subr.bf16.mxu0 %v6094
    %8608 = vmatpush1.bf16.msra.mxu0 %v6093
    %8609 = vmatprep.subr.bf16.mxu0 0
    %8610 = vmatpush2.bf16.msra.mxu0 0
    %8611 = vmatprep.subr.bf16.mxu0 0
    %8612 = vmatpush2.bf16.msra.mxu0 0
    %8613 = vmatprep.subr.bf16.mxu0 0
    %8614 = vmatpush2.bf16.msra.mxu0 0
    %8615 = vmatprep.subr.bf16.mxu0 0
    %8616 = vmatpush2.bf16.msra.mxu0 0
    %8617 = vmatprep.subr.bf16.mxu0 0
    %8618 = vmatpush2.bf16.msra.mxu0 0
    %8619 = vmatprep.subr.bf16.mxu0 0
    %8620 = vmatpush2.bf16.msra.mxu0 0
    %8621 = vmatprep.subr.bf16.mxu0 0
    %8622 = vmatpush2.bf16.msra.mxu0 0
    %8623 = vmatprep.subr.bf16.mxu0 0
    %8624 = vmatpush2.bf16.msra.mxu0 0
    %8625 = vmatprep.mubr.bf16.mxu0 0
    %8626 = vmatmul.mubr.bf16.gmra.mxu0 %v8551
    %v8627 = vpop.f32.mrf.mxu0
    %v8628 = vadd.f32 0.0, %v8627
    %v8629 = vpop.f32.mrf.mxu0
    %v8630 = vadd.f32 0.0, %v8629
    %v8631 = vpop.f32.mrf.mxu0
    %v8632 = vpop.f32.mrf.mxu0
    %8633 = vdwg.mxu0
    %v8638 = vrot.slane %v8587, 6
    %v8639 = vrot.slane %v8589, 6
    %v8640 = vrot.slane %v8628, 6
    %v8641 = vrot.slane %v8630, 6
    %v8646 = vadd.f32 %v5772, %v8638
    %v8647 = vadd.f32 %v5774, %v8639
    %v8648 = vadd.f32 %v5823, %v8640
    %v8649 = vadd.f32 %v5825, %v8641
    %v8650 = vsub.f32 0.0, %v8646
    %v8651 = vmul.f32 %v8650, 1.442695
    %v8652 = vpow.pop %v8651
    %v8653 = vadd.f32 %v8652, 1.0
    %v8654 = vrcp.pop %v8653
    %v8655 = vmul.f32 1.0, %v8654
    %v8656 = vsub.f32 0.0, %v8647
    %v8657 = vmul.f32 %v8656, 1.442695
    %v8658 = vpow.pop %v8657
    %v8659 = vadd.f32 %v8658, 1.0
    %v8660 = vrcp.pop %v8659
    %v8661 = vmul.f32 1.0, %v8660
    %v8662 = vtanh.pop %v8648
    %v8663 = vsub.f32 0.0, %v8649
    %v8664 = vmul.f32 %v8663, 1.442695
    %v8665 = vpow.pop %v8664
    %v8666 = vadd.f32 %v8665, 1.0
    %v8667 = vrcp.pop %v8666
    %v8668 = vmul.f32 1.0, %v8667
    %v8670 = vrot.slane %v8419, 6
    %v8672 = vmul.f32 %v8661, %v8670
    %v8673 = vmul.f32 %v8655, %v8662
    %v8674 = vadd.f32 %v8672, %v8673
    %v8675 = vtanh.pop %v8674
    %v8676 = vmul.f32 %v8668, %v8675
    %v8677 = vpack.c.bf16 %v8550, %v8550
    %v8679 = vrot.slane %v8677, 1
    %8681 = vmatprep.subr.bf16.mxu0 %v6390
    %8682 = vmatpush1.bf16.msra.mxu0 %v6389
    %8683 = vmatprep.subr.bf16.mxu0 %v6386
    %8684 = vmatpush1.bf16.msra.mxu0 %v6385
    %8685 = vmatprep.subr.bf16.mxu0 %v6382
    %8686 = vmatpush1.bf16.msra.mxu0 %v6381
    %8687 = vmatprep.subr.bf16.mxu0 %v6378
    %8688 = vmatpush1.bf16.msra.mxu0 %v6377
    %8689 = vmatprep.subr.bf16.mxu0 %v6374
    %8690 = vmatpush1.bf16.msra.mxu0 %v6373
    %8691 = vmatprep.subr.bf16.mxu0 %v6370
    %8692 = vmatpush1.bf16.msra.mxu0 %v6369
    %8693 = vmatprep.subr.bf16.mxu0 %v6366
    %8694 = vmatpush1.bf16.msra.mxu0 %v6365
    %8695 = vmatprep.subr.bf16.mxu0 %v6362
    %8696 = vmatpush1.bf16.msra.mxu0 %v6361
    %8697 = vmatprep.subr.bf16.mxu0 0
    %8698 = vmatpush2.bf16.msra.mxu0 0
    %8699 = vmatprep.subr.bf16.mxu0 0
    %8700 = vmatpush2.bf16.msra.mxu0 0
    %8701 = vmatprep.subr.bf16.mxu0 0
    %8702 = vmatpush2.bf16.msra.mxu0 0
    %8703 = vmatprep.subr.bf16.mxu0 0
    %8704 = vmatpush2.bf16.msra.mxu0 0
    %8705 = vmatprep.subr.bf16.mxu0 0
    %8706 = vmatpush2.bf16.msra.mxu0 0
    %8707 = vmatprep.subr.bf16.mxu0 0
    %8708 = vmatpush2.bf16.msra.mxu0 0
    %8709 = vmatprep.subr.bf16.mxu0 0
    %8710 = vmatpush2.bf16.msra.mxu0 0
    %8711 = vmatprep.subr.bf16.mxu0 0
    %8712 = vmatpush2.bf16.msra.mxu0 0
    %8713 = vmatprep.mubr.bf16.mxu0 0
    %8714 = vmatmul.mubr.bf16.gmra.mxu0 %v8679
    %v8715 = vpop.f32.mrf.mxu0
    %v8716 = vadd.f32 0.0, %v8715
    %v8717 = vpop.f32.mrf.mxu0
    %v8718 = vadd.f32 0.0, %v8717
    %v8719 = vpop.f32.mrf.mxu0
    %v8720 = vpop.f32.mrf.mxu0
    %8721 = vdwg.mxu0
    %8722 = vmatprep.subr.bf16.mxu0 %v6392
    %8723 = vmatpush1.bf16.msra.mxu0 %v6391
    %8724 = vmatprep.subr.bf16.mxu0 %v6388
    %8725 = vmatpush1.bf16.msra.mxu0 %v6387
    %8726 = vmatprep.subr.bf16.mxu0 %v6384
    %8727 = vmatpush1.bf16.msra.mxu0 %v6383
    %8728 = vmatprep.subr.bf16.mxu0 %v6380
    %8729 = vmatpush1.bf16.msra.mxu0 %v6379
    %8730 = vmatprep.subr.bf16.mxu0 %v6376
    %8731 = vmatpush1.bf16.msra.mxu0 %v6375
    %8732 = vmatprep.subr.bf16.mxu0 %v6372
    %8733 = vmatpush1.bf16.msra.mxu0 %v6371
    %8734 = vmatprep.subr.bf16.mxu0 %v6368
    %8735 = vmatpush1.bf16.msra.mxu0 %v6367
    %8736 = vmatprep.subr.bf16.mxu0 %v6364
    %8737 = vmatpush1.bf16.msra.mxu0 %v6363
    %8738 = vmatprep.subr.bf16.mxu0 0
    %8739 = vmatpush2.bf16.msra.mxu0 0
    %8740 = vmatprep.subr.bf16.mxu0 0
    %8741 = vmatpush2.bf16.msra.mxu0 0
    %8742 = vmatprep.subr.bf16.mxu0 0
    %8743 = vmatpush2.bf16.msra.mxu0 0
    %8744 = vmatprep.subr.bf16.mxu0 0
    %8745 = vmatpush2.bf16.msra.mxu0 0
    %8746 = vmatprep.subr.bf16.mxu0 0
    %8747 = vmatpush2.bf16.msra.mxu0 0
    %8748 = vmatprep.subr.bf16.mxu0 0
    %8749 = vmatpush2.bf16.msra.mxu0 0
    %8750 = vmatprep.subr.bf16.mxu0 0
    %8751 = vmatpush2.bf16.msra.mxu0 0
    %8752 = vmatprep.subr.bf16.mxu0 0
    %8753 = vmatpush2.bf16.msra.mxu0 0
    %8754 = vmatprep.mubr.bf16.mxu0 0
    %8755 = vmatmul.mubr.bf16.gmra.mxu0 %v8679
    %v8756 = vpop.f32.mrf.mxu0
    %v8757 = vadd.f32 0.0, %v8756
    %v8758 = vpop.f32.mrf.mxu0
    %v8759 = vadd.f32 0.0, %v8758
    %v8760 = vpop.f32.mrf.mxu0
    %v8761 = vpop.f32.mrf.mxu0
    %8762 = vdwg.mxu0
    %v8763 = vadd.f32 %v5864, %v8716
    %v8764 = vadd.f32 %v5866, %v8718
    %v8765 = vadd.f32 %v5915, %v8757
    %v8766 = vadd.f32 %v5917, %v8759
    %v8767 = vsub.f32 0.0, %v8763
    %v8768 = vmul.f32 %v8767, 1.442695
    %v8769 = vpow.pop %v8768
    %v8770 = vadd.f32 %v8769, 1.0
    %v8771 = vrcp.pop %v8770
    %v8772 = vmul.f32 1.0, %v8771
    %v8773 = vsub.f32 0.0, %v8764
    %v8774 = vmul.f32 %v8773, 1.442695
    %v8775 = vpow.pop %v8774
    %v8776 = vadd.f32 %v8775, 1.0
    %v8777 = vrcp.pop %v8776
    %v8778 = vmul.f32 1.0, %v8777
    %v8779 = vtanh.pop %v8765
    %v8780 = vsub.f32 0.0, %v8766
    %v8781 = vmul.f32 %v8780, 1.442695
    %v8782 = vpow.pop %v8781
    %v8783 = vadd.f32 %v8782, 1.0
    %v8784 = vrcp.pop %v8783
    %v8785 = vmul.f32 1.0, %v8784
    %v8787 = vrot.slane %v8548, 2
    %v8789 = vmul.f32 %v8778, %v8787
    %v8790 = vmul.f32 %v8772, %v8779
    %v8791 = vadd.f32 %v8789, %v8790
    %v8792 = vtanh.pop %v8791
    %v8793 = vmul.f32 %v8785, %v8792
    %v8795 = vrot.slane %v5298, 2
    %8796 = vrot.lane.b32.xlu0 %v8795, 32
    %v8797 = vpop.permute.xlu0 %8796
    %v8799 = vsel %vm444, %v5181, %v8797
    %vm8800 = vcmask 261126
    %v8801 = vsel %vm8800, %v5181, 0.0
    %8802 = vadd.xlane.f32.xlu0 %v8801
    %v8803 = vpop.xlane.xlu0 %8802
    %vm8804 = vcmask 254976
    %v8805 = vsel %vm8804, %v5298, 0.0
    %8806 = vadd.xlane.f32.xlu0 %v8805
    %v8807 = vpop.xlane.xlu0 %8806
    %v8809 = vrot.slane %v8807, 2
    %vm8811 = vcmask 7168
    %v8812 = vsel %vm8811, %v8803, %v8809
    %v8813 = vmul.f32 %v8812, 0.03125
    %v8814 = vsel %vm8800, %v5181, -inf
    %8815 = vmax.xlane.f32.xlu0 %v8814
    %v8816 = vpop.xlane.xlu0 %8815
    %v8817 = vsel %vm8804, %v5298, -inf
    %8818 = vmax.xlane.f32.xlu0 %v8817
    %v8819 = vpop.xlane.xlu0 %8818
    %v8821 = vrot.slane %v8819, 2
    %v8823 = vsel %vm8811, %v8816, %v8821
    %v8825 = vrot.slane %v8793, 6
    %8826 = vrot.lane.b32.xlu0 %v8825, 32
    %v8827 = vpop.permute.xlu0 %8826
    %v8829 = vsel %vm444, %v8676, %v8827
    %vm8830 = vcmask 257026
    %v8831 = vsel %vm8830, %v8676, 0.0
    %8832 = vadd.xlane.f32.xlu0 %v8831
    %v8833 = vpop.xlane.xlu0 %8832
    %v8834 = vsel %vm8804, %v8793, 0.0
    %8835 = vadd.xlane.f32.xlu0 %v8834
    %v8836 = vpop.xlane.xlu0 %8835
    %v8838 = vrot.slane %v8836, 6
    %v8840 = vsel %vm8811, %v8833, %v8838
    %v8841 = vmul.f32 %v8840, 0.03125
    %v8842 = vsel %vm8830, %v8676, -inf
    %8843 = vmax.xlane.f32.xlu0 %v8842
    %v8844 = vpop.xlane.xlu0 %8843
    %v8845 = vsel %vm8804, %v8793, -inf
    %8846 = vmax.xlane.f32.xlu0 %v8845
    %v8847 = vpop.xlane.xlu0 %8846
    %v8849 = vrot.slane %v8847, 6
    %v8851 = vsel %vm8811, %v8844, %v8849
    %8853 = vrot.lane.b32.xlu0 %v8813, 64
    %v8854 = vpop.permute.xlu0 %8853
    %8857 = vrot.lane.b32.xlu0 %v8823, 66
    %v8858 = vpop.permute.xlu0 %8857
    %v8861 = vrot.slane %v8829, 4
    %8862 = vrot.lane.b32.xlu0 %v8861, 68
    %v8863 = vpop.permute.xlu0 %8862
    %v8866 = vrot.slane %v8841, 4
    %8867 = vrot.lane.b32.xlu0 %v8866, 4
    %v8868 = vpop.permute.xlu0 %8867
    %v8871 = vrot.slane %v8851, 4
    %8872 = vrot.lane.b32.xlu0 %v8871, 6
    %v8873 = vpop.permute.xlu0 %8872
    %v8875 = vsel %vm453, %v8799, %v8854
    %vm8876 = vcmask 539648
    %v8877 = vsel %vm8876, %v8875, %v8858
    %vm8878 = vcmask 556032
    %v8879 = vsel %vm8878, %v8877, %v8863
    %vm8880 = vcmask 31744
    %v8881 = vsel %vm8880, %v8863, %v8868
    %vm8882 = vcmask 48128
    %v8883 = vsel %vm8882, %v8881, %v8873
    %v8884 = vpack.c.bf16 %v8879, %v8879
    %v8885 = vpack.c.bf16 %v8883, %v8883
    %v8886 = vld [vmem:[%s18] sm:$0xf]
    %v8887 = vld [vmem:[%s18 + $0x4] sm:$0xf]
    %v8888 = vld [vmem:[%s18 + $0x8] sm:$0xf]
    %v8889 = vld [vmem:[%s18 + $0xc] sm:$0xf]
    %v8890 = vld [vmem:[%s18 + $0x10] sm:$0xf]
    %v8891 = vld [vmem:[%s18 + $0x14] sm:$0xf]
    %v8892 = vld [vmem:[%s18 + $0x18] sm:$0xf]
    %v8893 = vld [vmem:[%s18 + $0x1c] sm:$0xf]
    %v8894 = vld [vmem:[%s18 + $0x20] sm:$0xf]
    %v8895 = vld [vmem:[%s18 + $0x24] sm:$0xf]
    %v8896 = vld [vmem:[%s18 + $0x28] sm:$0xf]
    %v8897 = vld [vmem:[%s18 + $0x2c] sm:$0xf]
    %v8898 = vld [vmem:[%s18 + $0x30] sm:$0xf]
    %v8899 = vld [vmem:[%s18 + $0x34] sm:$0xf]
    %v8900 = vld [vmem:[%s18 + $0x38] sm:$0xf]
    %v8901 = vld [vmem:[%s18 + $0x3c] sm:$0xf]
    %v8902 = vld [vmem:[%s18 + $0x40] sm:$0xf]
    %v8903 = vld [vmem:[%s19] sm:$0x1]
    %v8905 = vlaneseq
    %v8906 = vshrl.u32 %v8905, 7
    %v8907 = vsub.s32 0, %v8906
    %v8908 = vrot.slane %v8903, %v8907
    %v8912 = vrot.slane %v8884, 3
    %v8913 = vrot.slane %v8885, 3
    %v8932 = vunpack.c.l.b16 %v8886
    %v8933 = vunpack.c.l.b16 %v8887
    %v8934 = vunpack.c.l.b16 %v8888
    %v8935 = vunpack.c.l.b16 %v8889
    %v8936 = vunpack.c.l.b16 %v8890
    %v8937 = vunpack.c.l.b16 %v8891
    %v8938 = vunpack.c.l.b16 %v8892
    %v8939 = vunpack.c.l.b16 %v8893
    %v8940 = vunpack.c.l.b16 %v8894
    %v8941 = vunpack.c.l.b16 %v8895
    %v8942 = vunpack.c.l.b16 %v8896
    %v8943 = vunpack.c.l.b16 %v8897
    %v8944 = vunpack.c.l.b16 %v8898
    %v8945 = vunpack.c.l.b16 %v8899
    %v8946 = vunpack.c.l.b16 %v8900
    %v8947 = vunpack.c.l.b16 %v8901
    %v8948 = vunpack.c.l.b16 %v8902
    %v8949 = vpack.c.b16 %v8933, %v8932
    %v8950 = vpack.c.b16 %v8935, %v8934
    %v8951 = vpack.c.b16 %v8937, %v8936
    %v8952 = vpack.c.b16 %v8939, %v8938
    %v8953 = vpack.c.b16 %v8941, %v8940
    %v8954 = vpack.c.b16 %v8943, %v8942
    %v8955 = vpack.c.b16 %v8945, %v8944
    %v8956 = vpack.c.b16 %v8947, %v8946
    %v8957 = vpack.c.b16 %v8948, %v8948
    %vm8966 = vcmask 64512
    %v8968 = vsel %vm8966, %v8913, 0
    %vm8970 = vcmask 1043456
    %v8972 = vsel %vm8970, %v8957, 0
    %8974 = vmatprep.subr.bf16.mxu0 0
    %8975 = vmatpush1.bf16.msra.mxu0 %v8956
    %8976 = vmatprep.subr.bf16.mxu0 0
    %8977 = vmatpush1.bf16.msra.mxu0 %v8955
    %8978 = vmatprep.subr.bf16.mxu0 0
    %8979 = vmatpush1.bf16.msra.mxu0 %v8954
    %8980 = vmatprep.subr.bf16.mxu0 0
    %8981 = vmatpush1.bf16.msra.mxu0 %v8953
    %8982 = vmatprep.subr.bf16.mxu0 0
    %8983 = vmatpush1.bf16.msra.mxu0 %v8952
    %8984 = vmatprep.subr.bf16.mxu0 0
    %8985 = vmatpush1.bf16.msra.mxu0 %v8951
    %8986 = vmatprep.subr.bf16.mxu0 0
    %8987 = vmatpush1.bf16.msra.mxu0 %v8950
    %8988 = vmatprep.subr.bf16.mxu0 0
    %8989 = vmatpush1.bf16.msra.mxu0 %v8949
    %8990 = vmatprep.subr.bf16.mxu0 0
    %8991 = vmatpush2.bf16.msra.mxu0 0
    %8992 = vmatprep.subr.bf16.mxu0 0
    %8993 = vmatpush2.bf16.msra.mxu0 0
    %8994 = vmatprep.subr.bf16.mxu0 0
    %8995 = vmatpush2.bf16.msra.mxu0 0
    %8996 = vmatprep.subr.bf16.mxu0 0
    %8997 = vmatpush2.bf16.msra.mxu0 0
    %8998 = vmatprep.subr.bf16.mxu0 0
    %8999 = vmatpush2.bf16.msra.mxu0 0
    %9000 = vmatprep.subr.bf16.mxu0 0
    %9001 = vmatpush2.bf16.msra.mxu0 0
    %9002 = vmatprep.subr.bf16.mxu0 0
    %9003 = vmatpush2.bf16.msra.mxu0 0
    %9004 = vmatprep.subr.bf16.mxu0 0
    %9005 = vmatpush2.bf16.msra.mxu0 %v8972
    %9006 = vmatprep.mubr.bf16.mxu0 %v8968
    %9007 = vmatmul.mubr.bf16.gmra.mxu0 %v8912
    %v9008 = vpop.f32.mrf.mxu0
    %v9009 = vadd.f32 %v8908, %v9008
    %v9010 = vpop.f32.mrf.mxu0
    %v9011 = vpop.f32.mrf.mxu0
    %v9012 = vpop.f32.mrf.mxu0
    %9013 = vdwg.mxu0
    %v9014 = vmax.f32 %v9009, 0.0
    %v9015 = vpack.c.bf16 %v9014, %v9014
    %v9016 = vld [vmem:[%s20] sm:$0xf]
    %v9017 = vld [vmem:[%s20 + $0x4] sm:$0xf]
    %v9018 = vld [vmem:[%s20 + $0x8] sm:$0xf]
    %v9019 = vld [vmem:[%s20 + $0xc] sm:$0xf]
    %v9020 = vld [vmem:[%s20 + $0x10] sm:$0xf]
    %v9021 = vld [vmem:[%s20 + $0x14] sm:$0xf]
    %v9022 = vld [vmem:[%s20 + $0x18] sm:$0xf]
    %v9023 = vld [vmem:[%s20 + $0x1c] sm:$0xf]
    %v9024 = vld [vmem:[%s20 + $0x20] sm:$0xf]
    %v9025 = vld [vmem:[%s20 + $0x24] sm:$0xf]
    %v9026 = vld [vmem:[%s20 + $0x28] sm:$0xf]
    %v9027 = vld [vmem:[%s20 + $0x2c] sm:$0xf]
    %v9028 = vld [vmem:[%s20 + $0x30] sm:$0xf]
    %v9029 = vld [vmem:[%s20 + $0x34] sm:$0xf]
    %v9030 = vld [vmem:[%s20 + $0x38] sm:$0xf]
    %v9031 = vld [vmem:[%s20 + $0x3c] sm:$0xf]
    %v9032 = vld [vmem:[#allocation2] sm:$0x1]
    %v9034 = vlaneseq
    %v9035 = vshrl.u32 %v9034, 7
    %v9036 = vsub.s32 0, %v9035
    %v9037 = vrot.slane %v9032, %v9036
    %v9055 = vunpack.c.l.b16 %v9016
    %v9056 = vunpack.c.l.b16 %v9017
    %v9057 = vunpack.c.l.b16 %v9018
    %v9058 = vunpack.c.l.b16 %v9019
    %v9059 = vunpack.c.l.b16 %v9020
    %v9060 = vunpack.c.l.b16 %v9021
    %v9061 = vunpack.c.l.b16 %v9022
    %v9062 = vunpack.c.l.b16 %v9023
    %v9063 = vunpack.c.l.b16 %v9024
    %v9064 = vunpack.c.l.b16 %v9025
    %v9065 = vunpack.c.l.b16 %v9026
    %v9066 = vunpack.c.l.b16 %v9027
    %v9067 = vunpack.c.l.b16 %v9028
    %v9068 = vunpack.c.l.b16 %v9029
    %v9069 = vunpack.c.l.b16 %v9030
    %v9070 = vunpack.c.l.b16 %v9031
    %v9071 = vpack.c.b16 %v9056, %v9055
    %v9072 = vpack.c.b16 %v9058, %v9057
    %v9073 = vpack.c.b16 %v9060, %v9059
    %v9074 = vpack.c.b16 %v9062, %v9061
    %v9075 = vpack.c.b16 %v9064, %v9063
    %v9076 = vpack.c.b16 %v9066, %v9065
    %v9077 = vpack.c.b16 %v9068, %v9067
    %v9078 = vpack.c.b16 %v9070, %v9069
    %9087 = vmatprep.subr.bf16.mxu0 0
    %9088 = vmatpush1.bf16.msra.mxu0 %v9078
    %9089 = vmatprep.subr.bf16.mxu0 0
    %9090 = vmatpush1.bf16.msra.mxu0 %v9077
    %9091 = vmatprep.subr.bf16.mxu0 0
    %9092 = vmatpush1.bf16.msra.mxu0 %v9076
    %9093 = vmatprep.subr.bf16.mxu0 0
    %9094 = vmatpush1.bf16.msra.mxu0 %v9075
    %9095 = vmatprep.subr.bf16.mxu0 0
    %9096 = vmatpush1.bf16.msra.mxu0 %v9074
    %9097 = vmatprep.subr.bf16.mxu0 0
    %9098 = vmatpush1.bf16.msra.mxu0 %v9073
    %9099 = vmatprep.subr.bf16.mxu0 0
    %9100 = vmatpush1.bf16.msra.mxu0 %v9072
    %9101 = vmatprep.subr.bf16.mxu0 0
    %9102 = vmatpush1.bf16.msra.mxu0 %v9071
    %9103 = vmatprep.subr.bf16.mxu0 0
    %9104 = vmatpush2.bf16.msra.mxu0 0
    %9105 = vmatprep.subr.bf16.mxu0 0
    %9106 = vmatpush2.bf16.msra.mxu0 0
    %9107 = vmatprep.subr.bf16.mxu0 0
    %9108 = vmatpush2.bf16.msra.mxu0 0
    %9109 = vmatprep.subr.bf16.mxu0 0
    %9110 = vmatpush2.bf16.msra.mxu0 0
    %9111 = vmatprep.subr.bf16.mxu0 0
    %9112 = vmatpush2.bf16.msra.mxu0 0
    %9113 = vmatprep.subr.bf16.mxu0 0
    %9114 = vmatpush2.bf16.msra.mxu0 0
    %9115 = vmatprep.subr.bf16.mxu0 0
    %9116 = vmatpush2.bf16.msra.mxu0 0
    %9117 = vmatprep.subr.bf16.mxu0 0
    %9118 = vmatpush2.bf16.msra.mxu0 0
    %9119 = vmatprep.mubr.bf16.mxu0 0
    %9120 = vmatmul.mubr.bf16.gmra.mxu0 %v9015
    %v9121 = vpop.f32.mrf.mxu0
    %v9122 = vadd.f32 %v9037, %v9121
    %v9123 = vpop.f32.mrf.mxu0
    %v9124 = vpop.f32.mrf.mxu0
    %v9125 = vpop.f32.mrf.mxu0
    %9126 = vdwg.mxu0
    %vm9127 = vcmask 1024
    %9128 = vst.msk [vmem:[%s22] sm:$0x3] %vm9127, %v9122
    // Predicated region
    $region138: #{attractive_net_forward.1} parent=1 // pred_check
      _
    $region139: #{attractive_net_forward.1} parent=1 // pred_check_branch
      %9130 = sbr.rel (0) target = $region141
    $region140: #{attractive_net_forward.1} parent=1 // pred_region
      _
    $region141: #{attractive_net_forward.1} parent=1 // pred_fallthru
      _
    // Predicated region
    $region142: #{attractive_net_forward.1} parent=1 // pred_check
      _
    $region143: #{attractive_net_forward.1} parent=1 // pred_check_branch
      %9132 = sbr.rel (0) target = $region145
    $region144: #{attractive_net_forward.1} parent=1 // pred_region
      _
    $region145: #{attractive_net_forward.1} parent=1 // pred_fallthru
      _
    %9133 = vsyncpa [#allocation4], 1
    %9134 = vsyncpa [#allocation6], 1
    %9135 = vsyncpa [#allocation9], 1
    %9136 = vsyncpa [#allocation12], 1
    %9137 = vsyncpa [#allocation15], 1
    %9138 = vsyncpa [#allocation18], 1
    %9139 = vsyncpa [#allocation21], 1

</llo_original>
